<compile_context>
chip_gen: v5e
topology: v5e:2x2
jax: 0.10.0
libtpu: 0.0.40
codegen_flags: <defaults>
</compile_context>

<pallas_src>
import functools

import jax
import jax.numpy as jnp
import numpy as np
from jax import lax
from jax.experimental import pallas as pl
from jax.experimental.pallas import tpu as pltpu


# ---- fixed LeNet geometry for 28x28 single-channel inputs -------------------
# (the standard LeNetContainer([4, 8], 5, 128, [32], 10) configuration)
KSIZE = 5                  # conv kernel size
HIN = 28                   # input spatial size
S1 = HIN - KSIZE + 1       # 24: conv1 output spatial
P1 = S1 // 2               # 12: pool1 output spatial
WPAD = 16                  # pool1 width padded 12 -> 16 (multiple of 8 sublanes)
S2 = P1 - KSIZE + 1        # 8 : conv2 output spatial
P2 = S2 // 2               # 4 : pool2 output spatial
NPOS2 = P2 * P2            # 16: pooled positions per image after pool2
NWIN = 4 * NPOS2           # 64: conv2 output positions per image (corner-grouped)
PB = P1 * WPAD             # 192: rows per image in the pooled conv1 activation
BLK = S2 * WPAD            # 128: rows of one conv2 window band


# ----------------------------- Pallas kernel ---------------------------------

def _lenet_kernel(B, C2,
                  p1_ref, w1_ref, b1_ref, w2_ref, b2_ref, tcat_ref,
                  wflat_ref, dmask_ref, rsel_ref, csel_ref, bf1_ref,
                  wf2_ref, bf2_ref, out_ref):
    f32 = jnp.float32
    ncr = B * PB                                   # rows per pool corner in conv1 GEMM

    # ---- conv1 as one im2col GEMM; pool1 + bias + ReLU as row-block epilogue
    y = jnp.dot(p1_ref[...], w1_ref[...], preferred_element_type=f32)   # (4*B*PB, C1)
    m = jnp.maximum(jnp.maximum(y[0 * ncr:1 * ncr], y[1 * ncr:2 * ncr]),
                    jnp.maximum(y[2 * ncr:3 * ncr], y[3 * ncr:4 * ncr]))
    y1 = jnp.maximum(m + b1_ref[...], 0.0)                               # (B*PB, C1)

    # ---- conv2 (+ pool2 + bias + ReLU); windows gathered via selection GEMMs
    tcat = tcat_ref[...]                                                 # (5*NWIN, BLK)
    pooled = []
    for b in range(B):
        acc = jnp.zeros((NWIN, C2), f32)
        for kh in range(KSIZE):
            base = b * PB + kh * WPAD                                    # 8-aligned
            band = y1[base:base + BLK, :]                                # (BLK, C1)
            wins = jnp.dot(tcat, band, preferred_element_type=f32)      # (5*NWIN, C1)
            for kw in range(KSIZE):
                w2k = w2_ref[kh * KSIZE + kw]                            # (C1, C2)
                acc = acc + jnp.dot(wins[kw * NWIN:(kw + 1) * NWIN, :],
                                    w2k, preferred_element_type=f32)
        acc = acc + b2_ref[...]
        pooled_b = jnp.maximum(
            jnp.maximum(acc[0 * NPOS2:1 * NPOS2], acc[1 * NPOS2:2 * NPOS2]),
            jnp.maximum(acc[2 * NPOS2:3 * NPOS2], acc[3 * NPOS2:4 * NPOS2]))
        pooled.append(jnp.maximum(pooled_b, 0.0))                        # (NPOS2, C2)
    pool2 = jnp.concatenate(pooled, axis=0)                              # (B*NPOS2, C2)

    # ---- NCHW flatten + fc1 as a masked GEMM chain (no in-kernel transpose)
    a = jnp.dot(pool2, wflat_ref[...], preferred_element_type=f32)       # (B*NPOS2, NPOS2*HID)
    a = a * dmask_ref[...]
    h = jnp.dot(rsel_ref[...], a, preferred_element_type=f32)            # (B, NPOS2*HID)
    h = jnp.dot(h, csel_ref[...], preferred_element_type=f32) + bf1_ref[...]   # (B, HID)

    # ---- fc2
    out_ref[...] = jnp.dot(h, wf2_ref[...], preferred_element_type=f32) + bf2_ref[...]


# ------------------------------ host-side glue -------------------------------

def _im2col_conv1_pool_grouped(x):
    """x:(B,1,28,28) -> (4*B*P1*WPAD, 25) conv1 patches, rows ordered
    (pool-corner, batch, pooled-row, padded-pooled-col).  Padded columns
    (pw >= 12) are zero and never consumed downstream.  Patch columns follow
    torch's OIHW flatten order (kh, kw) since Cin == 1."""
    B = x.shape[0]
    xs = x[:, 0]
    blocks = []
    for dh in (0, 1):
        for dw in (0, 1):
            cols = []
            for kh in range(KSIZE):
                for kw in range(KSIZE):
                    cols.append(xs[:, dh + kh: dh + kh + 2 * P1: 2,
                                      dw + kw: dw + kw + 2 * P1: 2])     # (B,12,12)
            pc = jnp.stack(cols, axis=-1)                                # (B,12,12,25)
            pc = jnp.pad(pc, ((0, 0), (0, 0), (0, WPAD - P1), (0, 0)))   # (B,12,16,25)
            blocks.append(pc.reshape(B * P1 * WPAD, KSIZE * KSIZE))
    return jnp.concatenate(blocks, axis=0)


def _conv2_window_selector():
    """Constant 0/1 matrix (5*NWIN, BLK) gathering conv2 windows from one
    (S2 rows x WPAD cols) band of the pooled conv1 activation, with output
    rows grouped by pool2 corner so pool2 becomes a row-block max."""
    T = np.zeros((KSIZE * NWIN, BLK), np.float32)
    for kw in range(KSIZE):
        for corner in range(4):
            dh, dw = corner // 2, corner % 2
            for qh in range(P2):
                for qw in range(P2):
                    i = kw * NWIN + corner * NPOS2 + qh * P2 + qw
                    j = (2 * qh + dh) * WPAD + (2 * qw + dw) + kw
                    T[i, j] = 1.0
    return T


def _fc1_fold_constants(B, hid):
    """Constants that fold the torch NCHW flatten into plain GEMMs."""
    n = NPOS2 * hid
    dmask = (np.arange(n)[None, :] // hid ==
             np.arange(B * NPOS2)[:, None] % NPOS2).astype(np.float32)   # (B*16, 16*hid)
    rsel = (np.arange(B * NPOS2)[None, :] // NPOS2 ==
            np.arange(B)[:, None]).astype(np.float32)                    # (B, B*16)
    csel = (np.arange(n)[:, None] % hid ==
            np.arange(hid)[None, :]).astype(np.float32)                  # (16*hid, hid)
    return dmask, rsel, csel


def _full_block(shape):
    nd = len(shape)
    return pl.BlockSpec(shape, lambda i, _z=(0,) * nd: _z)


@jax.jit
def lenet_forward(x, params):
    """Pallas implementation of LeNetContainer.forward.  x: (B,1,28,28) NCHW."""
    w1, b1, w2, b2, wf1, bf1, wf2, bf2 = params
    B = x.shape[0]
    C1, C2 = w1.shape[0], w2.shape[0]
    HID, NOUT = wf1.shape[0], wf2.shape[0]
    assert x.shape[1:] == (1, HIN, HIN)
    assert w1.shape == (C1, 1, KSIZE, KSIZE) and w2.shape == (C2, C1, KSIZE, KSIZE)
    assert wf1.shape[1] == C2 * NPOS2

    # im2col of the network input (single materialization, pool-corner grouped,
    # padding folded in).  Weight rearrangements are pure layout, done once.
    p1 = _im2col_conv1_pool_grouped(x)                                    # (4*B*PB, 25)
    w1m = w1.reshape(C1, KSIZE * KSIZE).T                                 # (25, C1)
    w2m = jnp.transpose(w2, (2, 3, 1, 0)).reshape(KSIZE * KSIZE, C1, C2)  # (25, C1, C2)
    wflat = jnp.transpose(wf1.reshape(HID, C2, NPOS2),
                          (1, 2, 0)).reshape(C2, NPOS2 * HID)             # (C2, 16*HID)
    tcat = jnp.asarray(_conv2_window_selector())
    dmask_np, rsel_np, csel_np = _fc1_fold_constants(B, HID)
    dmask, rsel, csel = (jnp.asarray(dmask_np), jnp.asarray(rsel_np),
                         jnp.asarray(csel_np))

    operands = (p1, w1m, b1.reshape(1, C1), w2m, b2.reshape(1, C2), tcat,
                wflat, dmask, rsel, csel, bf1.reshape(1, HID),
                wf2.T, bf2.reshape(1, NOUT))

    kernel = functools.partial(_lenet_kernel, B, C2)
    return pl.pallas_call(
        kernel,
        grid=(1,),
        in_specs=[_full_block(op.shape) for op in operands],
        out_specs=pl.BlockSpec((B, NOUT), lambda i: (0, 0)),
        out_shape=jax.ShapeDtypeStruct((B, NOUT), jnp.float32),
        compiler_params=pltpu.CompilerParams(dimension_semantics=("arbitrary",)),
    )(*operands)


# ------------------------------ reference ------------------------------------

def lenet_reference(x, params):
    """Pure-JAX reference (mirrors the PyTorch forward exactly, f32/HIGHEST)."""
    w1, b1, w2, b2, wf1, bf1, wf2, bf2 = params
    dn = ('NCHW', 'OIHW', 'NCHW')

    def conv(v, w, b):
        y = lax.conv_general_dilated(v, w, (1, 1), 'VALID',
                                     dimension_numbers=dn,
                                     precision=lax.Precision.HIGHEST)
        return y + b[None, :, None, None]

    def pool(v):
        Bq, C, H, W = v.shape
        return v.reshape(Bq, C, H // 2, 2, W // 2, 2).max(axis=(3, 5))

    y = jnp.maximum(pool(conv(x, w1, b1)), 0.0)
    y = jnp.maximum(pool(conv(y, w2, b2)), 0.0)
    y = y.reshape(y.shape[0], -1)
    y = jnp.dot(y, wf1.T, precision=lax.Precision.HIGHEST) + bf1
    y = jnp.dot(y, wf2.T, precision=lax.Precision.HIGHEST) + bf2
    return y


# -------------------------------- main ----------------------------------------

if __name__ == "__main__":
    # Module config: LeNetContainer(num_filters=[4,8], kernel_size=5,
    #                               input_dim=128, hidden_dims=[32], output_dim=10)
    num_filters = [4, 8]
    hidden_dims = [32]
    output_dim = 10
    B = 2
    input_dim = num_filters[1] * P2 * P2   # 8 * 4 * 4 = 128

    key = jax.random.PRNGKey(0)
    ks = jax.random.split(key, 9)
    scale = 0.1
    x = jax.random.normal(ks[0], (B, 1, HIN, HIN), jnp.float32)
    w1 = scale * jax.random.normal(ks[1], (num_filters[0], 1, KSIZE, KSIZE), jnp.float32)
    b1 = scale * jax.random.normal(ks[2], (num_filters[0],), jnp.float32)
    w2 = scale * jax.random.normal(ks[3], (num_filters[1], num_filters[0], KSIZE, KSIZE), jnp.float32)
    b2 = scale * jax.random.normal(ks[4], (num_filters[1],), jnp.float32)
    wf1 = scale * jax.random.normal(ks[5], (hidden_dims[0], input_dim), jnp.float32)
    bf1 = scale * jax.random.normal(ks[6], (hidden_dims[0],), jnp.float32)
    wf2 = scale * jax.random.normal(ks[7], (output_dim, hidden_dims[0]), jnp.float32)
    bf2 = scale * jax.random.normal(ks[8], (output_dim,), jnp.float32)
    params = (w1, b1, w2, b2, wf1, bf1, wf2, bf2)

    out = lenet_forward(x, params)
    out = jax.block_until_ready(out)

    ref = lenet_reference(x, params)
    assert out.shape == (B, output_dim), out.shape
    # Kernel matmuls run at default MXU precision (operands rounded toward
    # bf16, f32 accumulation) as requested by the perf review, while the
    # reference runs at HIGHEST; expected deviation is ~1e-3..1e-2, whereas any
    # structural/indexing bug produces O(0.1) errors.
    np.testing.assert_allclose(np.asarray(out), np.asarray(ref), rtol=2e-2, atol=2e-2)
    print("KERNEL_OK")
</pallas_src>

<mosaic_0001>
module attributes {stable_mosaic.version = 11 : i64} {
  func.func @_lenet_kernel(%arg0: i32, %arg1: memref<1536x25xf32, #tpu.memory_space<vmem>>, %arg2: memref<25x4xf32, #tpu.memory_space<vmem>>, %arg3: memref<1x4xf32, #tpu.memory_space<vmem>>, %arg4: memref<25x4x8xf32, #tpu.memory_space<vmem>>, %arg5: memref<1x8xf32, #tpu.memory_space<vmem>>, %arg6: memref<320x128xf32, #tpu.memory_space<vmem>>, %arg7: memref<8x512xf32, #tpu.memory_space<vmem>>, %arg8: memref<32x512xf32, #tpu.memory_space<vmem>>, %arg9: memref<2x32xf32, #tpu.memory_space<vmem>>, %arg10: memref<512x32xf32, #tpu.memory_space<vmem>>, %arg11: memref<1x32xf32, #tpu.memory_space<vmem>>, %arg12: memref<32x10xf32, #tpu.memory_space<vmem>>, %arg13: memref<1x10xf32, #tpu.memory_space<vmem>>, %arg14: memref<2x10xf32, #tpu.memory_space<vmem>>) attributes {dimension_semantics = [#tpu.dimension_semantics<arbitrary>], iteration_bounds = array<i64: 1>, scalar_prefetch = 0 : i64, scratch_operands = 0 : i64, tpu.core_type = #tpu.core_type<tc>, window_params = [{pipeline_mode = #tpu.pipeline_mode<synchronous>, transform_indices = @transform_0, window_bounds = array<i64: 1536, 25>}, {pipeline_mode = #tpu.pipeline_mode<synchronous>, transform_indices = @transform_1, window_bounds = array<i64: 25, 4>}, {pipeline_mode = #tpu.pipeline_mode<synchronous>, transform_indices = @transform_2, window_bounds = array<i64: 1, 4>}, {pipeline_mode = #tpu.pipeline_mode<synchronous>, transform_indices = @transform_3, window_bounds = array<i64: 25, 4, 8>}, {pipeline_mode = #tpu.pipeline_mode<synchronous>, transform_indices = @transform_4, window_bounds = array<i64: 1, 8>}, {pipeline_mode = #tpu.pipeline_mode<synchronous>, transform_indices = @transform_5, window_bounds = array<i64: 320, 128>}, {pipeline_mode = #tpu.pipeline_mode<synchronous>, transform_indices = @transform_6, window_bounds = array<i64: 8, 512>}, {pipeline_mode = #tpu.pipeline_mode<synchronous>, transform_indices = @transform_7, window_bounds = array<i64: 32, 512>}, {pipeline_mode = #tpu.pipeline_mode<synchronous>, transform_indices = @transform_8, window_bounds = array<i64: 2, 32>}, {pipeline_mode = #tpu.pipeline_mode<synchronous>, transform_indices = @transform_9, window_bounds = array<i64: 512, 32>}, {pipeline_mode = #tpu.pipeline_mode<synchronous>, transform_indices = @transform_10, window_bounds = array<i64: 1, 32>}, {pipeline_mode = #tpu.pipeline_mode<synchronous>, transform_indices = @transform_11, window_bounds = array<i64: 32, 10>}, {pipeline_mode = #tpu.pipeline_mode<synchronous>, transform_indices = @transform_12, window_bounds = array<i64: 1, 10>}, {pipeline_mode = #tpu.pipeline_mode<synchronous>, transform_indices = @transform_13, window_bounds = array<i64: 2, 10>}]} {
    %c0 = arith.constant 0 : index
    %c0_0 = arith.constant 0 : index
    %0 = vector.load %arg1[%c0, %c0_0] : memref<1536x25xf32, #tpu.memory_space<vmem>>, vector<1536x25xf32>
    %c0_1 = arith.constant 0 : index
    %c0_2 = arith.constant 0 : index
    %1 = vector.load %arg2[%c0_1, %c0_2] : memref<25x4xf32, #tpu.memory_space<vmem>>, vector<25x4xf32>
    %cst = arith.constant dense<0.000000e+00> : vector<1536x4xf32>
    %2 = tpu.matmul %0, %1, %cst {dimension_numbers = #tpu.dot_dimension_numbers<[1], [0], [0], [1], [0, 0, 1, 1], [], []>} : vector<1536x25xf32>, vector<25x4xf32>, vector<1536x4xf32> -> vector<1536x4xf32>
    %3 = vector.extract_strided_slice %2 {offsets = [0, 0], sizes = [384, 4], strides = [1, 1]} : vector<1536x4xf32> to vector<384x4xf32>
    %4 = vector.extract_strided_slice %2 {offsets = [384, 0], sizes = [384, 4], strides = [1, 1]} : vector<1536x4xf32> to vector<384x4xf32>
    %5 = arith.maximumf %3, %4 : vector<384x4xf32>
    %6 = vector.extract_strided_slice %2 {offsets = [768, 0], sizes = [384, 4], strides = [1, 1]} : vector<1536x4xf32> to vector<384x4xf32>
    %7 = vector.extract_strided_slice %2 {offsets = [1152, 0], sizes = [384, 4], strides = [1, 1]} : vector<1536x4xf32> to vector<384x4xf32>
    %8 = arith.maximumf %6, %7 : vector<384x4xf32>
    %9 = arith.maximumf %5, %8 : vector<384x4xf32>
    %c0_3 = arith.constant 0 : index
    %c0_4 = arith.constant 0 : index
    %10 = vector.load %arg3[%c0_3, %c0_4] : memref<1x4xf32, #tpu.memory_space<vmem>>, vector<1x4xf32>
    %11 = vector.broadcast %10 : vector<1x4xf32> to vector<384x4xf32>
    %12 = arith.addf %9, %11 : vector<384x4xf32>
    %cst_5 = arith.constant 0.000000e+00 : f32
    %13 = vector.broadcast %cst_5 : f32 to vector<384x4xf32>
    %14 = arith.maximumf %12, %13 : vector<384x4xf32>
    %c0_6 = arith.constant 0 : index
    %c0_7 = arith.constant 0 : index
    %15 = vector.load %arg6[%c0_6, %c0_7] : memref<320x128xf32, #tpu.memory_space<vmem>>, vector<320x128xf32>
    %cst_8 = arith.constant 0.000000e+00 : f32
    %16 = vector.broadcast %cst_8 : f32 to vector<64x8xf32>
    %17 = vector.extract_strided_slice %14 {offsets = [0, 0], sizes = [128, 4], strides = [1, 1]} : vector<384x4xf32> to vector<128x4xf32>
    %cst_9 = arith.constant dense<0.000000e+00> : vector<320x4xf32>
    %18 = tpu.matmul %15, %17, %cst_9 {dimension_numbers = #tpu.dot_dimension_numbers<[1], [0], [0], [1], [0, 0, 1, 1], [], []>} : vector<320x128xf32>, vector<128x4xf32>, vector<320x4xf32> -> vector<320x4xf32>
    %c0_10 = arith.constant 0 : index
    %c0_11 = arith.constant 0 : index
    %c0_12 = arith.constant 0 : index
    %19 = vector.load %arg4[%c0_10, %c0_11, %c0_12] : memref<25x4x8xf32, #tpu.memory_space<vmem>>, vector<1x4x8xf32>
    %20 = vector.shape_cast %19 : vector<1x4x8xf32> to vector<4x8xf32>
    %21 = vector.extract_strided_slice %18 {offsets = [0, 0], sizes = [64, 4], strides = [1, 1]} : vector<320x4xf32> to vector<64x4xf32>
    %cst_13 = arith.constant dense<0.000000e+00> : vector<64x8xf32>
    %22 = tpu.matmul %21, %20, %cst_13 {dimension_numbers = #tpu.dot_dimension_numbers<[1], [0], [0], [1], [0, 0, 1, 1], [], []>} : vector<64x4xf32>, vector<4x8xf32>, vector<64x8xf32> -> vector<64x8xf32>
    %23 = arith.addf %16, %22 : vector<64x8xf32>
    %c1 = arith.constant 1 : index
    %c0_14 = arith.constant 0 : index
    %c0_15 = arith.constant 0 : index
    %24 = vector.load %arg4[%c1, %c0_14, %c0_15] : memref<25x4x8xf32, #tpu.memory_space<vmem>>, vector<1x4x8xf32>
    %25 = vector.shape_cast %24 : vector<1x4x8xf32> to vector<4x8xf32>
    %26 = vector.extract_strided_slice %18 {offsets = [64, 0], sizes = [64, 4], strides = [1, 1]} : vector<320x4xf32> to vector<64x4xf32>
    %cst_16 = arith.constant dense<0.000000e+00> : vector<64x8xf32>
    %27 = tpu.matmul %26, %25, %cst_16 {dimension_numbers = #tpu.dot_dimension_numbers<[1], [0], [0], [1], [0, 0, 1, 1], [], []>} : vector<64x4xf32>, vector<4x8xf32>, vector<64x8xf32> -> vector<64x8xf32>
    %28 = arith.addf %23, %27 : vector<64x8xf32>
    %c2 = arith.constant 2 : index
    %c0_17 = arith.constant 0 : index
    %c0_18 = arith.constant 0 : index
    %29 = vector.load %arg4[%c2, %c0_17, %c0_18] : memref<25x4x8xf32, #tpu.memory_space<vmem>>, vector<1x4x8xf32>
    %30 = vector.shape_cast %29 : vector<1x4x8xf32> to vector<4x8xf32>
    %31 = vector.extract_strided_slice %18 {offsets = [128, 0], sizes = [64, 4], strides = [1, 1]} : vector<320x4xf32> to vector<64x4xf32>
    %cst_19 = arith.constant dense<0.000000e+00> : vector<64x8xf32>
    %32 = tpu.matmul %31, %30, %cst_19 {dimension_numbers = #tpu.dot_dimension_numbers<[1], [0], [0], [1], [0, 0, 1, 1], [], []>} : vector<64x4xf32>, vector<4x8xf32>, vector<64x8xf32> -> vector<64x8xf32>
    %33 = arith.addf %28, %32 : vector<64x8xf32>
    %c3 = arith.constant 3 : index
    %c0_20 = arith.constant 0 : index
    %c0_21 = arith.constant 0 : index
    %34 = vector.load %arg4[%c3, %c0_20, %c0_21] : memref<25x4x8xf32, #tpu.memory_space<vmem>>, vector<1x4x8xf32>
    %35 = vector.shape_cast %34 : vector<1x4x8xf32> to vector<4x8xf32>
    %36 = vector.extract_strided_slice %18 {offsets = [192, 0], sizes = [64, 4], strides = [1, 1]} : vector<320x4xf32> to vector<64x4xf32>
    %cst_22 = arith.constant dense<0.000000e+00> : vector<64x8xf32>
    %37 = tpu.matmul %36, %35, %cst_22 {dimension_numbers = #tpu.dot_dimension_numbers<[1], [0], [0], [1], [0, 0, 1, 1], [], []>} : vector<64x4xf32>, vector<4x8xf32>, vector<64x8xf32> -> vector<64x8xf32>
    %38 = arith.addf %33, %37 : vector<64x8xf32>
    %c4 = arith.constant 4 : index
    %c0_23 = arith.constant 0 : index
    %c0_24 = arith.constant 0 : index
    %39 = vector.load %arg4[%c4, %c0_23, %c0_24] : memref<25x4x8xf32, #tpu.memory_space<vmem>>, vector<1x4x8xf32>
    %40 = vector.shape_cast %39 : vector<1x4x8xf32> to vector<4x8xf32>
    %41 = vector.extract_strided_slice %18 {offsets = [256, 0], sizes = [64, 4], strides = [1, 1]} : vector<320x4xf32> to vector<64x4xf32>
    %cst_25 = arith.constant dense<0.000000e+00> : vector<64x8xf32>
    %42 = tpu.matmul %41, %40, %cst_25 {dimension_numbers = #tpu.dot_dimension_numbers<[1], [0], [0], [1], [0, 0, 1, 1], [], []>} : vector<64x4xf32>, vector<4x8xf32>, vector<64x8xf32> -> vector<64x8xf32>
    %43 = arith.addf %38, %42 : vector<64x8xf32>
    %44 = vector.extract_strided_slice %14 {offsets = [16, 0], sizes = [128, 4], strides = [1, 1]} : vector<384x4xf32> to vector<128x4xf32>
    %cst_26 = arith.constant dense<0.000000e+00> : vector<320x4xf32>
    %45 = tpu.matmul %15, %44, %cst_26 {dimension_numbers = #tpu.dot_dimension_numbers<[1], [0], [0], [1], [0, 0, 1, 1], [], []>} : vector<320x128xf32>, vector<128x4xf32>, vector<320x4xf32> -> vector<320x4xf32>
    %c5 = arith.constant 5 : index
    %c0_27 = arith.constant 0 : index
    %c0_28 = arith.constant 0 : index
    %46 = vector.load %arg4[%c5, %c0_27, %c0_28] : memref<25x4x8xf32, #tpu.memory_space<vmem>>, vector<1x4x8xf32>
    %47 = vector.shape_cast %46 : vector<1x4x8xf32> to vector<4x8xf32>
    %48 = vector.extract_strided_slice %45 {offsets = [0, 0], sizes = [64, 4], strides = [1, 1]} : vector<320x4xf32> to vector<64x4xf32>
    %cst_29 = arith.constant dense<0.000000e+00> : vector<64x8xf32>
    %49 = tpu.matmul %48, %47, %cst_29 {dimension_numbers = #tpu.dot_dimension_numbers<[1], [0], [0], [1], [0, 0, 1, 1], [], []>} : vector<64x4xf32>, vector<4x8xf32>, vector<64x8xf32> -> vector<64x8xf32>
    %50 = arith.addf %43, %49 : vector<64x8xf32>
    %c6 = arith.constant 6 : index
    %c0_30 = arith.constant 0 : index
    %c0_31 = arith.constant 0 : index
    %51 = vector.load %arg4[%c6, %c0_30, %c0_31] : memref<25x4x8xf32, #tpu.memory_space<vmem>>, vector<1x4x8xf32>
    %52 = vector.shape_cast %51 : vector<1x4x8xf32> to vector<4x8xf32>
    %53 = vector.extract_strided_slice %45 {offsets = [64, 0], sizes = [64, 4], strides = [1, 1]} : vector<320x4xf32> to vector<64x4xf32>
    %cst_32 = arith.constant dense<0.000000e+00> : vector<64x8xf32>
    %54 = tpu.matmul %53, %52, %cst_32 {dimension_numbers = #tpu.dot_dimension_numbers<[1], [0], [0], [1], [0, 0, 1, 1], [], []>} : vector<64x4xf32>, vector<4x8xf32>, vector<64x8xf32> -> vector<64x8xf32>
    %55 = arith.addf %50, %54 : vector<64x8xf32>
    %c7 = arith.constant 7 : index
    %c0_33 = arith.constant 0 : index
    %c0_34 = arith.constant 0 : index
    %56 = vector.load %arg4[%c7, %c0_33, %c0_34] : memref<25x4x8xf32, #tpu.memory_space<vmem>>, vector<1x4x8xf32>
    %57 = vector.shape_cast %56 : vector<1x4x8xf32> to vector<4x8xf32>
    %58 = vector.extract_strided_slice %45 {offsets = [128, 0], sizes = [64, 4], strides = [1, 1]} : vector<320x4xf32> to vector<64x4xf32>
    %cst_35 = arith.constant dense<0.000000e+00> : vector<64x8xf32>
    %59 = tpu.matmul %58, %57, %cst_35 {dimension_numbers = #tpu.dot_dimension_numbers<[1], [0], [0], [1], [0, 0, 1, 1], [], []>} : vector<64x4xf32>, vector<4x8xf32>, vector<64x8xf32> -> vector<64x8xf32>
    %60 = arith.addf %55, %59 : vector<64x8xf32>
    %c8 = arith.constant 8 : index
    %c0_36 = arith.constant 0 : index
    %c0_37 = arith.constant 0 : index
    %61 = vector.load %arg4[%c8, %c0_36, %c0_37] : memref<25x4x8xf32, #tpu.memory_space<vmem>>, vector<1x4x8xf32>
    %62 = vector.shape_cast %61 : vector<1x4x8xf32> to vector<4x8xf32>
    %63 = vector.extract_strided_slice %45 {offsets = [192, 0], sizes = [64, 4], strides = [1, 1]} : vector<320x4xf32> to vector<64x4xf32>
    %cst_38 = arith.constant dense<0.000000e+00> : vector<64x8xf32>
    %64 = tpu.matmul %63, %62, %cst_38 {dimension_numbers = #tpu.dot_dimension_numbers<[1], [0], [0], [1], [0, 0, 1, 1], [], []>} : vector<64x4xf32>, vector<4x8xf32>, vector<64x8xf32> -> vector<64x8xf32>
    %65 = arith.addf %60, %64 : vector<64x8xf32>
    %c9 = arith.constant 9 : index
    %c0_39 = arith.constant 0 : index
    %c0_40 = arith.constant 0 : index
    %66 = vector.load %arg4[%c9, %c0_39, %c0_40] : memref<25x4x8xf32, #tpu.memory_space<vmem>>, vector<1x4x8xf32>
    %67 = vector.shape_cast %66 : vector<1x4x8xf32> to vector<4x8xf32>
    %68 = vector.extract_strided_slice %45 {offsets = [256, 0], sizes = [64, 4], strides = [1, 1]} : vector<320x4xf32> to vector<64x4xf32>
    %cst_41 = arith.constant dense<0.000000e+00> : vector<64x8xf32>
    %69 = tpu.matmul %68, %67, %cst_41 {dimension_numbers = #tpu.dot_dimension_numbers<[1], [0], [0], [1], [0, 0, 1, 1], [], []>} : vector<64x4xf32>, vector<4x8xf32>, vector<64x8xf32> -> vector<64x8xf32>
    %70 = arith.addf %65, %69 : vector<64x8xf32>
    %71 = vector.extract_strided_slice %14 {offsets = [32, 0], sizes = [128, 4], strides = [1, 1]} : vector<384x4xf32> to vector<128x4xf32>
    %cst_42 = arith.constant dense<0.000000e+00> : vector<320x4xf32>
    %72 = tpu.matmul %15, %71, %cst_42 {dimension_numbers = #tpu.dot_dimension_numbers<[1], [0], [0], [1], [0, 0, 1, 1], [], []>} : vector<320x128xf32>, vector<128x4xf32>, vector<320x4xf32> -> vector<320x4xf32>
    %c10 = arith.constant 10 : index
    %c0_43 = arith.constant 0 : index
    %c0_44 = arith.constant 0 : index
    %73 = vector.load %arg4[%c10, %c0_43, %c0_44] : memref<25x4x8xf32, #tpu.memory_space<vmem>>, vector<1x4x8xf32>
    %74 = vector.shape_cast %73 : vector<1x4x8xf32> to vector<4x8xf32>
    %75 = vector.extract_strided_slice %72 {offsets = [0, 0], sizes = [64, 4], strides = [1, 1]} : vector<320x4xf32> to vector<64x4xf32>
    %cst_45 = arith.constant dense<0.000000e+00> : vector<64x8xf32>
    %76 = tpu.matmul %75, %74, %cst_45 {dimension_numbers = #tpu.dot_dimension_numbers<[1], [0], [0], [1], [0, 0, 1, 1], [], []>} : vector<64x4xf32>, vector<4x8xf32>, vector<64x8xf32> -> vector<64x8xf32>
    %77 = arith.addf %70, %76 : vector<64x8xf32>
    %c11 = arith.constant 11 : index
    %c0_46 = arith.constant 0 : index
    %c0_47 = arith.constant 0 : index
    %78 = vector.load %arg4[%c11, %c0_46, %c0_47] : memref<25x4x8xf32, #tpu.memory_space<vmem>>, vector<1x4x8xf32>
    %79 = vector.shape_cast %78 : vector<1x4x8xf32> to vector<4x8xf32>
    %80 = vector.extract_strided_slice %72 {offsets = [64, 0], sizes = [64, 4], strides = [1, 1]} : vector<320x4xf32> to vector<64x4xf32>
    %cst_48 = arith.constant dense<0.000000e+00> : vector<64x8xf32>
    %81 = tpu.matmul %80, %79, %cst_48 {dimension_numbers = #tpu.dot_dimension_numbers<[1], [0], [0], [1], [0, 0, 1, 1], [], []>} : vector<64x4xf32>, vector<4x8xf32>, vector<64x8xf32> -> vector<64x8xf32>
    %82 = arith.addf %77, %81 : vector<64x8xf32>
    %c12 = arith.constant 12 : index
    %c0_49 = arith.constant 0 : index
    %c0_50 = arith.constant 0 : index
    %83 = vector.load %arg4[%c12, %c0_49, %c0_50] : memref<25x4x8xf32, #tpu.memory_space<vmem>>, vector<1x4x8xf32>
    %84 = vector.shape_cast %83 : vector<1x4x8xf32> to vector<4x8xf32>
    %85 = vector.extract_strided_slice %72 {offsets = [128, 0], sizes = [64, 4], strides = [1, 1]} : vector<320x4xf32> to vector<64x4xf32>
    %cst_51 = arith.constant dense<0.000000e+00> : vector<64x8xf32>
    %86 = tpu.matmul %85, %84, %cst_51 {dimension_numbers = #tpu.dot_dimension_numbers<[1], [0], [0], [1], [0, 0, 1, 1], [], []>} : vector<64x4xf32>, vector<4x8xf32>, vector<64x8xf32> -> vector<64x8xf32>
    %87 = arith.addf %82, %86 : vector<64x8xf32>
    %c13 = arith.constant 13 : index
    %c0_52 = arith.constant 0 : index
    %c0_53 = arith.constant 0 : index
    %88 = vector.load %arg4[%c13, %c0_52, %c0_53] : memref<25x4x8xf32, #tpu.memory_space<vmem>>, vector<1x4x8xf32>
    %89 = vector.shape_cast %88 : vector<1x4x8xf32> to vector<4x8xf32>
    %90 = vector.extract_strided_slice %72 {offsets = [192, 0], sizes = [64, 4], strides = [1, 1]} : vector<320x4xf32> to vector<64x4xf32>
    %cst_54 = arith.constant dense<0.000000e+00> : vector<64x8xf32>
    %91 = tpu.matmul %90, %89, %cst_54 {dimension_numbers = #tpu.dot_dimension_numbers<[1], [0], [0], [1], [0, 0, 1, 1], [], []>} : vector<64x4xf32>, vector<4x8xf32>, vector<64x8xf32> -> vector<64x8xf32>
    %92 = arith.addf %87, %91 : vector<64x8xf32>
    %c14 = arith.constant 14 : index
    %c0_55 = arith.constant 0 : index
    %c0_56 = arith.constant 0 : index
    %93 = vector.load %arg4[%c14, %c0_55, %c0_56] : memref<25x4x8xf32, #tpu.memory_space<vmem>>, vector<1x4x8xf32>
    %94 = vector.shape_cast %93 : vector<1x4x8xf32> to vector<4x8xf32>
    %95 = vector.extract_strided_slice %72 {offsets = [256, 0], sizes = [64, 4], strides = [1, 1]} : vector<320x4xf32> to vector<64x4xf32>
    %cst_57 = arith.constant dense<0.000000e+00> : vector<64x8xf32>
    %96 = tpu.matmul %95, %94, %cst_57 {dimension_numbers = #tpu.dot_dimension_numbers<[1], [0], [0], [1], [0, 0, 1, 1], [], []>} : vector<64x4xf32>, vector<4x8xf32>, vector<64x8xf32> -> vector<64x8xf32>
    %97 = arith.addf %92, %96 : vector<64x8xf32>
    %98 = vector.extract_strided_slice %14 {offsets = [48, 0], sizes = [128, 4], strides = [1, 1]} : vector<384x4xf32> to vector<128x4xf32>
    %cst_58 = arith.constant dense<0.000000e+00> : vector<320x4xf32>
    %99 = tpu.matmul %15, %98, %cst_58 {dimension_numbers = #tpu.dot_dimension_numbers<[1], [0], [0], [1], [0, 0, 1, 1], [], []>} : vector<320x128xf32>, vector<128x4xf32>, vector<320x4xf32> -> vector<320x4xf32>
    %c15 = arith.constant 15 : index
    %c0_59 = arith.constant 0 : index
    %c0_60 = arith.constant 0 : index
    %100 = vector.load %arg4[%c15, %c0_59, %c0_60] : memref<25x4x8xf32, #tpu.memory_space<vmem>>, vector<1x4x8xf32>
    %101 = vector.shape_cast %100 : vector<1x4x8xf32> to vector<4x8xf32>
    %102 = vector.extract_strided_slice %99 {offsets = [0, 0], sizes = [64, 4], strides = [1, 1]} : vector<320x4xf32> to vector<64x4xf32>
    %cst_61 = arith.constant dense<0.000000e+00> : vector<64x8xf32>
    %103 = tpu.matmul %102, %101, %cst_61 {dimension_numbers = #tpu.dot_dimension_numbers<[1], [0], [0], [1], [0, 0, 1, 1], [], []>} : vector<64x4xf32>, vector<4x8xf32>, vector<64x8xf32> -> vector<64x8xf32>
    %104 = arith.addf %97, %103 : vector<64x8xf32>
    %c16 = arith.constant 16 : index
    %c0_62 = arith.constant 0 : index
    %c0_63 = arith.constant 0 : index
    %105 = vector.load %arg4[%c16, %c0_62, %c0_63] : memref<25x4x8xf32, #tpu.memory_space<vmem>>, vector<1x4x8xf32>
    %106 = vector.shape_cast %105 : vector<1x4x8xf32> to vector<4x8xf32>
    %107 = vector.extract_strided_slice %99 {offsets = [64, 0], sizes = [64, 4], strides = [1, 1]} : vector<320x4xf32> to vector<64x4xf32>
    %cst_64 = arith.constant dense<0.000000e+00> : vector<64x8xf32>
    %108 = tpu.matmul %107, %106, %cst_64 {dimension_numbers = #tpu.dot_dimension_numbers<[1], [0], [0], [1], [0, 0, 1, 1], [], []>} : vector<64x4xf32>, vector<4x8xf32>, vector<64x8xf32> -> vector<64x8xf32>
    %109 = arith.addf %104, %108 : vector<64x8xf32>
    %c17 = arith.constant 17 : index
    %c0_65 = arith.constant 0 : index
    %c0_66 = arith.constant 0 : index
    %110 = vector.load %arg4[%c17, %c0_65, %c0_66] : memref<25x4x8xf32, #tpu.memory_space<vmem>>, vector<1x4x8xf32>
    %111 = vector.shape_cast %110 : vector<1x4x8xf32> to vector<4x8xf32>
    %112 = vector.extract_strided_slice %99 {offsets = [128, 0], sizes = [64, 4], strides = [1, 1]} : vector<320x4xf32> to vector<64x4xf32>
    %cst_67 = arith.constant dense<0.000000e+00> : vector<64x8xf32>
    %113 = tpu.matmul %112, %111, %cst_67 {dimension_numbers = #tpu.dot_dimension_numbers<[1], [0], [0], [1], [0, 0, 1, 1], [], []>} : vector<64x4xf32>, vector<4x8xf32>, vector<64x8xf32> -> vector<64x8xf32>
    %114 = arith.addf %109, %113 : vector<64x8xf32>
    %c18 = arith.constant 18 : index
    %c0_68 = arith.constant 0 : index
    %c0_69 = arith.constant 0 : index
    %115 = vector.load %arg4[%c18, %c0_68, %c0_69] : memref<25x4x8xf32, #tpu.memory_space<vmem>>, vector<1x4x8xf32>
    %116 = vector.shape_cast %115 : vector<1x4x8xf32> to vector<4x8xf32>
    %117 = vector.extract_strided_slice %99 {offsets = [192, 0], sizes = [64, 4], strides = [1, 1]} : vector<320x4xf32> to vector<64x4xf32>
    %cst_70 = arith.constant dense<0.000000e+00> : vector<64x8xf32>
    %118 = tpu.matmul %117, %116, %cst_70 {dimension_numbers = #tpu.dot_dimension_numbers<[1], [0], [0], [1], [0, 0, 1, 1], [], []>} : vector<64x4xf32>, vector<4x8xf32>, vector<64x8xf32> -> vector<64x8xf32>
    %119 = arith.addf %114, %118 : vector<64x8xf32>
    %c19 = arith.constant 19 : index
    %c0_71 = arith.constant 0 : index
    %c0_72 = arith.constant 0 : index
    %120 = vector.load %arg4[%c19, %c0_71, %c0_72] : memref<25x4x8xf32, #tpu.memory_space<vmem>>, vector<1x4x8xf32>
    %121 = vector.shape_cast %120 : vector<1x4x8xf32> to vector<4x8xf32>
    %122 = vector.extract_strided_slice %99 {offsets = [256, 0], sizes = [64, 4], strides = [1, 1]} : vector<320x4xf32> to vector<64x4xf32>
    %cst_73 = arith.constant dense<0.000000e+00> : vector<64x8xf32>
    %123 = tpu.matmul %122, %121, %cst_73 {dimension_numbers = #tpu.dot_dimension_numbers<[1], [0], [0], [1], [0, 0, 1, 1], [], []>} : vector<64x4xf32>, vector<4x8xf32>, vector<64x8xf32> -> vector<64x8xf32>
    %124 = arith.addf %119, %123 : vector<64x8xf32>
    %125 = vector.extract_strided_slice %14 {offsets = [64, 0], sizes = [128, 4], strides = [1, 1]} : vector<384x4xf32> to vector<128x4xf32>
    %cst_74 = arith.constant dense<0.000000e+00> : vector<320x4xf32>
    %126 = tpu.matmul %15, %125, %cst_74 {dimension_numbers = #tpu.dot_dimension_numbers<[1], [0], [0], [1], [0, 0, 1, 1], [], []>} : vector<320x128xf32>, vector<128x4xf32>, vector<320x4xf32> -> vector<320x4xf32>
    %c20 = arith.constant 20 : index
    %c0_75 = arith.constant 0 : index
    %c0_76 = arith.constant 0 : index
    %127 = vector.load %arg4[%c20, %c0_75, %c0_76] : memref<25x4x8xf32, #tpu.memory_space<vmem>>, vector<1x4x8xf32>
    %128 = vector.shape_cast %127 : vector<1x4x8xf32> to vector<4x8xf32>
    %129 = vector.extract_strided_slice %126 {offsets = [0, 0], sizes = [64, 4], strides = [1, 1]} : vector<320x4xf32> to vector<64x4xf32>
    %cst_77 = arith.constant dense<0.000000e+00> : vector<64x8xf32>
    %130 = tpu.matmul %129, %128, %cst_77 {dimension_numbers = #tpu.dot_dimension_numbers<[1], [0], [0], [1], [0, 0, 1, 1], [], []>} : vector<64x4xf32>, vector<4x8xf32>, vector<64x8xf32> -> vector<64x8xf32>
    %131 = arith.addf %124, %130 : vector<64x8xf32>
    %c21 = arith.constant 21 : index
    %c0_78 = arith.constant 0 : index
    %c0_79 = arith.constant 0 : index
    %132 = vector.load %arg4[%c21, %c0_78, %c0_79] : memref<25x4x8xf32, #tpu.memory_space<vmem>>, vector<1x4x8xf32>
    %133 = vector.shape_cast %132 : vector<1x4x8xf32> to vector<4x8xf32>
    %134 = vector.extract_strided_slice %126 {offsets = [64, 0], sizes = [64, 4], strides = [1, 1]} : vector<320x4xf32> to vector<64x4xf32>
    %cst_80 = arith.constant dense<0.000000e+00> : vector<64x8xf32>
    %135 = tpu.matmul %134, %133, %cst_80 {dimension_numbers = #tpu.dot_dimension_numbers<[1], [0], [0], [1], [0, 0, 1, 1], [], []>} : vector<64x4xf32>, vector<4x8xf32>, vector<64x8xf32> -> vector<64x8xf32>
    %136 = arith.addf %131, %135 : vector<64x8xf32>
    %c22 = arith.constant 22 : index
    %c0_81 = arith.constant 0 : index
    %c0_82 = arith.constant 0 : index
    %137 = vector.load %arg4[%c22, %c0_81, %c0_82] : memref<25x4x8xf32, #tpu.memory_space<vmem>>, vector<1x4x8xf32>
    %138 = vector.shape_cast %137 : vector<1x4x8xf32> to vector<4x8xf32>
    %139 = vector.extract_strided_slice %126 {offsets = [128, 0], sizes = [64, 4], strides = [1, 1]} : vector<320x4xf32> to vector<64x4xf32>
    %cst_83 = arith.constant dense<0.000000e+00> : vector<64x8xf32>
    %140 = tpu.matmul %139, %138, %cst_83 {dimension_numbers = #tpu.dot_dimension_numbers<[1], [0], [0], [1], [0, 0, 1, 1], [], []>} : vector<64x4xf32>, vector<4x8xf32>, vector<64x8xf32> -> vector<64x8xf32>
    %141 = arith.addf %136, %140 : vector<64x8xf32>
    %c23 = arith.constant 23 : index
    %c0_84 = arith.constant 0 : index
    %c0_85 = arith.constant 0 : index
    %142 = vector.load %arg4[%c23, %c0_84, %c0_85] : memref<25x4x8xf32, #tpu.memory_space<vmem>>, vector<1x4x8xf32>
    %143 = vector.shape_cast %142 : vector<1x4x8xf32> to vector<4x8xf32>
    %144 = vector.extract_strided_slice %126 {offsets = [192, 0], sizes = [64, 4], strides = [1, 1]} : vector<320x4xf32> to vector<64x4xf32>
    %cst_86 = arith.constant dense<0.000000e+00> : vector<64x8xf32>
    %145 = tpu.matmul %144, %143, %cst_86 {dimension_numbers = #tpu.dot_dimension_numbers<[1], [0], [0], [1], [0, 0, 1, 1], [], []>} : vector<64x4xf32>, vector<4x8xf32>, vector<64x8xf32> -> vector<64x8xf32>
    %146 = arith.addf %141, %145 : vector<64x8xf32>
    %c24 = arith.constant 24 : index
    %c0_87 = arith.constant 0 : index
    %c0_88 = arith.constant 0 : index
    %147 = vector.load %arg4[%c24, %c0_87, %c0_88] : memref<25x4x8xf32, #tpu.memory_space<vmem>>, vector<1x4x8xf32>
    %148 = vector.shape_cast %147 : vector<1x4x8xf32> to vector<4x8xf32>
    %149 = vector.extract_strided_slice %126 {offsets = [256, 0], sizes = [64, 4], strides = [1, 1]} : vector<320x4xf32> to vector<64x4xf32>
    %cst_89 = arith.constant dense<0.000000e+00> : vector<64x8xf32>
    %150 = tpu.matmul %149, %148, %cst_89 {dimension_numbers = #tpu.dot_dimension_numbers<[1], [0], [0], [1], [0, 0, 1, 1], [], []>} : vector<64x4xf32>, vector<4x8xf32>, vector<64x8xf32> -> vector<64x8xf32>
    %151 = arith.addf %146, %150 : vector<64x8xf32>
    %c0_90 = arith.constant 0 : index
    %c0_91 = arith.constant 0 : index
    %152 = vector.load %arg5[%c0_90, %c0_91] : memref<1x8xf32, #tpu.memory_space<vmem>>, vector<1x8xf32>
    %153 = vector.broadcast %152 : vector<1x8xf32> to vector<64x8xf32>
    %154 = arith.addf %151, %153 : vector<64x8xf32>
    %155 = vector.extract_strided_slice %154 {offsets = [0, 0], sizes = [16, 8], strides = [1, 1]} : vector<64x8xf32> to vector<16x8xf32>
    %156 = vector.extract_strided_slice %154 {offsets = [16, 0], sizes = [16, 8], strides = [1, 1]} : vector<64x8xf32> to vector<16x8xf32>
    %157 = arith.maximumf %155, %156 : vector<16x8xf32>
    %158 = vector.extract_strided_slice %154 {offsets = [32, 0], sizes = [16, 8], strides = [1, 1]} : vector<64x8xf32> to vector<16x8xf32>
    %159 = vector.extract_strided_slice %154 {offsets = [48, 0], sizes = [16, 8], strides = [1, 1]} : vector<64x8xf32> to vector<16x8xf32>
    %160 = arith.maximumf %158, %159 : vector<16x8xf32>
    %161 = arith.maximumf %157, %160 : vector<16x8xf32>
    %cst_92 = arith.constant 0.000000e+00 : f32
    %162 = vector.broadcast %cst_92 : f32 to vector<16x8xf32>
    %163 = arith.maximumf %161, %162 : vector<16x8xf32>
    %cst_93 = arith.constant 0.000000e+00 : f32
    %164 = vector.broadcast %cst_93 : f32 to vector<64x8xf32>
    %165 = vector.extract_strided_slice %14 {offsets = [192, 0], sizes = [128, 4], strides = [1, 1]} : vector<384x4xf32> to vector<128x4xf32>
    %cst_94 = arith.constant dense<0.000000e+00> : vector<320x4xf32>
    %166 = tpu.matmul %15, %165, %cst_94 {dimension_numbers = #tpu.dot_dimension_numbers<[1], [0], [0], [1], [0, 0, 1, 1], [], []>} : vector<320x128xf32>, vector<128x4xf32>, vector<320x4xf32> -> vector<320x4xf32>
    %c0_95 = arith.constant 0 : index
    %c0_96 = arith.constant 0 : index
    %c0_97 = arith.constant 0 : index
    %167 = vector.load %arg4[%c0_95, %c0_96, %c0_97] : memref<25x4x8xf32, #tpu.memory_space<vmem>>, vector<1x4x8xf32>
    %168 = vector.shape_cast %167 : vector<1x4x8xf32> to vector<4x8xf32>
    %169 = vector.extract_strided_slice %166 {offsets = [0, 0], sizes = [64, 4], strides = [1, 1]} : vector<320x4xf32> to vector<64x4xf32>
    %cst_98 = arith.constant dense<0.000000e+00> : vector<64x8xf32>
    %170 = tpu.matmul %169, %168, %cst_98 {dimension_numbers = #tpu.dot_dimension_numbers<[1], [0], [0], [1], [0, 0, 1, 1], [], []>} : vector<64x4xf32>, vector<4x8xf32>, vector<64x8xf32> -> vector<64x8xf32>
    %171 = arith.addf %164, %170 : vector<64x8xf32>
    %c1_99 = arith.constant 1 : index
    %c0_100 = arith.constant 0 : index
    %c0_101 = arith.constant 0 : index
    %172 = vector.load %arg4[%c1_99, %c0_100, %c0_101] : memref<25x4x8xf32, #tpu.memory_space<vmem>>, vector<1x4x8xf32>
    %173 = vector.shape_cast %172 : vector<1x4x8xf32> to vector<4x8xf32>
    %174 = vector.extract_strided_slice %166 {offsets = [64, 0], sizes = [64, 4], strides = [1, 1]} : vector<320x4xf32> to vector<64x4xf32>
    %cst_102 = arith.constant dense<0.000000e+00> : vector<64x8xf32>
    %175 = tpu.matmul %174, %173, %cst_102 {dimension_numbers = #tpu.dot_dimension_numbers<[1], [0], [0], [1], [0, 0, 1, 1], [], []>} : vector<64x4xf32>, vector<4x8xf32>, vector<64x8xf32> -> vector<64x8xf32>
    %176 = arith.addf %171, %175 : vector<64x8xf32>
    %c2_103 = arith.constant 2 : index
    %c0_104 = arith.constant 0 : index
    %c0_105 = arith.constant 0 : index
    %177 = vector.load %arg4[%c2_103, %c0_104, %c0_105] : memref<25x4x8xf32, #tpu.memory_space<vmem>>, vector<1x4x8xf32>
    %178 = vector.shape_cast %177 : vector<1x4x8xf32> to vector<4x8xf32>
    %179 = vector.extract_strided_slice %166 {offsets = [128, 0], sizes = [64, 4], strides = [1, 1]} : vector<320x4xf32> to vector<64x4xf32>
    %cst_106 = arith.constant dense<0.000000e+00> : vector<64x8xf32>
    %180 = tpu.matmul %179, %178, %cst_106 {dimension_numbers = #tpu.dot_dimension_numbers<[1], [0], [0], [1], [0, 0, 1, 1], [], []>} : vector<64x4xf32>, vector<4x8xf32>, vector<64x8xf32> -> vector<64x8xf32>
    %181 = arith.addf %176, %180 : vector<64x8xf32>
    %c3_107 = arith.constant 3 : index
    %c0_108 = arith.constant 0 : index
    %c0_109 = arith.constant 0 : index
    %182 = vector.load %arg4[%c3_107, %c0_108, %c0_109] : memref<25x4x8xf32, #tpu.memory_space<vmem>>, vector<1x4x8xf32>
    %183 = vector.shape_cast %182 : vector<1x4x8xf32> to vector<4x8xf32>
    %184 = vector.extract_strided_slice %166 {offsets = [192, 0], sizes = [64, 4], strides = [1, 1]} : vector<320x4xf32> to vector<64x4xf32>
    %cst_110 = arith.constant dense<0.000000e+00> : vector<64x8xf32>
    %185 = tpu.matmul %184, %183, %cst_110 {dimension_numbers = #tpu.dot_dimension_numbers<[1], [0], [0], [1], [0, 0, 1, 1], [], []>} : vector<64x4xf32>, vector<4x8xf32>, vector<64x8xf32> -> vector<64x8xf32>
    %186 = arith.addf %181, %185 : vector<64x8xf32>
    %c4_111 = arith.constant 4 : index
    %c0_112 = arith.constant 0 : index
    %c0_113 = arith.constant 0 : index
    %187 = vector.load %arg4[%c4_111, %c0_112, %c0_113] : memref<25x4x8xf32, #tpu.memory_space<vmem>>, vector<1x4x8xf32>
    %188 = vector.shape_cast %187 : vector<1x4x8xf32> to vector<4x8xf32>
    %189 = vector.extract_strided_slice %166 {offsets = [256, 0], sizes = [64, 4], strides = [1, 1]} : vector<320x4xf32> to vector<64x4xf32>
    %cst_114 = arith.constant dense<0.000000e+00> : vector<64x8xf32>
    %190 = tpu.matmul %189, %188, %cst_114 {dimension_numbers = #tpu.dot_dimension_numbers<[1], [0], [0], [1], [0, 0, 1, 1], [], []>} : vector<64x4xf32>, vector<4x8xf32>, vector<64x8xf32> -> vector<64x8xf32>
    %191 = arith.addf %186, %190 : vector<64x8xf32>
    %192 = vector.extract_strided_slice %14 {offsets = [208, 0], sizes = [128, 4], strides = [1, 1]} : vector<384x4xf32> to vector<128x4xf32>
    %cst_115 = arith.constant dense<0.000000e+00> : vector<320x4xf32>
    %193 = tpu.matmul %15, %192, %cst_115 {dimension_numbers = #tpu.dot_dimension_numbers<[1], [0], [0], [1], [0, 0, 1, 1], [], []>} : vector<320x128xf32>, vector<128x4xf32>, vector<320x4xf32> -> vector<320x4xf32>
    %c5_116 = arith.constant 5 : index
    %c0_117 = arith.constant 0 : index
    %c0_118 = arith.constant 0 : index
    %194 = vector.load %arg4[%c5_116, %c0_117, %c0_118] : memref<25x4x8xf32, #tpu.memory_space<vmem>>, vector<1x4x8xf32>
    %195 = vector.shape_cast %194 : vector<1x4x8xf32> to vector<4x8xf32>
    %196 = vector.extract_strided_slice %193 {offsets = [0, 0], sizes = [64, 4], strides = [1, 1]} : vector<320x4xf32> to vector<64x4xf32>
    %cst_119 = arith.constant dense<0.000000e+00> : vector<64x8xf32>
    %197 = tpu.matmul %196, %195, %cst_119 {dimension_numbers = #tpu.dot_dimension_numbers<[1], [0], [0], [1], [0, 0, 1, 1], [], []>} : vector<64x4xf32>, vector<4x8xf32>, vector<64x8xf32> -> vector<64x8xf32>
    %198 = arith.addf %191, %197 : vector<64x8xf32>
    %c6_120 = arith.constant 6 : index
    %c0_121 = arith.constant 0 : index
    %c0_122 = arith.constant 0 : index
    %199 = vector.load %arg4[%c6_120, %c0_121, %c0_122] : memref<25x4x8xf32, #tpu.memory_space<vmem>>, vector<1x4x8xf32>
    %200 = vector.shape_cast %199 : vector<1x4x8xf32> to vector<4x8xf32>
    %201 = vector.extract_strided_slice %193 {offsets = [64, 0], sizes = [64, 4], strides = [1, 1]} : vector<320x4xf32> to vector<64x4xf32>
    %cst_123 = arith.constant dense<0.000000e+00> : vector<64x8xf32>
    %202 = tpu.matmul %201, %200, %cst_123 {dimension_numbers = #tpu.dot_dimension_numbers<[1], [0], [0], [1], [0, 0, 1, 1], [], []>} : vector<64x4xf32>, vector<4x8xf32>, vector<64x8xf32> -> vector<64x8xf32>
    %203 = arith.addf %198, %202 : vector<64x8xf32>
    %c7_124 = arith.constant 7 : index
    %c0_125 = arith.constant 0 : index
    %c0_126 = arith.constant 0 : index
    %204 = vector.load %arg4[%c7_124, %c0_125, %c0_126] : memref<25x4x8xf32, #tpu.memory_space<vmem>>, vector<1x4x8xf32>
    %205 = vector.shape_cast %204 : vector<1x4x8xf32> to vector<4x8xf32>
    %206 = vector.extract_strided_slice %193 {offsets = [128, 0], sizes = [64, 4], strides = [1, 1]} : vector<320x4xf32> to vector<64x4xf32>
    %cst_127 = arith.constant dense<0.000000e+00> : vector<64x8xf32>
    %207 = tpu.matmul %206, %205, %cst_127 {dimension_numbers = #tpu.dot_dimension_numbers<[1], [0], [0], [1], [0, 0, 1, 1], [], []>} : vector<64x4xf32>, vector<4x8xf32>, vector<64x8xf32> -> vector<64x8xf32>
    %208 = arith.addf %203, %207 : vector<64x8xf32>
    %c8_128 = arith.constant 8 : index
    %c0_129 = arith.constant 0 : index
    %c0_130 = arith.constant 0 : index
    %209 = vector.load %arg4[%c8_128, %c0_129, %c0_130] : memref<25x4x8xf32, #tpu.memory_space<vmem>>, vector<1x4x8xf32>
    %210 = vector.shape_cast %209 : vector<1x4x8xf32> to vector<4x8xf32>
    %211 = vector.extract_strided_slice %193 {offsets = [192, 0], sizes = [64, 4], strides = [1, 1]} : vector<320x4xf32> to vector<64x4xf32>
    %cst_131 = arith.constant dense<0.000000e+00> : vector<64x8xf32>
    %212 = tpu.matmul %211, %210, %cst_131 {dimension_numbers = #tpu.dot_dimension_numbers<[1], [0], [0], [1], [0, 0, 1, 1], [], []>} : vector<64x4xf32>, vector<4x8xf32>, vector<64x8xf32> -> vector<64x8xf32>
    %213 = arith.addf %208, %212 : vector<64x8xf32>
    %c9_132 = arith.constant 9 : index
    %c0_133 = arith.constant 0 : index
    %c0_134 = arith.constant 0 : index
    %214 = vector.load %arg4[%c9_132, %c0_133, %c0_134] : memref<25x4x8xf32, #tpu.memory_space<vmem>>, vector<1x4x8xf32>
    %215 = vector.shape_cast %214 : vector<1x4x8xf32> to vector<4x8xf32>
    %216 = vector.extract_strided_slice %193 {offsets = [256, 0], sizes = [64, 4], strides = [1, 1]} : vector<320x4xf32> to vector<64x4xf32>
    %cst_135 = arith.constant dense<0.000000e+00> : vector<64x8xf32>
    %217 = tpu.matmul %216, %215, %cst_135 {dimension_numbers = #tpu.dot_dimension_numbers<[1], [0], [0], [1], [0, 0, 1, 1], [], []>} : vector<64x4xf32>, vector<4x8xf32>, vector<64x8xf32> -> vector<64x8xf32>
    %218 = arith.addf %213, %217 : vector<64x8xf32>
    %219 = vector.extract_strided_slice %14 {offsets = [224, 0], sizes = [128, 4], strides = [1, 1]} : vector<384x4xf32> to vector<128x4xf32>
    %cst_136 = arith.constant dense<0.000000e+00> : vector<320x4xf32>
    %220 = tpu.matmul %15, %219, %cst_136 {dimension_numbers = #tpu.dot_dimension_numbers<[1], [0], [0], [1], [0, 0, 1, 1], [], []>} : vector<320x128xf32>, vector<128x4xf32>, vector<320x4xf32> -> vector<320x4xf32>
    %c10_137 = arith.constant 10 : index
    %c0_138 = arith.constant 0 : index
    %c0_139 = arith.constant 0 : index
    %221 = vector.load %arg4[%c10_137, %c0_138, %c0_139] : memref<25x4x8xf32, #tpu.memory_space<vmem>>, vector<1x4x8xf32>
    %222 = vector.shape_cast %221 : vector<1x4x8xf32> to vector<4x8xf32>
    %223 = vector.extract_strided_slice %220 {offsets = [0, 0], sizes = [64, 4], strides = [1, 1]} : vector<320x4xf32> to vector<64x4xf32>
    %cst_140 = arith.constant dense<0.000000e+00> : vector<64x8xf32>
    %224 = tpu.matmul %223, %222, %cst_140 {dimension_numbers = #tpu.dot_dimension_numbers<[1], [0], [0], [1], [0, 0, 1, 1], [], []>} : vector<64x4xf32>, vector<4x8xf32>, vector<64x8xf32> -> vector<64x8xf32>
    %225 = arith.addf %218, %224 : vector<64x8xf32>
    %c11_141 = arith.constant 11 : index
    %c0_142 = arith.constant 0 : index
    %c0_143 = arith.constant 0 : index
    %226 = vector.load %arg4[%c11_141, %c0_142, %c0_143] : memref<25x4x8xf32, #tpu.memory_space<vmem>>, vector<1x4x8xf32>
    %227 = vector.shape_cast %226 : vector<1x4x8xf32> to vector<4x8xf32>
    %228 = vector.extract_strided_slice %220 {offsets = [64, 0], sizes = [64, 4], strides = [1, 1]} : vector<320x4xf32> to vector<64x4xf32>
    %cst_144 = arith.constant dense<0.000000e+00> : vector<64x8xf32>
    %229 = tpu.matmul %228, %227, %cst_144 {dimension_numbers = #tpu.dot_dimension_numbers<[1], [0], [0], [1], [0, 0, 1, 1], [], []>} : vector<64x4xf32>, vector<4x8xf32>, vector<64x8xf32> -> vector<64x8xf32>
    %230 = arith.addf %225, %229 : vector<64x8xf32>
    %c12_145 = arith.constant 12 : index
    %c0_146 = arith.constant 0 : index
    %c0_147 = arith.constant 0 : index
    %231 = vector.load %arg4[%c12_145, %c0_146, %c0_147] : memref<25x4x8xf32, #tpu.memory_space<vmem>>, vector<1x4x8xf32>
    %232 = vector.shape_cast %231 : vector<1x4x8xf32> to vector<4x8xf32>
    %233 = vector.extract_strided_slice %220 {offsets = [128, 0], sizes = [64, 4], strides = [1, 1]} : vector<320x4xf32> to vector<64x4xf32>
    %cst_148 = arith.constant dense<0.000000e+00> : vector<64x8xf32>
    %234 = tpu.matmul %233, %232, %cst_148 {dimension_numbers = #tpu.dot_dimension_numbers<[1], [0], [0], [1], [0, 0, 1, 1], [], []>} : vector<64x4xf32>, vector<4x8xf32>, vector<64x8xf32> -> vector<64x8xf32>
    %235 = arith.addf %230, %234 : vector<64x8xf32>
    %c13_149 = arith.constant 13 : index
    %c0_150 = arith.constant 0 : index
    %c0_151 = arith.constant 0 : index
    %236 = vector.load %arg4[%c13_149, %c0_150, %c0_151] : memref<25x4x8xf32, #tpu.memory_space<vmem>>, vector<1x4x8xf32>
    %237 = vector.shape_cast %236 : vector<1x4x8xf32> to vector<4x8xf32>
    %238 = vector.extract_strided_slice %220 {offsets = [192, 0], sizes = [64, 4], strides = [1, 1]} : vector<320x4xf32> to vector<64x4xf32>
    %cst_152 = arith.constant dense<0.000000e+00> : vector<64x8xf32>
    %239 = tpu.matmul %238, %237, %cst_152 {dimension_numbers = #tpu.dot_dimension_numbers<[1], [0], [0], [1], [0, 0, 1, 1], [], []>} : vector<64x4xf32>, vector<4x8xf32>, vector<64x8xf32> -> vector<64x8xf32>
    %240 = arith.addf %235, %239 : vector<64x8xf32>
    %c14_153 = arith.constant 14 : index
    %c0_154 = arith.constant 0 : index
    %c0_155 = arith.constant 0 : index
    %241 = vector.load %arg4[%c14_153, %c0_154, %c0_155] : memref<25x4x8xf32, #tpu.memory_space<vmem>>, vector<1x4x8xf32>
    %242 = vector.shape_cast %241 : vector<1x4x8xf32> to vector<4x8xf32>
    %243 = vector.extract_strided_slice %220 {offsets = [256, 0], sizes = [64, 4], strides = [1, 1]} : vector<320x4xf32> to vector<64x4xf32>
    %cst_156 = arith.constant dense<0.000000e+00> : vector<64x8xf32>
    %244 = tpu.matmul %243, %242, %cst_156 {dimension_numbers = #tpu.dot_dimension_numbers<[1], [0], [0], [1], [0, 0, 1, 1], [], []>} : vector<64x4xf32>, vector<4x8xf32>, vector<64x8xf32> -> vector<64x8xf32>
    %245 = arith.addf %240, %244 : vector<64x8xf32>
    %246 = vector.extract_strided_slice %14 {offsets = [240, 0], sizes = [128, 4], strides = [1, 1]} : vector<384x4xf32> to vector<128x4xf32>
    %cst_157 = arith.constant dense<0.000000e+00> : vector<320x4xf32>
    %247 = tpu.matmul %15, %246, %cst_157 {dimension_numbers = #tpu.dot_dimension_numbers<[1], [0], [0], [1], [0, 0, 1, 1], [], []>} : vector<320x128xf32>, vector<128x4xf32>, vector<320x4xf32> -> vector<320x4xf32>
    %c15_158 = arith.constant 15 : index
    %c0_159 = arith.constant 0 : index
    %c0_160 = arith.constant 0 : index
    %248 = vector.load %arg4[%c15_158, %c0_159, %c0_160] : memref<25x4x8xf32, #tpu.memory_space<vmem>>, vector<1x4x8xf32>
    %249 = vector.shape_cast %248 : vector<1x4x8xf32> to vector<4x8xf32>
    %250 = vector.extract_strided_slice %247 {offsets = [0, 0], sizes = [64, 4], strides = [1, 1]} : vector<320x4xf32> to vector<64x4xf32>
    %cst_161 = arith.constant dense<0.000000e+00> : vector<64x8xf32>
    %251 = tpu.matmul %250, %249, %cst_161 {dimension_numbers = #tpu.dot_dimension_numbers<[1], [0], [0], [1], [0, 0, 1, 1], [], []>} : vector<64x4xf32>, vector<4x8xf32>, vector<64x8xf32> -> vector<64x8xf32>
    %252 = arith.addf %245, %251 : vector<64x8xf32>
    %c16_162 = arith.constant 16 : index
    %c0_163 = arith.constant 0 : index
    %c0_164 = arith.constant 0 : index
    %253 = vector.load %arg4[%c16_162, %c0_163, %c0_164] : memref<25x4x8xf32, #tpu.memory_space<vmem>>, vector<1x4x8xf32>
    %254 = vector.shape_cast %253 : vector<1x4x8xf32> to vector<4x8xf32>
    %255 = vector.extract_strided_slice %247 {offsets = [64, 0], sizes = [64, 4], strides = [1, 1]} : vector<320x4xf32> to vector<64x4xf32>
    %cst_165 = arith.constant dense<0.000000e+00> : vector<64x8xf32>
    %256 = tpu.matmul %255, %254, %cst_165 {dimension_numbers = #tpu.dot_dimension_numbers<[1], [0], [0], [1], [0, 0, 1, 1], [], []>} : vector<64x4xf32>, vector<4x8xf32>, vector<64x8xf32> -> vector<64x8xf32>
    %257 = arith.addf %252, %256 : vector<64x8xf32>
    %c17_166 = arith.constant 17 : index
    %c0_167 = arith.constant 0 : index
    %c0_168 = arith.constant 0 : index
    %258 = vector.load %arg4[%c17_166, %c0_167, %c0_168] : memref<25x4x8xf32, #tpu.memory_space<vmem>>, vector<1x4x8xf32>
    %259 = vector.shape_cast %258 : vector<1x4x8xf32> to vector<4x8xf32>
    %260 = vector.extract_strided_slice %247 {offsets = [128, 0], sizes = [64, 4], strides = [1, 1]} : vector<320x4xf32> to vector<64x4xf32>
    %cst_169 = arith.constant dense<0.000000e+00> : vector<64x8xf32>
    %261 = tpu.matmul %260, %259, %cst_169 {dimension_numbers = #tpu.dot_dimension_numbers<[1], [0], [0], [1], [0, 0, 1, 1], [], []>} : vector<64x4xf32>, vector<4x8xf32>, vector<64x8xf32> -> vector<64x8xf32>
    %262 = arith.addf %257, %261 : vector<64x8xf32>
    %c18_170 = arith.constant 18 : index
    %c0_171 = arith.constant 0 : index
    %c0_172 = arith.constant 0 : index
    %263 = vector.load %arg4[%c18_170, %c0_171, %c0_172] : memref<25x4x8xf32, #tpu.memory_space<vmem>>, vector<1x4x8xf32>
    %264 = vector.shape_cast %263 : vector<1x4x8xf32> to vector<4x8xf32>
    %265 = vector.extract_strided_slice %247 {offsets = [192, 0], sizes = [64, 4], strides = [1, 1]} : vector<320x4xf32> to vector<64x4xf32>
    %cst_173 = arith.constant dense<0.000000e+00> : vector<64x8xf32>
    %266 = tpu.matmul %265, %264, %cst_173 {dimension_numbers = #tpu.dot_dimension_numbers<[1], [0], [0], [1], [0, 0, 1, 1], [], []>} : vector<64x4xf32>, vector<4x8xf32>, vector<64x8xf32> -> vector<64x8xf32>
    %267 = arith.addf %262, %266 : vector<64x8xf32>
    %c19_174 = arith.constant 19 : index
    %c0_175 = arith.constant 0 : index
    %c0_176 = arith.constant 0 : index
    %268 = vector.load %arg4[%c19_174, %c0_175, %c0_176] : memref<25x4x8xf32, #tpu.memory_space<vmem>>, vector<1x4x8xf32>
    %269 = vector.shape_cast %268 : vector<1x4x8xf32> to vector<4x8xf32>
    %270 = vector.extract_strided_slice %247 {offsets = [256, 0], sizes = [64, 4], strides = [1, 1]} : vector<320x4xf32> to vector<64x4xf32>
    %cst_177 = arith.constant dense<0.000000e+00> : vector<64x8xf32>
    %271 = tpu.matmul %270, %269, %cst_177 {dimension_numbers = #tpu.dot_dimension_numbers<[1], [0], [0], [1], [0, 0, 1, 1], [], []>} : vector<64x4xf32>, vector<4x8xf32>, vector<64x8xf32> -> vector<64x8xf32>
    %272 = arith.addf %267, %271 : vector<64x8xf32>
    %273 = vector.extract_strided_slice %14 {offsets = [256, 0], sizes = [128, 4], strides = [1, 1]} : vector<384x4xf32> to vector<128x4xf32>
    %cst_178 = arith.constant dense<0.000000e+00> : vector<320x4xf32>
    %274 = tpu.matmul %15, %273, %cst_178 {dimension_numbers = #tpu.dot_dimension_numbers<[1], [0], [0], [1], [0, 0, 1, 1], [], []>} : vector<320x128xf32>, vector<128x4xf32>, vector<320x4xf32> -> vector<320x4xf32>
    %c20_179 = arith.constant 20 : index
    %c0_180 = arith.constant 0 : index
    %c0_181 = arith.constant 0 : index
    %275 = vector.load %arg4[%c20_179, %c0_180, %c0_181] : memref<25x4x8xf32, #tpu.memory_space<vmem>>, vector<1x4x8xf32>
    %276 = vector.shape_cast %275 : vector<1x4x8xf32> to vector<4x8xf32>
    %277 = vector.extract_strided_slice %274 {offsets = [0, 0], sizes = [64, 4], strides = [1, 1]} : vector<320x4xf32> to vector<64x4xf32>
    %cst_182 = arith.constant dense<0.000000e+00> : vector<64x8xf32>
    %278 = tpu.matmul %277, %276, %cst_182 {dimension_numbers = #tpu.dot_dimension_numbers<[1], [0], [0], [1], [0, 0, 1, 1], [], []>} : vector<64x4xf32>, vector<4x8xf32>, vector<64x8xf32> -> vector<64x8xf32>
    %279 = arith.addf %272, %278 : vector<64x8xf32>
    %c21_183 = arith.constant 21 : index
    %c0_184 = arith.constant 0 : index
    %c0_185 = arith.constant 0 : index
    %280 = vector.load %arg4[%c21_183, %c0_184, %c0_185] : memref<25x4x8xf32, #tpu.memory_space<vmem>>, vector<1x4x8xf32>
    %281 = vector.shape_cast %280 : vector<1x4x8xf32> to vector<4x8xf32>
    %282 = vector.extract_strided_slice %274 {offsets = [64, 0], sizes = [64, 4], strides = [1, 1]} : vector<320x4xf32> to vector<64x4xf32>
    %cst_186 = arith.constant dense<0.000000e+00> : vector<64x8xf32>
    %283 = tpu.matmul %282, %281, %cst_186 {dimension_numbers = #tpu.dot_dimension_numbers<[1], [0], [0], [1], [0, 0, 1, 1], [], []>} : vector<64x4xf32>, vector<4x8xf32>, vector<64x8xf32> -> vector<64x8xf32>
    %284 = arith.addf %279, %283 : vector<64x8xf32>
    %c22_187 = arith.constant 22 : index
    %c0_188 = arith.constant 0 : index
    %c0_189 = arith.constant 0 : index
    %285 = vector.load %arg4[%c22_187, %c0_188, %c0_189] : memref<25x4x8xf32, #tpu.memory_space<vmem>>, vector<1x4x8xf32>
    %286 = vector.shape_cast %285 : vector<1x4x8xf32> to vector<4x8xf32>
    %287 = vector.extract_strided_slice %274 {offsets = [128, 0], sizes = [64, 4], strides = [1, 1]} : vector<320x4xf32> to vector<64x4xf32>
    %cst_190 = arith.constant dense<0.000000e+00> : vector<64x8xf32>
    %288 = tpu.matmul %287, %286, %cst_190 {dimension_numbers = #tpu.dot_dimension_numbers<[1], [0], [0], [1], [0, 0, 1, 1], [], []>} : vector<64x4xf32>, vector<4x8xf32>, vector<64x8xf32> -> vector<64x8xf32>
    %289 = arith.addf %284, %288 : vector<64x8xf32>
    %c23_191 = arith.constant 23 : index
    %c0_192 = arith.constant 0 : index
    %c0_193 = arith.constant 0 : index
    %290 = vector.load %arg4[%c23_191, %c0_192, %c0_193] : memref<25x4x8xf32, #tpu.memory_space<vmem>>, vector<1x4x8xf32>
    %291 = vector.shape_cast %290 : vector<1x4x8xf32> to vector<4x8xf32>
    %292 = vector.extract_strided_slice %274 {offsets = [192, 0], sizes = [64, 4], strides = [1, 1]} : vector<320x4xf32> to vector<64x4xf32>
    %cst_194 = arith.constant dense<0.000000e+00> : vector<64x8xf32>
    %293 = tpu.matmul %292, %291, %cst_194 {dimension_numbers = #tpu.dot_dimension_numbers<[1], [0], [0], [1], [0, 0, 1, 1], [], []>} : vector<64x4xf32>, vector<4x8xf32>, vector<64x8xf32> -> vector<64x8xf32>
    %294 = arith.addf %289, %293 : vector<64x8xf32>
    %c24_195 = arith.constant 24 : index
    %c0_196 = arith.constant 0 : index
    %c0_197 = arith.constant 0 : index
    %295 = vector.load %arg4[%c24_195, %c0_196, %c0_197] : memref<25x4x8xf32, #tpu.memory_space<vmem>>, vector<1x4x8xf32>
    %296 = vector.shape_cast %295 : vector<1x4x8xf32> to vector<4x8xf32>
    %297 = vector.extract_strided_slice %274 {offsets = [256, 0], sizes = [64, 4], strides = [1, 1]} : vector<320x4xf32> to vector<64x4xf32>
    %cst_198 = arith.constant dense<0.000000e+00> : vector<64x8xf32>
    %298 = tpu.matmul %297, %296, %cst_198 {dimension_numbers = #tpu.dot_dimension_numbers<[1], [0], [0], [1], [0, 0, 1, 1], [], []>} : vector<64x4xf32>, vector<4x8xf32>, vector<64x8xf32> -> vector<64x8xf32>
    %299 = arith.addf %294, %298 : vector<64x8xf32>
    %c0_199 = arith.constant 0 : index
    %c0_200 = arith.constant 0 : index
    %300 = vector.load %arg5[%c0_199, %c0_200] : memref<1x8xf32, #tpu.memory_space<vmem>>, vector<1x8xf32>
    %301 = vector.broadcast %300 : vector<1x8xf32> to vector<64x8xf32>
    %302 = arith.addf %299, %301 : vector<64x8xf32>
    %303 = vector.extract_strided_slice %302 {offsets = [0, 0], sizes = [16, 8], strides = [1, 1]} : vector<64x8xf32> to vector<16x8xf32>
    %304 = vector.extract_strided_slice %302 {offsets = [16, 0], sizes = [16, 8], strides = [1, 1]} : vector<64x8xf32> to vector<16x8xf32>
    %305 = arith.maximumf %303, %304 : vector<16x8xf32>
    %306 = vector.extract_strided_slice %302 {offsets = [32, 0], sizes = [16, 8], strides = [1, 1]} : vector<64x8xf32> to vector<16x8xf32>
    %307 = vector.extract_strided_slice %302 {offsets = [48, 0], sizes = [16, 8], strides = [1, 1]} : vector<64x8xf32> to vector<16x8xf32>
    %308 = arith.maximumf %306, %307 : vector<16x8xf32>
    %309 = arith.maximumf %305, %308 : vector<16x8xf32>
    %cst_201 = arith.constant 0.000000e+00 : f32
    %310 = vector.broadcast %cst_201 : f32 to vector<16x8xf32>
    %311 = arith.maximumf %309, %310 : vector<16x8xf32>
    %312 = tpu.concatenate %163, %311 in 0 : vector<16x8xf32>, vector<16x8xf32> -> vector<32x8xf32>
    %c0_202 = arith.constant 0 : index
    %c0_203 = arith.constant 0 : index
    %313 = vector.load %arg7[%c0_202, %c0_203] : memref<8x512xf32, #tpu.memory_space<vmem>>, vector<8x512xf32>
    %cst_204 = arith.constant dense<0.000000e+00> : vector<32x512xf32>
    %314 = tpu.matmul %312, %313, %cst_204 {dimension_numbers = #tpu.dot_dimension_numbers<[1], [0], [0], [1], [0, 0, 1, 1], [], []>} : vector<32x8xf32>, vector<8x512xf32>, vector<32x512xf32> -> vector<32x512xf32>
    %c0_205 = arith.constant 0 : index
    %c0_206 = arith.constant 0 : index
    %315 = vector.load %arg8[%c0_205, %c0_206] : memref<32x512xf32, #tpu.memory_space<vmem>>, vector<32x512xf32>
    %316 = arith.mulf %314, %315 : vector<32x512xf32>
    %c0_207 = arith.constant 0 : index
    %c0_208 = arith.constant 0 : index
    %317 = vector.load %arg9[%c0_207, %c0_208] : memref<2x32xf32, #tpu.memory_space<vmem>>, vector<2x32xf32>
    %cst_209 = arith.constant dense<0.000000e+00> : vector<2x512xf32>
    %318 = tpu.matmul %317, %316, %cst_209 {dimension_numbers = #tpu.dot_dimension_numbers<[1], [0], [0], [1], [0, 0, 1, 1], [], []>} : vector<2x32xf32>, vector<32x512xf32>, vector<2x512xf32> -> vector<2x512xf32>
    %c0_210 = arith.constant 0 : index
    %c0_211 = arith.constant 0 : index
    %319 = vector.load %arg10[%c0_210, %c0_211] : memref<512x32xf32, #tpu.memory_space<vmem>>, vector<512x32xf32>
    %cst_212 = arith.constant dense<0.000000e+00> : vector<2x32xf32>
    %320 = tpu.matmul %318, %319, %cst_212 {dimension_numbers = #tpu.dot_dimension_numbers<[1], [0], [0], [1], [0, 0, 1, 1], [], []>} : vector<2x512xf32>, vector<512x32xf32>, vector<2x32xf32> -> vector<2x32xf32>
    %c0_213 = arith.constant 0 : index
    %c0_214 = arith.constant 0 : index
    %321 = vector.load %arg11[%c0_213, %c0_214] : memref<1x32xf32, #tpu.memory_space<vmem>>, vector<1x32xf32>
    %322 = vector.broadcast %321 : vector<1x32xf32> to vector<2x32xf32>
    %323 = arith.addf %320, %322 : vector<2x32xf32>
    %c0_215 = arith.constant 0 : index
    %c0_216 = arith.constant 0 : index
    %324 = vector.load %arg12[%c0_215, %c0_216] : memref<32x10xf32, #tpu.memory_space<vmem>>, vector<32x10xf32>
    %cst_217 = arith.constant dense<0.000000e+00> : vector<2x10xf32>
    %325 = tpu.matmul %323, %324, %cst_217 {dimension_numbers = #tpu.dot_dimension_numbers<[1], [0], [0], [1], [0, 0, 1, 1], [], []>} : vector<2x32xf32>, vector<32x10xf32>, vector<2x10xf32> -> vector<2x10xf32>
    %c0_218 = arith.constant 0 : index
    %c0_219 = arith.constant 0 : index
    %326 = vector.load %arg13[%c0_218, %c0_219] : memref<1x10xf32, #tpu.memory_space<vmem>>, vector<1x10xf32>
    %327 = vector.broadcast %326 : vector<1x10xf32> to vector<2x10xf32>
    %328 = arith.addf %325, %327 : vector<2x10xf32>
    %c0_220 = arith.constant 0 : index
    %c0_221 = arith.constant 0 : index
    %329 = vector.load %arg14[%c0_220, %c0_221] : memref<2x10xf32, #tpu.memory_space<vmem>>, vector<2x10xf32>
    tpu.vector_store %arg14[%c0_220, %c0_221], %328 {strides = array<i32>} : memref<2x10xf32, #tpu.memory_space<vmem>>, vector<2x10xf32>,
    return
  }
  func.func @transform_0(%arg0: i32) -> (i32, i32) {
    %c0_i32 = arith.constant 0 : i32
    %c0_i32_0 = arith.constant 0 : i32
    %c0_i32_1 = arith.constant 0 : i32
    return %c0_i32, %c0_i32_0 : i32, i32
  }
  func.func @transform_1(%arg0: i32) -> (i32, i32) {
    %c0_i32 = arith.constant 0 : i32
    %c0_i32_0 = arith.constant 0 : i32
    %c0_i32_1 = arith.constant 0 : i32
    return %c0_i32, %c0_i32_0 : i32, i32
  }
  func.func @transform_2(%arg0: i32) -> (i32, i32) {
    %c0_i32 = arith.constant 0 : i32
    %c0_i32_0 = arith.constant 0 : i32
    %c0_i32_1 = arith.constant 0 : i32
    return %c0_i32, %c0_i32_0 : i32, i32
  }
  func.func @transform_3(%arg0: i32) -> (i32, i32, i32) {
    %c0_i32 = arith.constant 0 : i32
    %c0_i32_0 = arith.constant 0 : i32
    %c0_i32_1 = arith.constant 0 : i32
    %c0_i32_2 = arith.constant 0 : i32
    return %c0_i32, %c0_i32_0, %c0_i32_1 : i32, i32, i32
  }
  func.func @transform_4(%arg0: i32) -> (i32, i32) {
    %c0_i32 = arith.constant 0 : i32
    %c0_i32_0 = arith.constant 0 : i32
    %c0_i32_1 = arith.constant 0 : i32
    return %c0_i32, %c0_i32_0 : i32, i32
  }
  func.func @transform_5(%arg0: i32) -> (i32, i32) {
    %c0_i32 = arith.constant 0 : i32
    %c0_i32_0 = arith.constant 0 : i32
    %c0_i32_1 = arith.constant 0 : i32
    return %c0_i32, %c0_i32_0 : i32, i32
  }
  func.func @transform_6(%arg0: i32) -> (i32, i32) {
    %c0_i32 = arith.constant 0 : i32
    %c0_i32_0 = arith.constant 0 : i32
    %c0_i32_1 = arith.constant 0 : i32
    return %c0_i32, %c0_i32_0 : i32, i32
  }
  func.func @transform_7(%arg0: i32) -> (i32, i32) {
    %c0_i32 = arith.constant 0 : i32
    %c0_i32_0 = arith.constant 0 : i32
    %c0_i32_1 = arith.constant 0 : i32
    return %c0_i32, %c0_i32_0 : i32, i32
  }
  func.func @transform_8(%arg0: i32) -> (i32, i32) {
    %c0_i32 = arith.constant 0 : i32
    %c0_i32_0 = arith.constant 0 : i32
    %c0_i32_1 = arith.constant 0 : i32
    return %c0_i32, %c0_i32_0 : i32, i32
  }
  func.func @transform_9(%arg0: i32) -> (i32, i32) {
    %c0_i32 = arith.constant 0 : i32
    %c0_i32_0 = arith.constant 0 : i32
    %c0_i32_1 = arith.constant 0 : i32
    return %c0_i32, %c0_i32_0 : i32, i32
  }
  func.func @transform_10(%arg0: i32) -> (i32, i32) {
    %c0_i32 = arith.constant 0 : i32
    %c0_i32_0 = arith.constant 0 : i32
    %c0_i32_1 = arith.constant 0 : i32
    return %c0_i32, %c0_i32_0 : i32, i32
  }
  func.func @transform_11(%arg0: i32) -> (i32, i32) {
    %c0_i32 = arith.constant 0 : i32
    %c0_i32_0 = arith.constant 0 : i32
    %c0_i32_1 = arith.constant 0 : i32
    return %c0_i32, %c0_i32_0 : i32, i32
  }
  func.func @transform_12(%arg0: i32) -> (i32, i32) {
    %c0_i32 = arith.constant 0 : i32
    %c0_i32_0 = arith.constant 0 : i32
    %c0_i32_1 = arith.constant 0 : i32
    return %c0_i32, %c0_i32_0 : i32, i32
  }
  func.func @transform_13(%arg0: i32) -> (i32, i32) {
    %c0_i32 = arith.constant 0 : i32
    %c0_i32_0 = arith.constant 0 : i32
    %c0_i32_1 = arith.constant 0 : i32
    return %c0_i32, %c0_i32_0 : i32, i32
  }
}

</mosaic_0001>

<llo_original>
// kernel: lenet_forward.1
$region0: #{lenet_forward.1}
  #allocation0 [shape = 'u32[]', space=smem, size = 0x4, offset = 0x4, fixed_abs, tag = 'smem constant byte address 0x4 - core index']
  #allocation1 [shape = 'u32[72,128]{1,0:T(1,128)}', space=vmem, size = 0x9000, scoped, tag = 'internal scratch']
  %s0 = inlined_call_operand.vmem [shape: f32[1536,25], index: 0, kind: input, shape index: {}]
  %s1 = inlined_call_operand.vmem [shape: f32[25,4], index: 1, kind: input, shape index: {}]
  %s2 = inlined_call_operand.vmem [shape: f32[1,4], index: 2, kind: input, shape index: {}]
  %s3 = inlined_call_operand.vmem [shape: f32[25,4,8], index: 3, kind: input, shape index: {}]
  %s4 = inlined_call_operand.vmem [shape: f32[1,8], index: 4, kind: input, shape index: {}]
  %s5 = inlined_call_operand.vmem [shape: f32[320,128], index: 5, kind: input, shape index: {}]
  %s6 = inlined_call_operand.vmem [shape: f32[8,512], index: 6, kind: input, shape index: {}]
  %s7 = inlined_call_operand.vmem [shape: f32[32,512], index: 7, kind: input, shape index: {}]
  %s8 = inlined_call_operand.vmem [shape: f32[2,32], index: 8, kind: input, shape index: {}]
  %s9 = inlined_call_operand.vmem [shape: f32[512,32], index: 9, kind: input, shape index: {}]
  %s10 = inlined_call_operand.vmem [shape: f32[1,32], index: 10, kind: input, shape index: {}]
  %s11 = inlined_call_operand.vmem [shape: f32[32,10], index: 11, kind: input, shape index: {}]
  %s12 = inlined_call_operand.vmem [shape: f32[1,10], index: 12, kind: input, shape index: {}]
  %s13 = inlined_call_operand.hbm [shape: f32[2,10], index: 13, kind: output, shape index: {}]
  %s14 = sld [smem:[#allocation0]]
  $region62: #{lenet_forward.1} parent=0
    _
  %s16 = ssub.s32 1, %s14
  %s17 = scalar_select 0, %s16, %s14
  $region1: #{lenet_forward.1} parent=0
    #allocation2 [shape = 'u8[1024]{0}', space=vmem, size = 0x400, scoped, tag = 'output window, operand 0, single buffered']
    #allocation3 [shape = 's32[1]{0}', space=sflag, size = 0x4, scoped, tag = 'scoped memory for lenet_forward.1']
    %18 = vsyncpa [#allocation3], 0
    // Predicated region
    $region2: #{lenet_forward.1} parent=1 // pred_check
      _
    $region3: #{lenet_forward.1} parent=1 // pred_check_branch
      %20 = sbr.rel (0) target = $region5
    $region4: #{lenet_forward.1} parent=1 // pred_region
      _
    $region5: #{lenet_forward.1} parent=1 // pred_fallthru
      _
    // Predicated region
    $region6: #{lenet_forward.1} parent=1 // pred_check
      _
    $region7: #{lenet_forward.1} parent=1 // pred_check_branch
      %22 = sbr.rel (0) target = $region9
    $region8: #{lenet_forward.1} parent=1 // pred_region
      _
    $region9: #{lenet_forward.1} parent=1 // pred_fallthru
      _
    // Predicated region
    $region10: #{lenet_forward.1} parent=1 // pred_check
      _
    $region11: #{lenet_forward.1} parent=1 // pred_check_branch
      %24 = sbr.rel (0) target = $region13
    $region12: #{lenet_forward.1} parent=1 // pred_region
      _
    $region13: #{lenet_forward.1} parent=1 // pred_fallthru
      _
    // Predicated region
    $region14: #{lenet_forward.1} parent=1 // pred_check
      _
    $region15: #{lenet_forward.1} parent=1 // pred_check_branch
      %26 = sbr.rel (0) target = $region17
    $region16: #{lenet_forward.1} parent=1 // pred_region
      _
    $region17: #{lenet_forward.1} parent=1 // pred_fallthru
      _
    // Predicated region
    $region18: #{lenet_forward.1} parent=1 // pred_check
      _
    $region19: #{lenet_forward.1} parent=1 // pred_check_branch
      %28 = sbr.rel (0) target = $region21
    $region20: #{lenet_forward.1} parent=1 // pred_region
      _
    $region21: #{lenet_forward.1} parent=1 // pred_fallthru
      _
    // Predicated region
    $region22: #{lenet_forward.1} parent=1 // pred_check
      _
    $region23: #{lenet_forward.1} parent=1 // pred_check_branch
      %30 = sbr.rel (0) target = $region25
    $region24: #{lenet_forward.1} parent=1 // pred_region
      _
    $region25: #{lenet_forward.1} parent=1 // pred_fallthru
      _
    // Predicated region
    $region26: #{lenet_forward.1} parent=1 // pred_check
      _
    $region27: #{lenet_forward.1} parent=1 // pred_check_branch
      %32 = sbr.rel (0) target = $region29
    $region28: #{lenet_forward.1} parent=1 // pred_region
      _
    $region29: #{lenet_forward.1} parent=1 // pred_fallthru
      _
    // Predicated region
    $region30: #{lenet_forward.1} parent=1 // pred_check
      _
    $region31: #{lenet_forward.1} parent=1 // pred_check_branch
      %34 = sbr.rel (0) target = $region33
    $region32: #{lenet_forward.1} parent=1 // pred_region
      _
    $region33: #{lenet_forward.1} parent=1 // pred_fallthru
      _
    // Predicated region
    $region34: #{lenet_forward.1} parent=1 // pred_check
      _
    $region35: #{lenet_forward.1} parent=1 // pred_check_branch
      %36 = sbr.rel (0) target = $region37
    $region36: #{lenet_forward.1} parent=1 // pred_region
      _
    $region37: #{lenet_forward.1} parent=1 // pred_fallthru
      _
    // Predicated region
    $region38: #{lenet_forward.1} parent=1 // pred_check
      _
    $region39: #{lenet_forward.1} parent=1 // pred_check_branch
      %38 = sbr.rel (0) target = $region41
    $region40: #{lenet_forward.1} parent=1 // pred_region
      _
    $region41: #{lenet_forward.1} parent=1 // pred_fallthru
      _
    // Predicated region
    $region42: #{lenet_forward.1} parent=1 // pred_check
      _
    $region43: #{lenet_forward.1} parent=1 // pred_check_branch
      %40 = sbr.rel (0) target = $region45
    $region44: #{lenet_forward.1} parent=1 // pred_region
      _
    $region45: #{lenet_forward.1} parent=1 // pred_fallthru
      _
    // Predicated region
    $region46: #{lenet_forward.1} parent=1 // pred_check
      _
    $region47: #{lenet_forward.1} parent=1 // pred_check_branch
      %42 = sbr.rel (0) target = $region49
    $region48: #{lenet_forward.1} parent=1 // pred_region
      _
    $region49: #{lenet_forward.1} parent=1 // pred_fallthru
      _
    // Predicated region
    $region50: #{lenet_forward.1} parent=1 // pred_check
      _
    $region51: #{lenet_forward.1} parent=1 // pred_check_branch
      %44 = sbr.rel (0) target = $region53
    $region52: #{lenet_forward.1} parent=1 // pred_region
      _
    $region53: #{lenet_forward.1} parent=1 // pred_fallthru
      _
    %v45 = vld [vmem:[%s0] sm:$0xff]
    %v46 = vld [vmem:[%s0 + $0x8] sm:$0xff]
    %v47 = vld [vmem:[%s0 + $0x10] sm:$0xff]
    %v48 = vld [vmem:[%s0 + $0x18] sm:$0xff]
    %v49 = vld [vmem:[%s0 + $0x20] sm:$0xff]
    %v50 = vld [vmem:[%s0 + $0x28] sm:$0xff]
    %v51 = vld [vmem:[%s0 + $0x30] sm:$0xff]
    %v52 = vld [vmem:[%s0 + $0x38] sm:$0xff]
    %v53 = vld [vmem:[%s0 + $0x40] sm:$0xff]
    %v54 = vld [vmem:[%s0 + $0x48] sm:$0xff]
    %v55 = vld [vmem:[%s0 + $0x50] sm:$0xff]
    %v56 = vld [vmem:[%s0 + $0x58] sm:$0xff]
    %v57 = vld [vmem:[%s0 + $0x60] sm:$0xff]
    %v58 = vld [vmem:[%s0 + $0x68] sm:$0xff]
    %v59 = vld [vmem:[%s0 + $0x70] sm:$0xff]
    %v60 = vld [vmem:[%s0 + $0x78] sm:$0xff]
    %v61 = vld [vmem:[%s0 + $0x80] sm:$0xff]
    %v62 = vld [vmem:[%s0 + $0x88] sm:$0xff]
    %v63 = vld [vmem:[%s0 + $0x90] sm:$0xff]
    %v64 = vld [vmem:[%s0 + $0x98] sm:$0xff]
    %v65 = vld [vmem:[%s0 + $0xa0] sm:$0xff]
    %v66 = vld [vmem:[%s0 + $0xa8] sm:$0xff]
    %v67 = vld [vmem:[%s0 + $0xb0] sm:$0xff]
    %v68 = vld [vmem:[%s0 + $0xb8] sm:$0xff]
    %v69 = vld [vmem:[%s0 + $0xc0] sm:$0xff]
    %v70 = vld [vmem:[%s0 + $0xc8] sm:$0xff]
    %v71 = vld [vmem:[%s0 + $0xd0] sm:$0xff]
    %v72 = vld [vmem:[%s0 + $0xd8] sm:$0xff]
    %v73 = vld [vmem:[%s0 + $0xe0] sm:$0xff]
    %v74 = vld [vmem:[%s0 + $0xe8] sm:$0xff]
    %v75 = vld [vmem:[%s0 + $0xf0] sm:$0xff]
    %v76 = vld [vmem:[%s0 + $0xf8] sm:$0xff]
    %v77 = vld [vmem:[%s0 + $0x100] sm:$0xff]
    %v78 = vld [vmem:[%s0 + $0x108] sm:$0xff]
    %v79 = vld [vmem:[%s0 + $0x110] sm:$0xff]
    %v80 = vld [vmem:[%s0 + $0x118] sm:$0xff]
    %v81 = vld [vmem:[%s0 + $0x120] sm:$0xff]
    %v82 = vld [vmem:[%s0 + $0x128] sm:$0xff]
    %v83 = vld [vmem:[%s0 + $0x130] sm:$0xff]
    %v84 = vld [vmem:[%s0 + $0x138] sm:$0xff]
    %v85 = vld [vmem:[%s0 + $0x140] sm:$0xff]
    %v86 = vld [vmem:[%s0 + $0x148] sm:$0xff]
    %v87 = vld [vmem:[%s0 + $0x150] sm:$0xff]
    %v88 = vld [vmem:[%s0 + $0x158] sm:$0xff]
    %v89 = vld [vmem:[%s0 + $0x160] sm:$0xff]
    %v90 = vld [vmem:[%s0 + $0x168] sm:$0xff]
    %v91 = vld [vmem:[%s0 + $0x170] sm:$0xff]
    %v92 = vld [vmem:[%s0 + $0x178] sm:$0xff]
    %v93 = vld [vmem:[%s0 + $0x180] sm:$0xff]
    %v94 = vld [vmem:[%s0 + $0x188] sm:$0xff]
    %v95 = vld [vmem:[%s0 + $0x190] sm:$0xff]
    %v96 = vld [vmem:[%s0 + $0x198] sm:$0xff]
    %v97 = vld [vmem:[%s0 + $0x1a0] sm:$0xff]
    %v98 = vld [vmem:[%s0 + $0x1a8] sm:$0xff]
    %v99 = vld [vmem:[%s0 + $0x1b0] sm:$0xff]
    %v100 = vld [vmem:[%s0 + $0x1b8] sm:$0xff]
    %v101 = vld [vmem:[%s0 + $0x1c0] sm:$0xff]
    %v102 = vld [vmem:[%s0 + $0x1c8] sm:$0xff]
    %v103 = vld [vmem:[%s0 + $0x1d0] sm:$0xff]
    %v104 = vld [vmem:[%s0 + $0x1d8] sm:$0xff]
    %v105 = vld [vmem:[%s0 + $0x1e0] sm:$0xff]
    %v106 = vld [vmem:[%s0 + $0x1e8] sm:$0xff]
    %v107 = vld [vmem:[%s0 + $0x1f0] sm:$0xff]
    %v108 = vld [vmem:[%s0 + $0x1f8] sm:$0xff]
    %v109 = vld [vmem:[%s0 + $0x200] sm:$0xff]
    %v110 = vld [vmem:[%s0 + $0x208] sm:$0xff]
    %v111 = vld [vmem:[%s0 + $0x210] sm:$0xff]
    %v112 = vld [vmem:[%s0 + $0x218] sm:$0xff]
    %v113 = vld [vmem:[%s0 + $0x220] sm:$0xff]
    %v114 = vld [vmem:[%s0 + $0x228] sm:$0xff]
    %v115 = vld [vmem:[%s0 + $0x230] sm:$0xff]
    %v116 = vld [vmem:[%s0 + $0x238] sm:$0xff]
    %v117 = vld [vmem:[%s0 + $0x240] sm:$0xff]
    %v118 = vld [vmem:[%s0 + $0x248] sm:$0xff]
    %v119 = vld [vmem:[%s0 + $0x250] sm:$0xff]
    %v120 = vld [vmem:[%s0 + $0x258] sm:$0xff]
    %v121 = vld [vmem:[%s0 + $0x260] sm:$0xff]
    %v122 = vld [vmem:[%s0 + $0x268] sm:$0xff]
    %v123 = vld [vmem:[%s0 + $0x270] sm:$0xff]
    %v124 = vld [vmem:[%s0 + $0x278] sm:$0xff]
    %v125 = vld [vmem:[%s0 + $0x280] sm:$0xff]
    %v126 = vld [vmem:[%s0 + $0x288] sm:$0xff]
    %v127 = vld [vmem:[%s0 + $0x290] sm:$0xff]
    %v128 = vld [vmem:[%s0 + $0x298] sm:$0xff]
    %v129 = vld [vmem:[%s0 + $0x2a0] sm:$0xff]
    %v130 = vld [vmem:[%s0 + $0x2a8] sm:$0xff]
    %v131 = vld [vmem:[%s0 + $0x2b0] sm:$0xff]
    %v132 = vld [vmem:[%s0 + $0x2b8] sm:$0xff]
    %v133 = vld [vmem:[%s0 + $0x2c0] sm:$0xff]
    %v134 = vld [vmem:[%s0 + $0x2c8] sm:$0xff]
    %v135 = vld [vmem:[%s0 + $0x2d0] sm:$0xff]
    %v136 = vld [vmem:[%s0 + $0x2d8] sm:$0xff]
    %v137 = vld [vmem:[%s0 + $0x2e0] sm:$0xff]
    %v138 = vld [vmem:[%s0 + $0x2e8] sm:$0xff]
    %v139 = vld [vmem:[%s0 + $0x2f0] sm:$0xff]
    %v140 = vld [vmem:[%s0 + $0x2f8] sm:$0xff]
    %v141 = vld [vmem:[%s0 + $0x300] sm:$0xff]
    %v142 = vld [vmem:[%s0 + $0x308] sm:$0xff]
    %v143 = vld [vmem:[%s0 + $0x310] sm:$0xff]
    %v144 = vld [vmem:[%s0 + $0x318] sm:$0xff]
    %v145 = vld [vmem:[%s0 + $0x320] sm:$0xff]
    %v146 = vld [vmem:[%s0 + $0x328] sm:$0xff]
    %v147 = vld [vmem:[%s0 + $0x330] sm:$0xff]
    %v148 = vld [vmem:[%s0 + $0x338] sm:$0xff]
    %v149 = vld [vmem:[%s0 + $0x340] sm:$0xff]
    %v150 = vld [vmem:[%s0 + $0x348] sm:$0xff]
    %v151 = vld [vmem:[%s0 + $0x350] sm:$0xff]
    %v152 = vld [vmem:[%s0 + $0x358] sm:$0xff]
    %v153 = vld [vmem:[%s0 + $0x360] sm:$0xff]
    %v154 = vld [vmem:[%s0 + $0x368] sm:$0xff]
    %v155 = vld [vmem:[%s0 + $0x370] sm:$0xff]
    %v156 = vld [vmem:[%s0 + $0x378] sm:$0xff]
    %v157 = vld [vmem:[%s0 + $0x380] sm:$0xff]
    %v158 = vld [vmem:[%s0 + $0x388] sm:$0xff]
    %v159 = vld [vmem:[%s0 + $0x390] sm:$0xff]
    %v160 = vld [vmem:[%s0 + $0x398] sm:$0xff]
    %v161 = vld [vmem:[%s0 + $0x3a0] sm:$0xff]
    %v162 = vld [vmem:[%s0 + $0x3a8] sm:$0xff]
    %v163 = vld [vmem:[%s0 + $0x3b0] sm:$0xff]
    %v164 = vld [vmem:[%s0 + $0x3b8] sm:$0xff]
    %v165 = vld [vmem:[%s0 + $0x3c0] sm:$0xff]
    %v166 = vld [vmem:[%s0 + $0x3c8] sm:$0xff]
    %v167 = vld [vmem:[%s0 + $0x3d0] sm:$0xff]
    %v168 = vld [vmem:[%s0 + $0x3d8] sm:$0xff]
    %v169 = vld [vmem:[%s0 + $0x3e0] sm:$0xff]
    %v170 = vld [vmem:[%s0 + $0x3e8] sm:$0xff]
    %v171 = vld [vmem:[%s0 + $0x3f0] sm:$0xff]
    %v172 = vld [vmem:[%s0 + $0x3f8] sm:$0xff]
    %v173 = vld [vmem:[%s0 + $0x400] sm:$0xff]
    %v174 = vld [vmem:[%s0 + $0x408] sm:$0xff]
    %v175 = vld [vmem:[%s0 + $0x410] sm:$0xff]
    %v176 = vld [vmem:[%s0 + $0x418] sm:$0xff]
    %v177 = vld [vmem:[%s0 + $0x420] sm:$0xff]
    %v178 = vld [vmem:[%s0 + $0x428] sm:$0xff]
    %v179 = vld [vmem:[%s0 + $0x430] sm:$0xff]
    %v180 = vld [vmem:[%s0 + $0x438] sm:$0xff]
    %v181 = vld [vmem:[%s0 + $0x440] sm:$0xff]
    %v182 = vld [vmem:[%s0 + $0x448] sm:$0xff]
    %v183 = vld [vmem:[%s0 + $0x450] sm:$0xff]
    %v184 = vld [vmem:[%s0 + $0x458] sm:$0xff]
    %v185 = vld [vmem:[%s0 + $0x460] sm:$0xff]
    %v186 = vld [vmem:[%s0 + $0x468] sm:$0xff]
    %v187 = vld [vmem:[%s0 + $0x470] sm:$0xff]
    %v188 = vld [vmem:[%s0 + $0x478] sm:$0xff]
    %v189 = vld [vmem:[%s0 + $0x480] sm:$0xff]
    %v190 = vld [vmem:[%s0 + $0x488] sm:$0xff]
    %v191 = vld [vmem:[%s0 + $0x490] sm:$0xff]
    %v192 = vld [vmem:[%s0 + $0x498] sm:$0xff]
    %v193 = vld [vmem:[%s0 + $0x4a0] sm:$0xff]
    %v194 = vld [vmem:[%s0 + $0x4a8] sm:$0xff]
    %v195 = vld [vmem:[%s0 + $0x4b0] sm:$0xff]
    %v196 = vld [vmem:[%s0 + $0x4b8] sm:$0xff]
    %v197 = vld [vmem:[%s0 + $0x4c0] sm:$0xff]
    %v198 = vld [vmem:[%s0 + $0x4c8] sm:$0xff]
    %v199 = vld [vmem:[%s0 + $0x4d0] sm:$0xff]
    %v200 = vld [vmem:[%s0 + $0x4d8] sm:$0xff]
    %v201 = vld [vmem:[%s0 + $0x4e0] sm:$0xff]
    %v202 = vld [vmem:[%s0 + $0x4e8] sm:$0xff]
    %v203 = vld [vmem:[%s0 + $0x4f0] sm:$0xff]
    %v204 = vld [vmem:[%s0 + $0x4f8] sm:$0xff]
    %v205 = vld [vmem:[%s0 + $0x500] sm:$0xff]
    %v206 = vld [vmem:[%s0 + $0x508] sm:$0xff]
    %v207 = vld [vmem:[%s0 + $0x510] sm:$0xff]
    %v208 = vld [vmem:[%s0 + $0x518] sm:$0xff]
    %v209 = vld [vmem:[%s0 + $0x520] sm:$0xff]
    %v210 = vld [vmem:[%s0 + $0x528] sm:$0xff]
    %v211 = vld [vmem:[%s0 + $0x530] sm:$0xff]
    %v212 = vld [vmem:[%s0 + $0x538] sm:$0xff]
    %v213 = vld [vmem:[%s0 + $0x540] sm:$0xff]
    %v214 = vld [vmem:[%s0 + $0x548] sm:$0xff]
    %v215 = vld [vmem:[%s0 + $0x550] sm:$0xff]
    %v216 = vld [vmem:[%s0 + $0x558] sm:$0xff]
    %v217 = vld [vmem:[%s0 + $0x560] sm:$0xff]
    %v218 = vld [vmem:[%s0 + $0x568] sm:$0xff]
    %v219 = vld [vmem:[%s0 + $0x570] sm:$0xff]
    %v220 = vld [vmem:[%s0 + $0x578] sm:$0xff]
    %v221 = vld [vmem:[%s0 + $0x580] sm:$0xff]
    %v222 = vld [vmem:[%s0 + $0x588] sm:$0xff]
    %v223 = vld [vmem:[%s0 + $0x590] sm:$0xff]
    %v224 = vld [vmem:[%s0 + $0x598] sm:$0xff]
    %v225 = vld [vmem:[%s0 + $0x5a0] sm:$0xff]
    %v226 = vld [vmem:[%s0 + $0x5a8] sm:$0xff]
    %v227 = vld [vmem:[%s0 + $0x5b0] sm:$0xff]
    %v228 = vld [vmem:[%s0 + $0x5b8] sm:$0xff]
    %v229 = vld [vmem:[%s0 + $0x5c0] sm:$0xff]
    %v230 = vld [vmem:[%s0 + $0x5c8] sm:$0xff]
    %v231 = vld [vmem:[%s0 + $0x5d0] sm:$0xff]
    %v232 = vld [vmem:[%s0 + $0x5d8] sm:$0xff]
    %v233 = vld [vmem:[%s0 + $0x5e0] sm:$0xff]
    %v234 = vld [vmem:[%s0 + $0x5e8] sm:$0xff]
    %v235 = vld [vmem:[%s0 + $0x5f0] sm:$0xff]
    %v236 = vld [vmem:[%s0 + $0x5f8] sm:$0xff]
    %v237 = vld [vmem:[%s1] sm:$0xff]
    %v238 = vld [vmem:[%s1 + $0x8] sm:$0xff]
    %v239 = vld [vmem:[%s1 + $0x10] sm:$0xff]
    %v240 = vld [vmem:[%s1 + $0x18] sm:$0x1]
    %vm241 = vcmask 203776
    %v243 = vsel %vm241, %v45, 0
    %v246 = vsel %vm241, %v46, 0
    %v249 = vsel %vm241, %v47, 0
    %v252 = vsel %vm241, %v48, 0
    %v255 = vsel %vm241, %v49, 0
    %v258 = vsel %vm241, %v50, 0
    %v261 = vsel %vm241, %v51, 0
    %v264 = vsel %vm241, %v52, 0
    %v267 = vsel %vm241, %v53, 0
    %v270 = vsel %vm241, %v54, 0
    %v273 = vsel %vm241, %v55, 0
    %v276 = vsel %vm241, %v56, 0
    %v279 = vsel %vm241, %v57, 0
    %v282 = vsel %vm241, %v58, 0
    %v285 = vsel %vm241, %v59, 0
    %v288 = vsel %vm241, %v60, 0
    %v291 = vsel %vm241, %v61, 0
    %v294 = vsel %vm241, %v62, 0
    %v297 = vsel %vm241, %v63, 0
    %v300 = vsel %vm241, %v64, 0
    %v303 = vsel %vm241, %v65, 0
    %v306 = vsel %vm241, %v66, 0
    %v309 = vsel %vm241, %v67, 0
    %v312 = vsel %vm241, %v68, 0
    %v315 = vsel %vm241, %v69, 0
    %v318 = vsel %vm241, %v70, 0
    %v321 = vsel %vm241, %v71, 0
    %v324 = vsel %vm241, %v72, 0
    %v327 = vsel %vm241, %v73, 0
    %v330 = vsel %vm241, %v74, 0
    %v333 = vsel %vm241, %v75, 0
    %v336 = vsel %vm241, %v76, 0
    %v339 = vsel %vm241, %v77, 0
    %v342 = vsel %vm241, %v78, 0
    %v345 = vsel %vm241, %v79, 0
    %v348 = vsel %vm241, %v80, 0
    %v351 = vsel %vm241, %v81, 0
    %v354 = vsel %vm241, %v82, 0
    %v357 = vsel %vm241, %v83, 0
    %v360 = vsel %vm241, %v84, 0
    %v363 = vsel %vm241, %v85, 0
    %v366 = vsel %vm241, %v86, 0
    %v369 = vsel %vm241, %v87, 0
    %v372 = vsel %vm241, %v88, 0
    %v375 = vsel %vm241, %v89, 0
    %v378 = vsel %vm241, %v90, 0
    %v381 = vsel %vm241, %v91, 0
    %v384 = vsel %vm241, %v92, 0
    %v387 = vsel %vm241, %v93, 0
    %v390 = vsel %vm241, %v94, 0
    %v393 = vsel %vm241, %v95, 0
    %v396 = vsel %vm241, %v96, 0
    %v399 = vsel %vm241, %v97, 0
    %v402 = vsel %vm241, %v98, 0
    %v405 = vsel %vm241, %v99, 0
    %v408 = vsel %vm241, %v100, 0
    %v411 = vsel %vm241, %v101, 0
    %v414 = vsel %vm241, %v102, 0
    %v417 = vsel %vm241, %v103, 0
    %v420 = vsel %vm241, %v104, 0
    %v423 = vsel %vm241, %v105, 0
    %v426 = vsel %vm241, %v106, 0
    %v429 = vsel %vm241, %v107, 0
    %v432 = vsel %vm241, %v108, 0
    %v435 = vsel %vm241, %v109, 0
    %v438 = vsel %vm241, %v110, 0
    %v441 = vsel %vm241, %v111, 0
    %v444 = vsel %vm241, %v112, 0
    %v447 = vsel %vm241, %v113, 0
    %v450 = vsel %vm241, %v114, 0
    %v453 = vsel %vm241, %v115, 0
    %v456 = vsel %vm241, %v116, 0
    %v459 = vsel %vm241, %v117, 0
    %v462 = vsel %vm241, %v118, 0
    %v465 = vsel %vm241, %v119, 0
    %v468 = vsel %vm241, %v120, 0
    %v471 = vsel %vm241, %v121, 0
    %v474 = vsel %vm241, %v122, 0
    %v477 = vsel %vm241, %v123, 0
    %v480 = vsel %vm241, %v124, 0
    %v483 = vsel %vm241, %v125, 0
    %v486 = vsel %vm241, %v126, 0
    %v489 = vsel %vm241, %v127, 0
    %v492 = vsel %vm241, %v128, 0
    %v495 = vsel %vm241, %v129, 0
    %v498 = vsel %vm241, %v130, 0
    %v501 = vsel %vm241, %v131, 0
    %v504 = vsel %vm241, %v132, 0
    %v507 = vsel %vm241, %v133, 0
    %v510 = vsel %vm241, %v134, 0
    %v513 = vsel %vm241, %v135, 0
    %v516 = vsel %vm241, %v136, 0
    %v519 = vsel %vm241, %v137, 0
    %v522 = vsel %vm241, %v138, 0
    %v525 = vsel %vm241, %v139, 0
    %v528 = vsel %vm241, %v140, 0
    %v531 = vsel %vm241, %v141, 0
    %v534 = vsel %vm241, %v142, 0
    %v537 = vsel %vm241, %v143, 0
    %v540 = vsel %vm241, %v144, 0
    %v543 = vsel %vm241, %v145, 0
    %v546 = vsel %vm241, %v146, 0
    %v549 = vsel %vm241, %v147, 0
    %v552 = vsel %vm241, %v148, 0
    %v555 = vsel %vm241, %v149, 0
    %v558 = vsel %vm241, %v150, 0
    %v561 = vsel %vm241, %v151, 0
    %v564 = vsel %vm241, %v152, 0
    %v567 = vsel %vm241, %v153, 0
    %v570 = vsel %vm241, %v154, 0
    %v573 = vsel %vm241, %v155, 0
    %v576 = vsel %vm241, %v156, 0
    %v579 = vsel %vm241, %v157, 0
    %v582 = vsel %vm241, %v158, 0
    %v585 = vsel %vm241, %v159, 0
    %v588 = vsel %vm241, %v160, 0
    %v591 = vsel %vm241, %v161, 0
    %v594 = vsel %vm241, %v162, 0
    %v597 = vsel %vm241, %v163, 0
    %v600 = vsel %vm241, %v164, 0
    %v603 = vsel %vm241, %v165, 0
    %v606 = vsel %vm241, %v166, 0
    %v609 = vsel %vm241, %v167, 0
    %v612 = vsel %vm241, %v168, 0
    %v615 = vsel %vm241, %v169, 0
    %v618 = vsel %vm241, %v170, 0
    %v621 = vsel %vm241, %v171, 0
    %v624 = vsel %vm241, %v172, 0
    %v627 = vsel %vm241, %v173, 0
    %v630 = vsel %vm241, %v174, 0
    %v633 = vsel %vm241, %v175, 0
    %v636 = vsel %vm241, %v176, 0
    %v639 = vsel %vm241, %v177, 0
    %v642 = vsel %vm241, %v178, 0
    %v645 = vsel %vm241, %v179, 0
    %v648 = vsel %vm241, %v180, 0
    %v651 = vsel %vm241, %v181, 0
    %v654 = vsel %vm241, %v182, 0
    %v657 = vsel %vm241, %v183, 0
    %v660 = vsel %vm241, %v184, 0
    %v663 = vsel %vm241, %v185, 0
    %v666 = vsel %vm241, %v186, 0
    %v669 = vsel %vm241, %v187, 0
    %v672 = vsel %vm241, %v188, 0
    %v675 = vsel %vm241, %v189, 0
    %v678 = vsel %vm241, %v190, 0
    %v681 = vsel %vm241, %v191, 0
    %v684 = vsel %vm241, %v192, 0
    %v687 = vsel %vm241, %v193, 0
    %v690 = vsel %vm241, %v194, 0
    %v693 = vsel %vm241, %v195, 0
    %v696 = vsel %vm241, %v196, 0
    %v699 = vsel %vm241, %v197, 0
    %v702 = vsel %vm241, %v198, 0
    %v705 = vsel %vm241, %v199, 0
    %v708 = vsel %vm241, %v200, 0
    %v711 = vsel %vm241, %v201, 0
    %v714 = vsel %vm241, %v202, 0
    %v717 = vsel %vm241, %v203, 0
    %v720 = vsel %vm241, %v204, 0
    %v723 = vsel %vm241, %v205, 0
    %v726 = vsel %vm241, %v206, 0
    %v729 = vsel %vm241, %v207, 0
    %v732 = vsel %vm241, %v208, 0
    %v735 = vsel %vm241, %v209, 0
    %v738 = vsel %vm241, %v210, 0
    %v741 = vsel %vm241, %v211, 0
    %v744 = vsel %vm241, %v212, 0
    %v747 = vsel %vm241, %v213, 0
    %v750 = vsel %vm241, %v214, 0
    %v753 = vsel %vm241, %v215, 0
    %v756 = vsel %vm241, %v216, 0
    %v759 = vsel %vm241, %v217, 0
    %v762 = vsel %vm241, %v218, 0
    %v765 = vsel %vm241, %v219, 0
    %v768 = vsel %vm241, %v220, 0
    %v771 = vsel %vm241, %v221, 0
    %v774 = vsel %vm241, %v222, 0
    %v777 = vsel %vm241, %v223, 0
    %v780 = vsel %vm241, %v224, 0
    %v783 = vsel %vm241, %v225, 0
    %v786 = vsel %vm241, %v226, 0
    %v789 = vsel %vm241, %v227, 0
    %v792 = vsel %vm241, %v228, 0
    %v795 = vsel %vm241, %v229, 0
    %v798 = vsel %vm241, %v230, 0
    %v801 = vsel %vm241, %v231, 0
    %v804 = vsel %vm241, %v232, 0
    %v807 = vsel %vm241, %v233, 0
    %v810 = vsel %vm241, %v234, 0
    %v813 = vsel %vm241, %v235, 0
    %v816 = vsel %vm241, %v236, 0
    %vm818 = vcmask 1040384
    %v820 = vsel %vm818, %v240, 0
    %822 = vmatpush.msra.mxu0 0.0
    %823 = vmatpush.msra.mxu0 0.0
    %824 = vmatpush.msra.mxu0 0.0
    %825 = vmatpush.msra.mxu0 0.0
    %826 = vmatpush.msra.mxu0 0.0
    %827 = vmatpush.msra.mxu0 0.0
    %828 = vmatpush.msra.mxu0 0.0
    %829 = vmatpush.msra.mxu0 0.0
    %830 = vmatpush.msra.mxu0 0.0
    %831 = vmatpush.msra.mxu0 0.0
    %832 = vmatpush.msra.mxu0 0.0
    %833 = vmatpush.msra.mxu0 0.0
    %834 = vmatpush.msra.mxu0 %v820
    %835 = vmatpush.msra.mxu0 %v239
    %836 = vmatpush.msra.mxu0 %v238
    %837 = vmatpush.msra.mxu0 %v237
    %838 = vmatmul.f32.gmra.mxu0 %v243
    %v839 = vpop.f32.mrf.mxu0
    %v840 = vadd.f32 0.0, %v839
    %841 = vmatmul.f32.gmra.mxu0 %v246
    %v842 = vpop.f32.mrf.mxu0
    %v843 = vadd.f32 0.0, %v842
    %844 = vmatmul.f32.gmra.mxu0 %v249
    %v845 = vpop.f32.mrf.mxu0
    %v846 = vadd.f32 0.0, %v845
    %847 = vmatmul.f32.gmra.mxu0 %v252
    %v848 = vpop.f32.mrf.mxu0
    %v849 = vadd.f32 0.0, %v848
    %850 = vmatmul.f32.gmra.mxu0 %v255
    %v851 = vpop.f32.mrf.mxu0
    %v852 = vadd.f32 0.0, %v851
    %853 = vmatmul.f32.gmra.mxu0 %v258
    %v854 = vpop.f32.mrf.mxu0
    %v855 = vadd.f32 0.0, %v854
    %856 = vmatmul.f32.gmra.mxu0 %v261
    %v857 = vpop.f32.mrf.mxu0
    %v858 = vadd.f32 0.0, %v857
    %859 = vmatmul.f32.gmra.mxu0 %v264
    %v860 = vpop.f32.mrf.mxu0
    %v861 = vadd.f32 0.0, %v860
    %862 = vmatmul.f32.gmra.mxu0 %v267
    %v863 = vpop.f32.mrf.mxu0
    %v864 = vadd.f32 0.0, %v863
    %865 = vmatmul.f32.gmra.mxu0 %v270
    %v866 = vpop.f32.mrf.mxu0
    %v867 = vadd.f32 0.0, %v866
    %868 = vmatmul.f32.gmra.mxu0 %v273
    %v869 = vpop.f32.mrf.mxu0
    %v870 = vadd.f32 0.0, %v869
    %871 = vmatmul.f32.gmra.mxu0 %v276
    %v872 = vpop.f32.mrf.mxu0
    %v873 = vadd.f32 0.0, %v872
    %874 = vmatmul.f32.gmra.mxu0 %v279
    %v875 = vpop.f32.mrf.mxu0
    %v876 = vadd.f32 0.0, %v875
    %877 = vmatmul.f32.gmra.mxu0 %v282
    %v878 = vpop.f32.mrf.mxu0
    %v879 = vadd.f32 0.0, %v878
    %880 = vmatmul.f32.gmra.mxu0 %v285
    %v881 = vpop.f32.mrf.mxu0
    %v882 = vadd.f32 0.0, %v881
    %883 = vmatmul.f32.gmra.mxu0 %v288
    %v884 = vpop.f32.mrf.mxu0
    %v885 = vadd.f32 0.0, %v884
    %886 = vmatmul.f32.gmra.mxu0 %v291
    %v887 = vpop.f32.mrf.mxu0
    %v888 = vadd.f32 0.0, %v887
    %889 = vmatmul.f32.gmra.mxu0 %v294
    %v890 = vpop.f32.mrf.mxu0
    %v891 = vadd.f32 0.0, %v890
    %892 = vmatmul.f32.gmra.mxu0 %v297
    %v893 = vpop.f32.mrf.mxu0
    %v894 = vadd.f32 0.0, %v893
    %895 = vmatmul.f32.gmra.mxu0 %v300
    %v896 = vpop.f32.mrf.mxu0
    %v897 = vadd.f32 0.0, %v896
    %898 = vmatmul.f32.gmra.mxu0 %v303
    %v899 = vpop.f32.mrf.mxu0
    %v900 = vadd.f32 0.0, %v899
    %901 = vmatmul.f32.gmra.mxu0 %v306
    %v902 = vpop.f32.mrf.mxu0
    %v903 = vadd.f32 0.0, %v902
    %904 = vmatmul.f32.gmra.mxu0 %v309
    %v905 = vpop.f32.mrf.mxu0
    %v906 = vadd.f32 0.0, %v905
    %907 = vmatmul.f32.gmra.mxu0 %v312
    %v908 = vpop.f32.mrf.mxu0
    %v909 = vadd.f32 0.0, %v908
    %910 = vmatmul.f32.gmra.mxu0 %v315
    %v911 = vpop.f32.mrf.mxu0
    %v912 = vadd.f32 0.0, %v911
    %913 = vmatmul.f32.gmra.mxu0 %v318
    %v914 = vpop.f32.mrf.mxu0
    %v915 = vadd.f32 0.0, %v914
    %916 = vmatmul.f32.gmra.mxu0 %v321
    %v917 = vpop.f32.mrf.mxu0
    %v918 = vadd.f32 0.0, %v917
    %919 = vmatmul.f32.gmra.mxu0 %v324
    %v920 = vpop.f32.mrf.mxu0
    %v921 = vadd.f32 0.0, %v920
    %922 = vmatmul.f32.gmra.mxu0 %v327
    %v923 = vpop.f32.mrf.mxu0
    %v924 = vadd.f32 0.0, %v923
    %925 = vmatmul.f32.gmra.mxu0 %v330
    %v926 = vpop.f32.mrf.mxu0
    %v927 = vadd.f32 0.0, %v926
    %928 = vmatmul.f32.gmra.mxu0 %v333
    %v929 = vpop.f32.mrf.mxu0
    %v930 = vadd.f32 0.0, %v929
    %931 = vmatmul.f32.gmra.mxu0 %v336
    %v932 = vpop.f32.mrf.mxu0
    %v933 = vadd.f32 0.0, %v932
    %934 = vmatmul.f32.gmra.mxu0 %v339
    %v935 = vpop.f32.mrf.mxu0
    %v936 = vadd.f32 0.0, %v935
    %937 = vmatmul.f32.gmra.mxu0 %v342
    %v938 = vpop.f32.mrf.mxu0
    %v939 = vadd.f32 0.0, %v938
    %940 = vmatmul.f32.gmra.mxu0 %v345
    %v941 = vpop.f32.mrf.mxu0
    %v942 = vadd.f32 0.0, %v941
    %943 = vmatmul.f32.gmra.mxu0 %v348
    %v944 = vpop.f32.mrf.mxu0
    %v945 = vadd.f32 0.0, %v944
    %946 = vmatmul.f32.gmra.mxu0 %v351
    %v947 = vpop.f32.mrf.mxu0
    %v948 = vadd.f32 0.0, %v947
    %949 = vmatmul.f32.gmra.mxu0 %v354
    %v950 = vpop.f32.mrf.mxu0
    %v951 = vadd.f32 0.0, %v950
    %952 = vmatmul.f32.gmra.mxu0 %v357
    %v953 = vpop.f32.mrf.mxu0
    %v954 = vadd.f32 0.0, %v953
    %955 = vmatmul.f32.gmra.mxu0 %v360
    %v956 = vpop.f32.mrf.mxu0
    %v957 = vadd.f32 0.0, %v956
    %958 = vmatmul.f32.gmra.mxu0 %v363
    %v959 = vpop.f32.mrf.mxu0
    %v960 = vadd.f32 0.0, %v959
    %961 = vmatmul.f32.gmra.mxu0 %v366
    %v962 = vpop.f32.mrf.mxu0
    %v963 = vadd.f32 0.0, %v962
    %964 = vmatmul.f32.gmra.mxu0 %v369
    %v965 = vpop.f32.mrf.mxu0
    %v966 = vadd.f32 0.0, %v965
    %967 = vmatmul.f32.gmra.mxu0 %v372
    %v968 = vpop.f32.mrf.mxu0
    %v969 = vadd.f32 0.0, %v968
    %970 = vmatmul.f32.gmra.mxu0 %v375
    %v971 = vpop.f32.mrf.mxu0
    %v972 = vadd.f32 0.0, %v971
    %973 = vmatmul.f32.gmra.mxu0 %v378
    %v974 = vpop.f32.mrf.mxu0
    %v975 = vadd.f32 0.0, %v974
    %976 = vmatmul.f32.gmra.mxu0 %v381
    %v977 = vpop.f32.mrf.mxu0
    %v978 = vadd.f32 0.0, %v977
    %979 = vmatmul.f32.gmra.mxu0 %v384
    %v980 = vpop.f32.mrf.mxu0
    %v981 = vadd.f32 0.0, %v980
    %982 = vmatmul.f32.gmra.mxu0 %v387
    %v983 = vpop.f32.mrf.mxu0
    %v984 = vadd.f32 0.0, %v983
    %985 = vmatmul.f32.gmra.mxu0 %v390
    %v986 = vpop.f32.mrf.mxu0
    %v987 = vadd.f32 0.0, %v986
    %988 = vmatmul.f32.gmra.mxu0 %v393
    %v989 = vpop.f32.mrf.mxu0
    %v990 = vadd.f32 0.0, %v989
    %991 = vmatmul.f32.gmra.mxu0 %v396
    %v992 = vpop.f32.mrf.mxu0
    %v993 = vadd.f32 0.0, %v992
    %994 = vmatmul.f32.gmra.mxu0 %v399
    %v995 = vpop.f32.mrf.mxu0
    %v996 = vadd.f32 0.0, %v995
    %997 = vmatmul.f32.gmra.mxu0 %v402
    %v998 = vpop.f32.mrf.mxu0
    %v999 = vadd.f32 0.0, %v998
    %1000 = vmatmul.f32.gmra.mxu0 %v405
    %v1001 = vpop.f32.mrf.mxu0
    %v1002 = vadd.f32 0.0, %v1001
    %1003 = vmatmul.f32.gmra.mxu0 %v408
    %v1004 = vpop.f32.mrf.mxu0
    %v1005 = vadd.f32 0.0, %v1004
    %1006 = vmatmul.f32.gmra.mxu0 %v411
    %v1007 = vpop.f32.mrf.mxu0
    %v1008 = vadd.f32 0.0, %v1007
    %1009 = vmatmul.f32.gmra.mxu0 %v414
    %v1010 = vpop.f32.mrf.mxu0
    %v1011 = vadd.f32 0.0, %v1010
    %1012 = vmatmul.f32.gmra.mxu0 %v417
    %v1013 = vpop.f32.mrf.mxu0
    %v1014 = vadd.f32 0.0, %v1013
    %1015 = vmatmul.f32.gmra.mxu0 %v420
    %v1016 = vpop.f32.mrf.mxu0
    %v1017 = vadd.f32 0.0, %v1016
    %1018 = vmatmul.f32.gmra.mxu0 %v423
    %v1019 = vpop.f32.mrf.mxu0
    %v1020 = vadd.f32 0.0, %v1019
    %1021 = vmatmul.f32.gmra.mxu0 %v426
    %v1022 = vpop.f32.mrf.mxu0
    %v1023 = vadd.f32 0.0, %v1022
    %1024 = vmatmul.f32.gmra.mxu0 %v429
    %v1025 = vpop.f32.mrf.mxu0
    %v1026 = vadd.f32 0.0, %v1025
    %1027 = vmatmul.f32.gmra.mxu0 %v432
    %v1028 = vpop.f32.mrf.mxu0
    %v1029 = vadd.f32 0.0, %v1028
    %1030 = vmatmul.f32.gmra.mxu0 %v435
    %v1031 = vpop.f32.mrf.mxu0
    %v1032 = vadd.f32 0.0, %v1031
    %1033 = vmatmul.f32.gmra.mxu0 %v438
    %v1034 = vpop.f32.mrf.mxu0
    %v1035 = vadd.f32 0.0, %v1034
    %1036 = vmatmul.f32.gmra.mxu0 %v441
    %v1037 = vpop.f32.mrf.mxu0
    %v1038 = vadd.f32 0.0, %v1037
    %1039 = vmatmul.f32.gmra.mxu0 %v444
    %v1040 = vpop.f32.mrf.mxu0
    %v1041 = vadd.f32 0.0, %v1040
    %1042 = vmatmul.f32.gmra.mxu0 %v447
    %v1043 = vpop.f32.mrf.mxu0
    %v1044 = vadd.f32 0.0, %v1043
    %1045 = vmatmul.f32.gmra.mxu0 %v450
    %v1046 = vpop.f32.mrf.mxu0
    %v1047 = vadd.f32 0.0, %v1046
    %1048 = vmatmul.f32.gmra.mxu0 %v453
    %v1049 = vpop.f32.mrf.mxu0
    %v1050 = vadd.f32 0.0, %v1049
    %1051 = vmatmul.f32.gmra.mxu0 %v456
    %v1052 = vpop.f32.mrf.mxu0
    %v1053 = vadd.f32 0.0, %v1052
    %1054 = vmatmul.f32.gmra.mxu0 %v459
    %v1055 = vpop.f32.mrf.mxu0
    %v1056 = vadd.f32 0.0, %v1055
    %1057 = vmatmul.f32.gmra.mxu0 %v462
    %v1058 = vpop.f32.mrf.mxu0
    %v1059 = vadd.f32 0.0, %v1058
    %1060 = vmatmul.f32.gmra.mxu0 %v465
    %v1061 = vpop.f32.mrf.mxu0
    %v1062 = vadd.f32 0.0, %v1061
    %1063 = vmatmul.f32.gmra.mxu0 %v468
    %v1064 = vpop.f32.mrf.mxu0
    %v1065 = vadd.f32 0.0, %v1064
    %1066 = vmatmul.f32.gmra.mxu0 %v471
    %v1067 = vpop.f32.mrf.mxu0
    %v1068 = vadd.f32 0.0, %v1067
    %1069 = vmatmul.f32.gmra.mxu0 %v474
    %v1070 = vpop.f32.mrf.mxu0
    %v1071 = vadd.f32 0.0, %v1070
    %1072 = vmatmul.f32.gmra.mxu0 %v477
    %v1073 = vpop.f32.mrf.mxu0
    %v1074 = vadd.f32 0.0, %v1073
    %1075 = vmatmul.f32.gmra.mxu0 %v480
    %v1076 = vpop.f32.mrf.mxu0
    %v1077 = vadd.f32 0.0, %v1076
    %1078 = vmatmul.f32.gmra.mxu0 %v483
    %v1079 = vpop.f32.mrf.mxu0
    %v1080 = vadd.f32 0.0, %v1079
    %1081 = vmatmul.f32.gmra.mxu0 %v486
    %v1082 = vpop.f32.mrf.mxu0
    %v1083 = vadd.f32 0.0, %v1082
    %1084 = vmatmul.f32.gmra.mxu0 %v489
    %v1085 = vpop.f32.mrf.mxu0
    %v1086 = vadd.f32 0.0, %v1085
    %1087 = vmatmul.f32.gmra.mxu0 %v492
    %v1088 = vpop.f32.mrf.mxu0
    %v1089 = vadd.f32 0.0, %v1088
    %1090 = vmatmul.f32.gmra.mxu0 %v495
    %v1091 = vpop.f32.mrf.mxu0
    %v1092 = vadd.f32 0.0, %v1091
    %1093 = vmatmul.f32.gmra.mxu0 %v498
    %v1094 = vpop.f32.mrf.mxu0
    %v1095 = vadd.f32 0.0, %v1094
    %1096 = vmatmul.f32.gmra.mxu0 %v501
    %v1097 = vpop.f32.mrf.mxu0
    %v1098 = vadd.f32 0.0, %v1097
    %1099 = vmatmul.f32.gmra.mxu0 %v504
    %v1100 = vpop.f32.mrf.mxu0
    %v1101 = vadd.f32 0.0, %v1100
    %1102 = vmatmul.f32.gmra.mxu0 %v507
    %v1103 = vpop.f32.mrf.mxu0
    %v1104 = vadd.f32 0.0, %v1103
    %1105 = vmatmul.f32.gmra.mxu0 %v510
    %v1106 = vpop.f32.mrf.mxu0
    %v1107 = vadd.f32 0.0, %v1106
    %1108 = vmatmul.f32.gmra.mxu0 %v513
    %v1109 = vpop.f32.mrf.mxu0
    %v1110 = vadd.f32 0.0, %v1109
    %1111 = vmatmul.f32.gmra.mxu0 %v516
    %v1112 = vpop.f32.mrf.mxu0
    %v1113 = vadd.f32 0.0, %v1112
    %1114 = vmatmul.f32.gmra.mxu0 %v519
    %v1115 = vpop.f32.mrf.mxu0
    %v1116 = vadd.f32 0.0, %v1115
    %1117 = vmatmul.f32.gmra.mxu0 %v522
    %v1118 = vpop.f32.mrf.mxu0
    %v1119 = vadd.f32 0.0, %v1118
    %1120 = vmatmul.f32.gmra.mxu0 %v525
    %v1121 = vpop.f32.mrf.mxu0
    %v1122 = vadd.f32 0.0, %v1121
    %1123 = vmatmul.f32.gmra.mxu0 %v528
    %v1124 = vpop.f32.mrf.mxu0
    %v1125 = vadd.f32 0.0, %v1124
    %1126 = vmatmul.f32.gmra.mxu0 %v531
    %v1127 = vpop.f32.mrf.mxu0
    %v1128 = vadd.f32 0.0, %v1127
    %1129 = vmatmul.f32.gmra.mxu0 %v534
    %v1130 = vpop.f32.mrf.mxu0
    %v1131 = vadd.f32 0.0, %v1130
    %1132 = vmatmul.f32.gmra.mxu0 %v537
    %v1133 = vpop.f32.mrf.mxu0
    %v1134 = vadd.f32 0.0, %v1133
    %1135 = vmatmul.f32.gmra.mxu0 %v540
    %v1136 = vpop.f32.mrf.mxu0
    %v1137 = vadd.f32 0.0, %v1136
    %1138 = vmatmul.f32.gmra.mxu0 %v543
    %v1139 = vpop.f32.mrf.mxu0
    %v1140 = vadd.f32 0.0, %v1139
    %1141 = vmatmul.f32.gmra.mxu0 %v546
    %v1142 = vpop.f32.mrf.mxu0
    %v1143 = vadd.f32 0.0, %v1142
    %1144 = vmatmul.f32.gmra.mxu0 %v549
    %v1145 = vpop.f32.mrf.mxu0
    %v1146 = vadd.f32 0.0, %v1145
    %1147 = vmatmul.f32.gmra.mxu0 %v552
    %v1148 = vpop.f32.mrf.mxu0
    %v1149 = vadd.f32 0.0, %v1148
    %1150 = vmatmul.f32.gmra.mxu0 %v555
    %v1151 = vpop.f32.mrf.mxu0
    %v1152 = vadd.f32 0.0, %v1151
    %1153 = vmatmul.f32.gmra.mxu0 %v558
    %v1154 = vpop.f32.mrf.mxu0
    %v1155 = vadd.f32 0.0, %v1154
    %1156 = vmatmul.f32.gmra.mxu0 %v561
    %v1157 = vpop.f32.mrf.mxu0
    %v1158 = vadd.f32 0.0, %v1157
    %1159 = vmatmul.f32.gmra.mxu0 %v564
    %v1160 = vpop.f32.mrf.mxu0
    %v1161 = vadd.f32 0.0, %v1160
    %1162 = vmatmul.f32.gmra.mxu0 %v567
    %v1163 = vpop.f32.mrf.mxu0
    %v1164 = vadd.f32 0.0, %v1163
    %1165 = vmatmul.f32.gmra.mxu0 %v570
    %v1166 = vpop.f32.mrf.mxu0
    %v1167 = vadd.f32 0.0, %v1166
    %1168 = vmatmul.f32.gmra.mxu0 %v573
    %v1169 = vpop.f32.mrf.mxu0
    %v1170 = vadd.f32 0.0, %v1169
    %1171 = vmatmul.f32.gmra.mxu0 %v576
    %v1172 = vpop.f32.mrf.mxu0
    %v1173 = vadd.f32 0.0, %v1172
    %1174 = vmatmul.f32.gmra.mxu0 %v579
    %v1175 = vpop.f32.mrf.mxu0
    %v1176 = vadd.f32 0.0, %v1175
    %1177 = vmatmul.f32.gmra.mxu0 %v582
    %v1178 = vpop.f32.mrf.mxu0
    %v1179 = vadd.f32 0.0, %v1178
    %1180 = vmatmul.f32.gmra.mxu0 %v585
    %v1181 = vpop.f32.mrf.mxu0
    %v1182 = vadd.f32 0.0, %v1181
    %1183 = vmatmul.f32.gmra.mxu0 %v588
    %v1184 = vpop.f32.mrf.mxu0
    %v1185 = vadd.f32 0.0, %v1184
    %1186 = vmatmul.f32.gmra.mxu0 %v591
    %v1187 = vpop.f32.mrf.mxu0
    %v1188 = vadd.f32 0.0, %v1187
    %1189 = vmatmul.f32.gmra.mxu0 %v594
    %v1190 = vpop.f32.mrf.mxu0
    %v1191 = vadd.f32 0.0, %v1190
    %1192 = vmatmul.f32.gmra.mxu0 %v597
    %v1193 = vpop.f32.mrf.mxu0
    %v1194 = vadd.f32 0.0, %v1193
    %1195 = vmatmul.f32.gmra.mxu0 %v600
    %v1196 = vpop.f32.mrf.mxu0
    %v1197 = vadd.f32 0.0, %v1196
    %1198 = vmatmul.f32.gmra.mxu0 %v603
    %v1199 = vpop.f32.mrf.mxu0
    %v1200 = vadd.f32 0.0, %v1199
    %1201 = vmatmul.f32.gmra.mxu0 %v606
    %v1202 = vpop.f32.mrf.mxu0
    %v1203 = vadd.f32 0.0, %v1202
    %1204 = vmatmul.f32.gmra.mxu0 %v609
    %v1205 = vpop.f32.mrf.mxu0
    %v1206 = vadd.f32 0.0, %v1205
    %1207 = vmatmul.f32.gmra.mxu0 %v612
    %v1208 = vpop.f32.mrf.mxu0
    %v1209 = vadd.f32 0.0, %v1208
    %1210 = vmatmul.f32.gmra.mxu0 %v615
    %v1211 = vpop.f32.mrf.mxu0
    %v1212 = vadd.f32 0.0, %v1211
    %1213 = vmatmul.f32.gmra.mxu0 %v618
    %v1214 = vpop.f32.mrf.mxu0
    %v1215 = vadd.f32 0.0, %v1214
    %1216 = vmatmul.f32.gmra.mxu0 %v621
    %v1217 = vpop.f32.mrf.mxu0
    %v1218 = vadd.f32 0.0, %v1217
    %1219 = vmatmul.f32.gmra.mxu0 %v624
    %v1220 = vpop.f32.mrf.mxu0
    %v1221 = vadd.f32 0.0, %v1220
    %1222 = vmatmul.f32.gmra.mxu0 %v627
    %v1223 = vpop.f32.mrf.mxu0
    %v1224 = vadd.f32 0.0, %v1223
    %1225 = vmatmul.f32.gmra.mxu0 %v630
    %v1226 = vpop.f32.mrf.mxu0
    %v1227 = vadd.f32 0.0, %v1226
    %1228 = vmatmul.f32.gmra.mxu0 %v633
    %v1229 = vpop.f32.mrf.mxu0
    %v1230 = vadd.f32 0.0, %v1229
    %1231 = vmatmul.f32.gmra.mxu0 %v636
    %v1232 = vpop.f32.mrf.mxu0
    %v1233 = vadd.f32 0.0, %v1232
    %1234 = vmatmul.f32.gmra.mxu0 %v639
    %v1235 = vpop.f32.mrf.mxu0
    %v1236 = vadd.f32 0.0, %v1235
    %1237 = vmatmul.f32.gmra.mxu0 %v642
    %v1238 = vpop.f32.mrf.mxu0
    %v1239 = vadd.f32 0.0, %v1238
    %1240 = vmatmul.f32.gmra.mxu0 %v645
    %v1241 = vpop.f32.mrf.mxu0
    %v1242 = vadd.f32 0.0, %v1241
    %1243 = vmatmul.f32.gmra.mxu0 %v648
    %v1244 = vpop.f32.mrf.mxu0
    %v1245 = vadd.f32 0.0, %v1244
    %1246 = vmatmul.f32.gmra.mxu0 %v651
    %v1247 = vpop.f32.mrf.mxu0
    %v1248 = vadd.f32 0.0, %v1247
    %1249 = vmatmul.f32.gmra.mxu0 %v654
    %v1250 = vpop.f32.mrf.mxu0
    %v1251 = vadd.f32 0.0, %v1250
    %1252 = vmatmul.f32.gmra.mxu0 %v657
    %v1253 = vpop.f32.mrf.mxu0
    %v1254 = vadd.f32 0.0, %v1253
    %1255 = vmatmul.f32.gmra.mxu0 %v660
    %v1256 = vpop.f32.mrf.mxu0
    %v1257 = vadd.f32 0.0, %v1256
    %1258 = vmatmul.f32.gmra.mxu0 %v663
    %v1259 = vpop.f32.mrf.mxu0
    %v1260 = vadd.f32 0.0, %v1259
    %1261 = vmatmul.f32.gmra.mxu0 %v666
    %v1262 = vpop.f32.mrf.mxu0
    %v1263 = vadd.f32 0.0, %v1262
    %1264 = vmatmul.f32.gmra.mxu0 %v669
    %v1265 = vpop.f32.mrf.mxu0
    %v1266 = vadd.f32 0.0, %v1265
    %1267 = vmatmul.f32.gmra.mxu0 %v672
    %v1268 = vpop.f32.mrf.mxu0
    %v1269 = vadd.f32 0.0, %v1268
    %1270 = vmatmul.f32.gmra.mxu0 %v675
    %v1271 = vpop.f32.mrf.mxu0
    %v1272 = vadd.f32 0.0, %v1271
    %1273 = vmatmul.f32.gmra.mxu0 %v678
    %v1274 = vpop.f32.mrf.mxu0
    %v1275 = vadd.f32 0.0, %v1274
    %1276 = vmatmul.f32.gmra.mxu0 %v681
    %v1277 = vpop.f32.mrf.mxu0
    %v1278 = vadd.f32 0.0, %v1277
    %1279 = vmatmul.f32.gmra.mxu0 %v684
    %v1280 = vpop.f32.mrf.mxu0
    %v1281 = vadd.f32 0.0, %v1280
    %1282 = vmatmul.f32.gmra.mxu0 %v687
    %v1283 = vpop.f32.mrf.mxu0
    %v1284 = vadd.f32 0.0, %v1283
    %1285 = vmatmul.f32.gmra.mxu0 %v690
    %v1286 = vpop.f32.mrf.mxu0
    %v1287 = vadd.f32 0.0, %v1286
    %1288 = vmatmul.f32.gmra.mxu0 %v693
    %v1289 = vpop.f32.mrf.mxu0
    %v1290 = vadd.f32 0.0, %v1289
    %1291 = vmatmul.f32.gmra.mxu0 %v696
    %v1292 = vpop.f32.mrf.mxu0
    %v1293 = vadd.f32 0.0, %v1292
    %1294 = vmatmul.f32.gmra.mxu0 %v699
    %v1295 = vpop.f32.mrf.mxu0
    %v1296 = vadd.f32 0.0, %v1295
    %1297 = vmatmul.f32.gmra.mxu0 %v702
    %v1298 = vpop.f32.mrf.mxu0
    %v1299 = vadd.f32 0.0, %v1298
    %1300 = vmatmul.f32.gmra.mxu0 %v705
    %v1301 = vpop.f32.mrf.mxu0
    %v1302 = vadd.f32 0.0, %v1301
    %1303 = vmatmul.f32.gmra.mxu0 %v708
    %v1304 = vpop.f32.mrf.mxu0
    %v1305 = vadd.f32 0.0, %v1304
    %1306 = vmatmul.f32.gmra.mxu0 %v711
    %v1307 = vpop.f32.mrf.mxu0
    %v1308 = vadd.f32 0.0, %v1307
    %1309 = vmatmul.f32.gmra.mxu0 %v714
    %v1310 = vpop.f32.mrf.mxu0
    %v1311 = vadd.f32 0.0, %v1310
    %1312 = vmatmul.f32.gmra.mxu0 %v717
    %v1313 = vpop.f32.mrf.mxu0
    %v1314 = vadd.f32 0.0, %v1313
    %1315 = vmatmul.f32.gmra.mxu0 %v720
    %v1316 = vpop.f32.mrf.mxu0
    %v1317 = vadd.f32 0.0, %v1316
    %1318 = vmatmul.f32.gmra.mxu0 %v723
    %v1319 = vpop.f32.mrf.mxu0
    %v1320 = vadd.f32 0.0, %v1319
    %1321 = vmatmul.f32.gmra.mxu0 %v726
    %v1322 = vpop.f32.mrf.mxu0
    %v1323 = vadd.f32 0.0, %v1322
    %1324 = vmatmul.f32.gmra.mxu0 %v729
    %v1325 = vpop.f32.mrf.mxu0
    %v1326 = vadd.f32 0.0, %v1325
    %1327 = vmatmul.f32.gmra.mxu0 %v732
    %v1328 = vpop.f32.mrf.mxu0
    %v1329 = vadd.f32 0.0, %v1328
    %1330 = vmatmul.f32.gmra.mxu0 %v735
    %v1331 = vpop.f32.mrf.mxu0
    %v1332 = vadd.f32 0.0, %v1331
    %1333 = vmatmul.f32.gmra.mxu0 %v738
    %v1334 = vpop.f32.mrf.mxu0
    %v1335 = vadd.f32 0.0, %v1334
    %1336 = vmatmul.f32.gmra.mxu0 %v741
    %v1337 = vpop.f32.mrf.mxu0
    %v1338 = vadd.f32 0.0, %v1337
    %1339 = vmatmul.f32.gmra.mxu0 %v744
    %v1340 = vpop.f32.mrf.mxu0
    %v1341 = vadd.f32 0.0, %v1340
    %1342 = vmatmul.f32.gmra.mxu0 %v747
    %v1343 = vpop.f32.mrf.mxu0
    %v1344 = vadd.f32 0.0, %v1343
    %1345 = vmatmul.f32.gmra.mxu0 %v750
    %v1346 = vpop.f32.mrf.mxu0
    %v1347 = vadd.f32 0.0, %v1346
    %1348 = vmatmul.f32.gmra.mxu0 %v753
    %v1349 = vpop.f32.mrf.mxu0
    %v1350 = vadd.f32 0.0, %v1349
    %1351 = vmatmul.f32.gmra.mxu0 %v756
    %v1352 = vpop.f32.mrf.mxu0
    %v1353 = vadd.f32 0.0, %v1352
    %1354 = vmatmul.f32.gmra.mxu0 %v759
    %v1355 = vpop.f32.mrf.mxu0
    %v1356 = vadd.f32 0.0, %v1355
    %1357 = vmatmul.f32.gmra.mxu0 %v762
    %v1358 = vpop.f32.mrf.mxu0
    %v1359 = vadd.f32 0.0, %v1358
    %1360 = vmatmul.f32.gmra.mxu0 %v765
    %v1361 = vpop.f32.mrf.mxu0
    %v1362 = vadd.f32 0.0, %v1361
    %1363 = vmatmul.f32.gmra.mxu0 %v768
    %v1364 = vpop.f32.mrf.mxu0
    %v1365 = vadd.f32 0.0, %v1364
    %1366 = vmatmul.f32.gmra.mxu0 %v771
    %v1367 = vpop.f32.mrf.mxu0
    %v1368 = vadd.f32 0.0, %v1367
    %1369 = vmatmul.f32.gmra.mxu0 %v774
    %v1370 = vpop.f32.mrf.mxu0
    %v1371 = vadd.f32 0.0, %v1370
    %1372 = vmatmul.f32.gmra.mxu0 %v777
    %v1373 = vpop.f32.mrf.mxu0
    %v1374 = vadd.f32 0.0, %v1373
    %1375 = vmatmul.f32.gmra.mxu0 %v780
    %v1376 = vpop.f32.mrf.mxu0
    %v1377 = vadd.f32 0.0, %v1376
    %1378 = vmatmul.f32.gmra.mxu0 %v783
    %v1379 = vpop.f32.mrf.mxu0
    %v1380 = vadd.f32 0.0, %v1379
    %1381 = vmatmul.f32.gmra.mxu0 %v786
    %v1382 = vpop.f32.mrf.mxu0
    %v1383 = vadd.f32 0.0, %v1382
    %1384 = vmatmul.f32.gmra.mxu0 %v789
    %v1385 = vpop.f32.mrf.mxu0
    %v1386 = vadd.f32 0.0, %v1385
    %1387 = vmatmul.f32.gmra.mxu0 %v792
    %v1388 = vpop.f32.mrf.mxu0
    %v1389 = vadd.f32 0.0, %v1388
    %1390 = vmatmul.f32.gmra.mxu0 %v795
    %v1391 = vpop.f32.mrf.mxu0
    %v1392 = vadd.f32 0.0, %v1391
    %1393 = vmatmul.f32.gmra.mxu0 %v798
    %v1394 = vpop.f32.mrf.mxu0
    %v1395 = vadd.f32 0.0, %v1394
    %1396 = vmatmul.f32.gmra.mxu0 %v801
    %v1397 = vpop.f32.mrf.mxu0
    %v1398 = vadd.f32 0.0, %v1397
    %1399 = vmatmul.f32.gmra.mxu0 %v804
    %v1400 = vpop.f32.mrf.mxu0
    %v1401 = vadd.f32 0.0, %v1400
    %1402 = vmatmul.f32.gmra.mxu0 %v807
    %v1403 = vpop.f32.mrf.mxu0
    %v1404 = vadd.f32 0.0, %v1403
    %1405 = vmatmul.f32.gmra.mxu0 %v810
    %v1406 = vpop.f32.mrf.mxu0
    %v1407 = vadd.f32 0.0, %v1406
    %1408 = vmatmul.f32.gmra.mxu0 %v813
    %v1409 = vpop.f32.mrf.mxu0
    %v1410 = vadd.f32 0.0, %v1409
    %1411 = vmatmul.f32.gmra.mxu0 %v816
    %v1412 = vpop.f32.mrf.mxu0
    %v1413 = vadd.f32 0.0, %v1412
    %1414 = vdwg.mxu0
    %v1415 = vmax.f32 %v840, %v984
    %v1416 = vmax.f32 %v843, %v987
    %v1417 = vmax.f32 %v846, %v990
    %v1418 = vmax.f32 %v849, %v993
    %v1419 = vmax.f32 %v852, %v996
    %v1420 = vmax.f32 %v855, %v999
    %v1421 = vmax.f32 %v858, %v1002
    %v1422 = vmax.f32 %v861, %v1005
    %v1423 = vmax.f32 %v864, %v1008
    %v1424 = vmax.f32 %v867, %v1011
    %v1425 = vmax.f32 %v870, %v1014
    %v1426 = vmax.f32 %v873, %v1017
    %v1427 = vmax.f32 %v876, %v1020
    %v1428 = vmax.f32 %v879, %v1023
    %v1429 = vmax.f32 %v882, %v1026
    %v1430 = vmax.f32 %v885, %v1029
    %v1431 = vmax.f32 %v888, %v1032
    %v1432 = vmax.f32 %v891, %v1035
    %v1433 = vmax.f32 %v894, %v1038
    %v1434 = vmax.f32 %v897, %v1041
    %v1435 = vmax.f32 %v900, %v1044
    %v1436 = vmax.f32 %v903, %v1047
    %v1437 = vmax.f32 %v906, %v1050
    %v1438 = vmax.f32 %v909, %v1053
    %v1439 = vmax.f32 %v912, %v1056
    %v1440 = vmax.f32 %v915, %v1059
    %v1441 = vmax.f32 %v918, %v1062
    %v1442 = vmax.f32 %v921, %v1065
    %v1443 = vmax.f32 %v924, %v1068
    %v1444 = vmax.f32 %v927, %v1071
    %v1445 = vmax.f32 %v930, %v1074
    %v1446 = vmax.f32 %v933, %v1077
    %v1447 = vmax.f32 %v936, %v1080
    %v1448 = vmax.f32 %v939, %v1083
    %v1449 = vmax.f32 %v942, %v1086
    %v1450 = vmax.f32 %v945, %v1089
    %v1451 = vmax.f32 %v948, %v1092
    %v1452 = vmax.f32 %v951, %v1095
    %v1453 = vmax.f32 %v954, %v1098
    %v1454 = vmax.f32 %v957, %v1101
    %v1455 = vmax.f32 %v960, %v1104
    %v1456 = vmax.f32 %v963, %v1107
    %v1457 = vmax.f32 %v966, %v1110
    %v1458 = vmax.f32 %v969, %v1113
    %v1459 = vmax.f32 %v972, %v1116
    %v1460 = vmax.f32 %v975, %v1119
    %v1461 = vmax.f32 %v978, %v1122
    %v1462 = vmax.f32 %v981, %v1125
    %v1463 = vmax.f32 %v1128, %v1272
    %v1464 = vmax.f32 %v1131, %v1275
    %v1465 = vmax.f32 %v1134, %v1278
    %v1466 = vmax.f32 %v1137, %v1281
    %v1467 = vmax.f32 %v1140, %v1284
    %v1468 = vmax.f32 %v1143, %v1287
    %v1469 = vmax.f32 %v1146, %v1290
    %v1470 = vmax.f32 %v1149, %v1293
    %v1471 = vmax.f32 %v1152, %v1296
    %v1472 = vmax.f32 %v1155, %v1299
    %v1473 = vmax.f32 %v1158, %v1302
    %v1474 = vmax.f32 %v1161, %v1305
    %v1475 = vmax.f32 %v1164, %v1308
    %v1476 = vmax.f32 %v1167, %v1311
    %v1477 = vmax.f32 %v1170, %v1314
    %v1478 = vmax.f32 %v1173, %v1317
    %v1479 = vmax.f32 %v1176, %v1320
    %v1480 = vmax.f32 %v1179, %v1323
    %v1481 = vmax.f32 %v1182, %v1326
    %v1482 = vmax.f32 %v1185, %v1329
    %v1483 = vmax.f32 %v1188, %v1332
    %v1484 = vmax.f32 %v1191, %v1335
    %v1485 = vmax.f32 %v1194, %v1338
    %v1486 = vmax.f32 %v1197, %v1341
    %v1487 = vmax.f32 %v1200, %v1344
    %v1488 = vmax.f32 %v1203, %v1347
    %v1489 = vmax.f32 %v1206, %v1350
    %v1490 = vmax.f32 %v1209, %v1353
    %v1491 = vmax.f32 %v1212, %v1356
    %v1492 = vmax.f32 %v1215, %v1359
    %v1493 = vmax.f32 %v1218, %v1362
    %v1494 = vmax.f32 %v1221, %v1365
    %v1495 = vmax.f32 %v1224, %v1368
    %v1496 = vmax.f32 %v1227, %v1371
    %v1497 = vmax.f32 %v1230, %v1374
    %v1498 = vmax.f32 %v1233, %v1377
    %v1499 = vmax.f32 %v1236, %v1380
    %v1500 = vmax.f32 %v1239, %v1383
    %v1501 = vmax.f32 %v1242, %v1386
    %v1502 = vmax.f32 %v1245, %v1389
    %v1503 = vmax.f32 %v1248, %v1392
    %v1504 = vmax.f32 %v1251, %v1395
    %v1505 = vmax.f32 %v1254, %v1398
    %v1506 = vmax.f32 %v1257, %v1401
    %v1507 = vmax.f32 %v1260, %v1404
    %v1508 = vmax.f32 %v1263, %v1407
    %v1509 = vmax.f32 %v1266, %v1410
    %v1510 = vmax.f32 %v1269, %v1413
    %v1511 = vmax.f32 %v1415, %v1463
    %v1512 = vmax.f32 %v1416, %v1464
    %v1513 = vmax.f32 %v1417, %v1465
    %v1514 = vmax.f32 %v1418, %v1466
    %v1515 = vmax.f32 %v1419, %v1467
    %v1516 = vmax.f32 %v1420, %v1468
    %v1517 = vmax.f32 %v1421, %v1469
    %v1518 = vmax.f32 %v1422, %v1470
    %v1519 = vmax.f32 %v1423, %v1471
    %v1520 = vmax.f32 %v1424, %v1472
    %v1521 = vmax.f32 %v1425, %v1473
    %v1522 = vmax.f32 %v1426, %v1474
    %v1523 = vmax.f32 %v1427, %v1475
    %v1524 = vmax.f32 %v1428, %v1476
    %v1525 = vmax.f32 %v1429, %v1477
    %v1526 = vmax.f32 %v1430, %v1478
    %v1527 = vmax.f32 %v1431, %v1479
    %v1528 = vmax.f32 %v1432, %v1480
    %v1529 = vmax.f32 %v1433, %v1481
    %v1530 = vmax.f32 %v1434, %v1482
    %v1531 = vmax.f32 %v1435, %v1483
    %v1532 = vmax.f32 %v1436, %v1484
    %v1533 = vmax.f32 %v1437, %v1485
    %v1534 = vmax.f32 %v1438, %v1486
    %v1535 = vmax.f32 %v1439, %v1487
    %v1536 = vmax.f32 %v1440, %v1488
    %v1537 = vmax.f32 %v1441, %v1489
    %v1538 = vmax.f32 %v1442, %v1490
    %v1539 = vmax.f32 %v1443, %v1491
    %v1540 = vmax.f32 %v1444, %v1492
    %v1541 = vmax.f32 %v1445, %v1493
    %v1542 = vmax.f32 %v1446, %v1494
    %v1543 = vmax.f32 %v1447, %v1495
    %v1544 = vmax.f32 %v1448, %v1496
    %v1545 = vmax.f32 %v1449, %v1497
    %v1546 = vmax.f32 %v1450, %v1498
    %v1547 = vmax.f32 %v1451, %v1499
    %v1548 = vmax.f32 %v1452, %v1500
    %v1549 = vmax.f32 %v1453, %v1501
    %v1550 = vmax.f32 %v1454, %v1502
    %v1551 = vmax.f32 %v1455, %v1503
    %v1552 = vmax.f32 %v1456, %v1504
    %v1553 = vmax.f32 %v1457, %v1505
    %v1554 = vmax.f32 %v1458, %v1506
    %v1555 = vmax.f32 %v1459, %v1507
    %v1556 = vmax.f32 %v1460, %v1508
    %v1557 = vmax.f32 %v1461, %v1509
    %v1558 = vmax.f32 %v1462, %v1510
    %v1559 = vld [vmem:[%s2] sm:$0x1]
    %v1561 = vperm.slane %v1559, 0
    %v1563 = vadd.f32 %v1511, %v1561
    %v1564 = vadd.f32 %v1512, %v1561
    %v1565 = vadd.f32 %v1513, %v1561
    %v1566 = vadd.f32 %v1514, %v1561
    %v1567 = vadd.f32 %v1515, %v1561
    %v1568 = vadd.f32 %v1516, %v1561
    %v1569 = vadd.f32 %v1517, %v1561
    %v1570 = vadd.f32 %v1518, %v1561
    %v1571 = vadd.f32 %v1519, %v1561
    %v1572 = vadd.f32 %v1520, %v1561
    %v1573 = vadd.f32 %v1521, %v1561
    %v1574 = vadd.f32 %v1522, %v1561
    %v1575 = vadd.f32 %v1523, %v1561
    %v1576 = vadd.f32 %v1524, %v1561
    %v1577 = vadd.f32 %v1525, %v1561
    %v1578 = vadd.f32 %v1526, %v1561
    %v1579 = vadd.f32 %v1527, %v1561
    %v1580 = vadd.f32 %v1528, %v1561
    %v1581 = vadd.f32 %v1529, %v1561
    %v1582 = vadd.f32 %v1530, %v1561
    %v1583 = vadd.f32 %v1531, %v1561
    %v1584 = vadd.f32 %v1532, %v1561
    %v1585 = vadd.f32 %v1533, %v1561
    %v1586 = vadd.f32 %v1534, %v1561
    %v1587 = vadd.f32 %v1535, %v1561
    %v1588 = vadd.f32 %v1536, %v1561
    %v1589 = vadd.f32 %v1537, %v1561
    %v1590 = vadd.f32 %v1538, %v1561
    %v1591 = vadd.f32 %v1539, %v1561
    %v1592 = vadd.f32 %v1540, %v1561
    %v1593 = vadd.f32 %v1541, %v1561
    %v1594 = vadd.f32 %v1542, %v1561
    %v1595 = vadd.f32 %v1543, %v1561
    %v1596 = vadd.f32 %v1544, %v1561
    %v1597 = vadd.f32 %v1545, %v1561
    %v1598 = vadd.f32 %v1546, %v1561
    %v1599 = vadd.f32 %v1547, %v1561
    %v1600 = vadd.f32 %v1548, %v1561
    %v1601 = vadd.f32 %v1549, %v1561
    %v1602 = vadd.f32 %v1550, %v1561
    %v1603 = vadd.f32 %v1551, %v1561
    %v1604 = vadd.f32 %v1552, %v1561
    %v1605 = vadd.f32 %v1553, %v1561
    %v1606 = vadd.f32 %v1554, %v1561
    %v1607 = vadd.f32 %v1555, %v1561
    %v1608 = vadd.f32 %v1556, %v1561
    %v1609 = vadd.f32 %v1557, %v1561
    %v1610 = vadd.f32 %v1558, %v1561
    %v1611 = vmax.f32 %v1563, 0.0
    %v1612 = vmax.f32 %v1564, 0.0
    %v1613 = vmax.f32 %v1565, 0.0
    %v1614 = vmax.f32 %v1566, 0.0
    %v1615 = vmax.f32 %v1567, 0.0
    %v1616 = vmax.f32 %v1568, 0.0
    %v1617 = vmax.f32 %v1569, 0.0
    %v1618 = vmax.f32 %v1570, 0.0
    %v1619 = vmax.f32 %v1571, 0.0
    %v1620 = vmax.f32 %v1572, 0.0
    %v1621 = vmax.f32 %v1573, 0.0
    %v1622 = vmax.f32 %v1574, 0.0
    %v1623 = vmax.f32 %v1575, 0.0
    %v1624 = vmax.f32 %v1576, 0.0
    %v1625 = vmax.f32 %v1577, 0.0
    %v1626 = vmax.f32 %v1578, 0.0
    %v1627 = vmax.f32 %v1579, 0.0
    %v1628 = vmax.f32 %v1580, 0.0
    %v1629 = vmax.f32 %v1581, 0.0
    %v1630 = vmax.f32 %v1582, 0.0
    %v1631 = vmax.f32 %v1583, 0.0
    %v1632 = vmax.f32 %v1584, 0.0
    %v1633 = vmax.f32 %v1585, 0.0
    %v1634 = vmax.f32 %v1586, 0.0
    %v1635 = vmax.f32 %v1587, 0.0
    %v1636 = vmax.f32 %v1588, 0.0
    %v1637 = vmax.f32 %v1589, 0.0
    %v1638 = vmax.f32 %v1590, 0.0
    %v1639 = vmax.f32 %v1591, 0.0
    %v1640 = vmax.f32 %v1592, 0.0
    %v1641 = vmax.f32 %v1593, 0.0
    %v1642 = vmax.f32 %v1594, 0.0
    %v1643 = vmax.f32 %v1595, 0.0
    %v1644 = vmax.f32 %v1596, 0.0
    %v1645 = vmax.f32 %v1597, 0.0
    %v1646 = vmax.f32 %v1598, 0.0
    %v1647 = vmax.f32 %v1599, 0.0
    %v1648 = vmax.f32 %v1600, 0.0
    %v1649 = vmax.f32 %v1601, 0.0
    %v1650 = vmax.f32 %v1602, 0.0
    %v1651 = vmax.f32 %v1603, 0.0
    %v1652 = vmax.f32 %v1604, 0.0
    %v1653 = vmax.f32 %v1605, 0.0
    %v1654 = vmax.f32 %v1606, 0.0
    %v1655 = vmax.f32 %v1607, 0.0
    %v1656 = vmax.f32 %v1608, 0.0
    %v1657 = vmax.f32 %v1609, 0.0
    %v1658 = vmax.f32 %v1610, 0.0
    %v1659 = vld [vmem:[%s5] sm:$0xff]
    %v1660 = vld [vmem:[%s5 + $0x8] sm:$0xff]
    %v1661 = vld [vmem:[%s5 + $0x10] sm:$0xff]
    %v1662 = vld [vmem:[%s5 + $0x18] sm:$0xff]
    %v1663 = vld [vmem:[%s5 + $0x20] sm:$0xff]
    %v1664 = vld [vmem:[%s5 + $0x28] sm:$0xff]
    %v1665 = vld [vmem:[%s5 + $0x30] sm:$0xff]
    %v1666 = vld [vmem:[%s5 + $0x38] sm:$0xff]
    %v1667 = vld [vmem:[%s5 + $0x40] sm:$0xff]
    %v1668 = vld [vmem:[%s5 + $0x48] sm:$0xff]
    %v1669 = vld [vmem:[%s5 + $0x50] sm:$0xff]
    %v1670 = vld [vmem:[%s5 + $0x58] sm:$0xff]
    %v1671 = vld [vmem:[%s5 + $0x60] sm:$0xff]
    %v1672 = vld [vmem:[%s5 + $0x68] sm:$0xff]
    %v1673 = vld [vmem:[%s5 + $0x70] sm:$0xff]
    %v1674 = vld [vmem:[%s5 + $0x78] sm:$0xff]
    %v1675 = vld [vmem:[%s5 + $0x80] sm:$0xff]
    %v1676 = vld [vmem:[%s5 + $0x88] sm:$0xff]
    %v1677 = vld [vmem:[%s5 + $0x90] sm:$0xff]
    %v1678 = vld [vmem:[%s5 + $0x98] sm:$0xff]
    %v1679 = vld [vmem:[%s5 + $0xa0] sm:$0xff]
    %v1680 = vld [vmem:[%s5 + $0xa8] sm:$0xff]
    %v1681 = vld [vmem:[%s5 + $0xb0] sm:$0xff]
    %v1682 = vld [vmem:[%s5 + $0xb8] sm:$0xff]
    %v1683 = vld [vmem:[%s5 + $0xc0] sm:$0xff]
    %v1684 = vld [vmem:[%s5 + $0xc8] sm:$0xff]
    %v1685 = vld [vmem:[%s5 + $0xd0] sm:$0xff]
    %v1686 = vld [vmem:[%s5 + $0xd8] sm:$0xff]
    %v1687 = vld [vmem:[%s5 + $0xe0] sm:$0xff]
    %v1688 = vld [vmem:[%s5 + $0xe8] sm:$0xff]
    %v1689 = vld [vmem:[%s5 + $0xf0] sm:$0xff]
    %v1690 = vld [vmem:[%s5 + $0xf8] sm:$0xff]
    %v1691 = vld [vmem:[%s5 + $0x100] sm:$0xff]
    %v1692 = vld [vmem:[%s5 + $0x108] sm:$0xff]
    %v1693 = vld [vmem:[%s5 + $0x110] sm:$0xff]
    %v1694 = vld [vmem:[%s5 + $0x118] sm:$0xff]
    %v1695 = vld [vmem:[%s5 + $0x120] sm:$0xff]
    %v1696 = vld [vmem:[%s5 + $0x128] sm:$0xff]
    %v1697 = vld [vmem:[%s5 + $0x130] sm:$0xff]
    %v1698 = vld [vmem:[%s5 + $0x138] sm:$0xff]
    %1699 = vmatpush.msra.mxu0 %v1626
    %1700 = vmatpush.msra.mxu0 %v1625
    %1701 = vmatpush.msra.mxu0 %v1624
    %1702 = vmatpush.msra.mxu0 %v1623
    %1703 = vmatpush.msra.mxu0 %v1622
    %1704 = vmatpush.msra.mxu0 %v1621
    %1705 = vmatpush.msra.mxu0 %v1620
    %1706 = vmatpush.msra.mxu0 %v1619
    %1707 = vmatpush.msra.mxu0 %v1618
    %1708 = vmatpush.msra.mxu0 %v1617
    %1709 = vmatpush.msra.mxu0 %v1616
    %1710 = vmatpush.msra.mxu0 %v1615
    %1711 = vmatpush.msra.mxu0 %v1614
    %1712 = vmatpush.msra.mxu0 %v1613
    %1713 = vmatpush.msra.mxu0 %v1612
    %1714 = vmatpush.msra.mxu0 %v1611
    %1715 = vmatmul.f32.gmra.mxu0 %v1659
    %v1716 = vpop.f32.mrf.mxu0
    %v1717 = vadd.f32 0.0, %v1716
    %1718 = vmatmul.f32.gmra.mxu0 %v1660
    %v1719 = vpop.f32.mrf.mxu0
    %v1720 = vadd.f32 0.0, %v1719
    %1721 = vmatmul.f32.gmra.mxu0 %v1661
    %v1722 = vpop.f32.mrf.mxu0
    %v1723 = vadd.f32 0.0, %v1722
    %1724 = vmatmul.f32.gmra.mxu0 %v1662
    %v1725 = vpop.f32.mrf.mxu0
    %v1726 = vadd.f32 0.0, %v1725
    %1727 = vmatmul.f32.gmra.mxu0 %v1663
    %v1728 = vpop.f32.mrf.mxu0
    %v1729 = vadd.f32 0.0, %v1728
    %1730 = vmatmul.f32.gmra.mxu0 %v1664
    %v1731 = vpop.f32.mrf.mxu0
    %v1732 = vadd.f32 0.0, %v1731
    %1733 = vmatmul.f32.gmra.mxu0 %v1665
    %v1734 = vpop.f32.mrf.mxu0
    %v1735 = vadd.f32 0.0, %v1734
    %1736 = vmatmul.f32.gmra.mxu0 %v1666
    %v1737 = vpop.f32.mrf.mxu0
    %v1738 = vadd.f32 0.0, %v1737
    %1739 = vmatmul.f32.gmra.mxu0 %v1667
    %v1740 = vpop.f32.mrf.mxu0
    %v1741 = vadd.f32 0.0, %v1740
    %1742 = vmatmul.f32.gmra.mxu0 %v1668
    %v1743 = vpop.f32.mrf.mxu0
    %v1744 = vadd.f32 0.0, %v1743
    %1745 = vmatmul.f32.gmra.mxu0 %v1669
    %v1746 = vpop.f32.mrf.mxu0
    %v1747 = vadd.f32 0.0, %v1746
    %1748 = vmatmul.f32.gmra.mxu0 %v1670
    %v1749 = vpop.f32.mrf.mxu0
    %v1750 = vadd.f32 0.0, %v1749
    %1751 = vmatmul.f32.gmra.mxu0 %v1671
    %v1752 = vpop.f32.mrf.mxu0
    %v1753 = vadd.f32 0.0, %v1752
    %1754 = vmatmul.f32.gmra.mxu0 %v1672
    %v1755 = vpop.f32.mrf.mxu0
    %v1756 = vadd.f32 0.0, %v1755
    %1757 = vmatmul.f32.gmra.mxu0 %v1673
    %v1758 = vpop.f32.mrf.mxu0
    %v1759 = vadd.f32 0.0, %v1758
    %1760 = vmatmul.f32.gmra.mxu0 %v1674
    %v1761 = vpop.f32.mrf.mxu0
    %v1762 = vadd.f32 0.0, %v1761
    %1763 = vmatmul.f32.gmra.mxu0 %v1675
    %v1764 = vpop.f32.mrf.mxu0
    %v1765 = vadd.f32 0.0, %v1764
    %1766 = vmatmul.f32.gmra.mxu0 %v1676
    %v1767 = vpop.f32.mrf.mxu0
    %v1768 = vadd.f32 0.0, %v1767
    %1769 = vmatmul.f32.gmra.mxu0 %v1677
    %v1770 = vpop.f32.mrf.mxu0
    %v1771 = vadd.f32 0.0, %v1770
    %1772 = vmatmul.f32.gmra.mxu0 %v1678
    %v1773 = vpop.f32.mrf.mxu0
    %v1774 = vadd.f32 0.0, %v1773
    %1775 = vmatmul.f32.gmra.mxu0 %v1679
    %v1776 = vpop.f32.mrf.mxu0
    %v1777 = vadd.f32 0.0, %v1776
    %1778 = vmatmul.f32.gmra.mxu0 %v1680
    %v1779 = vpop.f32.mrf.mxu0
    %v1780 = vadd.f32 0.0, %v1779
    %1781 = vmatmul.f32.gmra.mxu0 %v1681
    %v1782 = vpop.f32.mrf.mxu0
    %v1783 = vadd.f32 0.0, %v1782
    %1784 = vmatmul.f32.gmra.mxu0 %v1682
    %v1785 = vpop.f32.mrf.mxu0
    %v1786 = vadd.f32 0.0, %v1785
    %1787 = vmatmul.f32.gmra.mxu0 %v1683
    %v1788 = vpop.f32.mrf.mxu0
    %v1789 = vadd.f32 0.0, %v1788
    %1790 = vmatmul.f32.gmra.mxu0 %v1684
    %v1791 = vpop.f32.mrf.mxu0
    %v1792 = vadd.f32 0.0, %v1791
    %1793 = vmatmul.f32.gmra.mxu0 %v1685
    %v1794 = vpop.f32.mrf.mxu0
    %v1795 = vadd.f32 0.0, %v1794
    %1796 = vmatmul.f32.gmra.mxu0 %v1686
    %v1797 = vpop.f32.mrf.mxu0
    %v1798 = vadd.f32 0.0, %v1797
    %1799 = vmatmul.f32.gmra.mxu0 %v1687
    %v1800 = vpop.f32.mrf.mxu0
    %v1801 = vadd.f32 0.0, %v1800
    %1802 = vmatmul.f32.gmra.mxu0 %v1688
    %v1803 = vpop.f32.mrf.mxu0
    %v1804 = vadd.f32 0.0, %v1803
    %1805 = vmatmul.f32.gmra.mxu0 %v1689
    %v1806 = vpop.f32.mrf.mxu0
    %v1807 = vadd.f32 0.0, %v1806
    %1808 = vmatmul.f32.gmra.mxu0 %v1690
    %v1809 = vpop.f32.mrf.mxu0
    %v1810 = vadd.f32 0.0, %v1809
    %1811 = vmatmul.f32.gmra.mxu0 %v1691
    %v1812 = vpop.f32.mrf.mxu0
    %v1813 = vadd.f32 0.0, %v1812
    %1814 = vmatmul.f32.gmra.mxu0 %v1692
    %v1815 = vpop.f32.mrf.mxu0
    %v1816 = vadd.f32 0.0, %v1815
    %1817 = vmatmul.f32.gmra.mxu0 %v1693
    %v1818 = vpop.f32.mrf.mxu0
    %v1819 = vadd.f32 0.0, %v1818
    %1820 = vmatmul.f32.gmra.mxu0 %v1694
    %v1821 = vpop.f32.mrf.mxu0
    %v1822 = vadd.f32 0.0, %v1821
    %1823 = vmatmul.f32.gmra.mxu0 %v1695
    %v1824 = vpop.f32.mrf.mxu0
    %v1825 = vadd.f32 0.0, %v1824
    %1826 = vmatmul.f32.gmra.mxu0 %v1696
    %v1827 = vpop.f32.mrf.mxu0
    %v1828 = vadd.f32 0.0, %v1827
    %1829 = vmatmul.f32.gmra.mxu0 %v1697
    %v1830 = vpop.f32.mrf.mxu0
    %v1831 = vadd.f32 0.0, %v1830
    %1832 = vmatmul.f32.gmra.mxu0 %v1698
    %v1833 = vpop.f32.mrf.mxu0
    %v1834 = vadd.f32 0.0, %v1833
    %1835 = vdwg.mxu0
    %v1836 = vld [vmem:[%s3] sm:$0xf]
    %s1837 = scalar_lea.vmem %s3, 4
    %v1838 = vld [vmem:[%s1837] sm:$0xf]
    %vm1839 = vcmask 31744
    %v1841 = vsel %vm1839, %v1741, 0
    %v1844 = vsel %vm1839, %v1744, 0
    %v1847 = vsel %vm1839, %v1747, 0
    %v1850 = vsel %vm1839, %v1750, 0
    %v1853 = vsel %vm1839, %v1753, 0
    %v1856 = vsel %vm1839, %v1756, 0
    %v1859 = vsel %vm1839, %v1759, 0
    %v1862 = vsel %vm1839, %v1762, 0
    %vm1864 = vcmask 1043456
    %v1866 = vsel %vm1864, %v1838, 0
    %1868 = vmatpush.msra.mxu0 0.0
    %1869 = vmatpush.msra.mxu0 0.0
    %1870 = vmatpush.msra.mxu0 0.0
    %1871 = vmatpush.msra.mxu0 0.0
    %1872 = vmatpush.msra.mxu0 0.0
    %1873 = vmatpush.msra.mxu0 0.0
    %1874 = vmatpush.msra.mxu0 0.0
    %1875 = vmatpush.msra.mxu0 0.0
    %1876 = vmatpush.msra.mxu0 0.0
    %1877 = vmatpush.msra.mxu0 0.0
    %1878 = vmatpush.msra.mxu0 0.0
    %1879 = vmatpush.msra.mxu0 0.0
    %1880 = vmatpush.msra.mxu0 0.0
    %1881 = vmatpush.msra.mxu0 0.0
    %1882 = vmatpush.msra.mxu0 0.0
    %1883 = vmatpush.msra.mxu0 %v1866
    %1884 = vmatmul.f32.gmra.mxu0 %v1841
    %v1885 = vpop.f32.mrf.mxu0
    %v1886 = vadd.f32 0.0, %v1885
    %1887 = vmatmul.f32.gmra.mxu0 %v1844
    %v1888 = vpop.f32.mrf.mxu0
    %v1889 = vadd.f32 0.0, %v1888
    %1890 = vmatmul.f32.gmra.mxu0 %v1847
    %v1891 = vpop.f32.mrf.mxu0
    %v1892 = vadd.f32 0.0, %v1891
    %1893 = vmatmul.f32.gmra.mxu0 %v1850
    %v1894 = vpop.f32.mrf.mxu0
    %v1895 = vadd.f32 0.0, %v1894
    %1896 = vmatmul.f32.gmra.mxu0 %v1853
    %v1897 = vpop.f32.mrf.mxu0
    %v1898 = vadd.f32 0.0, %v1897
    %1899 = vmatmul.f32.gmra.mxu0 %v1856
    %v1900 = vpop.f32.mrf.mxu0
    %v1901 = vadd.f32 0.0, %v1900
    %1902 = vmatmul.f32.gmra.mxu0 %v1859
    %v1903 = vpop.f32.mrf.mxu0
    %v1904 = vadd.f32 0.0, %v1903
    %1905 = vmatmul.f32.gmra.mxu0 %v1862
    %v1906 = vpop.f32.mrf.mxu0
    %v1907 = vadd.f32 0.0, %v1906
    %1908 = vdwg.mxu0
    %v1910 = vsel %vm1839, %v1717, 0
    %v1913 = vsel %vm1839, %v1720, 0
    %v1916 = vsel %vm1839, %v1723, 0
    %v1919 = vsel %vm1839, %v1726, 0
    %v1922 = vsel %vm1839, %v1729, 0
    %v1925 = vsel %vm1839, %v1732, 0
    %v1928 = vsel %vm1839, %v1735, 0
    %v1931 = vsel %vm1839, %v1738, 0
    %v1934 = vsel %vm1864, %v1836, 0
    %1936 = vmatpush.msra.mxu0 0.0
    %1937 = vmatpush.msra.mxu0 0.0
    %1938 = vmatpush.msra.mxu0 0.0
    %1939 = vmatpush.msra.mxu0 0.0
    %1940 = vmatpush.msra.mxu0 0.0
    %1941 = vmatpush.msra.mxu0 0.0
    %1942 = vmatpush.msra.mxu0 0.0
    %1943 = vmatpush.msra.mxu0 0.0
    %1944 = vmatpush.msra.mxu0 0.0
    %1945 = vmatpush.msra.mxu0 0.0
    %1946 = vmatpush.msra.mxu0 0.0
    %1947 = vmatpush.msra.mxu0 0.0
    %1948 = vmatpush.msra.mxu0 0.0
    %1949 = vmatpush.msra.mxu0 0.0
    %1950 = vmatpush.msra.mxu0 0.0
    %1951 = vmatpush.msra.mxu0 %v1934
    %1952 = vmatmul.f32.gmra.mxu0 %v1910
    %v1953 = vpop.f32.mrf.mxu0
    %v1954 = vadd.f32 %v1886, %v1953
    %1955 = vmatmul.f32.gmra.mxu0 %v1913
    %v1956 = vpop.f32.mrf.mxu0
    %v1957 = vadd.f32 %v1889, %v1956
    %1958 = vmatmul.f32.gmra.mxu0 %v1916
    %v1959 = vpop.f32.mrf.mxu0
    %v1960 = vadd.f32 %v1892, %v1959
    %1961 = vmatmul.f32.gmra.mxu0 %v1919
    %v1962 = vpop.f32.mrf.mxu0
    %v1963 = vadd.f32 %v1895, %v1962
    %1964 = vmatmul.f32.gmra.mxu0 %v1922
    %v1965 = vpop.f32.mrf.mxu0
    %v1966 = vadd.f32 %v1898, %v1965
    %1967 = vmatmul.f32.gmra.mxu0 %v1925
    %v1968 = vpop.f32.mrf.mxu0
    %v1969 = vadd.f32 %v1901, %v1968
    %1970 = vmatmul.f32.gmra.mxu0 %v1928
    %v1971 = vpop.f32.mrf.mxu0
    %v1972 = vadd.f32 %v1904, %v1971
    %1973 = vmatmul.f32.gmra.mxu0 %v1931
    %v1974 = vpop.f32.mrf.mxu0
    %v1975 = vadd.f32 %v1907, %v1974
    %1976 = vdwg.mxu0
    %s1977 = scalar_lea.vmem %s3, 8
    %v1978 = vld [vmem:[%s1977] sm:$0xf]
    %v1980 = vsel %vm1839, %v1765, 0
    %v1983 = vsel %vm1839, %v1768, 0
    %v1986 = vsel %vm1839, %v1771, 0
    %v1989 = vsel %vm1839, %v1774, 0
    %v1992 = vsel %vm1839, %v1777, 0
    %v1995 = vsel %vm1839, %v1780, 0
    %v1998 = vsel %vm1839, %v1783, 0
    %v2001 = vsel %vm1839, %v1786, 0
    %v2004 = vsel %vm1864, %v1978, 0
    %2006 = vmatpush.msra.mxu0 0.0
    %2007 = vmatpush.msra.mxu0 0.0
    %2008 = vmatpush.msra.mxu0 0.0
    %2009 = vmatpush.msra.mxu0 0.0
    %2010 = vmatpush.msra.mxu0 0.0
    %2011 = vmatpush.msra.mxu0 0.0
    %2012 = vmatpush.msra.mxu0 0.0
    %2013 = vmatpush.msra.mxu0 0.0
    %2014 = vmatpush.msra.mxu0 0.0
    %2015 = vmatpush.msra.mxu0 0.0
    %2016 = vmatpush.msra.mxu0 0.0
    %2017 = vmatpush.msra.mxu0 0.0
    %2018 = vmatpush.msra.mxu0 0.0
    %2019 = vmatpush.msra.mxu0 0.0
    %2020 = vmatpush.msra.mxu0 0.0
    %2021 = vmatpush.msra.mxu0 %v2004
    %2022 = vmatmul.f32.gmra.mxu0 %v1980
    %v2023 = vpop.f32.mrf.mxu0
    %v2024 = vadd.f32 0.0, %v2023
    %2025 = vmatmul.f32.gmra.mxu0 %v1983
    %v2026 = vpop.f32.mrf.mxu0
    %v2027 = vadd.f32 0.0, %v2026
    %2028 = vmatmul.f32.gmra.mxu0 %v1986
    %v2029 = vpop.f32.mrf.mxu0
    %v2030 = vadd.f32 0.0, %v2029
    %2031 = vmatmul.f32.gmra.mxu0 %v1989
    %v2032 = vpop.f32.mrf.mxu0
    %v2033 = vadd.f32 0.0, %v2032
    %2034 = vmatmul.f32.gmra.mxu0 %v1992
    %v2035 = vpop.f32.mrf.mxu0
    %v2036 = vadd.f32 0.0, %v2035
    %2037 = vmatmul.f32.gmra.mxu0 %v1995
    %v2038 = vpop.f32.mrf.mxu0
    %v2039 = vadd.f32 0.0, %v2038
    %2040 = vmatmul.f32.gmra.mxu0 %v1998
    %v2041 = vpop.f32.mrf.mxu0
    %v2042 = vadd.f32 0.0, %v2041
    %2043 = vmatmul.f32.gmra.mxu0 %v2001
    %v2044 = vpop.f32.mrf.mxu0
    %v2045 = vadd.f32 0.0, %v2044
    %2046 = vdwg.mxu0
    %v2047 = vadd.f32 %v1954, %v2024
    %v2048 = vadd.f32 %v1957, %v2027
    %v2049 = vadd.f32 %v1960, %v2030
    %v2050 = vadd.f32 %v1963, %v2033
    %v2051 = vadd.f32 %v1966, %v2036
    %v2052 = vadd.f32 %v1969, %v2039
    %v2053 = vadd.f32 %v1972, %v2042
    %v2054 = vadd.f32 %v1975, %v2045
    %s2055 = scalar_lea.vmem %s3, 12
    %v2056 = vld [vmem:[%s2055] sm:$0xf]
    %v2058 = vsel %vm1839, %v1789, 0
    %v2061 = vsel %vm1839, %v1792, 0
    %v2064 = vsel %vm1839, %v1795, 0
    %v2067 = vsel %vm1839, %v1798, 0
    %v2070 = vsel %vm1839, %v1801, 0
    %v2073 = vsel %vm1839, %v1804, 0
    %v2076 = vsel %vm1839, %v1807, 0
    %v2079 = vsel %vm1839, %v1810, 0
    %v2082 = vsel %vm1864, %v2056, 0
    %2084 = vmatpush.msra.mxu0 0.0
    %2085 = vmatpush.msra.mxu0 0.0
    %2086 = vmatpush.msra.mxu0 0.0
    %2087 = vmatpush.msra.mxu0 0.0
    %2088 = vmatpush.msra.mxu0 0.0
    %2089 = vmatpush.msra.mxu0 0.0
    %2090 = vmatpush.msra.mxu0 0.0
    %2091 = vmatpush.msra.mxu0 0.0
    %2092 = vmatpush.msra.mxu0 0.0
    %2093 = vmatpush.msra.mxu0 0.0
    %2094 = vmatpush.msra.mxu0 0.0
    %2095 = vmatpush.msra.mxu0 0.0
    %2096 = vmatpush.msra.mxu0 0.0
    %2097 = vmatpush.msra.mxu0 0.0
    %2098 = vmatpush.msra.mxu0 0.0
    %2099 = vmatpush.msra.mxu0 %v2082
    %2100 = vmatmul.f32.gmra.mxu0 %v2058
    %v2101 = vpop.f32.mrf.mxu0
    %v2102 = vadd.f32 0.0, %v2101
    %2103 = vmatmul.f32.gmra.mxu0 %v2061
    %v2104 = vpop.f32.mrf.mxu0
    %v2105 = vadd.f32 0.0, %v2104
    %2106 = vmatmul.f32.gmra.mxu0 %v2064
    %v2107 = vpop.f32.mrf.mxu0
    %v2108 = vadd.f32 0.0, %v2107
    %2109 = vmatmul.f32.gmra.mxu0 %v2067
    %v2110 = vpop.f32.mrf.mxu0
    %v2111 = vadd.f32 0.0, %v2110
    %2112 = vmatmul.f32.gmra.mxu0 %v2070
    %v2113 = vpop.f32.mrf.mxu0
    %v2114 = vadd.f32 0.0, %v2113
    %2115 = vmatmul.f32.gmra.mxu0 %v2073
    %v2116 = vpop.f32.mrf.mxu0
    %v2117 = vadd.f32 0.0, %v2116
    %2118 = vmatmul.f32.gmra.mxu0 %v2076
    %v2119 = vpop.f32.mrf.mxu0
    %v2120 = vadd.f32 0.0, %v2119
    %2121 = vmatmul.f32.gmra.mxu0 %v2079
    %v2122 = vpop.f32.mrf.mxu0
    %v2123 = vadd.f32 0.0, %v2122
    %2124 = vdwg.mxu0
    %v2125 = vadd.f32 %v2047, %v2102
    %v2126 = vadd.f32 %v2048, %v2105
    %v2127 = vadd.f32 %v2049, %v2108
    %v2128 = vadd.f32 %v2050, %v2111
    %v2129 = vadd.f32 %v2051, %v2114
    %v2130 = vadd.f32 %v2052, %v2117
    %v2131 = vadd.f32 %v2053, %v2120
    %v2132 = vadd.f32 %v2054, %v2123
    %s2133 = scalar_lea.vmem %s3, 16
    %v2134 = vld [vmem:[%s2133] sm:$0xf]
    %v2136 = vsel %vm1839, %v1813, 0
    %v2139 = vsel %vm1839, %v1816, 0
    %v2142 = vsel %vm1839, %v1819, 0
    %v2145 = vsel %vm1839, %v1822, 0
    %v2148 = vsel %vm1839, %v1825, 0
    %v2151 = vsel %vm1839, %v1828, 0
    %v2154 = vsel %vm1839, %v1831, 0
    %v2157 = vsel %vm1839, %v1834, 0
    %v2160 = vsel %vm1864, %v2134, 0
    %2162 = vmatpush.msra.mxu0 0.0
    %2163 = vmatpush.msra.mxu0 0.0
    %2164 = vmatpush.msra.mxu0 0.0
    %2165 = vmatpush.msra.mxu0 0.0
    %2166 = vmatpush.msra.mxu0 0.0
    %2167 = vmatpush.msra.mxu0 0.0
    %2168 = vmatpush.msra.mxu0 0.0
    %2169 = vmatpush.msra.mxu0 0.0
    %2170 = vmatpush.msra.mxu0 0.0
    %2171 = vmatpush.msra.mxu0 0.0
    %2172 = vmatpush.msra.mxu0 0.0
    %2173 = vmatpush.msra.mxu0 0.0
    %2174 = vmatpush.msra.mxu0 0.0
    %2175 = vmatpush.msra.mxu0 0.0
    %2176 = vmatpush.msra.mxu0 0.0
    %2177 = vmatpush.msra.mxu0 %v2160
    %2178 = vmatmul.f32.gmra.mxu0 %v2136
    %v2179 = vpop.f32.mrf.mxu0
    %v2180 = vadd.f32 0.0, %v2179
    %2181 = vmatmul.f32.gmra.mxu0 %v2139
    %v2182 = vpop.f32.mrf.mxu0
    %v2183 = vadd.f32 0.0, %v2182
    %2184 = vmatmul.f32.gmra.mxu0 %v2142
    %v2185 = vpop.f32.mrf.mxu0
    %v2186 = vadd.f32 0.0, %v2185
    %2187 = vmatmul.f32.gmra.mxu0 %v2145
    %v2188 = vpop.f32.mrf.mxu0
    %v2189 = vadd.f32 0.0, %v2188
    %2190 = vmatmul.f32.gmra.mxu0 %v2148
    %v2191 = vpop.f32.mrf.mxu0
    %v2192 = vadd.f32 0.0, %v2191
    %2193 = vmatmul.f32.gmra.mxu0 %v2151
    %v2194 = vpop.f32.mrf.mxu0
    %v2195 = vadd.f32 0.0, %v2194
    %2196 = vmatmul.f32.gmra.mxu0 %v2154
    %v2197 = vpop.f32.mrf.mxu0
    %v2198 = vadd.f32 0.0, %v2197
    %2199 = vmatmul.f32.gmra.mxu0 %v2157
    %v2200 = vpop.f32.mrf.mxu0
    %v2201 = vadd.f32 0.0, %v2200
    %2202 = vdwg.mxu0
    %v2203 = vadd.f32 %v2125, %v2180
    %v2204 = vadd.f32 %v2126, %v2183
    %v2205 = vadd.f32 %v2127, %v2186
    %v2206 = vadd.f32 %v2128, %v2189
    %v2207 = vadd.f32 %v2129, %v2192
    %v2208 = vadd.f32 %v2130, %v2195
    %v2209 = vadd.f32 %v2131, %v2198
    %v2210 = vadd.f32 %v2132, %v2201
    %2211 = vmatpush.msra.mxu0 %v1628
    %2212 = vmatpush.msra.mxu0 %v1627
    %2213 = vmatpush.msra.mxu0 %v1626
    %2214 = vmatpush.msra.mxu0 %v1625
    %2215 = vmatpush.msra.mxu0 %v1624
    %2216 = vmatpush.msra.mxu0 %v1623
    %2217 = vmatpush.msra.mxu0 %v1622
    %2218 = vmatpush.msra.mxu0 %v1621
    %2219 = vmatpush.msra.mxu0 %v1620
    %2220 = vmatpush.msra.mxu0 %v1619
    %2221 = vmatpush.msra.mxu0 %v1618
    %2222 = vmatpush.msra.mxu0 %v1617
    %2223 = vmatpush.msra.mxu0 %v1616
    %2224 = vmatpush.msra.mxu0 %v1615
    %2225 = vmatpush.msra.mxu0 %v1614
    %2226 = vmatpush.msra.mxu0 %v1613
    %2227 = vmatmul.f32.gmra.mxu0 %v1659
    %v2228 = vpop.f32.mrf.mxu0
    %v2229 = vadd.f32 0.0, %v2228
    %2230 = vmatmul.f32.gmra.mxu0 %v1660
    %v2231 = vpop.f32.mrf.mxu0
    %v2232 = vadd.f32 0.0, %v2231
    %2233 = vmatmul.f32.gmra.mxu0 %v1661
    %v2234 = vpop.f32.mrf.mxu0
    %v2235 = vadd.f32 0.0, %v2234
    %2236 = vmatmul.f32.gmra.mxu0 %v1662
    %v2237 = vpop.f32.mrf.mxu0
    %v2238 = vadd.f32 0.0, %v2237
    %2239 = vmatmul.f32.gmra.mxu0 %v1663
    %v2240 = vpop.f32.mrf.mxu0
    %v2241 = vadd.f32 0.0, %v2240
    %2242 = vmatmul.f32.gmra.mxu0 %v1664
    %v2243 = vpop.f32.mrf.mxu0
    %v2244 = vadd.f32 0.0, %v2243
    %2245 = vmatmul.f32.gmra.mxu0 %v1665
    %v2246 = vpop.f32.mrf.mxu0
    %v2247 = vadd.f32 0.0, %v2246
    %2248 = vmatmul.f32.gmra.mxu0 %v1666
    %v2249 = vpop.f32.mrf.mxu0
    %v2250 = vadd.f32 0.0, %v2249
    %2251 = vmatmul.f32.gmra.mxu0 %v1667
    %v2252 = vpop.f32.mrf.mxu0
    %v2253 = vadd.f32 0.0, %v2252
    %2254 = vmatmul.f32.gmra.mxu0 %v1668
    %v2255 = vpop.f32.mrf.mxu0
    %v2256 = vadd.f32 0.0, %v2255
    %2257 = vmatmul.f32.gmra.mxu0 %v1669
    %v2258 = vpop.f32.mrf.mxu0
    %v2259 = vadd.f32 0.0, %v2258
    %2260 = vmatmul.f32.gmra.mxu0 %v1670
    %v2261 = vpop.f32.mrf.mxu0
    %v2262 = vadd.f32 0.0, %v2261
    %2263 = vmatmul.f32.gmra.mxu0 %v1671
    %v2264 = vpop.f32.mrf.mxu0
    %v2265 = vadd.f32 0.0, %v2264
    %2266 = vmatmul.f32.gmra.mxu0 %v1672
    %v2267 = vpop.f32.mrf.mxu0
    %v2268 = vadd.f32 0.0, %v2267
    %2269 = vmatmul.f32.gmra.mxu0 %v1673
    %v2270 = vpop.f32.mrf.mxu0
    %v2271 = vadd.f32 0.0, %v2270
    %2272 = vmatmul.f32.gmra.mxu0 %v1674
    %v2273 = vpop.f32.mrf.mxu0
    %v2274 = vadd.f32 0.0, %v2273
    %2275 = vmatmul.f32.gmra.mxu0 %v1675
    %v2276 = vpop.f32.mrf.mxu0
    %v2277 = vadd.f32 0.0, %v2276
    %2278 = vmatmul.f32.gmra.mxu0 %v1676
    %v2279 = vpop.f32.mrf.mxu0
    %v2280 = vadd.f32 0.0, %v2279
    %2281 = vmatmul.f32.gmra.mxu0 %v1677
    %v2282 = vpop.f32.mrf.mxu0
    %v2283 = vadd.f32 0.0, %v2282
    %2284 = vmatmul.f32.gmra.mxu0 %v1678
    %v2285 = vpop.f32.mrf.mxu0
    %v2286 = vadd.f32 0.0, %v2285
    %2287 = vmatmul.f32.gmra.mxu0 %v1679
    %v2288 = vpop.f32.mrf.mxu0
    %v2289 = vadd.f32 0.0, %v2288
    %2290 = vmatmul.f32.gmra.mxu0 %v1680
    %v2291 = vpop.f32.mrf.mxu0
    %v2292 = vadd.f32 0.0, %v2291
    %2293 = vmatmul.f32.gmra.mxu0 %v1681
    %v2294 = vpop.f32.mrf.mxu0
    %v2295 = vadd.f32 0.0, %v2294
    %2296 = vmatmul.f32.gmra.mxu0 %v1682
    %v2297 = vpop.f32.mrf.mxu0
    %v2298 = vadd.f32 0.0, %v2297
    %2299 = vmatmul.f32.gmra.mxu0 %v1683
    %v2300 = vpop.f32.mrf.mxu0
    %v2301 = vadd.f32 0.0, %v2300
    %2302 = vmatmul.f32.gmra.mxu0 %v1684
    %v2303 = vpop.f32.mrf.mxu0
    %v2304 = vadd.f32 0.0, %v2303
    %2305 = vmatmul.f32.gmra.mxu0 %v1685
    %v2306 = vpop.f32.mrf.mxu0
    %v2307 = vadd.f32 0.0, %v2306
    %2308 = vmatmul.f32.gmra.mxu0 %v1686
    %v2309 = vpop.f32.mrf.mxu0
    %v2310 = vadd.f32 0.0, %v2309
    %2311 = vmatmul.f32.gmra.mxu0 %v1687
    %v2312 = vpop.f32.mrf.mxu0
    %v2313 = vadd.f32 0.0, %v2312
    %2314 = vmatmul.f32.gmra.mxu0 %v1688
    %v2315 = vpop.f32.mrf.mxu0
    %v2316 = vadd.f32 0.0, %v2315
    %2317 = vmatmul.f32.gmra.mxu0 %v1689
    %v2318 = vpop.f32.mrf.mxu0
    %v2319 = vadd.f32 0.0, %v2318
    %2320 = vmatmul.f32.gmra.mxu0 %v1690
    %v2321 = vpop.f32.mrf.mxu0
    %v2322 = vadd.f32 0.0, %v2321
    %2323 = vmatmul.f32.gmra.mxu0 %v1691
    %v2324 = vpop.f32.mrf.mxu0
    %v2325 = vadd.f32 0.0, %v2324
    %2326 = vmatmul.f32.gmra.mxu0 %v1692
    %v2327 = vpop.f32.mrf.mxu0
    %v2328 = vadd.f32 0.0, %v2327
    %2329 = vmatmul.f32.gmra.mxu0 %v1693
    %v2330 = vpop.f32.mrf.mxu0
    %v2331 = vadd.f32 0.0, %v2330
    %2332 = vmatmul.f32.gmra.mxu0 %v1694
    %v2333 = vpop.f32.mrf.mxu0
    %v2334 = vadd.f32 0.0, %v2333
    %2335 = vmatmul.f32.gmra.mxu0 %v1695
    %v2336 = vpop.f32.mrf.mxu0
    %v2337 = vadd.f32 0.0, %v2336
    %2338 = vmatmul.f32.gmra.mxu0 %v1696
    %v2339 = vpop.f32.mrf.mxu0
    %v2340 = vadd.f32 0.0, %v2339
    %2341 = vmatmul.f32.gmra.mxu0 %v1697
    %v2342 = vpop.f32.mrf.mxu0
    %v2343 = vadd.f32 0.0, %v2342
    %2344 = vmatmul.f32.gmra.mxu0 %v1698
    %v2345 = vpop.f32.mrf.mxu0
    %v2346 = vadd.f32 0.0, %v2345
    %2347 = vdwg.mxu0
    %s2348 = scalar_lea.vmem %s3, 20
    %v2349 = vld [vmem:[%s2348] sm:$0xf]
    %v2351 = vsel %vm1839, %v2229, 0
    %v2354 = vsel %vm1839, %v2232, 0
    %v2357 = vsel %vm1839, %v2235, 0
    %v2360 = vsel %vm1839, %v2238, 0
    %v2363 = vsel %vm1839, %v2241, 0
    %v2366 = vsel %vm1839, %v2244, 0
    %v2369 = vsel %vm1839, %v2247, 0
    %v2372 = vsel %vm1839, %v2250, 0
    %v2375 = vsel %vm1864, %v2349, 0
    %2377 = vmatpush.msra.mxu0 0.0
    %2378 = vmatpush.msra.mxu0 0.0
    %2379 = vmatpush.msra.mxu0 0.0
    %2380 = vmatpush.msra.mxu0 0.0
    %2381 = vmatpush.msra.mxu0 0.0
    %2382 = vmatpush.msra.mxu0 0.0
    %2383 = vmatpush.msra.mxu0 0.0
    %2384 = vmatpush.msra.mxu0 0.0
    %2385 = vmatpush.msra.mxu0 0.0
    %2386 = vmatpush.msra.mxu0 0.0
    %2387 = vmatpush.msra.mxu0 0.0
    %2388 = vmatpush.msra.mxu0 0.0
    %2389 = vmatpush.msra.mxu0 0.0
    %2390 = vmatpush.msra.mxu0 0.0
    %2391 = vmatpush.msra.mxu0 0.0
    %2392 = vmatpush.msra.mxu0 %v2375
    %2393 = vmatmul.f32.gmra.mxu0 %v2351
    %v2394 = vpop.f32.mrf.mxu0
    %v2395 = vadd.f32 0.0, %v2394
    %2396 = vmatmul.f32.gmra.mxu0 %v2354
    %v2397 = vpop.f32.mrf.mxu0
    %v2398 = vadd.f32 0.0, %v2397
    %2399 = vmatmul.f32.gmra.mxu0 %v2357
    %v2400 = vpop.f32.mrf.mxu0
    %v2401 = vadd.f32 0.0, %v2400
    %2402 = vmatmul.f32.gmra.mxu0 %v2360
    %v2403 = vpop.f32.mrf.mxu0
    %v2404 = vadd.f32 0.0, %v2403
    %2405 = vmatmul.f32.gmra.mxu0 %v2363
    %v2406 = vpop.f32.mrf.mxu0
    %v2407 = vadd.f32 0.0, %v2406
    %2408 = vmatmul.f32.gmra.mxu0 %v2366
    %v2409 = vpop.f32.mrf.mxu0
    %v2410 = vadd.f32 0.0, %v2409
    %2411 = vmatmul.f32.gmra.mxu0 %v2369
    %v2412 = vpop.f32.mrf.mxu0
    %v2413 = vadd.f32 0.0, %v2412
    %2414 = vmatmul.f32.gmra.mxu0 %v2372
    %v2415 = vpop.f32.mrf.mxu0
    %v2416 = vadd.f32 0.0, %v2415
    %2417 = vdwg.mxu0
    %v2418 = vadd.f32 %v2203, %v2395
    %v2419 = vadd.f32 %v2204, %v2398
    %v2420 = vadd.f32 %v2205, %v2401
    %v2421 = vadd.f32 %v2206, %v2404
    %v2422 = vadd.f32 %v2207, %v2407
    %v2423 = vadd.f32 %v2208, %v2410
    %v2424 = vadd.f32 %v2209, %v2413
    %v2425 = vadd.f32 %v2210, %v2416
    %s2426 = scalar_lea.vmem %s3, 24
    %v2427 = vld [vmem:[%s2426] sm:$0xf]
    %v2429 = vsel %vm1839, %v2253, 0
    %v2432 = vsel %vm1839, %v2256, 0
    %v2435 = vsel %vm1839, %v2259, 0
    %v2438 = vsel %vm1839, %v2262, 0
    %v2441 = vsel %vm1839, %v2265, 0
    %v2444 = vsel %vm1839, %v2268, 0
    %v2447 = vsel %vm1839, %v2271, 0
    %v2450 = vsel %vm1839, %v2274, 0
    %v2453 = vsel %vm1864, %v2427, 0
    %2455 = vmatpush.msra.mxu0 0.0
    %2456 = vmatpush.msra.mxu0 0.0
    %2457 = vmatpush.msra.mxu0 0.0
    %2458 = vmatpush.msra.mxu0 0.0
    %2459 = vmatpush.msra.mxu0 0.0
    %2460 = vmatpush.msra.mxu0 0.0
    %2461 = vmatpush.msra.mxu0 0.0
    %2462 = vmatpush.msra.mxu0 0.0
    %2463 = vmatpush.msra.mxu0 0.0
    %2464 = vmatpush.msra.mxu0 0.0
    %2465 = vmatpush.msra.mxu0 0.0
    %2466 = vmatpush.msra.mxu0 0.0
    %2467 = vmatpush.msra.mxu0 0.0
    %2468 = vmatpush.msra.mxu0 0.0
    %2469 = vmatpush.msra.mxu0 0.0
    %2470 = vmatpush.msra.mxu0 %v2453
    %2471 = vmatmul.f32.gmra.mxu0 %v2429
    %v2472 = vpop.f32.mrf.mxu0
    %v2473 = vadd.f32 0.0, %v2472
    %2474 = vmatmul.f32.gmra.mxu0 %v2432
    %v2475 = vpop.f32.mrf.mxu0
    %v2476 = vadd.f32 0.0, %v2475
    %2477 = vmatmul.f32.gmra.mxu0 %v2435
    %v2478 = vpop.f32.mrf.mxu0
    %v2479 = vadd.f32 0.0, %v2478
    %2480 = vmatmul.f32.gmra.mxu0 %v2438
    %v2481 = vpop.f32.mrf.mxu0
    %v2482 = vadd.f32 0.0, %v2481
    %2483 = vmatmul.f32.gmra.mxu0 %v2441
    %v2484 = vpop.f32.mrf.mxu0
    %v2485 = vadd.f32 0.0, %v2484
    %2486 = vmatmul.f32.gmra.mxu0 %v2444
    %v2487 = vpop.f32.mrf.mxu0
    %v2488 = vadd.f32 0.0, %v2487
    %2489 = vmatmul.f32.gmra.mxu0 %v2447
    %v2490 = vpop.f32.mrf.mxu0
    %v2491 = vadd.f32 0.0, %v2490
    %2492 = vmatmul.f32.gmra.mxu0 %v2450
    %v2493 = vpop.f32.mrf.mxu0
    %v2494 = vadd.f32 0.0, %v2493
    %2495 = vdwg.mxu0
    %v2496 = vadd.f32 %v2418, %v2473
    %v2497 = vadd.f32 %v2419, %v2476
    %v2498 = vadd.f32 %v2420, %v2479
    %v2499 = vadd.f32 %v2421, %v2482
    %v2500 = vadd.f32 %v2422, %v2485
    %v2501 = vadd.f32 %v2423, %v2488
    %v2502 = vadd.f32 %v2424, %v2491
    %v2503 = vadd.f32 %v2425, %v2494
    %s2504 = scalar_lea.vmem %s3, 28
    %v2505 = vld [vmem:[%s2504] sm:$0xf]
    %v2507 = vsel %vm1839, %v2277, 0
    %v2510 = vsel %vm1839, %v2280, 0
    %v2513 = vsel %vm1839, %v2283, 0
    %v2516 = vsel %vm1839, %v2286, 0
    %v2519 = vsel %vm1839, %v2289, 0
    %v2522 = vsel %vm1839, %v2292, 0
    %v2525 = vsel %vm1839, %v2295, 0
    %v2528 = vsel %vm1839, %v2298, 0
    %v2531 = vsel %vm1864, %v2505, 0
    %2533 = vmatpush.msra.mxu0 0.0
    %2534 = vmatpush.msra.mxu0 0.0
    %2535 = vmatpush.msra.mxu0 0.0
    %2536 = vmatpush.msra.mxu0 0.0
    %2537 = vmatpush.msra.mxu0 0.0
    %2538 = vmatpush.msra.mxu0 0.0
    %2539 = vmatpush.msra.mxu0 0.0
    %2540 = vmatpush.msra.mxu0 0.0
    %2541 = vmatpush.msra.mxu0 0.0
    %2542 = vmatpush.msra.mxu0 0.0
    %2543 = vmatpush.msra.mxu0 0.0
    %2544 = vmatpush.msra.mxu0 0.0
    %2545 = vmatpush.msra.mxu0 0.0
    %2546 = vmatpush.msra.mxu0 0.0
    %2547 = vmatpush.msra.mxu0 0.0
    %2548 = vmatpush.msra.mxu0 %v2531
    %2549 = vmatmul.f32.gmra.mxu0 %v2507
    %v2550 = vpop.f32.mrf.mxu0
    %v2551 = vadd.f32 0.0, %v2550
    %2552 = vmatmul.f32.gmra.mxu0 %v2510
    %v2553 = vpop.f32.mrf.mxu0
    %v2554 = vadd.f32 0.0, %v2553
    %2555 = vmatmul.f32.gmra.mxu0 %v2513
    %v2556 = vpop.f32.mrf.mxu0
    %v2557 = vadd.f32 0.0, %v2556
    %2558 = vmatmul.f32.gmra.mxu0 %v2516
    %v2559 = vpop.f32.mrf.mxu0
    %v2560 = vadd.f32 0.0, %v2559
    %2561 = vmatmul.f32.gmra.mxu0 %v2519
    %v2562 = vpop.f32.mrf.mxu0
    %v2563 = vadd.f32 0.0, %v2562
    %2564 = vmatmul.f32.gmra.mxu0 %v2522
    %v2565 = vpop.f32.mrf.mxu0
    %v2566 = vadd.f32 0.0, %v2565
    %2567 = vmatmul.f32.gmra.mxu0 %v2525
    %v2568 = vpop.f32.mrf.mxu0
    %v2569 = vadd.f32 0.0, %v2568
    %2570 = vmatmul.f32.gmra.mxu0 %v2528
    %v2571 = vpop.f32.mrf.mxu0
    %v2572 = vadd.f32 0.0, %v2571
    %2573 = vdwg.mxu0
    %v2574 = vadd.f32 %v2496, %v2551
    %v2575 = vadd.f32 %v2497, %v2554
    %v2576 = vadd.f32 %v2498, %v2557
    %v2577 = vadd.f32 %v2499, %v2560
    %v2578 = vadd.f32 %v2500, %v2563
    %v2579 = vadd.f32 %v2501, %v2566
    %v2580 = vadd.f32 %v2502, %v2569
    %v2581 = vadd.f32 %v2503, %v2572
    %s2582 = scalar_lea.vmem %s3, 32
    %v2583 = vld [vmem:[%s2582] sm:$0xf]
    %v2585 = vsel %vm1839, %v2301, 0
    %v2588 = vsel %vm1839, %v2304, 0
    %v2591 = vsel %vm1839, %v2307, 0
    %v2594 = vsel %vm1839, %v2310, 0
    %v2597 = vsel %vm1839, %v2313, 0
    %v2600 = vsel %vm1839, %v2316, 0
    %v2603 = vsel %vm1839, %v2319, 0
    %v2606 = vsel %vm1839, %v2322, 0
    %v2609 = vsel %vm1864, %v2583, 0
    %2611 = vmatpush.msra.mxu0 0.0
    %2612 = vmatpush.msra.mxu0 0.0
    %2613 = vmatpush.msra.mxu0 0.0
    %2614 = vmatpush.msra.mxu0 0.0
    %2615 = vmatpush.msra.mxu0 0.0
    %2616 = vmatpush.msra.mxu0 0.0
    %2617 = vmatpush.msra.mxu0 0.0
    %2618 = vmatpush.msra.mxu0 0.0
    %2619 = vmatpush.msra.mxu0 0.0
    %2620 = vmatpush.msra.mxu0 0.0
    %2621 = vmatpush.msra.mxu0 0.0
    %2622 = vmatpush.msra.mxu0 0.0
    %2623 = vmatpush.msra.mxu0 0.0
    %2624 = vmatpush.msra.mxu0 0.0
    %2625 = vmatpush.msra.mxu0 0.0
    %2626 = vmatpush.msra.mxu0 %v2609
    %2627 = vmatmul.f32.gmra.mxu0 %v2585
    %v2628 = vpop.f32.mrf.mxu0
    %v2629 = vadd.f32 0.0, %v2628
    %2630 = vmatmul.f32.gmra.mxu0 %v2588
    %v2631 = vpop.f32.mrf.mxu0
    %v2632 = vadd.f32 0.0, %v2631
    %2633 = vmatmul.f32.gmra.mxu0 %v2591
    %v2634 = vpop.f32.mrf.mxu0
    %v2635 = vadd.f32 0.0, %v2634
    %2636 = vmatmul.f32.gmra.mxu0 %v2594
    %v2637 = vpop.f32.mrf.mxu0
    %v2638 = vadd.f32 0.0, %v2637
    %2639 = vmatmul.f32.gmra.mxu0 %v2597
    %v2640 = vpop.f32.mrf.mxu0
    %v2641 = vadd.f32 0.0, %v2640
    %2642 = vmatmul.f32.gmra.mxu0 %v2600
    %v2643 = vpop.f32.mrf.mxu0
    %v2644 = vadd.f32 0.0, %v2643
    %2645 = vmatmul.f32.gmra.mxu0 %v2603
    %v2646 = vpop.f32.mrf.mxu0
    %v2647 = vadd.f32 0.0, %v2646
    %2648 = vmatmul.f32.gmra.mxu0 %v2606
    %v2649 = vpop.f32.mrf.mxu0
    %v2650 = vadd.f32 0.0, %v2649
    %2651 = vdwg.mxu0
    %v2652 = vadd.f32 %v2574, %v2629
    %v2653 = vadd.f32 %v2575, %v2632
    %v2654 = vadd.f32 %v2576, %v2635
    %v2655 = vadd.f32 %v2577, %v2638
    %v2656 = vadd.f32 %v2578, %v2641
    %v2657 = vadd.f32 %v2579, %v2644
    %v2658 = vadd.f32 %v2580, %v2647
    %v2659 = vadd.f32 %v2581, %v2650
    %s2660 = scalar_lea.vmem %s3, 36
    %v2661 = vld [vmem:[%s2660] sm:$0xf]
    %v2663 = vsel %vm1839, %v2325, 0
    %v2666 = vsel %vm1839, %v2328, 0
    %v2669 = vsel %vm1839, %v2331, 0
    %v2672 = vsel %vm1839, %v2334, 0
    %v2675 = vsel %vm1839, %v2337, 0
    %v2678 = vsel %vm1839, %v2340, 0
    %v2681 = vsel %vm1839, %v2343, 0
    %v2684 = vsel %vm1839, %v2346, 0
    %v2687 = vsel %vm1864, %v2661, 0
    %2689 = vmatpush.msra.mxu0 0.0
    %2690 = vmatpush.msra.mxu0 0.0
    %2691 = vmatpush.msra.mxu0 0.0
    %2692 = vmatpush.msra.mxu0 0.0
    %2693 = vmatpush.msra.mxu0 0.0
    %2694 = vmatpush.msra.mxu0 0.0
    %2695 = vmatpush.msra.mxu0 0.0
    %2696 = vmatpush.msra.mxu0 0.0
    %2697 = vmatpush.msra.mxu0 0.0
    %2698 = vmatpush.msra.mxu0 0.0
    %2699 = vmatpush.msra.mxu0 0.0
    %2700 = vmatpush.msra.mxu0 0.0
    %2701 = vmatpush.msra.mxu0 0.0
    %2702 = vmatpush.msra.mxu0 0.0
    %2703 = vmatpush.msra.mxu0 0.0
    %2704 = vmatpush.msra.mxu0 %v2687
    %2705 = vmatmul.f32.gmra.mxu0 %v2663
    %v2706 = vpop.f32.mrf.mxu0
    %v2707 = vadd.f32 0.0, %v2706
    %2708 = vmatmul.f32.gmra.mxu0 %v2666
    %v2709 = vpop.f32.mrf.mxu0
    %v2710 = vadd.f32 0.0, %v2709
    %2711 = vmatmul.f32.gmra.mxu0 %v2669
    %v2712 = vpop.f32.mrf.mxu0
    %v2713 = vadd.f32 0.0, %v2712
    %2714 = vmatmul.f32.gmra.mxu0 %v2672
    %v2715 = vpop.f32.mrf.mxu0
    %v2716 = vadd.f32 0.0, %v2715
    %2717 = vmatmul.f32.gmra.mxu0 %v2675
    %v2718 = vpop.f32.mrf.mxu0
    %v2719 = vadd.f32 0.0, %v2718
    %2720 = vmatmul.f32.gmra.mxu0 %v2678
    %v2721 = vpop.f32.mrf.mxu0
    %v2722 = vadd.f32 0.0, %v2721
    %2723 = vmatmul.f32.gmra.mxu0 %v2681
    %v2724 = vpop.f32.mrf.mxu0
    %v2725 = vadd.f32 0.0, %v2724
    %2726 = vmatmul.f32.gmra.mxu0 %v2684
    %v2727 = vpop.f32.mrf.mxu0
    %v2728 = vadd.f32 0.0, %v2727
    %2729 = vdwg.mxu0
    %v2730 = vadd.f32 %v2652, %v2707
    %v2731 = vadd.f32 %v2653, %v2710
    %v2732 = vadd.f32 %v2654, %v2713
    %v2733 = vadd.f32 %v2655, %v2716
    %v2734 = vadd.f32 %v2656, %v2719
    %v2735 = vadd.f32 %v2657, %v2722
    %v2736 = vadd.f32 %v2658, %v2725
    %v2737 = vadd.f32 %v2659, %v2728
    %2738 = vmatpush.msra.mxu0 %v1630
    %2739 = vmatpush.msra.mxu0 %v1629
    %2740 = vmatpush.msra.mxu0 %v1628
    %2741 = vmatpush.msra.mxu0 %v1627
    %2742 = vmatpush.msra.mxu0 %v1626
    %2743 = vmatpush.msra.mxu0 %v1625
    %2744 = vmatpush.msra.mxu0 %v1624
    %2745 = vmatpush.msra.mxu0 %v1623
    %2746 = vmatpush.msra.mxu0 %v1622
    %2747 = vmatpush.msra.mxu0 %v1621
    %2748 = vmatpush.msra.mxu0 %v1620
    %2749 = vmatpush.msra.mxu0 %v1619
    %2750 = vmatpush.msra.mxu0 %v1618
    %2751 = vmatpush.msra.mxu0 %v1617
    %2752 = vmatpush.msra.mxu0 %v1616
    %2753 = vmatpush.msra.mxu0 %v1615
    %2754 = vmatmul.f32.gmra.mxu0 %v1659
    %v2755 = vpop.f32.mrf.mxu0
    %v2756 = vadd.f32 0.0, %v2755
    %2757 = vmatmul.f32.gmra.mxu0 %v1660
    %v2758 = vpop.f32.mrf.mxu0
    %v2759 = vadd.f32 0.0, %v2758
    %2760 = vmatmul.f32.gmra.mxu0 %v1661
    %v2761 = vpop.f32.mrf.mxu0
    %v2762 = vadd.f32 0.0, %v2761
    %2763 = vmatmul.f32.gmra.mxu0 %v1662
    %v2764 = vpop.f32.mrf.mxu0
    %v2765 = vadd.f32 0.0, %v2764
    %2766 = vmatmul.f32.gmra.mxu0 %v1663
    %v2767 = vpop.f32.mrf.mxu0
    %v2768 = vadd.f32 0.0, %v2767
    %2769 = vmatmul.f32.gmra.mxu0 %v1664
    %v2770 = vpop.f32.mrf.mxu0
    %v2771 = vadd.f32 0.0, %v2770
    %2772 = vmatmul.f32.gmra.mxu0 %v1665
    %v2773 = vpop.f32.mrf.mxu0
    %v2774 = vadd.f32 0.0, %v2773
    %2775 = vmatmul.f32.gmra.mxu0 %v1666
    %v2776 = vpop.f32.mrf.mxu0
    %v2777 = vadd.f32 0.0, %v2776
    %2778 = vmatmul.f32.gmra.mxu0 %v1667
    %v2779 = vpop.f32.mrf.mxu0
    %v2780 = vadd.f32 0.0, %v2779
    %2781 = vmatmul.f32.gmra.mxu0 %v1668
    %v2782 = vpop.f32.mrf.mxu0
    %v2783 = vadd.f32 0.0, %v2782
    %2784 = vmatmul.f32.gmra.mxu0 %v1669
    %v2785 = vpop.f32.mrf.mxu0
    %v2786 = vadd.f32 0.0, %v2785
    %2787 = vmatmul.f32.gmra.mxu0 %v1670
    %v2788 = vpop.f32.mrf.mxu0
    %v2789 = vadd.f32 0.0, %v2788
    %2790 = vmatmul.f32.gmra.mxu0 %v1671
    %v2791 = vpop.f32.mrf.mxu0
    %v2792 = vadd.f32 0.0, %v2791
    %2793 = vmatmul.f32.gmra.mxu0 %v1672
    %v2794 = vpop.f32.mrf.mxu0
    %v2795 = vadd.f32 0.0, %v2794
    %2796 = vmatmul.f32.gmra.mxu0 %v1673
    %v2797 = vpop.f32.mrf.mxu0
    %v2798 = vadd.f32 0.0, %v2797
    %2799 = vmatmul.f32.gmra.mxu0 %v1674
    %v2800 = vpop.f32.mrf.mxu0
    %v2801 = vadd.f32 0.0, %v2800
    %2802 = vmatmul.f32.gmra.mxu0 %v1675
    %v2803 = vpop.f32.mrf.mxu0
    %v2804 = vadd.f32 0.0, %v2803
    %2805 = vmatmul.f32.gmra.mxu0 %v1676
    %v2806 = vpop.f32.mrf.mxu0
    %v2807 = vadd.f32 0.0, %v2806
    %2808 = vmatmul.f32.gmra.mxu0 %v1677
    %v2809 = vpop.f32.mrf.mxu0
    %v2810 = vadd.f32 0.0, %v2809
    %2811 = vmatmul.f32.gmra.mxu0 %v1678
    %v2812 = vpop.f32.mrf.mxu0
    %v2813 = vadd.f32 0.0, %v2812
    %2814 = vmatmul.f32.gmra.mxu0 %v1679
    %v2815 = vpop.f32.mrf.mxu0
    %v2816 = vadd.f32 0.0, %v2815
    %2817 = vmatmul.f32.gmra.mxu0 %v1680
    %v2818 = vpop.f32.mrf.mxu0
    %v2819 = vadd.f32 0.0, %v2818
    %2820 = vmatmul.f32.gmra.mxu0 %v1681
    %v2821 = vpop.f32.mrf.mxu0
    %v2822 = vadd.f32 0.0, %v2821
    %2823 = vmatmul.f32.gmra.mxu0 %v1682
    %v2824 = vpop.f32.mrf.mxu0
    %v2825 = vadd.f32 0.0, %v2824
    %2826 = vmatmul.f32.gmra.mxu0 %v1683
    %v2827 = vpop.f32.mrf.mxu0
    %v2828 = vadd.f32 0.0, %v2827
    %2829 = vmatmul.f32.gmra.mxu0 %v1684
    %v2830 = vpop.f32.mrf.mxu0
    %v2831 = vadd.f32 0.0, %v2830
    %2832 = vmatmul.f32.gmra.mxu0 %v1685
    %v2833 = vpop.f32.mrf.mxu0
    %v2834 = vadd.f32 0.0, %v2833
    %2835 = vmatmul.f32.gmra.mxu0 %v1686
    %v2836 = vpop.f32.mrf.mxu0
    %v2837 = vadd.f32 0.0, %v2836
    %2838 = vmatmul.f32.gmra.mxu0 %v1687
    %v2839 = vpop.f32.mrf.mxu0
    %v2840 = vadd.f32 0.0, %v2839
    %2841 = vmatmul.f32.gmra.mxu0 %v1688
    %v2842 = vpop.f32.mrf.mxu0
    %v2843 = vadd.f32 0.0, %v2842
    %2844 = vmatmul.f32.gmra.mxu0 %v1689
    %v2845 = vpop.f32.mrf.mxu0
    %v2846 = vadd.f32 0.0, %v2845
    %2847 = vmatmul.f32.gmra.mxu0 %v1690
    %v2848 = vpop.f32.mrf.mxu0
    %v2849 = vadd.f32 0.0, %v2848
    %2850 = vmatmul.f32.gmra.mxu0 %v1691
    %v2851 = vpop.f32.mrf.mxu0
    %v2852 = vadd.f32 0.0, %v2851
    %2853 = vmatmul.f32.gmra.mxu0 %v1692
    %v2854 = vpop.f32.mrf.mxu0
    %v2855 = vadd.f32 0.0, %v2854
    %2856 = vmatmul.f32.gmra.mxu0 %v1693
    %v2857 = vpop.f32.mrf.mxu0
    %v2858 = vadd.f32 0.0, %v2857
    %2859 = vmatmul.f32.gmra.mxu0 %v1694
    %v2860 = vpop.f32.mrf.mxu0
    %v2861 = vadd.f32 0.0, %v2860
    %2862 = vmatmul.f32.gmra.mxu0 %v1695
    %v2863 = vpop.f32.mrf.mxu0
    %v2864 = vadd.f32 0.0, %v2863
    %2865 = vmatmul.f32.gmra.mxu0 %v1696
    %v2866 = vpop.f32.mrf.mxu0
    %v2867 = vadd.f32 0.0, %v2866
    %2868 = vmatmul.f32.gmra.mxu0 %v1697
    %v2869 = vpop.f32.mrf.mxu0
    %v2870 = vadd.f32 0.0, %v2869
    %2871 = vmatmul.f32.gmra.mxu0 %v1698
    %v2872 = vpop.f32.mrf.mxu0
    %v2873 = vadd.f32 0.0, %v2872
    %2874 = vdwg.mxu0
    %s2875 = scalar_lea.vmem %s3, 40
    %v2876 = vld [vmem:[%s2875] sm:$0xf]
    %v2878 = vsel %vm1839, %v2756, 0
    %v2881 = vsel %vm1839, %v2759, 0
    %v2884 = vsel %vm1839, %v2762, 0
    %v2887 = vsel %vm1839, %v2765, 0
    %v2890 = vsel %vm1839, %v2768, 0
    %v2893 = vsel %vm1839, %v2771, 0
    %v2896 = vsel %vm1839, %v2774, 0
    %v2899 = vsel %vm1839, %v2777, 0
    %v2902 = vsel %vm1864, %v2876, 0
    %2904 = vmatpush.msra.mxu0 0.0
    %2905 = vmatpush.msra.mxu0 0.0
    %2906 = vmatpush.msra.mxu0 0.0
    %2907 = vmatpush.msra.mxu0 0.0
    %2908 = vmatpush.msra.mxu0 0.0
    %2909 = vmatpush.msra.mxu0 0.0
    %2910 = vmatpush.msra.mxu0 0.0
    %2911 = vmatpush.msra.mxu0 0.0
    %2912 = vmatpush.msra.mxu0 0.0
    %2913 = vmatpush.msra.mxu0 0.0
    %2914 = vmatpush.msra.mxu0 0.0
    %2915 = vmatpush.msra.mxu0 0.0
    %2916 = vmatpush.msra.mxu0 0.0
    %2917 = vmatpush.msra.mxu0 0.0
    %2918 = vmatpush.msra.mxu0 0.0
    %2919 = vmatpush.msra.mxu0 %v2902
    %2920 = vmatmul.f32.gmra.mxu0 %v2878
    %v2921 = vpop.f32.mrf.mxu0
    %v2922 = vadd.f32 0.0, %v2921
    %2923 = vmatmul.f32.gmra.mxu0 %v2881
    %v2924 = vpop.f32.mrf.mxu0
    %v2925 = vadd.f32 0.0, %v2924
    %2926 = vmatmul.f32.gmra.mxu0 %v2884
    %v2927 = vpop.f32.mrf.mxu0
    %v2928 = vadd.f32 0.0, %v2927
    %2929 = vmatmul.f32.gmra.mxu0 %v2887
    %v2930 = vpop.f32.mrf.mxu0
    %v2931 = vadd.f32 0.0, %v2930
    %2932 = vmatmul.f32.gmra.mxu0 %v2890
    %v2933 = vpop.f32.mrf.mxu0
    %v2934 = vadd.f32 0.0, %v2933
    %2935 = vmatmul.f32.gmra.mxu0 %v2893
    %v2936 = vpop.f32.mrf.mxu0
    %v2937 = vadd.f32 0.0, %v2936
    %2938 = vmatmul.f32.gmra.mxu0 %v2896
    %v2939 = vpop.f32.mrf.mxu0
    %v2940 = vadd.f32 0.0, %v2939
    %2941 = vmatmul.f32.gmra.mxu0 %v2899
    %v2942 = vpop.f32.mrf.mxu0
    %v2943 = vadd.f32 0.0, %v2942
    %2944 = vdwg.mxu0
    %v2945 = vadd.f32 %v2730, %v2922
    %v2946 = vadd.f32 %v2731, %v2925
    %v2947 = vadd.f32 %v2732, %v2928
    %v2948 = vadd.f32 %v2733, %v2931
    %v2949 = vadd.f32 %v2734, %v2934
    %v2950 = vadd.f32 %v2735, %v2937
    %v2951 = vadd.f32 %v2736, %v2940
    %v2952 = vadd.f32 %v2737, %v2943
    %s2953 = scalar_lea.vmem %s3, 44
    %v2954 = vld [vmem:[%s2953] sm:$0xf]
    %v2956 = vsel %vm1839, %v2780, 0
    %v2959 = vsel %vm1839, %v2783, 0
    %v2962 = vsel %vm1839, %v2786, 0
    %v2965 = vsel %vm1839, %v2789, 0
    %v2968 = vsel %vm1839, %v2792, 0
    %v2971 = vsel %vm1839, %v2795, 0
    %v2974 = vsel %vm1839, %v2798, 0
    %v2977 = vsel %vm1839, %v2801, 0
    %v2980 = vsel %vm1864, %v2954, 0
    %2982 = vmatpush.msra.mxu0 0.0
    %2983 = vmatpush.msra.mxu0 0.0
    %2984 = vmatpush.msra.mxu0 0.0
    %2985 = vmatpush.msra.mxu0 0.0
    %2986 = vmatpush.msra.mxu0 0.0
    %2987 = vmatpush.msra.mxu0 0.0
    %2988 = vmatpush.msra.mxu0 0.0
    %2989 = vmatpush.msra.mxu0 0.0
    %2990 = vmatpush.msra.mxu0 0.0
    %2991 = vmatpush.msra.mxu0 0.0
    %2992 = vmatpush.msra.mxu0 0.0
    %2993 = vmatpush.msra.mxu0 0.0
    %2994 = vmatpush.msra.mxu0 0.0
    %2995 = vmatpush.msra.mxu0 0.0
    %2996 = vmatpush.msra.mxu0 0.0
    %2997 = vmatpush.msra.mxu0 %v2980
    %2998 = vmatmul.f32.gmra.mxu0 %v2956
    %v2999 = vpop.f32.mrf.mxu0
    %v3000 = vadd.f32 0.0, %v2999
    %3001 = vmatmul.f32.gmra.mxu0 %v2959
    %v3002 = vpop.f32.mrf.mxu0
    %v3003 = vadd.f32 0.0, %v3002
    %3004 = vmatmul.f32.gmra.mxu0 %v2962
    %v3005 = vpop.f32.mrf.mxu0
    %v3006 = vadd.f32 0.0, %v3005
    %3007 = vmatmul.f32.gmra.mxu0 %v2965
    %v3008 = vpop.f32.mrf.mxu0
    %v3009 = vadd.f32 0.0, %v3008
    %3010 = vmatmul.f32.gmra.mxu0 %v2968
    %v3011 = vpop.f32.mrf.mxu0
    %v3012 = vadd.f32 0.0, %v3011
    %3013 = vmatmul.f32.gmra.mxu0 %v2971
    %v3014 = vpop.f32.mrf.mxu0
    %v3015 = vadd.f32 0.0, %v3014
    %3016 = vmatmul.f32.gmra.mxu0 %v2974
    %v3017 = vpop.f32.mrf.mxu0
    %v3018 = vadd.f32 0.0, %v3017
    %3019 = vmatmul.f32.gmra.mxu0 %v2977
    %v3020 = vpop.f32.mrf.mxu0
    %v3021 = vadd.f32 0.0, %v3020
    %3022 = vdwg.mxu0
    %v3023 = vadd.f32 %v2945, %v3000
    %v3024 = vadd.f32 %v2946, %v3003
    %v3025 = vadd.f32 %v2947, %v3006
    %v3026 = vadd.f32 %v2948, %v3009
    %v3027 = vadd.f32 %v2949, %v3012
    %v3028 = vadd.f32 %v2950, %v3015
    %v3029 = vadd.f32 %v2951, %v3018
    %v3030 = vadd.f32 %v2952, %v3021
    %s3031 = scalar_lea.vmem %s3, 48
    %v3032 = vld [vmem:[%s3031] sm:$0xf]
    %v3034 = vsel %vm1839, %v2804, 0
    %v3037 = vsel %vm1839, %v2807, 0
    %v3040 = vsel %vm1839, %v2810, 0
    %v3043 = vsel %vm1839, %v2813, 0
    %v3046 = vsel %vm1839, %v2816, 0
    %v3049 = vsel %vm1839, %v2819, 0
    %v3052 = vsel %vm1839, %v2822, 0
    %v3055 = vsel %vm1839, %v2825, 0
    %v3058 = vsel %vm1864, %v3032, 0
    %3060 = vmatpush.msra.mxu0 0.0
    %3061 = vmatpush.msra.mxu0 0.0
    %3062 = vmatpush.msra.mxu0 0.0
    %3063 = vmatpush.msra.mxu0 0.0
    %3064 = vmatpush.msra.mxu0 0.0
    %3065 = vmatpush.msra.mxu0 0.0
    %3066 = vmatpush.msra.mxu0 0.0
    %3067 = vmatpush.msra.mxu0 0.0
    %3068 = vmatpush.msra.mxu0 0.0
    %3069 = vmatpush.msra.mxu0 0.0
    %3070 = vmatpush.msra.mxu0 0.0
    %3071 = vmatpush.msra.mxu0 0.0
    %3072 = vmatpush.msra.mxu0 0.0
    %3073 = vmatpush.msra.mxu0 0.0
    %3074 = vmatpush.msra.mxu0 0.0
    %3075 = vmatpush.msra.mxu0 %v3058
    %3076 = vmatmul.f32.gmra.mxu0 %v3034
    %v3077 = vpop.f32.mrf.mxu0
    %v3078 = vadd.f32 0.0, %v3077
    %3079 = vmatmul.f32.gmra.mxu0 %v3037
    %v3080 = vpop.f32.mrf.mxu0
    %v3081 = vadd.f32 0.0, %v3080
    %3082 = vmatmul.f32.gmra.mxu0 %v3040
    %v3083 = vpop.f32.mrf.mxu0
    %v3084 = vadd.f32 0.0, %v3083
    %3085 = vmatmul.f32.gmra.mxu0 %v3043
    %v3086 = vpop.f32.mrf.mxu0
    %v3087 = vadd.f32 0.0, %v3086
    %3088 = vmatmul.f32.gmra.mxu0 %v3046
    %v3089 = vpop.f32.mrf.mxu0
    %v3090 = vadd.f32 0.0, %v3089
    %3091 = vmatmul.f32.gmra.mxu0 %v3049
    %v3092 = vpop.f32.mrf.mxu0
    %v3093 = vadd.f32 0.0, %v3092
    %3094 = vmatmul.f32.gmra.mxu0 %v3052
    %v3095 = vpop.f32.mrf.mxu0
    %v3096 = vadd.f32 0.0, %v3095
    %3097 = vmatmul.f32.gmra.mxu0 %v3055
    %v3098 = vpop.f32.mrf.mxu0
    %v3099 = vadd.f32 0.0, %v3098
    %3100 = vdwg.mxu0
    %v3101 = vadd.f32 %v3023, %v3078
    %v3102 = vadd.f32 %v3024, %v3081
    %v3103 = vadd.f32 %v3025, %v3084
    %v3104 = vadd.f32 %v3026, %v3087
    %v3105 = vadd.f32 %v3027, %v3090
    %v3106 = vadd.f32 %v3028, %v3093
    %v3107 = vadd.f32 %v3029, %v3096
    %v3108 = vadd.f32 %v3030, %v3099
    %s3109 = scalar_lea.vmem %s3, 52
    %v3110 = vld [vmem:[%s3109] sm:$0xf]
    %v3112 = vsel %vm1839, %v2828, 0
    %v3115 = vsel %vm1839, %v2831, 0
    %v3118 = vsel %vm1839, %v2834, 0
    %v3121 = vsel %vm1839, %v2837, 0
    %v3124 = vsel %vm1839, %v2840, 0
    %v3127 = vsel %vm1839, %v2843, 0
    %v3130 = vsel %vm1839, %v2846, 0
    %v3133 = vsel %vm1839, %v2849, 0
    %v3136 = vsel %vm1864, %v3110, 0
    %3138 = vmatpush.msra.mxu0 0.0
    %3139 = vmatpush.msra.mxu0 0.0
    %3140 = vmatpush.msra.mxu0 0.0
    %3141 = vmatpush.msra.mxu0 0.0
    %3142 = vmatpush.msra.mxu0 0.0
    %3143 = vmatpush.msra.mxu0 0.0
    %3144 = vmatpush.msra.mxu0 0.0
    %3145 = vmatpush.msra.mxu0 0.0
    %3146 = vmatpush.msra.mxu0 0.0
    %3147 = vmatpush.msra.mxu0 0.0
    %3148 = vmatpush.msra.mxu0 0.0
    %3149 = vmatpush.msra.mxu0 0.0
    %3150 = vmatpush.msra.mxu0 0.0
    %3151 = vmatpush.msra.mxu0 0.0
    %3152 = vmatpush.msra.mxu0 0.0
    %3153 = vmatpush.msra.mxu0 %v3136
    %3154 = vmatmul.f32.gmra.mxu0 %v3112
    %v3155 = vpop.f32.mrf.mxu0
    %v3156 = vadd.f32 0.0, %v3155
    %3157 = vmatmul.f32.gmra.mxu0 %v3115
    %v3158 = vpop.f32.mrf.mxu0
    %v3159 = vadd.f32 0.0, %v3158
    %3160 = vmatmul.f32.gmra.mxu0 %v3118
    %v3161 = vpop.f32.mrf.mxu0
    %v3162 = vadd.f32 0.0, %v3161
    %3163 = vmatmul.f32.gmra.mxu0 %v3121
    %v3164 = vpop.f32.mrf.mxu0
    %v3165 = vadd.f32 0.0, %v3164
    %3166 = vmatmul.f32.gmra.mxu0 %v3124
    %v3167 = vpop.f32.mrf.mxu0
    %v3168 = vadd.f32 0.0, %v3167
    %3169 = vmatmul.f32.gmra.mxu0 %v3127
    %v3170 = vpop.f32.mrf.mxu0
    %v3171 = vadd.f32 0.0, %v3170
    %3172 = vmatmul.f32.gmra.mxu0 %v3130
    %v3173 = vpop.f32.mrf.mxu0
    %v3174 = vadd.f32 0.0, %v3173
    %3175 = vmatmul.f32.gmra.mxu0 %v3133
    %v3176 = vpop.f32.mrf.mxu0
    %v3177 = vadd.f32 0.0, %v3176
    %3178 = vdwg.mxu0
    %v3179 = vadd.f32 %v3101, %v3156
    %v3180 = vadd.f32 %v3102, %v3159
    %v3181 = vadd.f32 %v3103, %v3162
    %v3182 = vadd.f32 %v3104, %v3165
    %v3183 = vadd.f32 %v3105, %v3168
    %v3184 = vadd.f32 %v3106, %v3171
    %v3185 = vadd.f32 %v3107, %v3174
    %v3186 = vadd.f32 %v3108, %v3177
    %s3187 = scalar_lea.vmem %s3, 56
    %v3188 = vld [vmem:[%s3187] sm:$0xf]
    %v3190 = vsel %vm1839, %v2852, 0
    %v3193 = vsel %vm1839, %v2855, 0
    %v3196 = vsel %vm1839, %v2858, 0
    %v3199 = vsel %vm1839, %v2861, 0
    %v3202 = vsel %vm1839, %v2864, 0
    %v3205 = vsel %vm1839, %v2867, 0
    %v3208 = vsel %vm1839, %v2870, 0
    %v3211 = vsel %vm1839, %v2873, 0
    %v3214 = vsel %vm1864, %v3188, 0
    %3216 = vmatpush.msra.mxu0 0.0
    %3217 = vmatpush.msra.mxu0 0.0
    %3218 = vmatpush.msra.mxu0 0.0
    %3219 = vmatpush.msra.mxu0 0.0
    %3220 = vmatpush.msra.mxu0 0.0
    %3221 = vmatpush.msra.mxu0 0.0
    %3222 = vmatpush.msra.mxu0 0.0
    %3223 = vmatpush.msra.mxu0 0.0
    %3224 = vmatpush.msra.mxu0 0.0
    %3225 = vmatpush.msra.mxu0 0.0
    %3226 = vmatpush.msra.mxu0 0.0
    %3227 = vmatpush.msra.mxu0 0.0
    %3228 = vmatpush.msra.mxu0 0.0
    %3229 = vmatpush.msra.mxu0 0.0
    %3230 = vmatpush.msra.mxu0 0.0
    %3231 = vmatpush.msra.mxu0 %v3214
    %3232 = vmatmul.f32.gmra.mxu0 %v3190
    %v3233 = vpop.f32.mrf.mxu0
    %v3234 = vadd.f32 0.0, %v3233
    %3235 = vmatmul.f32.gmra.mxu0 %v3193
    %v3236 = vpop.f32.mrf.mxu0
    %v3237 = vadd.f32 0.0, %v3236
    %3238 = vmatmul.f32.gmra.mxu0 %v3196
    %v3239 = vpop.f32.mrf.mxu0
    %v3240 = vadd.f32 0.0, %v3239
    %3241 = vmatmul.f32.gmra.mxu0 %v3199
    %v3242 = vpop.f32.mrf.mxu0
    %v3243 = vadd.f32 0.0, %v3242
    %3244 = vmatmul.f32.gmra.mxu0 %v3202
    %v3245 = vpop.f32.mrf.mxu0
    %v3246 = vadd.f32 0.0, %v3245
    %3247 = vmatmul.f32.gmra.mxu0 %v3205
    %v3248 = vpop.f32.mrf.mxu0
    %v3249 = vadd.f32 0.0, %v3248
    %3250 = vmatmul.f32.gmra.mxu0 %v3208
    %v3251 = vpop.f32.mrf.mxu0
    %v3252 = vadd.f32 0.0, %v3251
    %3253 = vmatmul.f32.gmra.mxu0 %v3211
    %v3254 = vpop.f32.mrf.mxu0
    %v3255 = vadd.f32 0.0, %v3254
    %3256 = vdwg.mxu0
    %v3257 = vadd.f32 %v3179, %v3234
    %v3258 = vadd.f32 %v3180, %v3237
    %v3259 = vadd.f32 %v3181, %v3240
    %v3260 = vadd.f32 %v3182, %v3243
    %v3261 = vadd.f32 %v3183, %v3246
    %v3262 = vadd.f32 %v3184, %v3249
    %v3263 = vadd.f32 %v3185, %v3252
    %v3264 = vadd.f32 %v3186, %v3255
    %3265 = vmatpush.msra.mxu0 %v1632
    %3266 = vmatpush.msra.mxu0 %v1631
    %3267 = vmatpush.msra.mxu0 %v1630
    %3268 = vmatpush.msra.mxu0 %v1629
    %3269 = vmatpush.msra.mxu0 %v1628
    %3270 = vmatpush.msra.mxu0 %v1627
    %3271 = vmatpush.msra.mxu0 %v1626
    %3272 = vmatpush.msra.mxu0 %v1625
    %3273 = vmatpush.msra.mxu0 %v1624
    %3274 = vmatpush.msra.mxu0 %v1623
    %3275 = vmatpush.msra.mxu0 %v1622
    %3276 = vmatpush.msra.mxu0 %v1621
    %3277 = vmatpush.msra.mxu0 %v1620
    %3278 = vmatpush.msra.mxu0 %v1619
    %3279 = vmatpush.msra.mxu0 %v1618
    %3280 = vmatpush.msra.mxu0 %v1617
    %3281 = vmatmul.f32.gmra.mxu0 %v1659
    %v3282 = vpop.f32.mrf.mxu0
    %v3283 = vadd.f32 0.0, %v3282
    %3284 = vmatmul.f32.gmra.mxu0 %v1660
    %v3285 = vpop.f32.mrf.mxu0
    %v3286 = vadd.f32 0.0, %v3285
    %3287 = vmatmul.f32.gmra.mxu0 %v1661
    %v3288 = vpop.f32.mrf.mxu0
    %v3289 = vadd.f32 0.0, %v3288
    %3290 = vmatmul.f32.gmra.mxu0 %v1662
    %v3291 = vpop.f32.mrf.mxu0
    %v3292 = vadd.f32 0.0, %v3291
    %3293 = vmatmul.f32.gmra.mxu0 %v1663
    %v3294 = vpop.f32.mrf.mxu0
    %v3295 = vadd.f32 0.0, %v3294
    %3296 = vmatmul.f32.gmra.mxu0 %v1664
    %v3297 = vpop.f32.mrf.mxu0
    %v3298 = vadd.f32 0.0, %v3297
    %3299 = vmatmul.f32.gmra.mxu0 %v1665
    %v3300 = vpop.f32.mrf.mxu0
    %v3301 = vadd.f32 0.0, %v3300
    %3302 = vmatmul.f32.gmra.mxu0 %v1666
    %v3303 = vpop.f32.mrf.mxu0
    %v3304 = vadd.f32 0.0, %v3303
    %3305 = vmatmul.f32.gmra.mxu0 %v1667
    %v3306 = vpop.f32.mrf.mxu0
    %v3307 = vadd.f32 0.0, %v3306
    %3308 = vmatmul.f32.gmra.mxu0 %v1668
    %v3309 = vpop.f32.mrf.mxu0
    %v3310 = vadd.f32 0.0, %v3309
    %3311 = vmatmul.f32.gmra.mxu0 %v1669
    %v3312 = vpop.f32.mrf.mxu0
    %v3313 = vadd.f32 0.0, %v3312
    %3314 = vmatmul.f32.gmra.mxu0 %v1670
    %v3315 = vpop.f32.mrf.mxu0
    %v3316 = vadd.f32 0.0, %v3315
    %3317 = vmatmul.f32.gmra.mxu0 %v1671
    %v3318 = vpop.f32.mrf.mxu0
    %v3319 = vadd.f32 0.0, %v3318
    %3320 = vmatmul.f32.gmra.mxu0 %v1672
    %v3321 = vpop.f32.mrf.mxu0
    %v3322 = vadd.f32 0.0, %v3321
    %3323 = vmatmul.f32.gmra.mxu0 %v1673
    %v3324 = vpop.f32.mrf.mxu0
    %v3325 = vadd.f32 0.0, %v3324
    %3326 = vmatmul.f32.gmra.mxu0 %v1674
    %v3327 = vpop.f32.mrf.mxu0
    %v3328 = vadd.f32 0.0, %v3327
    %3329 = vmatmul.f32.gmra.mxu0 %v1675
    %v3330 = vpop.f32.mrf.mxu0
    %v3331 = vadd.f32 0.0, %v3330
    %3332 = vmatmul.f32.gmra.mxu0 %v1676
    %v3333 = vpop.f32.mrf.mxu0
    %v3334 = vadd.f32 0.0, %v3333
    %3335 = vmatmul.f32.gmra.mxu0 %v1677
    %v3336 = vpop.f32.mrf.mxu0
    %v3337 = vadd.f32 0.0, %v3336
    %3338 = vmatmul.f32.gmra.mxu0 %v1678
    %v3339 = vpop.f32.mrf.mxu0
    %v3340 = vadd.f32 0.0, %v3339
    %3341 = vmatmul.f32.gmra.mxu0 %v1679
    %v3342 = vpop.f32.mrf.mxu0
    %v3343 = vadd.f32 0.0, %v3342
    %3344 = vmatmul.f32.gmra.mxu0 %v1680
    %v3345 = vpop.f32.mrf.mxu0
    %v3346 = vadd.f32 0.0, %v3345
    %3347 = vmatmul.f32.gmra.mxu0 %v1681
    %v3348 = vpop.f32.mrf.mxu0
    %v3349 = vadd.f32 0.0, %v3348
    %3350 = vmatmul.f32.gmra.mxu0 %v1682
    %v3351 = vpop.f32.mrf.mxu0
    %v3352 = vadd.f32 0.0, %v3351
    %3353 = vmatmul.f32.gmra.mxu0 %v1683
    %v3354 = vpop.f32.mrf.mxu0
    %v3355 = vadd.f32 0.0, %v3354
    %3356 = vmatmul.f32.gmra.mxu0 %v1684
    %v3357 = vpop.f32.mrf.mxu0
    %v3358 = vadd.f32 0.0, %v3357
    %3359 = vmatmul.f32.gmra.mxu0 %v1685
    %v3360 = vpop.f32.mrf.mxu0
    %v3361 = vadd.f32 0.0, %v3360
    %3362 = vmatmul.f32.gmra.mxu0 %v1686
    %v3363 = vpop.f32.mrf.mxu0
    %v3364 = vadd.f32 0.0, %v3363
    %3365 = vmatmul.f32.gmra.mxu0 %v1687
    %v3366 = vpop.f32.mrf.mxu0
    %v3367 = vadd.f32 0.0, %v3366
    %3368 = vmatmul.f32.gmra.mxu0 %v1688
    %v3369 = vpop.f32.mrf.mxu0
    %v3370 = vadd.f32 0.0, %v3369
    %3371 = vmatmul.f32.gmra.mxu0 %v1689
    %v3372 = vpop.f32.mrf.mxu0
    %v3373 = vadd.f32 0.0, %v3372
    %3374 = vmatmul.f32.gmra.mxu0 %v1690
    %v3375 = vpop.f32.mrf.mxu0
    %v3376 = vadd.f32 0.0, %v3375
    %3377 = vmatmul.f32.gmra.mxu0 %v1691
    %v3378 = vpop.f32.mrf.mxu0
    %v3379 = vadd.f32 0.0, %v3378
    %3380 = vmatmul.f32.gmra.mxu0 %v1692
    %v3381 = vpop.f32.mrf.mxu0
    %v3382 = vadd.f32 0.0, %v3381
    %3383 = vmatmul.f32.gmra.mxu0 %v1693
    %v3384 = vpop.f32.mrf.mxu0
    %v3385 = vadd.f32 0.0, %v3384
    %3386 = vmatmul.f32.gmra.mxu0 %v1694
    %v3387 = vpop.f32.mrf.mxu0
    %v3388 = vadd.f32 0.0, %v3387
    %3389 = vmatmul.f32.gmra.mxu0 %v1695
    %v3390 = vpop.f32.mrf.mxu0
    %v3391 = vadd.f32 0.0, %v3390
    %3392 = vmatmul.f32.gmra.mxu0 %v1696
    %v3393 = vpop.f32.mrf.mxu0
    %v3394 = vadd.f32 0.0, %v3393
    %3395 = vmatmul.f32.gmra.mxu0 %v1697
    %v3396 = vpop.f32.mrf.mxu0
    %v3397 = vadd.f32 0.0, %v3396
    %3398 = vmatmul.f32.gmra.mxu0 %v1698
    %v3399 = vpop.f32.mrf.mxu0
    %v3400 = vadd.f32 0.0, %v3399
    %3401 = vdwg.mxu0
    %s3402 = scalar_lea.vmem %s3, 60
    %v3403 = vld [vmem:[%s3402] sm:$0xf]
    %v3405 = vsel %vm1839, %v3283, 0
    %v3408 = vsel %vm1839, %v3286, 0
    %v3411 = vsel %vm1839, %v3289, 0
    %v3414 = vsel %vm1839, %v3292, 0
    %v3417 = vsel %vm1839, %v3295, 0
    %v3420 = vsel %vm1839, %v3298, 0
    %v3423 = vsel %vm1839, %v3301, 0
    %v3426 = vsel %vm1839, %v3304, 0
    %v3429 = vsel %vm1864, %v3403, 0
    %3431 = vmatpush.msra.mxu0 0.0
    %3432 = vmatpush.msra.mxu0 0.0
    %3433 = vmatpush.msra.mxu0 0.0
    %3434 = vmatpush.msra.mxu0 0.0
    %3435 = vmatpush.msra.mxu0 0.0
    %3436 = vmatpush.msra.mxu0 0.0
    %3437 = vmatpush.msra.mxu0 0.0
    %3438 = vmatpush.msra.mxu0 0.0
    %3439 = vmatpush.msra.mxu0 0.0
    %3440 = vmatpush.msra.mxu0 0.0
    %3441 = vmatpush.msra.mxu0 0.0
    %3442 = vmatpush.msra.mxu0 0.0
    %3443 = vmatpush.msra.mxu0 0.0
    %3444 = vmatpush.msra.mxu0 0.0
    %3445 = vmatpush.msra.mxu0 0.0
    %3446 = vmatpush.msra.mxu0 %v3429
    %3447 = vmatmul.f32.gmra.mxu0 %v3405
    %v3448 = vpop.f32.mrf.mxu0
    %v3449 = vadd.f32 0.0, %v3448
    %3450 = vmatmul.f32.gmra.mxu0 %v3408
    %v3451 = vpop.f32.mrf.mxu0
    %v3452 = vadd.f32 0.0, %v3451
    %3453 = vmatmul.f32.gmra.mxu0 %v3411
    %v3454 = vpop.f32.mrf.mxu0
    %v3455 = vadd.f32 0.0, %v3454
    %3456 = vmatmul.f32.gmra.mxu0 %v3414
    %v3457 = vpop.f32.mrf.mxu0
    %v3458 = vadd.f32 0.0, %v3457
    %3459 = vmatmul.f32.gmra.mxu0 %v3417
    %v3460 = vpop.f32.mrf.mxu0
    %v3461 = vadd.f32 0.0, %v3460
    %3462 = vmatmul.f32.gmra.mxu0 %v3420
    %v3463 = vpop.f32.mrf.mxu0
    %v3464 = vadd.f32 0.0, %v3463
    %3465 = vmatmul.f32.gmra.mxu0 %v3423
    %v3466 = vpop.f32.mrf.mxu0
    %v3467 = vadd.f32 0.0, %v3466
    %3468 = vmatmul.f32.gmra.mxu0 %v3426
    %v3469 = vpop.f32.mrf.mxu0
    %v3470 = vadd.f32 0.0, %v3469
    %3471 = vdwg.mxu0
    %v3472 = vadd.f32 %v3257, %v3449
    %v3473 = vadd.f32 %v3258, %v3452
    %v3474 = vadd.f32 %v3259, %v3455
    %v3475 = vadd.f32 %v3260, %v3458
    %v3476 = vadd.f32 %v3261, %v3461
    %v3477 = vadd.f32 %v3262, %v3464
    %v3478 = vadd.f32 %v3263, %v3467
    %v3479 = vadd.f32 %v3264, %v3470
    %s3480 = scalar_lea.vmem %s3, 64
    %v3481 = vld [vmem:[%s3480] sm:$0xf]
    %v3483 = vsel %vm1839, %v3307, 0
    %v3486 = vsel %vm1839, %v3310, 0
    %v3489 = vsel %vm1839, %v3313, 0
    %v3492 = vsel %vm1839, %v3316, 0
    %v3495 = vsel %vm1839, %v3319, 0
    %v3498 = vsel %vm1839, %v3322, 0
    %v3501 = vsel %vm1839, %v3325, 0
    %v3504 = vsel %vm1839, %v3328, 0
    %v3507 = vsel %vm1864, %v3481, 0
    %3509 = vmatpush.msra.mxu0 0.0
    %3510 = vmatpush.msra.mxu0 0.0
    %3511 = vmatpush.msra.mxu0 0.0
    %3512 = vmatpush.msra.mxu0 0.0
    %3513 = vmatpush.msra.mxu0 0.0
    %3514 = vmatpush.msra.mxu0 0.0
    %3515 = vmatpush.msra.mxu0 0.0
    %3516 = vmatpush.msra.mxu0 0.0
    %3517 = vmatpush.msra.mxu0 0.0
    %3518 = vmatpush.msra.mxu0 0.0
    %3519 = vmatpush.msra.mxu0 0.0
    %3520 = vmatpush.msra.mxu0 0.0
    %3521 = vmatpush.msra.mxu0 0.0
    %3522 = vmatpush.msra.mxu0 0.0
    %3523 = vmatpush.msra.mxu0 0.0
    %3524 = vmatpush.msra.mxu0 %v3507
    %3525 = vmatmul.f32.gmra.mxu0 %v3483
    %v3526 = vpop.f32.mrf.mxu0
    %v3527 = vadd.f32 0.0, %v3526
    %3528 = vmatmul.f32.gmra.mxu0 %v3486
    %v3529 = vpop.f32.mrf.mxu0
    %v3530 = vadd.f32 0.0, %v3529
    %3531 = vmatmul.f32.gmra.mxu0 %v3489
    %v3532 = vpop.f32.mrf.mxu0
    %v3533 = vadd.f32 0.0, %v3532
    %3534 = vmatmul.f32.gmra.mxu0 %v3492
    %v3535 = vpop.f32.mrf.mxu0
    %v3536 = vadd.f32 0.0, %v3535
    %3537 = vmatmul.f32.gmra.mxu0 %v3495
    %v3538 = vpop.f32.mrf.mxu0
    %v3539 = vadd.f32 0.0, %v3538
    %3540 = vmatmul.f32.gmra.mxu0 %v3498
    %v3541 = vpop.f32.mrf.mxu0
    %v3542 = vadd.f32 0.0, %v3541
    %3543 = vmatmul.f32.gmra.mxu0 %v3501
    %v3544 = vpop.f32.mrf.mxu0
    %v3545 = vadd.f32 0.0, %v3544
    %3546 = vmatmul.f32.gmra.mxu0 %v3504
    %v3547 = vpop.f32.mrf.mxu0
    %v3548 = vadd.f32 0.0, %v3547
    %3549 = vdwg.mxu0
    %v3550 = vadd.f32 %v3472, %v3527
    %v3551 = vadd.f32 %v3473, %v3530
    %v3552 = vadd.f32 %v3474, %v3533
    %v3553 = vadd.f32 %v3475, %v3536
    %v3554 = vadd.f32 %v3476, %v3539
    %v3555 = vadd.f32 %v3477, %v3542
    %v3556 = vadd.f32 %v3478, %v3545
    %v3557 = vadd.f32 %v3479, %v3548
    %s3558 = scalar_lea.vmem %s3, 68
    %v3559 = vld [vmem:[%s3558] sm:$0xf]
    %v3561 = vsel %vm1839, %v3331, 0
    %v3564 = vsel %vm1839, %v3334, 0
    %v3567 = vsel %vm1839, %v3337, 0
    %v3570 = vsel %vm1839, %v3340, 0
    %v3573 = vsel %vm1839, %v3343, 0
    %v3576 = vsel %vm1839, %v3346, 0
    %v3579 = vsel %vm1839, %v3349, 0
    %v3582 = vsel %vm1839, %v3352, 0
    %v3585 = vsel %vm1864, %v3559, 0
    %3587 = vmatpush.msra.mxu0 0.0
    %3588 = vmatpush.msra.mxu0 0.0
    %3589 = vmatpush.msra.mxu0 0.0
    %3590 = vmatpush.msra.mxu0 0.0
    %3591 = vmatpush.msra.mxu0 0.0
    %3592 = vmatpush.msra.mxu0 0.0
    %3593 = vmatpush.msra.mxu0 0.0
    %3594 = vmatpush.msra.mxu0 0.0
    %3595 = vmatpush.msra.mxu0 0.0
    %3596 = vmatpush.msra.mxu0 0.0
    %3597 = vmatpush.msra.mxu0 0.0
    %3598 = vmatpush.msra.mxu0 0.0
    %3599 = vmatpush.msra.mxu0 0.0
    %3600 = vmatpush.msra.mxu0 0.0
    %3601 = vmatpush.msra.mxu0 0.0
    %3602 = vmatpush.msra.mxu0 %v3585
    %3603 = vmatmul.f32.gmra.mxu0 %v3561
    %v3604 = vpop.f32.mrf.mxu0
    %v3605 = vadd.f32 0.0, %v3604
    %3606 = vmatmul.f32.gmra.mxu0 %v3564
    %v3607 = vpop.f32.mrf.mxu0
    %v3608 = vadd.f32 0.0, %v3607
    %3609 = vmatmul.f32.gmra.mxu0 %v3567
    %v3610 = vpop.f32.mrf.mxu0
    %v3611 = vadd.f32 0.0, %v3610
    %3612 = vmatmul.f32.gmra.mxu0 %v3570
    %v3613 = vpop.f32.mrf.mxu0
    %v3614 = vadd.f32 0.0, %v3613
    %3615 = vmatmul.f32.gmra.mxu0 %v3573
    %v3616 = vpop.f32.mrf.mxu0
    %v3617 = vadd.f32 0.0, %v3616
    %3618 = vmatmul.f32.gmra.mxu0 %v3576
    %v3619 = vpop.f32.mrf.mxu0
    %v3620 = vadd.f32 0.0, %v3619
    %3621 = vmatmul.f32.gmra.mxu0 %v3579
    %v3622 = vpop.f32.mrf.mxu0
    %v3623 = vadd.f32 0.0, %v3622
    %3624 = vmatmul.f32.gmra.mxu0 %v3582
    %v3625 = vpop.f32.mrf.mxu0
    %v3626 = vadd.f32 0.0, %v3625
    %3627 = vdwg.mxu0
    %v3628 = vadd.f32 %v3550, %v3605
    %v3629 = vadd.f32 %v3551, %v3608
    %v3630 = vadd.f32 %v3552, %v3611
    %v3631 = vadd.f32 %v3553, %v3614
    %v3632 = vadd.f32 %v3554, %v3617
    %v3633 = vadd.f32 %v3555, %v3620
    %v3634 = vadd.f32 %v3556, %v3623
    %v3635 = vadd.f32 %v3557, %v3626
    %s3636 = scalar_lea.vmem %s3, 72
    %v3637 = vld [vmem:[%s3636] sm:$0xf]
    %v3639 = vsel %vm1839, %v3355, 0
    %v3642 = vsel %vm1839, %v3358, 0
    %v3645 = vsel %vm1839, %v3361, 0
    %v3648 = vsel %vm1839, %v3364, 0
    %v3651 = vsel %vm1839, %v3367, 0
    %v3654 = vsel %vm1839, %v3370, 0
    %v3657 = vsel %vm1839, %v3373, 0
    %v3660 = vsel %vm1839, %v3376, 0
    %v3663 = vsel %vm1864, %v3637, 0
    %3665 = vmatpush.msra.mxu0 0.0
    %3666 = vmatpush.msra.mxu0 0.0
    %3667 = vmatpush.msra.mxu0 0.0
    %3668 = vmatpush.msra.mxu0 0.0
    %3669 = vmatpush.msra.mxu0 0.0
    %3670 = vmatpush.msra.mxu0 0.0
    %3671 = vmatpush.msra.mxu0 0.0
    %3672 = vmatpush.msra.mxu0 0.0
    %3673 = vmatpush.msra.mxu0 0.0
    %3674 = vmatpush.msra.mxu0 0.0
    %3675 = vmatpush.msra.mxu0 0.0
    %3676 = vmatpush.msra.mxu0 0.0
    %3677 = vmatpush.msra.mxu0 0.0
    %3678 = vmatpush.msra.mxu0 0.0
    %3679 = vmatpush.msra.mxu0 0.0
    %3680 = vmatpush.msra.mxu0 %v3663
    %3681 = vmatmul.f32.gmra.mxu0 %v3639
    %v3682 = vpop.f32.mrf.mxu0
    %v3683 = vadd.f32 0.0, %v3682
    %3684 = vmatmul.f32.gmra.mxu0 %v3642
    %v3685 = vpop.f32.mrf.mxu0
    %v3686 = vadd.f32 0.0, %v3685
    %3687 = vmatmul.f32.gmra.mxu0 %v3645
    %v3688 = vpop.f32.mrf.mxu0
    %v3689 = vadd.f32 0.0, %v3688
    %3690 = vmatmul.f32.gmra.mxu0 %v3648
    %v3691 = vpop.f32.mrf.mxu0
    %v3692 = vadd.f32 0.0, %v3691
    %3693 = vmatmul.f32.gmra.mxu0 %v3651
    %v3694 = vpop.f32.mrf.mxu0
    %v3695 = vadd.f32 0.0, %v3694
    %3696 = vmatmul.f32.gmra.mxu0 %v3654
    %v3697 = vpop.f32.mrf.mxu0
    %v3698 = vadd.f32 0.0, %v3697
    %3699 = vmatmul.f32.gmra.mxu0 %v3657
    %v3700 = vpop.f32.mrf.mxu0
    %v3701 = vadd.f32 0.0, %v3700
    %3702 = vmatmul.f32.gmra.mxu0 %v3660
    %v3703 = vpop.f32.mrf.mxu0
    %v3704 = vadd.f32 0.0, %v3703
    %3705 = vdwg.mxu0
    %v3706 = vadd.f32 %v3628, %v3683
    %v3707 = vadd.f32 %v3629, %v3686
    %v3708 = vadd.f32 %v3630, %v3689
    %v3709 = vadd.f32 %v3631, %v3692
    %v3710 = vadd.f32 %v3632, %v3695
    %v3711 = vadd.f32 %v3633, %v3698
    %v3712 = vadd.f32 %v3634, %v3701
    %v3713 = vadd.f32 %v3635, %v3704
    %s3714 = scalar_lea.vmem %s3, 76
    %v3715 = vld [vmem:[%s3714] sm:$0xf]
    %v3717 = vsel %vm1839, %v3379, 0
    %v3720 = vsel %vm1839, %v3382, 0
    %v3723 = vsel %vm1839, %v3385, 0
    %v3726 = vsel %vm1839, %v3388, 0
    %v3729 = vsel %vm1839, %v3391, 0
    %v3732 = vsel %vm1839, %v3394, 0
    %v3735 = vsel %vm1839, %v3397, 0
    %v3738 = vsel %vm1839, %v3400, 0
    %v3741 = vsel %vm1864, %v3715, 0
    %3743 = vmatpush.msra.mxu0 0.0
    %3744 = vmatpush.msra.mxu0 0.0
    %3745 = vmatpush.msra.mxu0 0.0
    %3746 = vmatpush.msra.mxu0 0.0
    %3747 = vmatpush.msra.mxu0 0.0
    %3748 = vmatpush.msra.mxu0 0.0
    %3749 = vmatpush.msra.mxu0 0.0
    %3750 = vmatpush.msra.mxu0 0.0
    %3751 = vmatpush.msra.mxu0 0.0
    %3752 = vmatpush.msra.mxu0 0.0
    %3753 = vmatpush.msra.mxu0 0.0
    %3754 = vmatpush.msra.mxu0 0.0
    %3755 = vmatpush.msra.mxu0 0.0
    %3756 = vmatpush.msra.mxu0 0.0
    %3757 = vmatpush.msra.mxu0 0.0
    %3758 = vmatpush.msra.mxu0 %v3741
    %3759 = vmatmul.f32.gmra.mxu0 %v3717
    %v3760 = vpop.f32.mrf.mxu0
    %v3761 = vadd.f32 0.0, %v3760
    %3762 = vmatmul.f32.gmra.mxu0 %v3720
    %v3763 = vpop.f32.mrf.mxu0
    %v3764 = vadd.f32 0.0, %v3763
    %3765 = vmatmul.f32.gmra.mxu0 %v3723
    %v3766 = vpop.f32.mrf.mxu0
    %v3767 = vadd.f32 0.0, %v3766
    %3768 = vmatmul.f32.gmra.mxu0 %v3726
    %v3769 = vpop.f32.mrf.mxu0
    %v3770 = vadd.f32 0.0, %v3769
    %3771 = vmatmul.f32.gmra.mxu0 %v3729
    %v3772 = vpop.f32.mrf.mxu0
    %v3773 = vadd.f32 0.0, %v3772
    %3774 = vmatmul.f32.gmra.mxu0 %v3732
    %v3775 = vpop.f32.mrf.mxu0
    %v3776 = vadd.f32 0.0, %v3775
    %3777 = vmatmul.f32.gmra.mxu0 %v3735
    %v3778 = vpop.f32.mrf.mxu0
    %v3779 = vadd.f32 0.0, %v3778
    %3780 = vmatmul.f32.gmra.mxu0 %v3738
    %v3781 = vpop.f32.mrf.mxu0
    %v3782 = vadd.f32 0.0, %v3781
    %3783 = vdwg.mxu0
    %v3784 = vadd.f32 %v3706, %v3761
    %v3785 = vadd.f32 %v3707, %v3764
    %v3786 = vadd.f32 %v3708, %v3767
    %v3787 = vadd.f32 %v3709, %v3770
    %v3788 = vadd.f32 %v3710, %v3773
    %v3789 = vadd.f32 %v3711, %v3776
    %v3790 = vadd.f32 %v3712, %v3779
    %v3791 = vadd.f32 %v3713, %v3782
    %3792 = vmatpush.msra.mxu0 %v1634
    %3793 = vmatpush.msra.mxu0 %v1633
    %3794 = vmatpush.msra.mxu0 %v1632
    %3795 = vmatpush.msra.mxu0 %v1631
    %3796 = vmatpush.msra.mxu0 %v1630
    %3797 = vmatpush.msra.mxu0 %v1629
    %3798 = vmatpush.msra.mxu0 %v1628
    %3799 = vmatpush.msra.mxu0 %v1627
    %3800 = vmatpush.msra.mxu0 %v1626
    %3801 = vmatpush.msra.mxu0 %v1625
    %3802 = vmatpush.msra.mxu0 %v1624
    %3803 = vmatpush.msra.mxu0 %v1623
    %3804 = vmatpush.msra.mxu0 %v1622
    %3805 = vmatpush.msra.mxu0 %v1621
    %3806 = vmatpush.msra.mxu0 %v1620
    %3807 = vmatpush.msra.mxu0 %v1619
    %3808 = vmatmul.f32.gmra.mxu0 %v1659
    %v3809 = vpop.f32.mrf.mxu0
    %v3810 = vadd.f32 0.0, %v3809
    %3811 = vmatmul.f32.gmra.mxu0 %v1660
    %v3812 = vpop.f32.mrf.mxu0
    %v3813 = vadd.f32 0.0, %v3812
    %3814 = vmatmul.f32.gmra.mxu0 %v1661
    %v3815 = vpop.f32.mrf.mxu0
    %v3816 = vadd.f32 0.0, %v3815
    %3817 = vmatmul.f32.gmra.mxu0 %v1662
    %v3818 = vpop.f32.mrf.mxu0
    %v3819 = vadd.f32 0.0, %v3818
    %3820 = vmatmul.f32.gmra.mxu0 %v1663
    %v3821 = vpop.f32.mrf.mxu0
    %v3822 = vadd.f32 0.0, %v3821
    %3823 = vmatmul.f32.gmra.mxu0 %v1664
    %v3824 = vpop.f32.mrf.mxu0
    %v3825 = vadd.f32 0.0, %v3824
    %3826 = vmatmul.f32.gmra.mxu0 %v1665
    %v3827 = vpop.f32.mrf.mxu0
    %v3828 = vadd.f32 0.0, %v3827
    %3829 = vmatmul.f32.gmra.mxu0 %v1666
    %v3830 = vpop.f32.mrf.mxu0
    %v3831 = vadd.f32 0.0, %v3830
    %3832 = vmatmul.f32.gmra.mxu0 %v1667
    %v3833 = vpop.f32.mrf.mxu0
    %v3834 = vadd.f32 0.0, %v3833
    %3835 = vmatmul.f32.gmra.mxu0 %v1668
    %v3836 = vpop.f32.mrf.mxu0
    %v3837 = vadd.f32 0.0, %v3836
    %3838 = vmatmul.f32.gmra.mxu0 %v1669
    %v3839 = vpop.f32.mrf.mxu0
    %v3840 = vadd.f32 0.0, %v3839
    %3841 = vmatmul.f32.gmra.mxu0 %v1670
    %v3842 = vpop.f32.mrf.mxu0
    %v3843 = vadd.f32 0.0, %v3842
    %3844 = vmatmul.f32.gmra.mxu0 %v1671
    %v3845 = vpop.f32.mrf.mxu0
    %v3846 = vadd.f32 0.0, %v3845
    %3847 = vmatmul.f32.gmra.mxu0 %v1672
    %v3848 = vpop.f32.mrf.mxu0
    %v3849 = vadd.f32 0.0, %v3848
    %3850 = vmatmul.f32.gmra.mxu0 %v1673
    %v3851 = vpop.f32.mrf.mxu0
    %v3852 = vadd.f32 0.0, %v3851
    %3853 = vmatmul.f32.gmra.mxu0 %v1674
    %v3854 = vpop.f32.mrf.mxu0
    %v3855 = vadd.f32 0.0, %v3854
    %3856 = vmatmul.f32.gmra.mxu0 %v1675
    %v3857 = vpop.f32.mrf.mxu0
    %v3858 = vadd.f32 0.0, %v3857
    %3859 = vmatmul.f32.gmra.mxu0 %v1676
    %v3860 = vpop.f32.mrf.mxu0
    %v3861 = vadd.f32 0.0, %v3860
    %3862 = vmatmul.f32.gmra.mxu0 %v1677
    %v3863 = vpop.f32.mrf.mxu0
    %v3864 = vadd.f32 0.0, %v3863
    %3865 = vmatmul.f32.gmra.mxu0 %v1678
    %v3866 = vpop.f32.mrf.mxu0
    %v3867 = vadd.f32 0.0, %v3866
    %3868 = vmatmul.f32.gmra.mxu0 %v1679
    %v3869 = vpop.f32.mrf.mxu0
    %v3870 = vadd.f32 0.0, %v3869
    %3871 = vmatmul.f32.gmra.mxu0 %v1680
    %v3872 = vpop.f32.mrf.mxu0
    %v3873 = vadd.f32 0.0, %v3872
    %3874 = vmatmul.f32.gmra.mxu0 %v1681
    %v3875 = vpop.f32.mrf.mxu0
    %v3876 = vadd.f32 0.0, %v3875
    %3877 = vmatmul.f32.gmra.mxu0 %v1682
    %v3878 = vpop.f32.mrf.mxu0
    %v3879 = vadd.f32 0.0, %v3878
    %3880 = vmatmul.f32.gmra.mxu0 %v1683
    %v3881 = vpop.f32.mrf.mxu0
    %v3882 = vadd.f32 0.0, %v3881
    %3883 = vmatmul.f32.gmra.mxu0 %v1684
    %v3884 = vpop.f32.mrf.mxu0
    %v3885 = vadd.f32 0.0, %v3884
    %3886 = vmatmul.f32.gmra.mxu0 %v1685
    %v3887 = vpop.f32.mrf.mxu0
    %v3888 = vadd.f32 0.0, %v3887
    %3889 = vmatmul.f32.gmra.mxu0 %v1686
    %v3890 = vpop.f32.mrf.mxu0
    %v3891 = vadd.f32 0.0, %v3890
    %3892 = vmatmul.f32.gmra.mxu0 %v1687
    %v3893 = vpop.f32.mrf.mxu0
    %v3894 = vadd.f32 0.0, %v3893
    %3895 = vmatmul.f32.gmra.mxu0 %v1688
    %v3896 = vpop.f32.mrf.mxu0
    %v3897 = vadd.f32 0.0, %v3896
    %3898 = vmatmul.f32.gmra.mxu0 %v1689
    %v3899 = vpop.f32.mrf.mxu0
    %v3900 = vadd.f32 0.0, %v3899
    %3901 = vmatmul.f32.gmra.mxu0 %v1690
    %v3902 = vpop.f32.mrf.mxu0
    %v3903 = vadd.f32 0.0, %v3902
    %3904 = vmatmul.f32.gmra.mxu0 %v1691
    %v3905 = vpop.f32.mrf.mxu0
    %v3906 = vadd.f32 0.0, %v3905
    %3907 = vmatmul.f32.gmra.mxu0 %v1692
    %v3908 = vpop.f32.mrf.mxu0
    %v3909 = vadd.f32 0.0, %v3908
    %3910 = vmatmul.f32.gmra.mxu0 %v1693
    %v3911 = vpop.f32.mrf.mxu0
    %v3912 = vadd.f32 0.0, %v3911
    %3913 = vmatmul.f32.gmra.mxu0 %v1694
    %v3914 = vpop.f32.mrf.mxu0
    %v3915 = vadd.f32 0.0, %v3914
    %3916 = vmatmul.f32.gmra.mxu0 %v1695
    %v3917 = vpop.f32.mrf.mxu0
    %v3918 = vadd.f32 0.0, %v3917
    %3919 = vmatmul.f32.gmra.mxu0 %v1696
    %v3920 = vpop.f32.mrf.mxu0
    %v3921 = vadd.f32 0.0, %v3920
    %3922 = vmatmul.f32.gmra.mxu0 %v1697
    %v3923 = vpop.f32.mrf.mxu0
    %v3924 = vadd.f32 0.0, %v3923
    %3925 = vmatmul.f32.gmra.mxu0 %v1698
    %v3926 = vpop.f32.mrf.mxu0
    %v3927 = vadd.f32 0.0, %v3926
    %3928 = vdwg.mxu0
    %s3929 = scalar_lea.vmem %s3, 80
    %v3930 = vld [vmem:[%s3929] sm:$0xf]
    %v3932 = vsel %vm1839, %v3810, 0
    %v3935 = vsel %vm1839, %v3813, 0
    %v3938 = vsel %vm1839, %v3816, 0
    %v3941 = vsel %vm1839, %v3819, 0
    %v3944 = vsel %vm1839, %v3822, 0
    %v3947 = vsel %vm1839, %v3825, 0
    %v3950 = vsel %vm1839, %v3828, 0
    %v3953 = vsel %vm1839, %v3831, 0
    %v3956 = vsel %vm1864, %v3930, 0
    %3958 = vmatpush.msra.mxu0 0.0
    %3959 = vmatpush.msra.mxu0 0.0
    %3960 = vmatpush.msra.mxu0 0.0
    %3961 = vmatpush.msra.mxu0 0.0
    %3962 = vmatpush.msra.mxu0 0.0
    %3963 = vmatpush.msra.mxu0 0.0
    %3964 = vmatpush.msra.mxu0 0.0
    %3965 = vmatpush.msra.mxu0 0.0
    %3966 = vmatpush.msra.mxu0 0.0
    %3967 = vmatpush.msra.mxu0 0.0
    %3968 = vmatpush.msra.mxu0 0.0
    %3969 = vmatpush.msra.mxu0 0.0
    %3970 = vmatpush.msra.mxu0 0.0
    %3971 = vmatpush.msra.mxu0 0.0
    %3972 = vmatpush.msra.mxu0 0.0
    %3973 = vmatpush.msra.mxu0 %v3956
    %3974 = vmatmul.f32.gmra.mxu0 %v3932
    %v3975 = vpop.f32.mrf.mxu0
    %v3976 = vadd.f32 0.0, %v3975
    %3977 = vmatmul.f32.gmra.mxu0 %v3935
    %v3978 = vpop.f32.mrf.mxu0
    %v3979 = vadd.f32 0.0, %v3978
    %3980 = vmatmul.f32.gmra.mxu0 %v3938
    %v3981 = vpop.f32.mrf.mxu0
    %v3982 = vadd.f32 0.0, %v3981
    %3983 = vmatmul.f32.gmra.mxu0 %v3941
    %v3984 = vpop.f32.mrf.mxu0
    %v3985 = vadd.f32 0.0, %v3984
    %3986 = vmatmul.f32.gmra.mxu0 %v3944
    %v3987 = vpop.f32.mrf.mxu0
    %v3988 = vadd.f32 0.0, %v3987
    %3989 = vmatmul.f32.gmra.mxu0 %v3947
    %v3990 = vpop.f32.mrf.mxu0
    %v3991 = vadd.f32 0.0, %v3990
    %3992 = vmatmul.f32.gmra.mxu0 %v3950
    %v3993 = vpop.f32.mrf.mxu0
    %v3994 = vadd.f32 0.0, %v3993
    %3995 = vmatmul.f32.gmra.mxu0 %v3953
    %v3996 = vpop.f32.mrf.mxu0
    %v3997 = vadd.f32 0.0, %v3996
    %3998 = vdwg.mxu0
    %v3999 = vadd.f32 %v3784, %v3976
    %v4000 = vadd.f32 %v3785, %v3979
    %v4001 = vadd.f32 %v3786, %v3982
    %v4002 = vadd.f32 %v3787, %v3985
    %v4003 = vadd.f32 %v3788, %v3988
    %v4004 = vadd.f32 %v3789, %v3991
    %v4005 = vadd.f32 %v3790, %v3994
    %v4006 = vadd.f32 %v3791, %v3997
    %s4007 = scalar_lea.vmem %s3, 84
    %v4008 = vld [vmem:[%s4007] sm:$0xf]
    %v4010 = vsel %vm1839, %v3834, 0
    %v4013 = vsel %vm1839, %v3837, 0
    %v4016 = vsel %vm1839, %v3840, 0
    %v4019 = vsel %vm1839, %v3843, 0
    %v4022 = vsel %vm1839, %v3846, 0
    %v4025 = vsel %vm1839, %v3849, 0
    %v4028 = vsel %vm1839, %v3852, 0
    %v4031 = vsel %vm1839, %v3855, 0
    %v4034 = vsel %vm1864, %v4008, 0
    %4036 = vmatpush.msra.mxu0 0.0
    %4037 = vmatpush.msra.mxu0 0.0
    %4038 = vmatpush.msra.mxu0 0.0
    %4039 = vmatpush.msra.mxu0 0.0
    %4040 = vmatpush.msra.mxu0 0.0
    %4041 = vmatpush.msra.mxu0 0.0
    %4042 = vmatpush.msra.mxu0 0.0
    %4043 = vmatpush.msra.mxu0 0.0
    %4044 = vmatpush.msra.mxu0 0.0
    %4045 = vmatpush.msra.mxu0 0.0
    %4046 = vmatpush.msra.mxu0 0.0
    %4047 = vmatpush.msra.mxu0 0.0
    %4048 = vmatpush.msra.mxu0 0.0
    %4049 = vmatpush.msra.mxu0 0.0
    %4050 = vmatpush.msra.mxu0 0.0
    %4051 = vmatpush.msra.mxu0 %v4034
    %4052 = vmatmul.f32.gmra.mxu0 %v4010
    %v4053 = vpop.f32.mrf.mxu0
    %v4054 = vadd.f32 0.0, %v4053
    %4055 = vmatmul.f32.gmra.mxu0 %v4013
    %v4056 = vpop.f32.mrf.mxu0
    %v4057 = vadd.f32 0.0, %v4056
    %4058 = vmatmul.f32.gmra.mxu0 %v4016
    %v4059 = vpop.f32.mrf.mxu0
    %v4060 = vadd.f32 0.0, %v4059
    %4061 = vmatmul.f32.gmra.mxu0 %v4019
    %v4062 = vpop.f32.mrf.mxu0
    %v4063 = vadd.f32 0.0, %v4062
    %4064 = vmatmul.f32.gmra.mxu0 %v4022
    %v4065 = vpop.f32.mrf.mxu0
    %v4066 = vadd.f32 0.0, %v4065
    %4067 = vmatmul.f32.gmra.mxu0 %v4025
    %v4068 = vpop.f32.mrf.mxu0
    %v4069 = vadd.f32 0.0, %v4068
    %4070 = vmatmul.f32.gmra.mxu0 %v4028
    %v4071 = vpop.f32.mrf.mxu0
    %v4072 = vadd.f32 0.0, %v4071
    %4073 = vmatmul.f32.gmra.mxu0 %v4031
    %v4074 = vpop.f32.mrf.mxu0
    %v4075 = vadd.f32 0.0, %v4074
    %4076 = vdwg.mxu0
    %v4077 = vadd.f32 %v3999, %v4054
    %v4078 = vadd.f32 %v4000, %v4057
    %v4079 = vadd.f32 %v4001, %v4060
    %v4080 = vadd.f32 %v4002, %v4063
    %v4081 = vadd.f32 %v4003, %v4066
    %v4082 = vadd.f32 %v4004, %v4069
    %v4083 = vadd.f32 %v4005, %v4072
    %v4084 = vadd.f32 %v4006, %v4075
    %s4085 = scalar_lea.vmem %s3, 88
    %v4086 = vld [vmem:[%s4085] sm:$0xf]
    %v4088 = vsel %vm1839, %v3858, 0
    %v4091 = vsel %vm1839, %v3861, 0
    %v4094 = vsel %vm1839, %v3864, 0
    %v4097 = vsel %vm1839, %v3867, 0
    %v4100 = vsel %vm1839, %v3870, 0
    %v4103 = vsel %vm1839, %v3873, 0
    %v4106 = vsel %vm1839, %v3876, 0
    %v4109 = vsel %vm1839, %v3879, 0
    %v4112 = vsel %vm1864, %v4086, 0
    %4114 = vmatpush.msra.mxu0 0.0
    %4115 = vmatpush.msra.mxu0 0.0
    %4116 = vmatpush.msra.mxu0 0.0
    %4117 = vmatpush.msra.mxu0 0.0
    %4118 = vmatpush.msra.mxu0 0.0
    %4119 = vmatpush.msra.mxu0 0.0
    %4120 = vmatpush.msra.mxu0 0.0
    %4121 = vmatpush.msra.mxu0 0.0
    %4122 = vmatpush.msra.mxu0 0.0
    %4123 = vmatpush.msra.mxu0 0.0
    %4124 = vmatpush.msra.mxu0 0.0
    %4125 = vmatpush.msra.mxu0 0.0
    %4126 = vmatpush.msra.mxu0 0.0
    %4127 = vmatpush.msra.mxu0 0.0
    %4128 = vmatpush.msra.mxu0 0.0
    %4129 = vmatpush.msra.mxu0 %v4112
    %4130 = vmatmul.f32.gmra.mxu0 %v4088
    %v4131 = vpop.f32.mrf.mxu0
    %v4132 = vadd.f32 0.0, %v4131
    %4133 = vmatmul.f32.gmra.mxu0 %v4091
    %v4134 = vpop.f32.mrf.mxu0
    %v4135 = vadd.f32 0.0, %v4134
    %4136 = vmatmul.f32.gmra.mxu0 %v4094
    %v4137 = vpop.f32.mrf.mxu0
    %v4138 = vadd.f32 0.0, %v4137
    %4139 = vmatmul.f32.gmra.mxu0 %v4097
    %v4140 = vpop.f32.mrf.mxu0
    %v4141 = vadd.f32 0.0, %v4140
    %4142 = vmatmul.f32.gmra.mxu0 %v4100
    %v4143 = vpop.f32.mrf.mxu0
    %v4144 = vadd.f32 0.0, %v4143
    %4145 = vmatmul.f32.gmra.mxu0 %v4103
    %v4146 = vpop.f32.mrf.mxu0
    %v4147 = vadd.f32 0.0, %v4146
    %4148 = vmatmul.f32.gmra.mxu0 %v4106
    %v4149 = vpop.f32.mrf.mxu0
    %v4150 = vadd.f32 0.0, %v4149
    %4151 = vmatmul.f32.gmra.mxu0 %v4109
    %v4152 = vpop.f32.mrf.mxu0
    %v4153 = vadd.f32 0.0, %v4152
    %4154 = vdwg.mxu0
    %v4155 = vadd.f32 %v4077, %v4132
    %v4156 = vadd.f32 %v4078, %v4135
    %v4157 = vadd.f32 %v4079, %v4138
    %v4158 = vadd.f32 %v4080, %v4141
    %v4159 = vadd.f32 %v4081, %v4144
    %v4160 = vadd.f32 %v4082, %v4147
    %v4161 = vadd.f32 %v4083, %v4150
    %v4162 = vadd.f32 %v4084, %v4153
    %s4163 = scalar_lea.vmem %s3, 92
    %v4164 = vld [vmem:[%s4163] sm:$0xf]
    %v4166 = vsel %vm1839, %v3882, 0
    %v4169 = vsel %vm1839, %v3885, 0
    %v4172 = vsel %vm1839, %v3888, 0
    %v4175 = vsel %vm1839, %v3891, 0
    %v4178 = vsel %vm1839, %v3894, 0
    %v4181 = vsel %vm1839, %v3897, 0
    %v4184 = vsel %vm1839, %v3900, 0
    %v4187 = vsel %vm1839, %v3903, 0
    %v4190 = vsel %vm1864, %v4164, 0
    %4192 = vmatpush.msra.mxu0 0.0
    %4193 = vmatpush.msra.mxu0 0.0
    %4194 = vmatpush.msra.mxu0 0.0
    %4195 = vmatpush.msra.mxu0 0.0
    %4196 = vmatpush.msra.mxu0 0.0
    %4197 = vmatpush.msra.mxu0 0.0
    %4198 = vmatpush.msra.mxu0 0.0
    %4199 = vmatpush.msra.mxu0 0.0
    %4200 = vmatpush.msra.mxu0 0.0
    %4201 = vmatpush.msra.mxu0 0.0
    %4202 = vmatpush.msra.mxu0 0.0
    %4203 = vmatpush.msra.mxu0 0.0
    %4204 = vmatpush.msra.mxu0 0.0
    %4205 = vmatpush.msra.mxu0 0.0
    %4206 = vmatpush.msra.mxu0 0.0
    %4207 = vmatpush.msra.mxu0 %v4190
    %4208 = vmatmul.f32.gmra.mxu0 %v4166
    %v4209 = vpop.f32.mrf.mxu0
    %v4210 = vadd.f32 0.0, %v4209
    %4211 = vmatmul.f32.gmra.mxu0 %v4169
    %v4212 = vpop.f32.mrf.mxu0
    %v4213 = vadd.f32 0.0, %v4212
    %4214 = vmatmul.f32.gmra.mxu0 %v4172
    %v4215 = vpop.f32.mrf.mxu0
    %v4216 = vadd.f32 0.0, %v4215
    %4217 = vmatmul.f32.gmra.mxu0 %v4175
    %v4218 = vpop.f32.mrf.mxu0
    %v4219 = vadd.f32 0.0, %v4218
    %4220 = vmatmul.f32.gmra.mxu0 %v4178
    %v4221 = vpop.f32.mrf.mxu0
    %v4222 = vadd.f32 0.0, %v4221
    %4223 = vmatmul.f32.gmra.mxu0 %v4181
    %v4224 = vpop.f32.mrf.mxu0
    %v4225 = vadd.f32 0.0, %v4224
    %4226 = vmatmul.f32.gmra.mxu0 %v4184
    %v4227 = vpop.f32.mrf.mxu0
    %v4228 = vadd.f32 0.0, %v4227
    %4229 = vmatmul.f32.gmra.mxu0 %v4187
    %v4230 = vpop.f32.mrf.mxu0
    %v4231 = vadd.f32 0.0, %v4230
    %4232 = vdwg.mxu0
    %v4233 = vadd.f32 %v4155, %v4210
    %v4234 = vadd.f32 %v4156, %v4213
    %v4235 = vadd.f32 %v4157, %v4216
    %v4236 = vadd.f32 %v4158, %v4219
    %v4237 = vadd.f32 %v4159, %v4222
    %v4238 = vadd.f32 %v4160, %v4225
    %v4239 = vadd.f32 %v4161, %v4228
    %v4240 = vadd.f32 %v4162, %v4231
    %s4241 = scalar_lea.vmem %s3, 96
    %v4242 = vld [vmem:[%s4241] sm:$0xf]
    %v4244 = vsel %vm1839, %v3906, 0
    %v4247 = vsel %vm1839, %v3909, 0
    %v4250 = vsel %vm1839, %v3912, 0
    %v4253 = vsel %vm1839, %v3915, 0
    %v4256 = vsel %vm1839, %v3918, 0
    %v4259 = vsel %vm1839, %v3921, 0
    %v4262 = vsel %vm1839, %v3924, 0
    %v4265 = vsel %vm1839, %v3927, 0
    %v4268 = vsel %vm1864, %v4242, 0
    %4270 = vmatpush.msra.mxu0 0.0
    %4271 = vmatpush.msra.mxu0 0.0
    %4272 = vmatpush.msra.mxu0 0.0
    %4273 = vmatpush.msra.mxu0 0.0
    %4274 = vmatpush.msra.mxu0 0.0
    %4275 = vmatpush.msra.mxu0 0.0
    %4276 = vmatpush.msra.mxu0 0.0
    %4277 = vmatpush.msra.mxu0 0.0
    %4278 = vmatpush.msra.mxu0 0.0
    %4279 = vmatpush.msra.mxu0 0.0
    %4280 = vmatpush.msra.mxu0 0.0
    %4281 = vmatpush.msra.mxu0 0.0
    %4282 = vmatpush.msra.mxu0 0.0
    %4283 = vmatpush.msra.mxu0 0.0
    %4284 = vmatpush.msra.mxu0 0.0
    %4285 = vmatpush.msra.mxu0 %v4268
    %4286 = vmatmul.f32.gmra.mxu0 %v4244
    %v4287 = vpop.f32.mrf.mxu0
    %v4288 = vadd.f32 0.0, %v4287
    %4289 = vmatmul.f32.gmra.mxu0 %v4247
    %v4290 = vpop.f32.mrf.mxu0
    %v4291 = vadd.f32 0.0, %v4290
    %4292 = vmatmul.f32.gmra.mxu0 %v4250
    %v4293 = vpop.f32.mrf.mxu0
    %v4294 = vadd.f32 0.0, %v4293
    %4295 = vmatmul.f32.gmra.mxu0 %v4253
    %v4296 = vpop.f32.mrf.mxu0
    %v4297 = vadd.f32 0.0, %v4296
    %4298 = vmatmul.f32.gmra.mxu0 %v4256
    %v4299 = vpop.f32.mrf.mxu0
    %v4300 = vadd.f32 0.0, %v4299
    %4301 = vmatmul.f32.gmra.mxu0 %v4259
    %v4302 = vpop.f32.mrf.mxu0
    %v4303 = vadd.f32 0.0, %v4302
    %4304 = vmatmul.f32.gmra.mxu0 %v4262
    %v4305 = vpop.f32.mrf.mxu0
    %v4306 = vadd.f32 0.0, %v4305
    %4307 = vmatmul.f32.gmra.mxu0 %v4265
    %v4308 = vpop.f32.mrf.mxu0
    %v4309 = vadd.f32 0.0, %v4308
    %4310 = vdwg.mxu0
    %v4311 = vadd.f32 %v4233, %v4288
    %v4312 = vadd.f32 %v4234, %v4291
    %v4313 = vadd.f32 %v4235, %v4294
    %v4314 = vadd.f32 %v4236, %v4297
    %v4315 = vadd.f32 %v4237, %v4300
    %v4316 = vadd.f32 %v4238, %v4303
    %v4317 = vadd.f32 %v4239, %v4306
    %v4318 = vadd.f32 %v4240, %v4309
    %v4319 = vld [vmem:[%s4] sm:$0x1]
    %v4321 = vperm.slane %v4319, 0
    %v4323 = vadd.f32 %v4311, %v4321
    %v4324 = vadd.f32 %v4312, %v4321
    %v4325 = vadd.f32 %v4313, %v4321
    %v4326 = vadd.f32 %v4314, %v4321
    %v4327 = vadd.f32 %v4315, %v4321
    %v4328 = vadd.f32 %v4316, %v4321
    %v4329 = vadd.f32 %v4317, %v4321
    %v4330 = vadd.f32 %v4318, %v4321
    %v4331 = vmax.f32 %v4323, %v4325
    %v4332 = vmax.f32 %v4324, %v4326
    %v4333 = vmax.f32 %v4327, %v4329
    %v4334 = vmax.f32 %v4328, %v4330
    %v4335 = vmax.f32 %v4331, %v4333
    %v4336 = vmax.f32 %v4332, %v4334
    %v4337 = vmax.f32 %v4335, 0.0
    %v4338 = vmax.f32 %v4336, 0.0
    %4339 = vmatpush.msra.mxu0 %v1650
    %4340 = vmatpush.msra.mxu0 %v1649
    %4341 = vmatpush.msra.mxu0 %v1648
    %4342 = vmatpush.msra.mxu0 %v1647
    %4343 = vmatpush.msra.mxu0 %v1646
    %4344 = vmatpush.msra.mxu0 %v1645
    %4345 = vmatpush.msra.mxu0 %v1644
    %4346 = vmatpush.msra.mxu0 %v1643
    %4347 = vmatpush.msra.mxu0 %v1642
    %4348 = vmatpush.msra.mxu0 %v1641
    %4349 = vmatpush.msra.mxu0 %v1640
    %4350 = vmatpush.msra.mxu0 %v1639
    %4351 = vmatpush.msra.mxu0 %v1638
    %4352 = vmatpush.msra.mxu0 %v1637
    %4353 = vmatpush.msra.mxu0 %v1636
    %4354 = vmatpush.msra.mxu0 %v1635
    %4355 = vmatmul.f32.gmra.mxu0 %v1659
    %v4356 = vpop.f32.mrf.mxu0
    %v4357 = vadd.f32 0.0, %v4356
    %4358 = vmatmul.f32.gmra.mxu0 %v1660
    %v4359 = vpop.f32.mrf.mxu0
    %v4360 = vadd.f32 0.0, %v4359
    %4361 = vmatmul.f32.gmra.mxu0 %v1661
    %v4362 = vpop.f32.mrf.mxu0
    %v4363 = vadd.f32 0.0, %v4362
    %4364 = vmatmul.f32.gmra.mxu0 %v1662
    %v4365 = vpop.f32.mrf.mxu0
    %v4366 = vadd.f32 0.0, %v4365
    %4367 = vmatmul.f32.gmra.mxu0 %v1663
    %v4368 = vpop.f32.mrf.mxu0
    %v4369 = vadd.f32 0.0, %v4368
    %4370 = vmatmul.f32.gmra.mxu0 %v1664
    %v4371 = vpop.f32.mrf.mxu0
    %v4372 = vadd.f32 0.0, %v4371
    %4373 = vmatmul.f32.gmra.mxu0 %v1665
    %v4374 = vpop.f32.mrf.mxu0
    %v4375 = vadd.f32 0.0, %v4374
    %4376 = vmatmul.f32.gmra.mxu0 %v1666
    %v4377 = vpop.f32.mrf.mxu0
    %v4378 = vadd.f32 0.0, %v4377
    %4379 = vmatmul.f32.gmra.mxu0 %v1667
    %v4380 = vpop.f32.mrf.mxu0
    %v4381 = vadd.f32 0.0, %v4380
    %4382 = vmatmul.f32.gmra.mxu0 %v1668
    %v4383 = vpop.f32.mrf.mxu0
    %v4384 = vadd.f32 0.0, %v4383
    %4385 = vmatmul.f32.gmra.mxu0 %v1669
    %v4386 = vpop.f32.mrf.mxu0
    %v4387 = vadd.f32 0.0, %v4386
    %4388 = vmatmul.f32.gmra.mxu0 %v1670
    %v4389 = vpop.f32.mrf.mxu0
    %v4390 = vadd.f32 0.0, %v4389
    %4391 = vmatmul.f32.gmra.mxu0 %v1671
    %v4392 = vpop.f32.mrf.mxu0
    %v4393 = vadd.f32 0.0, %v4392
    %4394 = vmatmul.f32.gmra.mxu0 %v1672
    %v4395 = vpop.f32.mrf.mxu0
    %v4396 = vadd.f32 0.0, %v4395
    %4397 = vmatmul.f32.gmra.mxu0 %v1673
    %v4398 = vpop.f32.mrf.mxu0
    %v4399 = vadd.f32 0.0, %v4398
    %4400 = vmatmul.f32.gmra.mxu0 %v1674
    %v4401 = vpop.f32.mrf.mxu0
    %v4402 = vadd.f32 0.0, %v4401
    %4403 = vmatmul.f32.gmra.mxu0 %v1675
    %v4404 = vpop.f32.mrf.mxu0
    %v4405 = vadd.f32 0.0, %v4404
    %4406 = vmatmul.f32.gmra.mxu0 %v1676
    %v4407 = vpop.f32.mrf.mxu0
    %v4408 = vadd.f32 0.0, %v4407
    %4409 = vmatmul.f32.gmra.mxu0 %v1677
    %v4410 = vpop.f32.mrf.mxu0
    %v4411 = vadd.f32 0.0, %v4410
    %4412 = vmatmul.f32.gmra.mxu0 %v1678
    %v4413 = vpop.f32.mrf.mxu0
    %v4414 = vadd.f32 0.0, %v4413
    %4415 = vmatmul.f32.gmra.mxu0 %v1679
    %v4416 = vpop.f32.mrf.mxu0
    %v4417 = vadd.f32 0.0, %v4416
    %4418 = vmatmul.f32.gmra.mxu0 %v1680
    %v4419 = vpop.f32.mrf.mxu0
    %v4420 = vadd.f32 0.0, %v4419
    %4421 = vmatmul.f32.gmra.mxu0 %v1681
    %v4422 = vpop.f32.mrf.mxu0
    %v4423 = vadd.f32 0.0, %v4422
    %4424 = vmatmul.f32.gmra.mxu0 %v1682
    %v4425 = vpop.f32.mrf.mxu0
    %v4426 = vadd.f32 0.0, %v4425
    %4427 = vmatmul.f32.gmra.mxu0 %v1683
    %v4428 = vpop.f32.mrf.mxu0
    %v4429 = vadd.f32 0.0, %v4428
    %4430 = vmatmul.f32.gmra.mxu0 %v1684
    %v4431 = vpop.f32.mrf.mxu0
    %v4432 = vadd.f32 0.0, %v4431
    %4433 = vmatmul.f32.gmra.mxu0 %v1685
    %v4434 = vpop.f32.mrf.mxu0
    %v4435 = vadd.f32 0.0, %v4434
    %4436 = vmatmul.f32.gmra.mxu0 %v1686
    %v4437 = vpop.f32.mrf.mxu0
    %v4438 = vadd.f32 0.0, %v4437
    %4439 = vmatmul.f32.gmra.mxu0 %v1687
    %v4440 = vpop.f32.mrf.mxu0
    %v4441 = vadd.f32 0.0, %v4440
    %4442 = vmatmul.f32.gmra.mxu0 %v1688
    %v4443 = vpop.f32.mrf.mxu0
    %v4444 = vadd.f32 0.0, %v4443
    %4445 = vmatmul.f32.gmra.mxu0 %v1689
    %v4446 = vpop.f32.mrf.mxu0
    %v4447 = vadd.f32 0.0, %v4446
    %4448 = vmatmul.f32.gmra.mxu0 %v1690
    %v4449 = vpop.f32.mrf.mxu0
    %v4450 = vadd.f32 0.0, %v4449
    %4451 = vmatmul.f32.gmra.mxu0 %v1691
    %v4452 = vpop.f32.mrf.mxu0
    %v4453 = vadd.f32 0.0, %v4452
    %4454 = vmatmul.f32.gmra.mxu0 %v1692
    %v4455 = vpop.f32.mrf.mxu0
    %v4456 = vadd.f32 0.0, %v4455
    %4457 = vmatmul.f32.gmra.mxu0 %v1693
    %v4458 = vpop.f32.mrf.mxu0
    %v4459 = vadd.f32 0.0, %v4458
    %4460 = vmatmul.f32.gmra.mxu0 %v1694
    %v4461 = vpop.f32.mrf.mxu0
    %v4462 = vadd.f32 0.0, %v4461
    %4463 = vmatmul.f32.gmra.mxu0 %v1695
    %v4464 = vpop.f32.mrf.mxu0
    %v4465 = vadd.f32 0.0, %v4464
    %4466 = vmatmul.f32.gmra.mxu0 %v1696
    %v4467 = vpop.f32.mrf.mxu0
    %v4468 = vadd.f32 0.0, %v4467
    %4469 = vmatmul.f32.gmra.mxu0 %v1697
    %v4470 = vpop.f32.mrf.mxu0
    %v4471 = vadd.f32 0.0, %v4470
    %4472 = vmatmul.f32.gmra.mxu0 %v1698
    %v4473 = vpop.f32.mrf.mxu0
    %v4474 = vadd.f32 0.0, %v4473
    %4475 = vdwg.mxu0
    %v4477 = vsel %vm1839, %v4381, 0
    %v4480 = vsel %vm1839, %v4384, 0
    %v4483 = vsel %vm1839, %v4387, 0
    %v4486 = vsel %vm1839, %v4390, 0
    %v4489 = vsel %vm1839, %v4393, 0
    %v4492 = vsel %vm1839, %v4396, 0
    %v4495 = vsel %vm1839, %v4399, 0
    %v4498 = vsel %vm1839, %v4402, 0
    %4500 = vmatpush.msra.mxu0 0.0
    %4501 = vmatpush.msra.mxu0 0.0
    %4502 = vmatpush.msra.mxu0 0.0
    %4503 = vmatpush.msra.mxu0 0.0
    %4504 = vmatpush.msra.mxu0 0.0
    %4505 = vmatpush.msra.mxu0 0.0
    %4506 = vmatpush.msra.mxu0 0.0
    %4507 = vmatpush.msra.mxu0 0.0
    %4508 = vmatpush.msra.mxu0 0.0
    %4509 = vmatpush.msra.mxu0 0.0
    %4510 = vmatpush.msra.mxu0 0.0
    %4511 = vmatpush.msra.mxu0 0.0
    %4512 = vmatpush.msra.mxu0 0.0
    %4513 = vmatpush.msra.mxu0 0.0
    %4514 = vmatpush.msra.mxu0 0.0
    %4515 = vmatpush.msra.mxu0 %v1866
    %4516 = vmatmul.f32.gmra.mxu0 %v4477
    %v4517 = vpop.f32.mrf.mxu0
    %v4518 = vadd.f32 0.0, %v4517
    %4519 = vmatmul.f32.gmra.mxu0 %v4480
    %v4520 = vpop.f32.mrf.mxu0
    %v4521 = vadd.f32 0.0, %v4520
    %4522 = vmatmul.f32.gmra.mxu0 %v4483
    %v4523 = vpop.f32.mrf.mxu0
    %v4524 = vadd.f32 0.0, %v4523
    %4525 = vmatmul.f32.gmra.mxu0 %v4486
    %v4526 = vpop.f32.mrf.mxu0
    %v4527 = vadd.f32 0.0, %v4526
    %4528 = vmatmul.f32.gmra.mxu0 %v4489
    %v4529 = vpop.f32.mrf.mxu0
    %v4530 = vadd.f32 0.0, %v4529
    %4531 = vmatmul.f32.gmra.mxu0 %v4492
    %v4532 = vpop.f32.mrf.mxu0
    %v4533 = vadd.f32 0.0, %v4532
    %4534 = vmatmul.f32.gmra.mxu0 %v4495
    %v4535 = vpop.f32.mrf.mxu0
    %v4536 = vadd.f32 0.0, %v4535
    %4537 = vmatmul.f32.gmra.mxu0 %v4498
    %v4538 = vpop.f32.mrf.mxu0
    %v4539 = vadd.f32 0.0, %v4538
    %4540 = vdwg.mxu0
    %v4542 = vsel %vm1839, %v4357, 0
    %v4545 = vsel %vm1839, %v4360, 0
    %v4548 = vsel %vm1839, %v4363, 0
    %v4551 = vsel %vm1839, %v4366, 0
    %v4554 = vsel %vm1839, %v4369, 0
    %v4557 = vsel %vm1839, %v4372, 0
    %v4560 = vsel %vm1839, %v4375, 0
    %v4563 = vsel %vm1839, %v4378, 0
    %4565 = vmatpush.msra.mxu0 0.0
    %4566 = vmatpush.msra.mxu0 0.0
    %4567 = vmatpush.msra.mxu0 0.0
    %4568 = vmatpush.msra.mxu0 0.0
    %4569 = vmatpush.msra.mxu0 0.0
    %4570 = vmatpush.msra.mxu0 0.0
    %4571 = vmatpush.msra.mxu0 0.0
    %4572 = vmatpush.msra.mxu0 0.0
    %4573 = vmatpush.msra.mxu0 0.0
    %4574 = vmatpush.msra.mxu0 0.0
    %4575 = vmatpush.msra.mxu0 0.0
    %4576 = vmatpush.msra.mxu0 0.0
    %4577 = vmatpush.msra.mxu0 0.0
    %4578 = vmatpush.msra.mxu0 0.0
    %4579 = vmatpush.msra.mxu0 0.0
    %4580 = vmatpush.msra.mxu0 %v1934
    %4581 = vmatmul.f32.gmra.mxu0 %v4542
    %v4582 = vpop.f32.mrf.mxu0
    %v4583 = vadd.f32 %v4518, %v4582
    %4584 = vmatmul.f32.gmra.mxu0 %v4545
    %v4585 = vpop.f32.mrf.mxu0
    %v4586 = vadd.f32 %v4521, %v4585
    %4587 = vmatmul.f32.gmra.mxu0 %v4548
    %v4588 = vpop.f32.mrf.mxu0
    %v4589 = vadd.f32 %v4524, %v4588
    %4590 = vmatmul.f32.gmra.mxu0 %v4551
    %v4591 = vpop.f32.mrf.mxu0
    %v4592 = vadd.f32 %v4527, %v4591
    %4593 = vmatmul.f32.gmra.mxu0 %v4554
    %v4594 = vpop.f32.mrf.mxu0
    %v4595 = vadd.f32 %v4530, %v4594
    %4596 = vmatmul.f32.gmra.mxu0 %v4557
    %v4597 = vpop.f32.mrf.mxu0
    %v4598 = vadd.f32 %v4533, %v4597
    %4599 = vmatmul.f32.gmra.mxu0 %v4560
    %v4600 = vpop.f32.mrf.mxu0
    %v4601 = vadd.f32 %v4536, %v4600
    %4602 = vmatmul.f32.gmra.mxu0 %v4563
    %v4603 = vpop.f32.mrf.mxu0
    %v4604 = vadd.f32 %v4539, %v4603
    %4605 = vdwg.mxu0
    %v4607 = vsel %vm1839, %v4405, 0
    %v4610 = vsel %vm1839, %v4408, 0
    %v4613 = vsel %vm1839, %v4411, 0
    %v4616 = vsel %vm1839, %v4414, 0
    %v4619 = vsel %vm1839, %v4417, 0
    %v4622 = vsel %vm1839, %v4420, 0
    %v4625 = vsel %vm1839, %v4423, 0
    %v4628 = vsel %vm1839, %v4426, 0
    %4630 = vmatpush.msra.mxu0 0.0
    %4631 = vmatpush.msra.mxu0 0.0
    %4632 = vmatpush.msra.mxu0 0.0
    %4633 = vmatpush.msra.mxu0 0.0
    %4634 = vmatpush.msra.mxu0 0.0
    %4635 = vmatpush.msra.mxu0 0.0
    %4636 = vmatpush.msra.mxu0 0.0
    %4637 = vmatpush.msra.mxu0 0.0
    %4638 = vmatpush.msra.mxu0 0.0
    %4639 = vmatpush.msra.mxu0 0.0
    %4640 = vmatpush.msra.mxu0 0.0
    %4641 = vmatpush.msra.mxu0 0.0
    %4642 = vmatpush.msra.mxu0 0.0
    %4643 = vmatpush.msra.mxu0 0.0
    %4644 = vmatpush.msra.mxu0 0.0
    %4645 = vmatpush.msra.mxu0 %v2004
    %4646 = vmatmul.f32.gmra.mxu0 %v4607
    %v4647 = vpop.f32.mrf.mxu0
    %v4648 = vadd.f32 0.0, %v4647
    %4649 = vmatmul.f32.gmra.mxu0 %v4610
    %v4650 = vpop.f32.mrf.mxu0
    %v4651 = vadd.f32 0.0, %v4650
    %4652 = vmatmul.f32.gmra.mxu0 %v4613
    %v4653 = vpop.f32.mrf.mxu0
    %v4654 = vadd.f32 0.0, %v4653
    %4655 = vmatmul.f32.gmra.mxu0 %v4616
    %v4656 = vpop.f32.mrf.mxu0
    %v4657 = vadd.f32 0.0, %v4656
    %4658 = vmatmul.f32.gmra.mxu0 %v4619
    %v4659 = vpop.f32.mrf.mxu0
    %v4660 = vadd.f32 0.0, %v4659
    %4661 = vmatmul.f32.gmra.mxu0 %v4622
    %v4662 = vpop.f32.mrf.mxu0
    %v4663 = vadd.f32 0.0, %v4662
    %4664 = vmatmul.f32.gmra.mxu0 %v4625
    %v4665 = vpop.f32.mrf.mxu0
    %v4666 = vadd.f32 0.0, %v4665
    %4667 = vmatmul.f32.gmra.mxu0 %v4628
    %v4668 = vpop.f32.mrf.mxu0
    %v4669 = vadd.f32 0.0, %v4668
    %4670 = vdwg.mxu0
    %v4671 = vadd.f32 %v4583, %v4648
    %v4672 = vadd.f32 %v4586, %v4651
    %v4673 = vadd.f32 %v4589, %v4654
    %v4674 = vadd.f32 %v4592, %v4657
    %v4675 = vadd.f32 %v4595, %v4660
    %v4676 = vadd.f32 %v4598, %v4663
    %v4677 = vadd.f32 %v4601, %v4666
    %v4678 = vadd.f32 %v4604, %v4669
    %v4680 = vsel %vm1839, %v4429, 0
    %v4683 = vsel %vm1839, %v4432, 0
    %v4686 = vsel %vm1839, %v4435, 0
    %v4689 = vsel %vm1839, %v4438, 0
    %v4692 = vsel %vm1839, %v4441, 0
    %v4695 = vsel %vm1839, %v4444, 0
    %v4698 = vsel %vm1839, %v4447, 0
    %v4701 = vsel %vm1839, %v4450, 0
    %4703 = vmatpush.msra.mxu0 0.0
    %4704 = vmatpush.msra.mxu0 0.0
    %4705 = vmatpush.msra.mxu0 0.0
    %4706 = vmatpush.msra.mxu0 0.0
    %4707 = vmatpush.msra.mxu0 0.0
    %4708 = vmatpush.msra.mxu0 0.0
    %4709 = vmatpush.msra.mxu0 0.0
    %4710 = vmatpush.msra.mxu0 0.0
    %4711 = vmatpush.msra.mxu0 0.0
    %4712 = vmatpush.msra.mxu0 0.0
    %4713 = vmatpush.msra.mxu0 0.0
    %4714 = vmatpush.msra.mxu0 0.0
    %4715 = vmatpush.msra.mxu0 0.0
    %4716 = vmatpush.msra.mxu0 0.0
    %4717 = vmatpush.msra.mxu0 0.0
    %4718 = vmatpush.msra.mxu0 %v2082
    %4719 = vmatmul.f32.gmra.mxu0 %v4680
    %v4720 = vpop.f32.mrf.mxu0
    %v4721 = vadd.f32 0.0, %v4720
    %4722 = vmatmul.f32.gmra.mxu0 %v4683
    %v4723 = vpop.f32.mrf.mxu0
    %v4724 = vadd.f32 0.0, %v4723
    %4725 = vmatmul.f32.gmra.mxu0 %v4686
    %v4726 = vpop.f32.mrf.mxu0
    %v4727 = vadd.f32 0.0, %v4726
    %4728 = vmatmul.f32.gmra.mxu0 %v4689
    %v4729 = vpop.f32.mrf.mxu0
    %v4730 = vadd.f32 0.0, %v4729
    %4731 = vmatmul.f32.gmra.mxu0 %v4692
    %v4732 = vpop.f32.mrf.mxu0
    %v4733 = vadd.f32 0.0, %v4732
    %4734 = vmatmul.f32.gmra.mxu0 %v4695
    %v4735 = vpop.f32.mrf.mxu0
    %v4736 = vadd.f32 0.0, %v4735
    %4737 = vmatmul.f32.gmra.mxu0 %v4698
    %v4738 = vpop.f32.mrf.mxu0
    %v4739 = vadd.f32 0.0, %v4738
    %4740 = vmatmul.f32.gmra.mxu0 %v4701
    %v4741 = vpop.f32.mrf.mxu0
    %v4742 = vadd.f32 0.0, %v4741
    %4743 = vdwg.mxu0
    %v4744 = vadd.f32 %v4671, %v4721
    %v4745 = vadd.f32 %v4672, %v4724
    %v4746 = vadd.f32 %v4673, %v4727
    %v4747 = vadd.f32 %v4674, %v4730
    %v4748 = vadd.f32 %v4675, %v4733
    %v4749 = vadd.f32 %v4676, %v4736
    %v4750 = vadd.f32 %v4677, %v4739
    %v4751 = vadd.f32 %v4678, %v4742
    %v4753 = vsel %vm1839, %v4453, 0
    %v4756 = vsel %vm1839, %v4456, 0
    %v4759 = vsel %vm1839, %v4459, 0
    %v4762 = vsel %vm1839, %v4462, 0
    %v4765 = vsel %vm1839, %v4465, 0
    %v4768 = vsel %vm1839, %v4468, 0
    %v4771 = vsel %vm1839, %v4471, 0
    %v4774 = vsel %vm1839, %v4474, 0
    %4776 = vmatpush.msra.mxu0 0.0
    %4777 = vmatpush.msra.mxu0 0.0
    %4778 = vmatpush.msra.mxu0 0.0
    %4779 = vmatpush.msra.mxu0 0.0
    %4780 = vmatpush.msra.mxu0 0.0
    %4781 = vmatpush.msra.mxu0 0.0
    %4782 = vmatpush.msra.mxu0 0.0
    %4783 = vmatpush.msra.mxu0 0.0
    %4784 = vmatpush.msra.mxu0 0.0
    %4785 = vmatpush.msra.mxu0 0.0
    %4786 = vmatpush.msra.mxu0 0.0
    %4787 = vmatpush.msra.mxu0 0.0
    %4788 = vmatpush.msra.mxu0 0.0
    %4789 = vmatpush.msra.mxu0 0.0
    %4790 = vmatpush.msra.mxu0 0.0
    %4791 = vmatpush.msra.mxu0 %v2160
    %4792 = vmatmul.f32.gmra.mxu0 %v4753
    %v4793 = vpop.f32.mrf.mxu0
    %v4794 = vadd.f32 0.0, %v4793
    %4795 = vmatmul.f32.gmra.mxu0 %v4756
    %v4796 = vpop.f32.mrf.mxu0
    %v4797 = vadd.f32 0.0, %v4796
    %4798 = vmatmul.f32.gmra.mxu0 %v4759
    %v4799 = vpop.f32.mrf.mxu0
    %v4800 = vadd.f32 0.0, %v4799
    %4801 = vmatmul.f32.gmra.mxu0 %v4762
    %v4802 = vpop.f32.mrf.mxu0
    %v4803 = vadd.f32 0.0, %v4802
    %4804 = vmatmul.f32.gmra.mxu0 %v4765
    %v4805 = vpop.f32.mrf.mxu0
    %v4806 = vadd.f32 0.0, %v4805
    %4807 = vmatmul.f32.gmra.mxu0 %v4768
    %v4808 = vpop.f32.mrf.mxu0
    %v4809 = vadd.f32 0.0, %v4808
    %4810 = vmatmul.f32.gmra.mxu0 %v4771
    %v4811 = vpop.f32.mrf.mxu0
    %v4812 = vadd.f32 0.0, %v4811
    %4813 = vmatmul.f32.gmra.mxu0 %v4774
    %v4814 = vpop.f32.mrf.mxu0
    %v4815 = vadd.f32 0.0, %v4814
    %4816 = vdwg.mxu0
    %v4817 = vadd.f32 %v4744, %v4794
    %v4818 = vadd.f32 %v4745, %v4797
    %v4819 = vadd.f32 %v4746, %v4800
    %v4820 = vadd.f32 %v4747, %v4803
    %v4821 = vadd.f32 %v4748, %v4806
    %v4822 = vadd.f32 %v4749, %v4809
    %v4823 = vadd.f32 %v4750, %v4812
    %v4824 = vadd.f32 %v4751, %v4815
    %4825 = vmatpush.msra.mxu0 %v1652
    %4826 = vmatpush.msra.mxu0 %v1651
    %4827 = vmatpush.msra.mxu0 %v1650
    %4828 = vmatpush.msra.mxu0 %v1649
    %4829 = vmatpush.msra.mxu0 %v1648
    %4830 = vmatpush.msra.mxu0 %v1647
    %4831 = vmatpush.msra.mxu0 %v1646
    %4832 = vmatpush.msra.mxu0 %v1645
    %4833 = vmatpush.msra.mxu0 %v1644
    %4834 = vmatpush.msra.mxu0 %v1643
    %4835 = vmatpush.msra.mxu0 %v1642
    %4836 = vmatpush.msra.mxu0 %v1641
    %4837 = vmatpush.msra.mxu0 %v1640
    %4838 = vmatpush.msra.mxu0 %v1639
    %4839 = vmatpush.msra.mxu0 %v1638
    %4840 = vmatpush.msra.mxu0 %v1637
    %4841 = vmatmul.f32.gmra.mxu0 %v1659
    %v4842 = vpop.f32.mrf.mxu0
    %v4843 = vadd.f32 0.0, %v4842
    %4844 = vmatmul.f32.gmra.mxu0 %v1660
    %v4845 = vpop.f32.mrf.mxu0
    %v4846 = vadd.f32 0.0, %v4845
    %4847 = vmatmul.f32.gmra.mxu0 %v1661
    %v4848 = vpop.f32.mrf.mxu0
    %v4849 = vadd.f32 0.0, %v4848
    %4850 = vmatmul.f32.gmra.mxu0 %v1662
    %v4851 = vpop.f32.mrf.mxu0
    %v4852 = vadd.f32 0.0, %v4851
    %4853 = vmatmul.f32.gmra.mxu0 %v1663
    %v4854 = vpop.f32.mrf.mxu0
    %v4855 = vadd.f32 0.0, %v4854
    %4856 = vmatmul.f32.gmra.mxu0 %v1664
    %v4857 = vpop.f32.mrf.mxu0
    %v4858 = vadd.f32 0.0, %v4857
    %4859 = vmatmul.f32.gmra.mxu0 %v1665
    %v4860 = vpop.f32.mrf.mxu0
    %v4861 = vadd.f32 0.0, %v4860
    %4862 = vmatmul.f32.gmra.mxu0 %v1666
    %v4863 = vpop.f32.mrf.mxu0
    %v4864 = vadd.f32 0.0, %v4863
    %4865 = vmatmul.f32.gmra.mxu0 %v1667
    %v4866 = vpop.f32.mrf.mxu0
    %v4867 = vadd.f32 0.0, %v4866
    %4868 = vmatmul.f32.gmra.mxu0 %v1668
    %v4869 = vpop.f32.mrf.mxu0
    %v4870 = vadd.f32 0.0, %v4869
    %4871 = vmatmul.f32.gmra.mxu0 %v1669
    %v4872 = vpop.f32.mrf.mxu0
    %v4873 = vadd.f32 0.0, %v4872
    %4874 = vmatmul.f32.gmra.mxu0 %v1670
    %v4875 = vpop.f32.mrf.mxu0
    %v4876 = vadd.f32 0.0, %v4875
    %4877 = vmatmul.f32.gmra.mxu0 %v1671
    %v4878 = vpop.f32.mrf.mxu0
    %v4879 = vadd.f32 0.0, %v4878
    %4880 = vmatmul.f32.gmra.mxu0 %v1672
    %v4881 = vpop.f32.mrf.mxu0
    %v4882 = vadd.f32 0.0, %v4881
    %4883 = vmatmul.f32.gmra.mxu0 %v1673
    %v4884 = vpop.f32.mrf.mxu0
    %v4885 = vadd.f32 0.0, %v4884
    %4886 = vmatmul.f32.gmra.mxu0 %v1674
    %v4887 = vpop.f32.mrf.mxu0
    %v4888 = vadd.f32 0.0, %v4887
    %4889 = vmatmul.f32.gmra.mxu0 %v1675
    %v4890 = vpop.f32.mrf.mxu0
    %v4891 = vadd.f32 0.0, %v4890
    %4892 = vmatmul.f32.gmra.mxu0 %v1676
    %v4893 = vpop.f32.mrf.mxu0
    %v4894 = vadd.f32 0.0, %v4893
    %4895 = vmatmul.f32.gmra.mxu0 %v1677
    %v4896 = vpop.f32.mrf.mxu0
    %v4897 = vadd.f32 0.0, %v4896
    %4898 = vmatmul.f32.gmra.mxu0 %v1678
    %v4899 = vpop.f32.mrf.mxu0
    %v4900 = vadd.f32 0.0, %v4899
    %4901 = vmatmul.f32.gmra.mxu0 %v1679
    %v4902 = vpop.f32.mrf.mxu0
    %v4903 = vadd.f32 0.0, %v4902
    %4904 = vmatmul.f32.gmra.mxu0 %v1680
    %v4905 = vpop.f32.mrf.mxu0
    %v4906 = vadd.f32 0.0, %v4905
    %4907 = vmatmul.f32.gmra.mxu0 %v1681
    %v4908 = vpop.f32.mrf.mxu0
    %v4909 = vadd.f32 0.0, %v4908
    %4910 = vmatmul.f32.gmra.mxu0 %v1682
    %v4911 = vpop.f32.mrf.mxu0
    %v4912 = vadd.f32 0.0, %v4911
    %4913 = vmatmul.f32.gmra.mxu0 %v1683
    %v4914 = vpop.f32.mrf.mxu0
    %v4915 = vadd.f32 0.0, %v4914
    %4916 = vmatmul.f32.gmra.mxu0 %v1684
    %v4917 = vpop.f32.mrf.mxu0
    %v4918 = vadd.f32 0.0, %v4917
    %4919 = vmatmul.f32.gmra.mxu0 %v1685
    %v4920 = vpop.f32.mrf.mxu0
    %v4921 = vadd.f32 0.0, %v4920
    %4922 = vmatmul.f32.gmra.mxu0 %v1686
    %v4923 = vpop.f32.mrf.mxu0
    %v4924 = vadd.f32 0.0, %v4923
    %4925 = vmatmul.f32.gmra.mxu0 %v1687
    %v4926 = vpop.f32.mrf.mxu0
    %v4927 = vadd.f32 0.0, %v4926
    %4928 = vmatmul.f32.gmra.mxu0 %v1688
    %v4929 = vpop.f32.mrf.mxu0
    %v4930 = vadd.f32 0.0, %v4929
    %4931 = vmatmul.f32.gmra.mxu0 %v1689
    %v4932 = vpop.f32.mrf.mxu0
    %v4933 = vadd.f32 0.0, %v4932
    %4934 = vmatmul.f32.gmra.mxu0 %v1690
    %v4935 = vpop.f32.mrf.mxu0
    %v4936 = vadd.f32 0.0, %v4935
    %4937 = vmatmul.f32.gmra.mxu0 %v1691
    %v4938 = vpop.f32.mrf.mxu0
    %v4939 = vadd.f32 0.0, %v4938
    %4940 = vmatmul.f32.gmra.mxu0 %v1692
    %v4941 = vpop.f32.mrf.mxu0
    %v4942 = vadd.f32 0.0, %v4941
    %4943 = vmatmul.f32.gmra.mxu0 %v1693
    %v4944 = vpop.f32.mrf.mxu0
    %v4945 = vadd.f32 0.0, %v4944
    %4946 = vmatmul.f32.gmra.mxu0 %v1694
    %v4947 = vpop.f32.mrf.mxu0
    %v4948 = vadd.f32 0.0, %v4947
    %4949 = vmatmul.f32.gmra.mxu0 %v1695
    %v4950 = vpop.f32.mrf.mxu0
    %v4951 = vadd.f32 0.0, %v4950
    %4952 = vmatmul.f32.gmra.mxu0 %v1696
    %v4953 = vpop.f32.mrf.mxu0
    %v4954 = vadd.f32 0.0, %v4953
    %4955 = vmatmul.f32.gmra.mxu0 %v1697
    %v4956 = vpop.f32.mrf.mxu0
    %v4957 = vadd.f32 0.0, %v4956
    %4958 = vmatmul.f32.gmra.mxu0 %v1698
    %v4959 = vpop.f32.mrf.mxu0
    %v4960 = vadd.f32 0.0, %v4959
    %4961 = vdwg.mxu0
    %v4963 = vsel %vm1839, %v4843, 0
    %v4966 = vsel %vm1839, %v4846, 0
    %v4969 = vsel %vm1839, %v4849, 0
    %v4972 = vsel %vm1839, %v4852, 0
    %v4975 = vsel %vm1839, %v4855, 0
    %v4978 = vsel %vm1839, %v4858, 0
    %v4981 = vsel %vm1839, %v4861, 0
    %v4984 = vsel %vm1839, %v4864, 0
    %4986 = vmatpush.msra.mxu0 0.0
    %4987 = vmatpush.msra.mxu0 0.0
    %4988 = vmatpush.msra.mxu0 0.0
    %4989 = vmatpush.msra.mxu0 0.0
    %4990 = vmatpush.msra.mxu0 0.0
    %4991 = vmatpush.msra.mxu0 0.0
    %4992 = vmatpush.msra.mxu0 0.0
    %4993 = vmatpush.msra.mxu0 0.0
    %4994 = vmatpush.msra.mxu0 0.0
    %4995 = vmatpush.msra.mxu0 0.0
    %4996 = vmatpush.msra.mxu0 0.0
    %4997 = vmatpush.msra.mxu0 0.0
    %4998 = vmatpush.msra.mxu0 0.0
    %4999 = vmatpush.msra.mxu0 0.0
    %5000 = vmatpush.msra.mxu0 0.0
    %5001 = vmatpush.msra.mxu0 %v2375
    %5002 = vmatmul.f32.gmra.mxu0 %v4963
    %v5003 = vpop.f32.mrf.mxu0
    %v5004 = vadd.f32 0.0, %v5003
    %5005 = vmatmul.f32.gmra.mxu0 %v4966
    %v5006 = vpop.f32.mrf.mxu0
    %v5007 = vadd.f32 0.0, %v5006
    %5008 = vmatmul.f32.gmra.mxu0 %v4969
    %v5009 = vpop.f32.mrf.mxu0
    %v5010 = vadd.f32 0.0, %v5009
    %5011 = vmatmul.f32.gmra.mxu0 %v4972
    %v5012 = vpop.f32.mrf.mxu0
    %v5013 = vadd.f32 0.0, %v5012
    %5014 = vmatmul.f32.gmra.mxu0 %v4975
    %v5015 = vpop.f32.mrf.mxu0
    %v5016 = vadd.f32 0.0, %v5015
    %5017 = vmatmul.f32.gmra.mxu0 %v4978
    %v5018 = vpop.f32.mrf.mxu0
    %v5019 = vadd.f32 0.0, %v5018
    %5020 = vmatmul.f32.gmra.mxu0 %v4981
    %v5021 = vpop.f32.mrf.mxu0
    %v5022 = vadd.f32 0.0, %v5021
    %5023 = vmatmul.f32.gmra.mxu0 %v4984
    %v5024 = vpop.f32.mrf.mxu0
    %v5025 = vadd.f32 0.0, %v5024
    %5026 = vdwg.mxu0
    %v5027 = vadd.f32 %v4817, %v5004
    %v5028 = vadd.f32 %v4818, %v5007
    %v5029 = vadd.f32 %v4819, %v5010
    %v5030 = vadd.f32 %v4820, %v5013
    %v5031 = vadd.f32 %v4821, %v5016
    %v5032 = vadd.f32 %v4822, %v5019
    %v5033 = vadd.f32 %v4823, %v5022
    %v5034 = vadd.f32 %v4824, %v5025
    %v5036 = vsel %vm1839, %v4867, 0
    %v5039 = vsel %vm1839, %v4870, 0
    %v5042 = vsel %vm1839, %v4873, 0
    %v5045 = vsel %vm1839, %v4876, 0
    %v5048 = vsel %vm1839, %v4879, 0
    %v5051 = vsel %vm1839, %v4882, 0
    %v5054 = vsel %vm1839, %v4885, 0
    %v5057 = vsel %vm1839, %v4888, 0
    %5059 = vmatpush.msra.mxu0 0.0
    %5060 = vmatpush.msra.mxu0 0.0
    %5061 = vmatpush.msra.mxu0 0.0
    %5062 = vmatpush.msra.mxu0 0.0
    %5063 = vmatpush.msra.mxu0 0.0
    %5064 = vmatpush.msra.mxu0 0.0
    %5065 = vmatpush.msra.mxu0 0.0
    %5066 = vmatpush.msra.mxu0 0.0
    %5067 = vmatpush.msra.mxu0 0.0
    %5068 = vmatpush.msra.mxu0 0.0
    %5069 = vmatpush.msra.mxu0 0.0
    %5070 = vmatpush.msra.mxu0 0.0
    %5071 = vmatpush.msra.mxu0 0.0
    %5072 = vmatpush.msra.mxu0 0.0
    %5073 = vmatpush.msra.mxu0 0.0
    %5074 = vmatpush.msra.mxu0 %v2453
    %5075 = vmatmul.f32.gmra.mxu0 %v5036
    %v5076 = vpop.f32.mrf.mxu0
    %v5077 = vadd.f32 0.0, %v5076
    %5078 = vmatmul.f32.gmra.mxu0 %v5039
    %v5079 = vpop.f32.mrf.mxu0
    %v5080 = vadd.f32 0.0, %v5079
    %5081 = vmatmul.f32.gmra.mxu0 %v5042
    %v5082 = vpop.f32.mrf.mxu0
    %v5083 = vadd.f32 0.0, %v5082
    %5084 = vmatmul.f32.gmra.mxu0 %v5045
    %v5085 = vpop.f32.mrf.mxu0
    %v5086 = vadd.f32 0.0, %v5085
    %5087 = vmatmul.f32.gmra.mxu0 %v5048
    %v5088 = vpop.f32.mrf.mxu0
    %v5089 = vadd.f32 0.0, %v5088
    %5090 = vmatmul.f32.gmra.mxu0 %v5051
    %v5091 = vpop.f32.mrf.mxu0
    %v5092 = vadd.f32 0.0, %v5091
    %5093 = vmatmul.f32.gmra.mxu0 %v5054
    %v5094 = vpop.f32.mrf.mxu0
    %v5095 = vadd.f32 0.0, %v5094
    %5096 = vmatmul.f32.gmra.mxu0 %v5057
    %v5097 = vpop.f32.mrf.mxu0
    %v5098 = vadd.f32 0.0, %v5097
    %5099 = vdwg.mxu0
    %v5100 = vadd.f32 %v5027, %v5077
    %v5101 = vadd.f32 %v5028, %v5080
    %v5102 = vadd.f32 %v5029, %v5083
    %v5103 = vadd.f32 %v5030, %v5086
    %v5104 = vadd.f32 %v5031, %v5089
    %v5105 = vadd.f32 %v5032, %v5092
    %v5106 = vadd.f32 %v5033, %v5095
    %v5107 = vadd.f32 %v5034, %v5098
    %v5109 = vsel %vm1839, %v4891, 0
    %v5112 = vsel %vm1839, %v4894, 0
    %v5115 = vsel %vm1839, %v4897, 0
    %v5118 = vsel %vm1839, %v4900, 0
    %v5121 = vsel %vm1839, %v4903, 0
    %v5124 = vsel %vm1839, %v4906, 0
    %v5127 = vsel %vm1839, %v4909, 0
    %v5130 = vsel %vm1839, %v4912, 0
    %5132 = vmatpush.msra.mxu0 0.0
    %5133 = vmatpush.msra.mxu0 0.0
    %5134 = vmatpush.msra.mxu0 0.0
    %5135 = vmatpush.msra.mxu0 0.0
    %5136 = vmatpush.msra.mxu0 0.0
    %5137 = vmatpush.msra.mxu0 0.0
    %5138 = vmatpush.msra.mxu0 0.0
    %5139 = vmatpush.msra.mxu0 0.0
    %5140 = vmatpush.msra.mxu0 0.0
    %5141 = vmatpush.msra.mxu0 0.0
    %5142 = vmatpush.msra.mxu0 0.0
    %5143 = vmatpush.msra.mxu0 0.0
    %5144 = vmatpush.msra.mxu0 0.0
    %5145 = vmatpush.msra.mxu0 0.0
    %5146 = vmatpush.msra.mxu0 0.0
    %5147 = vmatpush.msra.mxu0 %v2531
    %5148 = vmatmul.f32.gmra.mxu0 %v5109
    %v5149 = vpop.f32.mrf.mxu0
    %v5150 = vadd.f32 0.0, %v5149
    %5151 = vmatmul.f32.gmra.mxu0 %v5112
    %v5152 = vpop.f32.mrf.mxu0
    %v5153 = vadd.f32 0.0, %v5152
    %5154 = vmatmul.f32.gmra.mxu0 %v5115
    %v5155 = vpop.f32.mrf.mxu0
    %v5156 = vadd.f32 0.0, %v5155
    %5157 = vmatmul.f32.gmra.mxu0 %v5118
    %v5158 = vpop.f32.mrf.mxu0
    %v5159 = vadd.f32 0.0, %v5158
    %5160 = vmatmul.f32.gmra.mxu0 %v5121
    %v5161 = vpop.f32.mrf.mxu0
    %v5162 = vadd.f32 0.0, %v5161
    %5163 = vmatmul.f32.gmra.mxu0 %v5124
    %v5164 = vpop.f32.mrf.mxu0
    %v5165 = vadd.f32 0.0, %v5164
    %5166 = vmatmul.f32.gmra.mxu0 %v5127
    %v5167 = vpop.f32.mrf.mxu0
    %v5168 = vadd.f32 0.0, %v5167
    %5169 = vmatmul.f32.gmra.mxu0 %v5130
    %v5170 = vpop.f32.mrf.mxu0
    %v5171 = vadd.f32 0.0, %v5170
    %5172 = vdwg.mxu0
    %v5173 = vadd.f32 %v5100, %v5150
    %v5174 = vadd.f32 %v5101, %v5153
    %v5175 = vadd.f32 %v5102, %v5156
    %v5176 = vadd.f32 %v5103, %v5159
    %v5177 = vadd.f32 %v5104, %v5162
    %v5178 = vadd.f32 %v5105, %v5165
    %v5179 = vadd.f32 %v5106, %v5168
    %v5180 = vadd.f32 %v5107, %v5171
    %v5182 = vsel %vm1839, %v4915, 0
    %v5185 = vsel %vm1839, %v4918, 0
    %v5188 = vsel %vm1839, %v4921, 0
    %v5191 = vsel %vm1839, %v4924, 0
    %v5194 = vsel %vm1839, %v4927, 0
    %v5197 = vsel %vm1839, %v4930, 0
    %v5200 = vsel %vm1839, %v4933, 0
    %v5203 = vsel %vm1839, %v4936, 0
    %5205 = vmatpush.msra.mxu0 0.0
    %5206 = vmatpush.msra.mxu0 0.0
    %5207 = vmatpush.msra.mxu0 0.0
    %5208 = vmatpush.msra.mxu0 0.0
    %5209 = vmatpush.msra.mxu0 0.0
    %5210 = vmatpush.msra.mxu0 0.0
    %5211 = vmatpush.msra.mxu0 0.0
    %5212 = vmatpush.msra.mxu0 0.0
    %5213 = vmatpush.msra.mxu0 0.0
    %5214 = vmatpush.msra.mxu0 0.0
    %5215 = vmatpush.msra.mxu0 0.0
    %5216 = vmatpush.msra.mxu0 0.0
    %5217 = vmatpush.msra.mxu0 0.0
    %5218 = vmatpush.msra.mxu0 0.0
    %5219 = vmatpush.msra.mxu0 0.0
    %5220 = vmatpush.msra.mxu0 %v2609
    %5221 = vmatmul.f32.gmra.mxu0 %v5182
    %v5222 = vpop.f32.mrf.mxu0
    %v5223 = vadd.f32 0.0, %v5222
    %5224 = vmatmul.f32.gmra.mxu0 %v5185
    %v5225 = vpop.f32.mrf.mxu0
    %v5226 = vadd.f32 0.0, %v5225
    %5227 = vmatmul.f32.gmra.mxu0 %v5188
    %v5228 = vpop.f32.mrf.mxu0
    %v5229 = vadd.f32 0.0, %v5228
    %5230 = vmatmul.f32.gmra.mxu0 %v5191
    %v5231 = vpop.f32.mrf.mxu0
    %v5232 = vadd.f32 0.0, %v5231
    %5233 = vmatmul.f32.gmra.mxu0 %v5194
    %v5234 = vpop.f32.mrf.mxu0
    %v5235 = vadd.f32 0.0, %v5234
    %5236 = vmatmul.f32.gmra.mxu0 %v5197
    %v5237 = vpop.f32.mrf.mxu0
    %v5238 = vadd.f32 0.0, %v5237
    %5239 = vmatmul.f32.gmra.mxu0 %v5200
    %v5240 = vpop.f32.mrf.mxu0
    %v5241 = vadd.f32 0.0, %v5240
    %5242 = vmatmul.f32.gmra.mxu0 %v5203
    %v5243 = vpop.f32.mrf.mxu0
    %v5244 = vadd.f32 0.0, %v5243
    %5245 = vdwg.mxu0
    %v5246 = vadd.f32 %v5173, %v5223
    %v5247 = vadd.f32 %v5174, %v5226
    %v5248 = vadd.f32 %v5175, %v5229
    %v5249 = vadd.f32 %v5176, %v5232
    %v5250 = vadd.f32 %v5177, %v5235
    %v5251 = vadd.f32 %v5178, %v5238
    %v5252 = vadd.f32 %v5179, %v5241
    %v5253 = vadd.f32 %v5180, %v5244
    %v5255 = vsel %vm1839, %v4939, 0
    %v5258 = vsel %vm1839, %v4942, 0
    %v5261 = vsel %vm1839, %v4945, 0
    %v5264 = vsel %vm1839, %v4948, 0
    %v5267 = vsel %vm1839, %v4951, 0
    %v5270 = vsel %vm1839, %v4954, 0
    %v5273 = vsel %vm1839, %v4957, 0
    %v5276 = vsel %vm1839, %v4960, 0
    %5278 = vmatpush.msra.mxu0 0.0
    %5279 = vmatpush.msra.mxu0 0.0
    %5280 = vmatpush.msra.mxu0 0.0
    %5281 = vmatpush.msra.mxu0 0.0
    %5282 = vmatpush.msra.mxu0 0.0
    %5283 = vmatpush.msra.mxu0 0.0
    %5284 = vmatpush.msra.mxu0 0.0
    %5285 = vmatpush.msra.mxu0 0.0
    %5286 = vmatpush.msra.mxu0 0.0
    %5287 = vmatpush.msra.mxu0 0.0
    %5288 = vmatpush.msra.mxu0 0.0
    %5289 = vmatpush.msra.mxu0 0.0
    %5290 = vmatpush.msra.mxu0 0.0
    %5291 = vmatpush.msra.mxu0 0.0
    %5292 = vmatpush.msra.mxu0 0.0
    %5293 = vmatpush.msra.mxu0 %v2687
    %5294 = vmatmul.f32.gmra.mxu0 %v5255
    %v5295 = vpop.f32.mrf.mxu0
    %v5296 = vadd.f32 0.0, %v5295
    %5297 = vmatmul.f32.gmra.mxu0 %v5258
    %v5298 = vpop.f32.mrf.mxu0
    %v5299 = vadd.f32 0.0, %v5298
    %5300 = vmatmul.f32.gmra.mxu0 %v5261
    %v5301 = vpop.f32.mrf.mxu0
    %v5302 = vadd.f32 0.0, %v5301
    %5303 = vmatmul.f32.gmra.mxu0 %v5264
    %v5304 = vpop.f32.mrf.mxu0
    %v5305 = vadd.f32 0.0, %v5304
    %5306 = vmatmul.f32.gmra.mxu0 %v5267
    %v5307 = vpop.f32.mrf.mxu0
    %v5308 = vadd.f32 0.0, %v5307
    %5309 = vmatmul.f32.gmra.mxu0 %v5270
    %v5310 = vpop.f32.mrf.mxu0
    %v5311 = vadd.f32 0.0, %v5310
    %5312 = vmatmul.f32.gmra.mxu0 %v5273
    %v5313 = vpop.f32.mrf.mxu0
    %v5314 = vadd.f32 0.0, %v5313
    %5315 = vmatmul.f32.gmra.mxu0 %v5276
    %v5316 = vpop.f32.mrf.mxu0
    %v5317 = vadd.f32 0.0, %v5316
    %5318 = vdwg.mxu0
    %v5319 = vadd.f32 %v5246, %v5296
    %v5320 = vadd.f32 %v5247, %v5299
    %v5321 = vadd.f32 %v5248, %v5302
    %v5322 = vadd.f32 %v5249, %v5305
    %v5323 = vadd.f32 %v5250, %v5308
    %v5324 = vadd.f32 %v5251, %v5311
    %v5325 = vadd.f32 %v5252, %v5314
    %v5326 = vadd.f32 %v5253, %v5317
    %5327 = vmatpush.msra.mxu0 %v1654
    %5328 = vmatpush.msra.mxu0 %v1653
    %5329 = vmatpush.msra.mxu0 %v1652
    %5330 = vmatpush.msra.mxu0 %v1651
    %5331 = vmatpush.msra.mxu0 %v1650
    %5332 = vmatpush.msra.mxu0 %v1649
    %5333 = vmatpush.msra.mxu0 %v1648
    %5334 = vmatpush.msra.mxu0 %v1647
    %5335 = vmatpush.msra.mxu0 %v1646
    %5336 = vmatpush.msra.mxu0 %v1645
    %5337 = vmatpush.msra.mxu0 %v1644
    %5338 = vmatpush.msra.mxu0 %v1643
    %5339 = vmatpush.msra.mxu0 %v1642
    %5340 = vmatpush.msra.mxu0 %v1641
    %5341 = vmatpush.msra.mxu0 %v1640
    %5342 = vmatpush.msra.mxu0 %v1639
    %5343 = vmatmul.f32.gmra.mxu0 %v1659
    %v5344 = vpop.f32.mrf.mxu0
    %v5345 = vadd.f32 0.0, %v5344
    %5346 = vmatmul.f32.gmra.mxu0 %v1660
    %v5347 = vpop.f32.mrf.mxu0
    %v5348 = vadd.f32 0.0, %v5347
    %5349 = vmatmul.f32.gmra.mxu0 %v1661
    %v5350 = vpop.f32.mrf.mxu0
    %v5351 = vadd.f32 0.0, %v5350
    %5352 = vmatmul.f32.gmra.mxu0 %v1662
    %v5353 = vpop.f32.mrf.mxu0
    %v5354 = vadd.f32 0.0, %v5353
    %5355 = vmatmul.f32.gmra.mxu0 %v1663
    %v5356 = vpop.f32.mrf.mxu0
    %v5357 = vadd.f32 0.0, %v5356
    %5358 = vmatmul.f32.gmra.mxu0 %v1664
    %v5359 = vpop.f32.mrf.mxu0
    %v5360 = vadd.f32 0.0, %v5359
    %5361 = vmatmul.f32.gmra.mxu0 %v1665
    %v5362 = vpop.f32.mrf.mxu0
    %v5363 = vadd.f32 0.0, %v5362
    %5364 = vmatmul.f32.gmra.mxu0 %v1666
    %v5365 = vpop.f32.mrf.mxu0
    %v5366 = vadd.f32 0.0, %v5365
    %5367 = vmatmul.f32.gmra.mxu0 %v1667
    %v5368 = vpop.f32.mrf.mxu0
    %v5369 = vadd.f32 0.0, %v5368
    %5370 = vmatmul.f32.gmra.mxu0 %v1668
    %v5371 = vpop.f32.mrf.mxu0
    %v5372 = vadd.f32 0.0, %v5371
    %5373 = vmatmul.f32.gmra.mxu0 %v1669
    %v5374 = vpop.f32.mrf.mxu0
    %v5375 = vadd.f32 0.0, %v5374
    %5376 = vmatmul.f32.gmra.mxu0 %v1670
    %v5377 = vpop.f32.mrf.mxu0
    %v5378 = vadd.f32 0.0, %v5377
    %5379 = vmatmul.f32.gmra.mxu0 %v1671
    %v5380 = vpop.f32.mrf.mxu0
    %v5381 = vadd.f32 0.0, %v5380
    %5382 = vmatmul.f32.gmra.mxu0 %v1672
    %v5383 = vpop.f32.mrf.mxu0
    %v5384 = vadd.f32 0.0, %v5383
    %5385 = vmatmul.f32.gmra.mxu0 %v1673
    %v5386 = vpop.f32.mrf.mxu0
    %v5387 = vadd.f32 0.0, %v5386
    %5388 = vmatmul.f32.gmra.mxu0 %v1674
    %v5389 = vpop.f32.mrf.mxu0
    %v5390 = vadd.f32 0.0, %v5389
    %5391 = vmatmul.f32.gmra.mxu0 %v1675
    %v5392 = vpop.f32.mrf.mxu0
    %v5393 = vadd.f32 0.0, %v5392
    %5394 = vmatmul.f32.gmra.mxu0 %v1676
    %v5395 = vpop.f32.mrf.mxu0
    %v5396 = vadd.f32 0.0, %v5395
    %5397 = vmatmul.f32.gmra.mxu0 %v1677
    %v5398 = vpop.f32.mrf.mxu0
    %v5399 = vadd.f32 0.0, %v5398
    %5400 = vmatmul.f32.gmra.mxu0 %v1678
    %v5401 = vpop.f32.mrf.mxu0
    %v5402 = vadd.f32 0.0, %v5401
    %5403 = vmatmul.f32.gmra.mxu0 %v1679
    %v5404 = vpop.f32.mrf.mxu0
    %v5405 = vadd.f32 0.0, %v5404
    %5406 = vmatmul.f32.gmra.mxu0 %v1680
    %v5407 = vpop.f32.mrf.mxu0
    %v5408 = vadd.f32 0.0, %v5407
    %5409 = vmatmul.f32.gmra.mxu0 %v1681
    %v5410 = vpop.f32.mrf.mxu0
    %v5411 = vadd.f32 0.0, %v5410
    %5412 = vmatmul.f32.gmra.mxu0 %v1682
    %v5413 = vpop.f32.mrf.mxu0
    %v5414 = vadd.f32 0.0, %v5413
    %5415 = vmatmul.f32.gmra.mxu0 %v1683
    %v5416 = vpop.f32.mrf.mxu0
    %v5417 = vadd.f32 0.0, %v5416
    %5418 = vmatmul.f32.gmra.mxu0 %v1684
    %v5419 = vpop.f32.mrf.mxu0
    %v5420 = vadd.f32 0.0, %v5419
    %5421 = vmatmul.f32.gmra.mxu0 %v1685
    %v5422 = vpop.f32.mrf.mxu0
    %v5423 = vadd.f32 0.0, %v5422
    %5424 = vmatmul.f32.gmra.mxu0 %v1686
    %v5425 = vpop.f32.mrf.mxu0
    %v5426 = vadd.f32 0.0, %v5425
    %5427 = vmatmul.f32.gmra.mxu0 %v1687
    %v5428 = vpop.f32.mrf.mxu0
    %v5429 = vadd.f32 0.0, %v5428
    %5430 = vmatmul.f32.gmra.mxu0 %v1688
    %v5431 = vpop.f32.mrf.mxu0
    %v5432 = vadd.f32 0.0, %v5431
    %5433 = vmatmul.f32.gmra.mxu0 %v1689
    %v5434 = vpop.f32.mrf.mxu0
    %v5435 = vadd.f32 0.0, %v5434
    %5436 = vmatmul.f32.gmra.mxu0 %v1690
    %v5437 = vpop.f32.mrf.mxu0
    %v5438 = vadd.f32 0.0, %v5437
    %5439 = vmatmul.f32.gmra.mxu0 %v1691
    %v5440 = vpop.f32.mrf.mxu0
    %v5441 = vadd.f32 0.0, %v5440
    %5442 = vmatmul.f32.gmra.mxu0 %v1692
    %v5443 = vpop.f32.mrf.mxu0
    %v5444 = vadd.f32 0.0, %v5443
    %5445 = vmatmul.f32.gmra.mxu0 %v1693
    %v5446 = vpop.f32.mrf.mxu0
    %v5447 = vadd.f32 0.0, %v5446
    %5448 = vmatmul.f32.gmra.mxu0 %v1694
    %v5449 = vpop.f32.mrf.mxu0
    %v5450 = vadd.f32 0.0, %v5449
    %5451 = vmatmul.f32.gmra.mxu0 %v1695
    %v5452 = vpop.f32.mrf.mxu0
    %v5453 = vadd.f32 0.0, %v5452
    %5454 = vmatmul.f32.gmra.mxu0 %v1696
    %v5455 = vpop.f32.mrf.mxu0
    %v5456 = vadd.f32 0.0, %v5455
    %5457 = vmatmul.f32.gmra.mxu0 %v1697
    %v5458 = vpop.f32.mrf.mxu0
    %v5459 = vadd.f32 0.0, %v5458
    %5460 = vmatmul.f32.gmra.mxu0 %v1698
    %v5461 = vpop.f32.mrf.mxu0
    %v5462 = vadd.f32 0.0, %v5461
    %5463 = vdwg.mxu0
    %v5465 = vsel %vm1839, %v5345, 0
    %v5468 = vsel %vm1839, %v5348, 0
    %v5471 = vsel %vm1839, %v5351, 0
    %v5474 = vsel %vm1839, %v5354, 0
    %v5477 = vsel %vm1839, %v5357, 0
    %v5480 = vsel %vm1839, %v5360, 0
    %v5483 = vsel %vm1839, %v5363, 0
    %v5486 = vsel %vm1839, %v5366, 0
    %5488 = vmatpush.msra.mxu0 0.0
    %5489 = vmatpush.msra.mxu0 0.0
    %5490 = vmatpush.msra.mxu0 0.0
    %5491 = vmatpush.msra.mxu0 0.0
    %5492 = vmatpush.msra.mxu0 0.0
    %5493 = vmatpush.msra.mxu0 0.0
    %5494 = vmatpush.msra.mxu0 0.0
    %5495 = vmatpush.msra.mxu0 0.0
    %5496 = vmatpush.msra.mxu0 0.0
    %5497 = vmatpush.msra.mxu0 0.0
    %5498 = vmatpush.msra.mxu0 0.0
    %5499 = vmatpush.msra.mxu0 0.0
    %5500 = vmatpush.msra.mxu0 0.0
    %5501 = vmatpush.msra.mxu0 0.0
    %5502 = vmatpush.msra.mxu0 0.0
    %5503 = vmatpush.msra.mxu0 %v2902
    %5504 = vmatmul.f32.gmra.mxu0 %v5465
    %v5505 = vpop.f32.mrf.mxu0
    %v5506 = vadd.f32 0.0, %v5505
    %5507 = vmatmul.f32.gmra.mxu0 %v5468
    %v5508 = vpop.f32.mrf.mxu0
    %v5509 = vadd.f32 0.0, %v5508
    %5510 = vmatmul.f32.gmra.mxu0 %v5471
    %v5511 = vpop.f32.mrf.mxu0
    %v5512 = vadd.f32 0.0, %v5511
    %5513 = vmatmul.f32.gmra.mxu0 %v5474
    %v5514 = vpop.f32.mrf.mxu0
    %v5515 = vadd.f32 0.0, %v5514
    %5516 = vmatmul.f32.gmra.mxu0 %v5477
    %v5517 = vpop.f32.mrf.mxu0
    %v5518 = vadd.f32 0.0, %v5517
    %5519 = vmatmul.f32.gmra.mxu0 %v5480
    %v5520 = vpop.f32.mrf.mxu0
    %v5521 = vadd.f32 0.0, %v5520
    %5522 = vmatmul.f32.gmra.mxu0 %v5483
    %v5523 = vpop.f32.mrf.mxu0
    %v5524 = vadd.f32 0.0, %v5523
    %5525 = vmatmul.f32.gmra.mxu0 %v5486
    %v5526 = vpop.f32.mrf.mxu0
    %v5527 = vadd.f32 0.0, %v5526
    %5528 = vdwg.mxu0
    %v5529 = vadd.f32 %v5319, %v5506
    %v5530 = vadd.f32 %v5320, %v5509
    %v5531 = vadd.f32 %v5321, %v5512
    %v5532 = vadd.f32 %v5322, %v5515
    %v5533 = vadd.f32 %v5323, %v5518
    %v5534 = vadd.f32 %v5324, %v5521
    %v5535 = vadd.f32 %v5325, %v5524
    %v5536 = vadd.f32 %v5326, %v5527
    %v5538 = vsel %vm1839, %v5369, 0
    %v5541 = vsel %vm1839, %v5372, 0
    %v5544 = vsel %vm1839, %v5375, 0
    %v5547 = vsel %vm1839, %v5378, 0
    %v5550 = vsel %vm1839, %v5381, 0
    %v5553 = vsel %vm1839, %v5384, 0
    %v5556 = vsel %vm1839, %v5387, 0
    %v5559 = vsel %vm1839, %v5390, 0
    %5561 = vmatpush.msra.mxu0 0.0
    %5562 = vmatpush.msra.mxu0 0.0
    %5563 = vmatpush.msra.mxu0 0.0
    %5564 = vmatpush.msra.mxu0 0.0
    %5565 = vmatpush.msra.mxu0 0.0
    %5566 = vmatpush.msra.mxu0 0.0
    %5567 = vmatpush.msra.mxu0 0.0
    %5568 = vmatpush.msra.mxu0 0.0
    %5569 = vmatpush.msra.mxu0 0.0
    %5570 = vmatpush.msra.mxu0 0.0
    %5571 = vmatpush.msra.mxu0 0.0
    %5572 = vmatpush.msra.mxu0 0.0
    %5573 = vmatpush.msra.mxu0 0.0
    %5574 = vmatpush.msra.mxu0 0.0
    %5575 = vmatpush.msra.mxu0 0.0
    %5576 = vmatpush.msra.mxu0 %v2980
    %5577 = vmatmul.f32.gmra.mxu0 %v5538
    %v5578 = vpop.f32.mrf.mxu0
    %v5579 = vadd.f32 0.0, %v5578
    %5580 = vmatmul.f32.gmra.mxu0 %v5541
    %v5581 = vpop.f32.mrf.mxu0
    %v5582 = vadd.f32 0.0, %v5581
    %5583 = vmatmul.f32.gmra.mxu0 %v5544
    %v5584 = vpop.f32.mrf.mxu0
    %v5585 = vadd.f32 0.0, %v5584
    %5586 = vmatmul.f32.gmra.mxu0 %v5547
    %v5587 = vpop.f32.mrf.mxu0
    %v5588 = vadd.f32 0.0, %v5587
    %5589 = vmatmul.f32.gmra.mxu0 %v5550
    %v5590 = vpop.f32.mrf.mxu0
    %v5591 = vadd.f32 0.0, %v5590
    %5592 = vmatmul.f32.gmra.mxu0 %v5553
    %v5593 = vpop.f32.mrf.mxu0
    %v5594 = vadd.f32 0.0, %v5593
    %5595 = vmatmul.f32.gmra.mxu0 %v5556
    %v5596 = vpop.f32.mrf.mxu0
    %v5597 = vadd.f32 0.0, %v5596
    %5598 = vmatmul.f32.gmra.mxu0 %v5559
    %v5599 = vpop.f32.mrf.mxu0
    %v5600 = vadd.f32 0.0, %v5599
    %5601 = vdwg.mxu0
    %v5602 = vadd.f32 %v5529, %v5579
    %v5603 = vadd.f32 %v5530, %v5582
    %v5604 = vadd.f32 %v5531, %v5585
    %v5605 = vadd.f32 %v5532, %v5588
    %v5606 = vadd.f32 %v5533, %v5591
    %v5607 = vadd.f32 %v5534, %v5594
    %v5608 = vadd.f32 %v5535, %v5597
    %v5609 = vadd.f32 %v5536, %v5600
    %v5611 = vsel %vm1839, %v5393, 0
    %v5614 = vsel %vm1839, %v5396, 0
    %v5617 = vsel %vm1839, %v5399, 0
    %v5620 = vsel %vm1839, %v5402, 0
    %v5623 = vsel %vm1839, %v5405, 0
    %v5626 = vsel %vm1839, %v5408, 0
    %v5629 = vsel %vm1839, %v5411, 0
    %v5632 = vsel %vm1839, %v5414, 0
    %5634 = vmatpush.msra.mxu0 0.0
    %5635 = vmatpush.msra.mxu0 0.0
    %5636 = vmatpush.msra.mxu0 0.0
    %5637 = vmatpush.msra.mxu0 0.0
    %5638 = vmatpush.msra.mxu0 0.0
    %5639 = vmatpush.msra.mxu0 0.0
    %5640 = vmatpush.msra.mxu0 0.0
    %5641 = vmatpush.msra.mxu0 0.0
    %5642 = vmatpush.msra.mxu0 0.0
    %5643 = vmatpush.msra.mxu0 0.0
    %5644 = vmatpush.msra.mxu0 0.0
    %5645 = vmatpush.msra.mxu0 0.0
    %5646 = vmatpush.msra.mxu0 0.0
    %5647 = vmatpush.msra.mxu0 0.0
    %5648 = vmatpush.msra.mxu0 0.0
    %5649 = vmatpush.msra.mxu0 %v3058
    %5650 = vmatmul.f32.gmra.mxu0 %v5611
    %v5651 = vpop.f32.mrf.mxu0
    %v5652 = vadd.f32 0.0, %v5651
    %5653 = vmatmul.f32.gmra.mxu0 %v5614
    %v5654 = vpop.f32.mrf.mxu0
    %v5655 = vadd.f32 0.0, %v5654
    %5656 = vmatmul.f32.gmra.mxu0 %v5617
    %v5657 = vpop.f32.mrf.mxu0
    %v5658 = vadd.f32 0.0, %v5657
    %5659 = vmatmul.f32.gmra.mxu0 %v5620
    %v5660 = vpop.f32.mrf.mxu0
    %v5661 = vadd.f32 0.0, %v5660
    %5662 = vmatmul.f32.gmra.mxu0 %v5623
    %v5663 = vpop.f32.mrf.mxu0
    %v5664 = vadd.f32 0.0, %v5663
    %5665 = vmatmul.f32.gmra.mxu0 %v5626
    %v5666 = vpop.f32.mrf.mxu0
    %v5667 = vadd.f32 0.0, %v5666
    %5668 = vmatmul.f32.gmra.mxu0 %v5629
    %v5669 = vpop.f32.mrf.mxu0
    %v5670 = vadd.f32 0.0, %v5669
    %5671 = vmatmul.f32.gmra.mxu0 %v5632
    %v5672 = vpop.f32.mrf.mxu0
    %v5673 = vadd.f32 0.0, %v5672
    %5674 = vdwg.mxu0
    %v5675 = vadd.f32 %v5602, %v5652
    %v5676 = vadd.f32 %v5603, %v5655
    %v5677 = vadd.f32 %v5604, %v5658
    %v5678 = vadd.f32 %v5605, %v5661
    %v5679 = vadd.f32 %v5606, %v5664
    %v5680 = vadd.f32 %v5607, %v5667
    %v5681 = vadd.f32 %v5608, %v5670
    %v5682 = vadd.f32 %v5609, %v5673
    %v5684 = vsel %vm1839, %v5417, 0
    %v5687 = vsel %vm1839, %v5420, 0
    %v5690 = vsel %vm1839, %v5423, 0
    %v5693 = vsel %vm1839, %v5426, 0
    %v5696 = vsel %vm1839, %v5429, 0
    %v5699 = vsel %vm1839, %v5432, 0
    %v5702 = vsel %vm1839, %v5435, 0
    %v5705 = vsel %vm1839, %v5438, 0
    %5707 = vmatpush.msra.mxu0 0.0
    %5708 = vmatpush.msra.mxu0 0.0
    %5709 = vmatpush.msra.mxu0 0.0
    %5710 = vmatpush.msra.mxu0 0.0
    %5711 = vmatpush.msra.mxu0 0.0
    %5712 = vmatpush.msra.mxu0 0.0
    %5713 = vmatpush.msra.mxu0 0.0
    %5714 = vmatpush.msra.mxu0 0.0
    %5715 = vmatpush.msra.mxu0 0.0
    %5716 = vmatpush.msra.mxu0 0.0
    %5717 = vmatpush.msra.mxu0 0.0
    %5718 = vmatpush.msra.mxu0 0.0
    %5719 = vmatpush.msra.mxu0 0.0
    %5720 = vmatpush.msra.mxu0 0.0
    %5721 = vmatpush.msra.mxu0 0.0
    %5722 = vmatpush.msra.mxu0 %v3136
    %5723 = vmatmul.f32.gmra.mxu0 %v5684
    %v5724 = vpop.f32.mrf.mxu0
    %v5725 = vadd.f32 0.0, %v5724
    %5726 = vmatmul.f32.gmra.mxu0 %v5687
    %v5727 = vpop.f32.mrf.mxu0
    %v5728 = vadd.f32 0.0, %v5727
    %5729 = vmatmul.f32.gmra.mxu0 %v5690
    %v5730 = vpop.f32.mrf.mxu0
    %v5731 = vadd.f32 0.0, %v5730
    %5732 = vmatmul.f32.gmra.mxu0 %v5693
    %v5733 = vpop.f32.mrf.mxu0
    %v5734 = vadd.f32 0.0, %v5733
    %5735 = vmatmul.f32.gmra.mxu0 %v5696
    %v5736 = vpop.f32.mrf.mxu0
    %v5737 = vadd.f32 0.0, %v5736
    %5738 = vmatmul.f32.gmra.mxu0 %v5699
    %v5739 = vpop.f32.mrf.mxu0
    %v5740 = vadd.f32 0.0, %v5739
    %5741 = vmatmul.f32.gmra.mxu0 %v5702
    %v5742 = vpop.f32.mrf.mxu0
    %v5743 = vadd.f32 0.0, %v5742
    %5744 = vmatmul.f32.gmra.mxu0 %v5705
    %v5745 = vpop.f32.mrf.mxu0
    %v5746 = vadd.f32 0.0, %v5745
    %5747 = vdwg.mxu0
    %v5748 = vadd.f32 %v5675, %v5725
    %v5749 = vadd.f32 %v5676, %v5728
    %v5750 = vadd.f32 %v5677, %v5731
    %v5751 = vadd.f32 %v5678, %v5734
    %v5752 = vadd.f32 %v5679, %v5737
    %v5753 = vadd.f32 %v5680, %v5740
    %v5754 = vadd.f32 %v5681, %v5743
    %v5755 = vadd.f32 %v5682, %v5746
    %v5757 = vsel %vm1839, %v5441, 0
    %v5760 = vsel %vm1839, %v5444, 0
    %v5763 = vsel %vm1839, %v5447, 0
    %v5766 = vsel %vm1839, %v5450, 0
    %v5769 = vsel %vm1839, %v5453, 0
    %v5772 = vsel %vm1839, %v5456, 0
    %v5775 = vsel %vm1839, %v5459, 0
    %v5778 = vsel %vm1839, %v5462, 0
    %5780 = vmatpush.msra.mxu0 0.0
    %5781 = vmatpush.msra.mxu0 0.0
    %5782 = vmatpush.msra.mxu0 0.0
    %5783 = vmatpush.msra.mxu0 0.0
    %5784 = vmatpush.msra.mxu0 0.0
    %5785 = vmatpush.msra.mxu0 0.0
    %5786 = vmatpush.msra.mxu0 0.0
    %5787 = vmatpush.msra.mxu0 0.0
    %5788 = vmatpush.msra.mxu0 0.0
    %5789 = vmatpush.msra.mxu0 0.0
    %5790 = vmatpush.msra.mxu0 0.0
    %5791 = vmatpush.msra.mxu0 0.0
    %5792 = vmatpush.msra.mxu0 0.0
    %5793 = vmatpush.msra.mxu0 0.0
    %5794 = vmatpush.msra.mxu0 0.0
    %5795 = vmatpush.msra.mxu0 %v3214
    %5796 = vmatmul.f32.gmra.mxu0 %v5757
    %v5797 = vpop.f32.mrf.mxu0
    %v5798 = vadd.f32 0.0, %v5797
    %5799 = vmatmul.f32.gmra.mxu0 %v5760
    %v5800 = vpop.f32.mrf.mxu0
    %v5801 = vadd.f32 0.0, %v5800
    %5802 = vmatmul.f32.gmra.mxu0 %v5763
    %v5803 = vpop.f32.mrf.mxu0
    %v5804 = vadd.f32 0.0, %v5803
    %5805 = vmatmul.f32.gmra.mxu0 %v5766
    %v5806 = vpop.f32.mrf.mxu0
    %v5807 = vadd.f32 0.0, %v5806
    %5808 = vmatmul.f32.gmra.mxu0 %v5769
    %v5809 = vpop.f32.mrf.mxu0
    %v5810 = vadd.f32 0.0, %v5809
    %5811 = vmatmul.f32.gmra.mxu0 %v5772
    %v5812 = vpop.f32.mrf.mxu0
    %v5813 = vadd.f32 0.0, %v5812
    %5814 = vmatmul.f32.gmra.mxu0 %v5775
    %v5815 = vpop.f32.mrf.mxu0
    %v5816 = vadd.f32 0.0, %v5815
    %5817 = vmatmul.f32.gmra.mxu0 %v5778
    %v5818 = vpop.f32.mrf.mxu0
    %v5819 = vadd.f32 0.0, %v5818
    %5820 = vdwg.mxu0
    %v5821 = vadd.f32 %v5748, %v5798
    %v5822 = vadd.f32 %v5749, %v5801
    %v5823 = vadd.f32 %v5750, %v5804
    %v5824 = vadd.f32 %v5751, %v5807
    %v5825 = vadd.f32 %v5752, %v5810
    %v5826 = vadd.f32 %v5753, %v5813
    %v5827 = vadd.f32 %v5754, %v5816
    %v5828 = vadd.f32 %v5755, %v5819
    %5829 = vmatpush.msra.mxu0 %v1656
    %5830 = vmatpush.msra.mxu0 %v1655
    %5831 = vmatpush.msra.mxu0 %v1654
    %5832 = vmatpush.msra.mxu0 %v1653
    %5833 = vmatpush.msra.mxu0 %v1652
    %5834 = vmatpush.msra.mxu0 %v1651
    %5835 = vmatpush.msra.mxu0 %v1650
    %5836 = vmatpush.msra.mxu0 %v1649
    %5837 = vmatpush.msra.mxu0 %v1648
    %5838 = vmatpush.msra.mxu0 %v1647
    %5839 = vmatpush.msra.mxu0 %v1646
    %5840 = vmatpush.msra.mxu0 %v1645
    %5841 = vmatpush.msra.mxu0 %v1644
    %5842 = vmatpush.msra.mxu0 %v1643
    %5843 = vmatpush.msra.mxu0 %v1642
    %5844 = vmatpush.msra.mxu0 %v1641
    %5845 = vmatmul.f32.gmra.mxu0 %v1659
    %v5846 = vpop.f32.mrf.mxu0
    %v5847 = vadd.f32 0.0, %v5846
    %5848 = vmatmul.f32.gmra.mxu0 %v1660
    %v5849 = vpop.f32.mrf.mxu0
    %v5850 = vadd.f32 0.0, %v5849
    %5851 = vmatmul.f32.gmra.mxu0 %v1661
    %v5852 = vpop.f32.mrf.mxu0
    %v5853 = vadd.f32 0.0, %v5852
    %5854 = vmatmul.f32.gmra.mxu0 %v1662
    %v5855 = vpop.f32.mrf.mxu0
    %v5856 = vadd.f32 0.0, %v5855
    %5857 = vmatmul.f32.gmra.mxu0 %v1663
    %v5858 = vpop.f32.mrf.mxu0
    %v5859 = vadd.f32 0.0, %v5858
    %5860 = vmatmul.f32.gmra.mxu0 %v1664
    %v5861 = vpop.f32.mrf.mxu0
    %v5862 = vadd.f32 0.0, %v5861
    %5863 = vmatmul.f32.gmra.mxu0 %v1665
    %v5864 = vpop.f32.mrf.mxu0
    %v5865 = vadd.f32 0.0, %v5864
    %5866 = vmatmul.f32.gmra.mxu0 %v1666
    %v5867 = vpop.f32.mrf.mxu0
    %v5868 = vadd.f32 0.0, %v5867
    %5869 = vmatmul.f32.gmra.mxu0 %v1667
    %v5870 = vpop.f32.mrf.mxu0
    %v5871 = vadd.f32 0.0, %v5870
    %5872 = vmatmul.f32.gmra.mxu0 %v1668
    %v5873 = vpop.f32.mrf.mxu0
    %v5874 = vadd.f32 0.0, %v5873
    %5875 = vmatmul.f32.gmra.mxu0 %v1669
    %v5876 = vpop.f32.mrf.mxu0
    %v5877 = vadd.f32 0.0, %v5876
    %5878 = vmatmul.f32.gmra.mxu0 %v1670
    %v5879 = vpop.f32.mrf.mxu0
    %v5880 = vadd.f32 0.0, %v5879
    %5881 = vmatmul.f32.gmra.mxu0 %v1671
    %v5882 = vpop.f32.mrf.mxu0
    %v5883 = vadd.f32 0.0, %v5882
    %5884 = vmatmul.f32.gmra.mxu0 %v1672
    %v5885 = vpop.f32.mrf.mxu0
    %v5886 = vadd.f32 0.0, %v5885
    %5887 = vmatmul.f32.gmra.mxu0 %v1673
    %v5888 = vpop.f32.mrf.mxu0
    %v5889 = vadd.f32 0.0, %v5888
    %5890 = vmatmul.f32.gmra.mxu0 %v1674
    %v5891 = vpop.f32.mrf.mxu0
    %v5892 = vadd.f32 0.0, %v5891
    %5893 = vmatmul.f32.gmra.mxu0 %v1675
    %v5894 = vpop.f32.mrf.mxu0
    %v5895 = vadd.f32 0.0, %v5894
    %5896 = vmatmul.f32.gmra.mxu0 %v1676
    %v5897 = vpop.f32.mrf.mxu0
    %v5898 = vadd.f32 0.0, %v5897
    %5899 = vmatmul.f32.gmra.mxu0 %v1677
    %v5900 = vpop.f32.mrf.mxu0
    %v5901 = vadd.f32 0.0, %v5900
    %5902 = vmatmul.f32.gmra.mxu0 %v1678
    %v5903 = vpop.f32.mrf.mxu0
    %v5904 = vadd.f32 0.0, %v5903
    %5905 = vmatmul.f32.gmra.mxu0 %v1679
    %v5906 = vpop.f32.mrf.mxu0
    %v5907 = vadd.f32 0.0, %v5906
    %5908 = vmatmul.f32.gmra.mxu0 %v1680
    %v5909 = vpop.f32.mrf.mxu0
    %v5910 = vadd.f32 0.0, %v5909
    %5911 = vmatmul.f32.gmra.mxu0 %v1681
    %v5912 = vpop.f32.mrf.mxu0
    %v5913 = vadd.f32 0.0, %v5912
    %5914 = vmatmul.f32.gmra.mxu0 %v1682
    %v5915 = vpop.f32.mrf.mxu0
    %v5916 = vadd.f32 0.0, %v5915
    %5917 = vmatmul.f32.gmra.mxu0 %v1683
    %v5918 = vpop.f32.mrf.mxu0
    %v5919 = vadd.f32 0.0, %v5918
    %5920 = vmatmul.f32.gmra.mxu0 %v1684
    %v5921 = vpop.f32.mrf.mxu0
    %v5922 = vadd.f32 0.0, %v5921
    %5923 = vmatmul.f32.gmra.mxu0 %v1685
    %v5924 = vpop.f32.mrf.mxu0
    %v5925 = vadd.f32 0.0, %v5924
    %5926 = vmatmul.f32.gmra.mxu0 %v1686
    %v5927 = vpop.f32.mrf.mxu0
    %v5928 = vadd.f32 0.0, %v5927
    %5929 = vmatmul.f32.gmra.mxu0 %v1687
    %v5930 = vpop.f32.mrf.mxu0
    %v5931 = vadd.f32 0.0, %v5930
    %5932 = vmatmul.f32.gmra.mxu0 %v1688
    %v5933 = vpop.f32.mrf.mxu0
    %v5934 = vadd.f32 0.0, %v5933
    %5935 = vmatmul.f32.gmra.mxu0 %v1689
    %v5936 = vpop.f32.mrf.mxu0
    %v5937 = vadd.f32 0.0, %v5936
    %5938 = vmatmul.f32.gmra.mxu0 %v1690
    %v5939 = vpop.f32.mrf.mxu0
    %v5940 = vadd.f32 0.0, %v5939
    %5941 = vmatmul.f32.gmra.mxu0 %v1691
    %v5942 = vpop.f32.mrf.mxu0
    %v5943 = vadd.f32 0.0, %v5942
    %5944 = vmatmul.f32.gmra.mxu0 %v1692
    %v5945 = vpop.f32.mrf.mxu0
    %v5946 = vadd.f32 0.0, %v5945
    %5947 = vmatmul.f32.gmra.mxu0 %v1693
    %v5948 = vpop.f32.mrf.mxu0
    %v5949 = vadd.f32 0.0, %v5948
    %5950 = vmatmul.f32.gmra.mxu0 %v1694
    %v5951 = vpop.f32.mrf.mxu0
    %v5952 = vadd.f32 0.0, %v5951
    %5953 = vmatmul.f32.gmra.mxu0 %v1695
    %v5954 = vpop.f32.mrf.mxu0
    %v5955 = vadd.f32 0.0, %v5954
    %5956 = vmatmul.f32.gmra.mxu0 %v1696
    %v5957 = vpop.f32.mrf.mxu0
    %v5958 = vadd.f32 0.0, %v5957
    %5959 = vmatmul.f32.gmra.mxu0 %v1697
    %v5960 = vpop.f32.mrf.mxu0
    %v5961 = vadd.f32 0.0, %v5960
    %5962 = vmatmul.f32.gmra.mxu0 %v1698
    %v5963 = vpop.f32.mrf.mxu0
    %v5964 = vadd.f32 0.0, %v5963
    %5965 = vdwg.mxu0
    %v5967 = vsel %vm1839, %v5847, 0
    %v5970 = vsel %vm1839, %v5850, 0
    %v5973 = vsel %vm1839, %v5853, 0
    %v5976 = vsel %vm1839, %v5856, 0
    %v5979 = vsel %vm1839, %v5859, 0
    %v5982 = vsel %vm1839, %v5862, 0
    %v5985 = vsel %vm1839, %v5865, 0
    %v5988 = vsel %vm1839, %v5868, 0
    %5990 = vmatpush.msra.mxu0 0.0
    %5991 = vmatpush.msra.mxu0 0.0
    %5992 = vmatpush.msra.mxu0 0.0
    %5993 = vmatpush.msra.mxu0 0.0
    %5994 = vmatpush.msra.mxu0 0.0
    %5995 = vmatpush.msra.mxu0 0.0
    %5996 = vmatpush.msra.mxu0 0.0
    %5997 = vmatpush.msra.mxu0 0.0
    %5998 = vmatpush.msra.mxu0 0.0
    %5999 = vmatpush.msra.mxu0 0.0
    %6000 = vmatpush.msra.mxu0 0.0
    %6001 = vmatpush.msra.mxu0 0.0
    %6002 = vmatpush.msra.mxu0 0.0
    %6003 = vmatpush.msra.mxu0 0.0
    %6004 = vmatpush.msra.mxu0 0.0
    %6005 = vmatpush.msra.mxu0 %v3429
    %6006 = vmatmul.f32.gmra.mxu0 %v5967
    %v6007 = vpop.f32.mrf.mxu0
    %v6008 = vadd.f32 0.0, %v6007
    %6009 = vmatmul.f32.gmra.mxu0 %v5970
    %v6010 = vpop.f32.mrf.mxu0
    %v6011 = vadd.f32 0.0, %v6010
    %6012 = vmatmul.f32.gmra.mxu0 %v5973
    %v6013 = vpop.f32.mrf.mxu0
    %v6014 = vadd.f32 0.0, %v6013
    %6015 = vmatmul.f32.gmra.mxu0 %v5976
    %v6016 = vpop.f32.mrf.mxu0
    %v6017 = vadd.f32 0.0, %v6016
    %6018 = vmatmul.f32.gmra.mxu0 %v5979
    %v6019 = vpop.f32.mrf.mxu0
    %v6020 = vadd.f32 0.0, %v6019
    %6021 = vmatmul.f32.gmra.mxu0 %v5982
    %v6022 = vpop.f32.mrf.mxu0
    %v6023 = vadd.f32 0.0, %v6022
    %6024 = vmatmul.f32.gmra.mxu0 %v5985
    %v6025 = vpop.f32.mrf.mxu0
    %v6026 = vadd.f32 0.0, %v6025
    %6027 = vmatmul.f32.gmra.mxu0 %v5988
    %v6028 = vpop.f32.mrf.mxu0
    %v6029 = vadd.f32 0.0, %v6028
    %6030 = vdwg.mxu0
    %v6031 = vadd.f32 %v5821, %v6008
    %v6032 = vadd.f32 %v5822, %v6011
    %v6033 = vadd.f32 %v5823, %v6014
    %v6034 = vadd.f32 %v5824, %v6017
    %v6035 = vadd.f32 %v5825, %v6020
    %v6036 = vadd.f32 %v5826, %v6023
    %v6037 = vadd.f32 %v5827, %v6026
    %v6038 = vadd.f32 %v5828, %v6029
    %v6040 = vsel %vm1839, %v5871, 0
    %v6043 = vsel %vm1839, %v5874, 0
    %v6046 = vsel %vm1839, %v5877, 0
    %v6049 = vsel %vm1839, %v5880, 0
    %v6052 = vsel %vm1839, %v5883, 0
    %v6055 = vsel %vm1839, %v5886, 0
    %v6058 = vsel %vm1839, %v5889, 0
    %v6061 = vsel %vm1839, %v5892, 0
    %6063 = vmatpush.msra.mxu0 0.0
    %6064 = vmatpush.msra.mxu0 0.0
    %6065 = vmatpush.msra.mxu0 0.0
    %6066 = vmatpush.msra.mxu0 0.0
    %6067 = vmatpush.msra.mxu0 0.0
    %6068 = vmatpush.msra.mxu0 0.0
    %6069 = vmatpush.msra.mxu0 0.0
    %6070 = vmatpush.msra.mxu0 0.0
    %6071 = vmatpush.msra.mxu0 0.0
    %6072 = vmatpush.msra.mxu0 0.0
    %6073 = vmatpush.msra.mxu0 0.0
    %6074 = vmatpush.msra.mxu0 0.0
    %6075 = vmatpush.msra.mxu0 0.0
    %6076 = vmatpush.msra.mxu0 0.0
    %6077 = vmatpush.msra.mxu0 0.0
    %6078 = vmatpush.msra.mxu0 %v3507
    %6079 = vmatmul.f32.gmra.mxu0 %v6040
    %v6080 = vpop.f32.mrf.mxu0
    %v6081 = vadd.f32 0.0, %v6080
    %6082 = vmatmul.f32.gmra.mxu0 %v6043
    %v6083 = vpop.f32.mrf.mxu0
    %v6084 = vadd.f32 0.0, %v6083
    %6085 = vmatmul.f32.gmra.mxu0 %v6046
    %v6086 = vpop.f32.mrf.mxu0
    %v6087 = vadd.f32 0.0, %v6086
    %6088 = vmatmul.f32.gmra.mxu0 %v6049
    %v6089 = vpop.f32.mrf.mxu0
    %v6090 = vadd.f32 0.0, %v6089
    %6091 = vmatmul.f32.gmra.mxu0 %v6052
    %v6092 = vpop.f32.mrf.mxu0
    %v6093 = vadd.f32 0.0, %v6092
    %6094 = vmatmul.f32.gmra.mxu0 %v6055
    %v6095 = vpop.f32.mrf.mxu0
    %v6096 = vadd.f32 0.0, %v6095
    %6097 = vmatmul.f32.gmra.mxu0 %v6058
    %v6098 = vpop.f32.mrf.mxu0
    %v6099 = vadd.f32 0.0, %v6098
    %6100 = vmatmul.f32.gmra.mxu0 %v6061
    %v6101 = vpop.f32.mrf.mxu0
    %v6102 = vadd.f32 0.0, %v6101
    %6103 = vdwg.mxu0
    %v6104 = vadd.f32 %v6031, %v6081
    %v6105 = vadd.f32 %v6032, %v6084
    %v6106 = vadd.f32 %v6033, %v6087
    %v6107 = vadd.f32 %v6034, %v6090
    %v6108 = vadd.f32 %v6035, %v6093
    %v6109 = vadd.f32 %v6036, %v6096
    %v6110 = vadd.f32 %v6037, %v6099
    %v6111 = vadd.f32 %v6038, %v6102
    %v6113 = vsel %vm1839, %v5895, 0
    %v6116 = vsel %vm1839, %v5898, 0
    %v6119 = vsel %vm1839, %v5901, 0
    %v6122 = vsel %vm1839, %v5904, 0
    %v6125 = vsel %vm1839, %v5907, 0
    %v6128 = vsel %vm1839, %v5910, 0
    %v6131 = vsel %vm1839, %v5913, 0
    %v6134 = vsel %vm1839, %v5916, 0
    %6136 = vmatpush.msra.mxu0 0.0
    %6137 = vmatpush.msra.mxu0 0.0
    %6138 = vmatpush.msra.mxu0 0.0
    %6139 = vmatpush.msra.mxu0 0.0
    %6140 = vmatpush.msra.mxu0 0.0
    %6141 = vmatpush.msra.mxu0 0.0
    %6142 = vmatpush.msra.mxu0 0.0
    %6143 = vmatpush.msra.mxu0 0.0
    %6144 = vmatpush.msra.mxu0 0.0
    %6145 = vmatpush.msra.mxu0 0.0
    %6146 = vmatpush.msra.mxu0 0.0
    %6147 = vmatpush.msra.mxu0 0.0
    %6148 = vmatpush.msra.mxu0 0.0
    %6149 = vmatpush.msra.mxu0 0.0
    %6150 = vmatpush.msra.mxu0 0.0
    %6151 = vmatpush.msra.mxu0 %v3585
    %6152 = vmatmul.f32.gmra.mxu0 %v6113
    %v6153 = vpop.f32.mrf.mxu0
    %v6154 = vadd.f32 0.0, %v6153
    %6155 = vmatmul.f32.gmra.mxu0 %v6116
    %v6156 = vpop.f32.mrf.mxu0
    %v6157 = vadd.f32 0.0, %v6156
    %6158 = vmatmul.f32.gmra.mxu0 %v6119
    %v6159 = vpop.f32.mrf.mxu0
    %v6160 = vadd.f32 0.0, %v6159
    %6161 = vmatmul.f32.gmra.mxu0 %v6122
    %v6162 = vpop.f32.mrf.mxu0
    %v6163 = vadd.f32 0.0, %v6162
    %6164 = vmatmul.f32.gmra.mxu0 %v6125
    %v6165 = vpop.f32.mrf.mxu0
    %v6166 = vadd.f32 0.0, %v6165
    %6167 = vmatmul.f32.gmra.mxu0 %v6128
    %v6168 = vpop.f32.mrf.mxu0
    %v6169 = vadd.f32 0.0, %v6168
    %6170 = vmatmul.f32.gmra.mxu0 %v6131
    %v6171 = vpop.f32.mrf.mxu0
    %v6172 = vadd.f32 0.0, %v6171
    %6173 = vmatmul.f32.gmra.mxu0 %v6134
    %v6174 = vpop.f32.mrf.mxu0
    %v6175 = vadd.f32 0.0, %v6174
    %6176 = vdwg.mxu0
    %v6177 = vadd.f32 %v6104, %v6154
    %v6178 = vadd.f32 %v6105, %v6157
    %v6179 = vadd.f32 %v6106, %v6160
    %v6180 = vadd.f32 %v6107, %v6163
    %v6181 = vadd.f32 %v6108, %v6166
    %v6182 = vadd.f32 %v6109, %v6169
    %v6183 = vadd.f32 %v6110, %v6172
    %v6184 = vadd.f32 %v6111, %v6175
    %v6186 = vsel %vm1839, %v5919, 0
    %v6189 = vsel %vm1839, %v5922, 0
    %v6192 = vsel %vm1839, %v5925, 0
    %v6195 = vsel %vm1839, %v5928, 0
    %v6198 = vsel %vm1839, %v5931, 0
    %v6201 = vsel %vm1839, %v5934, 0
    %v6204 = vsel %vm1839, %v5937, 0
    %v6207 = vsel %vm1839, %v5940, 0
    %6209 = vmatpush.msra.mxu0 0.0
    %6210 = vmatpush.msra.mxu0 0.0
    %6211 = vmatpush.msra.mxu0 0.0
    %6212 = vmatpush.msra.mxu0 0.0
    %6213 = vmatpush.msra.mxu0 0.0
    %6214 = vmatpush.msra.mxu0 0.0
    %6215 = vmatpush.msra.mxu0 0.0
    %6216 = vmatpush.msra.mxu0 0.0
    %6217 = vmatpush.msra.mxu0 0.0
    %6218 = vmatpush.msra.mxu0 0.0
    %6219 = vmatpush.msra.mxu0 0.0
    %6220 = vmatpush.msra.mxu0 0.0
    %6221 = vmatpush.msra.mxu0 0.0
    %6222 = vmatpush.msra.mxu0 0.0
    %6223 = vmatpush.msra.mxu0 0.0
    %6224 = vmatpush.msra.mxu0 %v3663
    %6225 = vmatmul.f32.gmra.mxu0 %v6186
    %v6226 = vpop.f32.mrf.mxu0
    %v6227 = vadd.f32 0.0, %v6226
    %6228 = vmatmul.f32.gmra.mxu0 %v6189
    %v6229 = vpop.f32.mrf.mxu0
    %v6230 = vadd.f32 0.0, %v6229
    %6231 = vmatmul.f32.gmra.mxu0 %v6192
    %v6232 = vpop.f32.mrf.mxu0
    %v6233 = vadd.f32 0.0, %v6232
    %6234 = vmatmul.f32.gmra.mxu0 %v6195
    %v6235 = vpop.f32.mrf.mxu0
    %v6236 = vadd.f32 0.0, %v6235
    %6237 = vmatmul.f32.gmra.mxu0 %v6198
    %v6238 = vpop.f32.mrf.mxu0
    %v6239 = vadd.f32 0.0, %v6238
    %6240 = vmatmul.f32.gmra.mxu0 %v6201
    %v6241 = vpop.f32.mrf.mxu0
    %v6242 = vadd.f32 0.0, %v6241
    %6243 = vmatmul.f32.gmra.mxu0 %v6204
    %v6244 = vpop.f32.mrf.mxu0
    %v6245 = vadd.f32 0.0, %v6244
    %6246 = vmatmul.f32.gmra.mxu0 %v6207
    %v6247 = vpop.f32.mrf.mxu0
    %v6248 = vadd.f32 0.0, %v6247
    %6249 = vdwg.mxu0
    %v6250 = vadd.f32 %v6177, %v6227
    %v6251 = vadd.f32 %v6178, %v6230
    %v6252 = vadd.f32 %v6179, %v6233
    %v6253 = vadd.f32 %v6180, %v6236
    %v6254 = vadd.f32 %v6181, %v6239
    %v6255 = vadd.f32 %v6182, %v6242
    %v6256 = vadd.f32 %v6183, %v6245
    %v6257 = vadd.f32 %v6184, %v6248
    %v6259 = vsel %vm1839, %v5943, 0
    %v6262 = vsel %vm1839, %v5946, 0
    %v6265 = vsel %vm1839, %v5949, 0
    %v6268 = vsel %vm1839, %v5952, 0
    %v6271 = vsel %vm1839, %v5955, 0
    %v6274 = vsel %vm1839, %v5958, 0
    %v6277 = vsel %vm1839, %v5961, 0
    %v6280 = vsel %vm1839, %v5964, 0
    %6282 = vmatpush.msra.mxu0 0.0
    %6283 = vmatpush.msra.mxu0 0.0
    %6284 = vmatpush.msra.mxu0 0.0
    %6285 = vmatpush.msra.mxu0 0.0
    %6286 = vmatpush.msra.mxu0 0.0
    %6287 = vmatpush.msra.mxu0 0.0
    %6288 = vmatpush.msra.mxu0 0.0
    %6289 = vmatpush.msra.mxu0 0.0
    %6290 = vmatpush.msra.mxu0 0.0
    %6291 = vmatpush.msra.mxu0 0.0
    %6292 = vmatpush.msra.mxu0 0.0
    %6293 = vmatpush.msra.mxu0 0.0
    %6294 = vmatpush.msra.mxu0 0.0
    %6295 = vmatpush.msra.mxu0 0.0
    %6296 = vmatpush.msra.mxu0 0.0
    %6297 = vmatpush.msra.mxu0 %v3741
    %6298 = vmatmul.f32.gmra.mxu0 %v6259
    %v6299 = vpop.f32.mrf.mxu0
    %v6300 = vadd.f32 0.0, %v6299
    %6301 = vmatmul.f32.gmra.mxu0 %v6262
    %v6302 = vpop.f32.mrf.mxu0
    %v6303 = vadd.f32 0.0, %v6302
    %6304 = vmatmul.f32.gmra.mxu0 %v6265
    %v6305 = vpop.f32.mrf.mxu0
    %v6306 = vadd.f32 0.0, %v6305
    %6307 = vmatmul.f32.gmra.mxu0 %v6268
    %v6308 = vpop.f32.mrf.mxu0
    %v6309 = vadd.f32 0.0, %v6308
    %6310 = vmatmul.f32.gmra.mxu0 %v6271
    %v6311 = vpop.f32.mrf.mxu0
    %v6312 = vadd.f32 0.0, %v6311
    %6313 = vmatmul.f32.gmra.mxu0 %v6274
    %v6314 = vpop.f32.mrf.mxu0
    %v6315 = vadd.f32 0.0, %v6314
    %6316 = vmatmul.f32.gmra.mxu0 %v6277
    %v6317 = vpop.f32.mrf.mxu0
    %v6318 = vadd.f32 0.0, %v6317
    %6319 = vmatmul.f32.gmra.mxu0 %v6280
    %v6320 = vpop.f32.mrf.mxu0
    %v6321 = vadd.f32 0.0, %v6320
    %6322 = vdwg.mxu0
    %v6323 = vadd.f32 %v6250, %v6300
    %v6324 = vadd.f32 %v6251, %v6303
    %v6325 = vadd.f32 %v6252, %v6306
    %v6326 = vadd.f32 %v6253, %v6309
    %v6327 = vadd.f32 %v6254, %v6312
    %v6328 = vadd.f32 %v6255, %v6315
    %v6329 = vadd.f32 %v6256, %v6318
    %v6330 = vadd.f32 %v6257, %v6321
    %6331 = vmatpush.msra.mxu0 %v1658
    %6332 = vmatpush.msra.mxu0 %v1657
    %6333 = vmatpush.msra.mxu0 %v1656
    %6334 = vmatpush.msra.mxu0 %v1655
    %6335 = vmatpush.msra.mxu0 %v1654
    %6336 = vmatpush.msra.mxu0 %v1653
    %6337 = vmatpush.msra.mxu0 %v1652
    %6338 = vmatpush.msra.mxu0 %v1651
    %6339 = vmatpush.msra.mxu0 %v1650
    %6340 = vmatpush.msra.mxu0 %v1649
    %6341 = vmatpush.msra.mxu0 %v1648
    %6342 = vmatpush.msra.mxu0 %v1647
    %6343 = vmatpush.msra.mxu0 %v1646
    %6344 = vmatpush.msra.mxu0 %v1645
    %6345 = vmatpush.msra.mxu0 %v1644
    %6346 = vmatpush.msra.mxu0 %v1643
    %6347 = vmatmul.f32.gmra.mxu0 %v1659
    %v6348 = vpop.f32.mrf.mxu0
    %v6349 = vadd.f32 0.0, %v6348
    %6350 = vmatmul.f32.gmra.mxu0 %v1660
    %v6351 = vpop.f32.mrf.mxu0
    %v6352 = vadd.f32 0.0, %v6351
    %6353 = vmatmul.f32.gmra.mxu0 %v1661
    %v6354 = vpop.f32.mrf.mxu0
    %v6355 = vadd.f32 0.0, %v6354
    %6356 = vmatmul.f32.gmra.mxu0 %v1662
    %v6357 = vpop.f32.mrf.mxu0
    %v6358 = vadd.f32 0.0, %v6357
    %6359 = vmatmul.f32.gmra.mxu0 %v1663
    %v6360 = vpop.f32.mrf.mxu0
    %v6361 = vadd.f32 0.0, %v6360
    %6362 = vmatmul.f32.gmra.mxu0 %v1664
    %v6363 = vpop.f32.mrf.mxu0
    %v6364 = vadd.f32 0.0, %v6363
    %6365 = vmatmul.f32.gmra.mxu0 %v1665
    %v6366 = vpop.f32.mrf.mxu0
    %v6367 = vadd.f32 0.0, %v6366
    %6368 = vmatmul.f32.gmra.mxu0 %v1666
    %v6369 = vpop.f32.mrf.mxu0
    %v6370 = vadd.f32 0.0, %v6369
    %6371 = vmatmul.f32.gmra.mxu0 %v1667
    %v6372 = vpop.f32.mrf.mxu0
    %v6373 = vadd.f32 0.0, %v6372
    %6374 = vmatmul.f32.gmra.mxu0 %v1668
    %v6375 = vpop.f32.mrf.mxu0
    %v6376 = vadd.f32 0.0, %v6375
    %6377 = vmatmul.f32.gmra.mxu0 %v1669
    %v6378 = vpop.f32.mrf.mxu0
    %v6379 = vadd.f32 0.0, %v6378
    %6380 = vmatmul.f32.gmra.mxu0 %v1670
    %v6381 = vpop.f32.mrf.mxu0
    %v6382 = vadd.f32 0.0, %v6381
    %6383 = vmatmul.f32.gmra.mxu0 %v1671
    %v6384 = vpop.f32.mrf.mxu0
    %v6385 = vadd.f32 0.0, %v6384
    %6386 = vmatmul.f32.gmra.mxu0 %v1672
    %v6387 = vpop.f32.mrf.mxu0
    %v6388 = vadd.f32 0.0, %v6387
    %6389 = vmatmul.f32.gmra.mxu0 %v1673
    %v6390 = vpop.f32.mrf.mxu0
    %v6391 = vadd.f32 0.0, %v6390
    %6392 = vmatmul.f32.gmra.mxu0 %v1674
    %v6393 = vpop.f32.mrf.mxu0
    %v6394 = vadd.f32 0.0, %v6393
    %6395 = vmatmul.f32.gmra.mxu0 %v1675
    %v6396 = vpop.f32.mrf.mxu0
    %v6397 = vadd.f32 0.0, %v6396
    %6398 = vmatmul.f32.gmra.mxu0 %v1676
    %v6399 = vpop.f32.mrf.mxu0
    %v6400 = vadd.f32 0.0, %v6399
    %6401 = vmatmul.f32.gmra.mxu0 %v1677
    %v6402 = vpop.f32.mrf.mxu0
    %v6403 = vadd.f32 0.0, %v6402
    %6404 = vmatmul.f32.gmra.mxu0 %v1678
    %v6405 = vpop.f32.mrf.mxu0
    %v6406 = vadd.f32 0.0, %v6405
    %6407 = vmatmul.f32.gmra.mxu0 %v1679
    %v6408 = vpop.f32.mrf.mxu0
    %v6409 = vadd.f32 0.0, %v6408
    %6410 = vmatmul.f32.gmra.mxu0 %v1680
    %v6411 = vpop.f32.mrf.mxu0
    %v6412 = vadd.f32 0.0, %v6411
    %6413 = vmatmul.f32.gmra.mxu0 %v1681
    %v6414 = vpop.f32.mrf.mxu0
    %v6415 = vadd.f32 0.0, %v6414
    %6416 = vmatmul.f32.gmra.mxu0 %v1682
    %v6417 = vpop.f32.mrf.mxu0
    %v6418 = vadd.f32 0.0, %v6417
    %6419 = vmatmul.f32.gmra.mxu0 %v1683
    %v6420 = vpop.f32.mrf.mxu0
    %v6421 = vadd.f32 0.0, %v6420
    %6422 = vmatmul.f32.gmra.mxu0 %v1684
    %v6423 = vpop.f32.mrf.mxu0
    %v6424 = vadd.f32 0.0, %v6423
    %6425 = vmatmul.f32.gmra.mxu0 %v1685
    %v6426 = vpop.f32.mrf.mxu0
    %v6427 = vadd.f32 0.0, %v6426
    %6428 = vmatmul.f32.gmra.mxu0 %v1686
    %v6429 = vpop.f32.mrf.mxu0
    %v6430 = vadd.f32 0.0, %v6429
    %6431 = vmatmul.f32.gmra.mxu0 %v1687
    %v6432 = vpop.f32.mrf.mxu0
    %v6433 = vadd.f32 0.0, %v6432
    %6434 = vmatmul.f32.gmra.mxu0 %v1688
    %v6435 = vpop.f32.mrf.mxu0
    %v6436 = vadd.f32 0.0, %v6435
    %6437 = vmatmul.f32.gmra.mxu0 %v1689
    %v6438 = vpop.f32.mrf.mxu0
    %v6439 = vadd.f32 0.0, %v6438
    %6440 = vmatmul.f32.gmra.mxu0 %v1690
    %v6441 = vpop.f32.mrf.mxu0
    %v6442 = vadd.f32 0.0, %v6441
    %6443 = vmatmul.f32.gmra.mxu0 %v1691
    %v6444 = vpop.f32.mrf.mxu0
    %v6445 = vadd.f32 0.0, %v6444
    %6446 = vmatmul.f32.gmra.mxu0 %v1692
    %v6447 = vpop.f32.mrf.mxu0
    %v6448 = vadd.f32 0.0, %v6447
    %6449 = vmatmul.f32.gmra.mxu0 %v1693
    %v6450 = vpop.f32.mrf.mxu0
    %v6451 = vadd.f32 0.0, %v6450
    %6452 = vmatmul.f32.gmra.mxu0 %v1694
    %v6453 = vpop.f32.mrf.mxu0
    %v6454 = vadd.f32 0.0, %v6453
    %6455 = vmatmul.f32.gmra.mxu0 %v1695
    %v6456 = vpop.f32.mrf.mxu0
    %v6457 = vadd.f32 0.0, %v6456
    %6458 = vmatmul.f32.gmra.mxu0 %v1696
    %v6459 = vpop.f32.mrf.mxu0
    %v6460 = vadd.f32 0.0, %v6459
    %6461 = vmatmul.f32.gmra.mxu0 %v1697
    %v6462 = vpop.f32.mrf.mxu0
    %v6463 = vadd.f32 0.0, %v6462
    %6464 = vmatmul.f32.gmra.mxu0 %v1698
    %v6465 = vpop.f32.mrf.mxu0
    %v6466 = vadd.f32 0.0, %v6465
    %6467 = vdwg.mxu0
    %v6469 = vsel %vm1839, %v6349, 0
    %v6472 = vsel %vm1839, %v6352, 0
    %v6475 = vsel %vm1839, %v6355, 0
    %v6478 = vsel %vm1839, %v6358, 0
    %v6481 = vsel %vm1839, %v6361, 0
    %v6484 = vsel %vm1839, %v6364, 0
    %v6487 = vsel %vm1839, %v6367, 0
    %v6490 = vsel %vm1839, %v6370, 0
    %6492 = vmatpush.msra.mxu0 0.0
    %6493 = vmatpush.msra.mxu0 0.0
    %6494 = vmatpush.msra.mxu0 0.0
    %6495 = vmatpush.msra.mxu0 0.0
    %6496 = vmatpush.msra.mxu0 0.0
    %6497 = vmatpush.msra.mxu0 0.0
    %6498 = vmatpush.msra.mxu0 0.0
    %6499 = vmatpush.msra.mxu0 0.0
    %6500 = vmatpush.msra.mxu0 0.0
    %6501 = vmatpush.msra.mxu0 0.0
    %6502 = vmatpush.msra.mxu0 0.0
    %6503 = vmatpush.msra.mxu0 0.0
    %6504 = vmatpush.msra.mxu0 0.0
    %6505 = vmatpush.msra.mxu0 0.0
    %6506 = vmatpush.msra.mxu0 0.0
    %6507 = vmatpush.msra.mxu0 %v3956
    %6508 = vmatmul.f32.gmra.mxu0 %v6469
    %v6509 = vpop.f32.mrf.mxu0
    %v6510 = vadd.f32 0.0, %v6509
    %6511 = vmatmul.f32.gmra.mxu0 %v6472
    %v6512 = vpop.f32.mrf.mxu0
    %v6513 = vadd.f32 0.0, %v6512
    %6514 = vmatmul.f32.gmra.mxu0 %v6475
    %v6515 = vpop.f32.mrf.mxu0
    %v6516 = vadd.f32 0.0, %v6515
    %6517 = vmatmul.f32.gmra.mxu0 %v6478
    %v6518 = vpop.f32.mrf.mxu0
    %v6519 = vadd.f32 0.0, %v6518
    %6520 = vmatmul.f32.gmra.mxu0 %v6481
    %v6521 = vpop.f32.mrf.mxu0
    %v6522 = vadd.f32 0.0, %v6521
    %6523 = vmatmul.f32.gmra.mxu0 %v6484
    %v6524 = vpop.f32.mrf.mxu0
    %v6525 = vadd.f32 0.0, %v6524
    %6526 = vmatmul.f32.gmra.mxu0 %v6487
    %v6527 = vpop.f32.mrf.mxu0
    %v6528 = vadd.f32 0.0, %v6527
    %6529 = vmatmul.f32.gmra.mxu0 %v6490
    %v6530 = vpop.f32.mrf.mxu0
    %v6531 = vadd.f32 0.0, %v6530
    %6532 = vdwg.mxu0
    %v6533 = vadd.f32 %v6323, %v6510
    %v6534 = vadd.f32 %v6324, %v6513
    %v6535 = vadd.f32 %v6325, %v6516
    %v6536 = vadd.f32 %v6326, %v6519
    %v6537 = vadd.f32 %v6327, %v6522
    %v6538 = vadd.f32 %v6328, %v6525
    %v6539 = vadd.f32 %v6329, %v6528
    %v6540 = vadd.f32 %v6330, %v6531
    %v6542 = vsel %vm1839, %v6373, 0
    %v6545 = vsel %vm1839, %v6376, 0
    %v6548 = vsel %vm1839, %v6379, 0
    %v6551 = vsel %vm1839, %v6382, 0
    %v6554 = vsel %vm1839, %v6385, 0
    %v6557 = vsel %vm1839, %v6388, 0
    %v6560 = vsel %vm1839, %v6391, 0
    %v6563 = vsel %vm1839, %v6394, 0
    %6565 = vmatpush.msra.mxu0 0.0
    %6566 = vmatpush.msra.mxu0 0.0
    %6567 = vmatpush.msra.mxu0 0.0
    %6568 = vmatpush.msra.mxu0 0.0
    %6569 = vmatpush.msra.mxu0 0.0
    %6570 = vmatpush.msra.mxu0 0.0
    %6571 = vmatpush.msra.mxu0 0.0
    %6572 = vmatpush.msra.mxu0 0.0
    %6573 = vmatpush.msra.mxu0 0.0
    %6574 = vmatpush.msra.mxu0 0.0
    %6575 = vmatpush.msra.mxu0 0.0
    %6576 = vmatpush.msra.mxu0 0.0
    %6577 = vmatpush.msra.mxu0 0.0
    %6578 = vmatpush.msra.mxu0 0.0
    %6579 = vmatpush.msra.mxu0 0.0
    %6580 = vmatpush.msra.mxu0 %v4034
    %6581 = vmatmul.f32.gmra.mxu0 %v6542
    %v6582 = vpop.f32.mrf.mxu0
    %v6583 = vadd.f32 0.0, %v6582
    %6584 = vmatmul.f32.gmra.mxu0 %v6545
    %v6585 = vpop.f32.mrf.mxu0
    %v6586 = vadd.f32 0.0, %v6585
    %6587 = vmatmul.f32.gmra.mxu0 %v6548
    %v6588 = vpop.f32.mrf.mxu0
    %v6589 = vadd.f32 0.0, %v6588
    %6590 = vmatmul.f32.gmra.mxu0 %v6551
    %v6591 = vpop.f32.mrf.mxu0
    %v6592 = vadd.f32 0.0, %v6591
    %6593 = vmatmul.f32.gmra.mxu0 %v6554
    %v6594 = vpop.f32.mrf.mxu0
    %v6595 = vadd.f32 0.0, %v6594
    %6596 = vmatmul.f32.gmra.mxu0 %v6557
    %v6597 = vpop.f32.mrf.mxu0
    %v6598 = vadd.f32 0.0, %v6597
    %6599 = vmatmul.f32.gmra.mxu0 %v6560
    %v6600 = vpop.f32.mrf.mxu0
    %v6601 = vadd.f32 0.0, %v6600
    %6602 = vmatmul.f32.gmra.mxu0 %v6563
    %v6603 = vpop.f32.mrf.mxu0
    %v6604 = vadd.f32 0.0, %v6603
    %6605 = vdwg.mxu0
    %v6606 = vadd.f32 %v6533, %v6583
    %v6607 = vadd.f32 %v6534, %v6586
    %v6608 = vadd.f32 %v6535, %v6589
    %v6609 = vadd.f32 %v6536, %v6592
    %v6610 = vadd.f32 %v6537, %v6595
    %v6611 = vadd.f32 %v6538, %v6598
    %v6612 = vadd.f32 %v6539, %v6601
    %v6613 = vadd.f32 %v6540, %v6604
    %v6615 = vsel %vm1839, %v6397, 0
    %v6618 = vsel %vm1839, %v6400, 0
    %v6621 = vsel %vm1839, %v6403, 0
    %v6624 = vsel %vm1839, %v6406, 0
    %v6627 = vsel %vm1839, %v6409, 0
    %v6630 = vsel %vm1839, %v6412, 0
    %v6633 = vsel %vm1839, %v6415, 0
    %v6636 = vsel %vm1839, %v6418, 0
    %6638 = vmatpush.msra.mxu0 0.0
    %6639 = vmatpush.msra.mxu0 0.0
    %6640 = vmatpush.msra.mxu0 0.0
    %6641 = vmatpush.msra.mxu0 0.0
    %6642 = vmatpush.msra.mxu0 0.0
    %6643 = vmatpush.msra.mxu0 0.0
    %6644 = vmatpush.msra.mxu0 0.0
    %6645 = vmatpush.msra.mxu0 0.0
    %6646 = vmatpush.msra.mxu0 0.0
    %6647 = vmatpush.msra.mxu0 0.0
    %6648 = vmatpush.msra.mxu0 0.0
    %6649 = vmatpush.msra.mxu0 0.0
    %6650 = vmatpush.msra.mxu0 0.0
    %6651 = vmatpush.msra.mxu0 0.0
    %6652 = vmatpush.msra.mxu0 0.0
    %6653 = vmatpush.msra.mxu0 %v4112
    %6654 = vmatmul.f32.gmra.mxu0 %v6615
    %v6655 = vpop.f32.mrf.mxu0
    %v6656 = vadd.f32 0.0, %v6655
    %6657 = vmatmul.f32.gmra.mxu0 %v6618
    %v6658 = vpop.f32.mrf.mxu0
    %v6659 = vadd.f32 0.0, %v6658
    %6660 = vmatmul.f32.gmra.mxu0 %v6621
    %v6661 = vpop.f32.mrf.mxu0
    %v6662 = vadd.f32 0.0, %v6661
    %6663 = vmatmul.f32.gmra.mxu0 %v6624
    %v6664 = vpop.f32.mrf.mxu0
    %v6665 = vadd.f32 0.0, %v6664
    %6666 = vmatmul.f32.gmra.mxu0 %v6627
    %v6667 = vpop.f32.mrf.mxu0
    %v6668 = vadd.f32 0.0, %v6667
    %6669 = vmatmul.f32.gmra.mxu0 %v6630
    %v6670 = vpop.f32.mrf.mxu0
    %v6671 = vadd.f32 0.0, %v6670
    %6672 = vmatmul.f32.gmra.mxu0 %v6633
    %v6673 = vpop.f32.mrf.mxu0
    %v6674 = vadd.f32 0.0, %v6673
    %6675 = vmatmul.f32.gmra.mxu0 %v6636
    %v6676 = vpop.f32.mrf.mxu0
    %v6677 = vadd.f32 0.0, %v6676
    %6678 = vdwg.mxu0
    %v6679 = vadd.f32 %v6606, %v6656
    %v6680 = vadd.f32 %v6607, %v6659
    %v6681 = vadd.f32 %v6608, %v6662
    %v6682 = vadd.f32 %v6609, %v6665
    %v6683 = vadd.f32 %v6610, %v6668
    %v6684 = vadd.f32 %v6611, %v6671
    %v6685 = vadd.f32 %v6612, %v6674
    %v6686 = vadd.f32 %v6613, %v6677
    %v6688 = vsel %vm1839, %v6421, 0
    %v6691 = vsel %vm1839, %v6424, 0
    %v6694 = vsel %vm1839, %v6427, 0
    %v6697 = vsel %vm1839, %v6430, 0
    %v6700 = vsel %vm1839, %v6433, 0
    %v6703 = vsel %vm1839, %v6436, 0
    %v6706 = vsel %vm1839, %v6439, 0
    %v6709 = vsel %vm1839, %v6442, 0
    %6711 = vmatpush.msra.mxu0 0.0
    %6712 = vmatpush.msra.mxu0 0.0
    %6713 = vmatpush.msra.mxu0 0.0
    %6714 = vmatpush.msra.mxu0 0.0
    %6715 = vmatpush.msra.mxu0 0.0
    %6716 = vmatpush.msra.mxu0 0.0
    %6717 = vmatpush.msra.mxu0 0.0
    %6718 = vmatpush.msra.mxu0 0.0
    %6719 = vmatpush.msra.mxu0 0.0
    %6720 = vmatpush.msra.mxu0 0.0
    %6721 = vmatpush.msra.mxu0 0.0
    %6722 = vmatpush.msra.mxu0 0.0
    %6723 = vmatpush.msra.mxu0 0.0
    %6724 = vmatpush.msra.mxu0 0.0
    %6725 = vmatpush.msra.mxu0 0.0
    %6726 = vmatpush.msra.mxu0 %v4190
    %6727 = vmatmul.f32.gmra.mxu0 %v6688
    %v6728 = vpop.f32.mrf.mxu0
    %v6729 = vadd.f32 0.0, %v6728
    %6730 = vmatmul.f32.gmra.mxu0 %v6691
    %v6731 = vpop.f32.mrf.mxu0
    %v6732 = vadd.f32 0.0, %v6731
    %6733 = vmatmul.f32.gmra.mxu0 %v6694
    %v6734 = vpop.f32.mrf.mxu0
    %v6735 = vadd.f32 0.0, %v6734
    %6736 = vmatmul.f32.gmra.mxu0 %v6697
    %v6737 = vpop.f32.mrf.mxu0
    %v6738 = vadd.f32 0.0, %v6737
    %6739 = vmatmul.f32.gmra.mxu0 %v6700
    %v6740 = vpop.f32.mrf.mxu0
    %v6741 = vadd.f32 0.0, %v6740
    %6742 = vmatmul.f32.gmra.mxu0 %v6703
    %v6743 = vpop.f32.mrf.mxu0
    %v6744 = vadd.f32 0.0, %v6743
    %6745 = vmatmul.f32.gmra.mxu0 %v6706
    %v6746 = vpop.f32.mrf.mxu0
    %v6747 = vadd.f32 0.0, %v6746
    %6748 = vmatmul.f32.gmra.mxu0 %v6709
    %v6749 = vpop.f32.mrf.mxu0
    %v6750 = vadd.f32 0.0, %v6749
    %6751 = vdwg.mxu0
    %v6752 = vadd.f32 %v6679, %v6729
    %v6753 = vadd.f32 %v6680, %v6732
    %v6754 = vadd.f32 %v6681, %v6735
    %v6755 = vadd.f32 %v6682, %v6738
    %v6756 = vadd.f32 %v6683, %v6741
    %v6757 = vadd.f32 %v6684, %v6744
    %v6758 = vadd.f32 %v6685, %v6747
    %v6759 = vadd.f32 %v6686, %v6750
    %v6761 = vsel %vm1839, %v6445, 0
    %v6764 = vsel %vm1839, %v6448, 0
    %v6767 = vsel %vm1839, %v6451, 0
    %v6770 = vsel %vm1839, %v6454, 0
    %v6773 = vsel %vm1839, %v6457, 0
    %v6776 = vsel %vm1839, %v6460, 0
    %v6779 = vsel %vm1839, %v6463, 0
    %v6782 = vsel %vm1839, %v6466, 0
    %6784 = vmatpush.msra.mxu0 0.0
    %6785 = vmatpush.msra.mxu0 0.0
    %6786 = vmatpush.msra.mxu0 0.0
    %6787 = vmatpush.msra.mxu0 0.0
    %6788 = vmatpush.msra.mxu0 0.0
    %6789 = vmatpush.msra.mxu0 0.0
    %6790 = vmatpush.msra.mxu0 0.0
    %6791 = vmatpush.msra.mxu0 0.0
    %6792 = vmatpush.msra.mxu0 0.0
    %6793 = vmatpush.msra.mxu0 0.0
    %6794 = vmatpush.msra.mxu0 0.0
    %6795 = vmatpush.msra.mxu0 0.0
    %6796 = vmatpush.msra.mxu0 0.0
    %6797 = vmatpush.msra.mxu0 0.0
    %6798 = vmatpush.msra.mxu0 0.0
    %6799 = vmatpush.msra.mxu0 %v4268
    %6800 = vmatmul.f32.gmra.mxu0 %v6761
    %v6801 = vpop.f32.mrf.mxu0
    %v6802 = vadd.f32 0.0, %v6801
    %6803 = vmatmul.f32.gmra.mxu0 %v6764
    %v6804 = vpop.f32.mrf.mxu0
    %v6805 = vadd.f32 0.0, %v6804
    %6806 = vmatmul.f32.gmra.mxu0 %v6767
    %v6807 = vpop.f32.mrf.mxu0
    %v6808 = vadd.f32 0.0, %v6807
    %6809 = vmatmul.f32.gmra.mxu0 %v6770
    %v6810 = vpop.f32.mrf.mxu0
    %v6811 = vadd.f32 0.0, %v6810
    %6812 = vmatmul.f32.gmra.mxu0 %v6773
    %v6813 = vpop.f32.mrf.mxu0
    %v6814 = vadd.f32 0.0, %v6813
    %6815 = vmatmul.f32.gmra.mxu0 %v6776
    %v6816 = vpop.f32.mrf.mxu0
    %v6817 = vadd.f32 0.0, %v6816
    %6818 = vmatmul.f32.gmra.mxu0 %v6779
    %v6819 = vpop.f32.mrf.mxu0
    %v6820 = vadd.f32 0.0, %v6819
    %6821 = vmatmul.f32.gmra.mxu0 %v6782
    %v6822 = vpop.f32.mrf.mxu0
    %v6823 = vadd.f32 0.0, %v6822
    %6824 = vdwg.mxu0
    %v6825 = vadd.f32 %v6752, %v6802
    %v6826 = vadd.f32 %v6753, %v6805
    %v6827 = vadd.f32 %v6754, %v6808
    %v6828 = vadd.f32 %v6755, %v6811
    %v6829 = vadd.f32 %v6756, %v6814
    %v6830 = vadd.f32 %v6757, %v6817
    %v6831 = vadd.f32 %v6758, %v6820
    %v6832 = vadd.f32 %v6759, %v6823
    %v6833 = vadd.f32 %v6825, %v4321
    %v6834 = vadd.f32 %v6826, %v4321
    %v6835 = vadd.f32 %v6827, %v4321
    %v6836 = vadd.f32 %v6828, %v4321
    %v6837 = vadd.f32 %v6829, %v4321
    %v6838 = vadd.f32 %v6830, %v4321
    %v6839 = vadd.f32 %v6831, %v4321
    %v6840 = vadd.f32 %v6832, %v4321
    %v6841 = vmax.f32 %v6833, %v6835
    %v6842 = vmax.f32 %v6834, %v6836
    %v6843 = vmax.f32 %v6837, %v6839
    %v6844 = vmax.f32 %v6838, %v6840
    %v6845 = vmax.f32 %v6841, %v6843
    %v6846 = vmax.f32 %v6842, %v6844
    %v6847 = vmax.f32 %v6845, 0.0
    %v6848 = vmax.f32 %v6846, 0.0
    %v6849 = vld [vmem:[%s6] sm:$0xff]
    %v6850 = vld [vmem:[%s6 + $0x8] sm:$0xff]
    %v6851 = vld [vmem:[%s6 + $0x10] sm:$0xff]
    %v6852 = vld [vmem:[%s6 + $0x18] sm:$0xff]
    %vm6853 = vcmask 64512
    %v6855 = vsel %vm6853, %v4337, 0
    %v6858 = vsel %vm6853, %v4338, 0
    %v6861 = vsel %vm6853, %v6847, 0
    %v6864 = vsel %vm6853, %v6848, 0
    %6866 = vmatpush.msra.mxu0 0.0
    %6867 = vmatpush.msra.mxu0 0.0
    %6868 = vmatpush.msra.mxu0 0.0
    %6869 = vmatpush.msra.mxu0 0.0
    %6870 = vmatpush.msra.mxu0 0.0
    %6871 = vmatpush.msra.mxu0 0.0
    %6872 = vmatpush.msra.mxu0 0.0
    %6873 = vmatpush.msra.mxu0 0.0
    %6874 = vmatpush.msra.mxu0 0.0
    %6875 = vmatpush.msra.mxu0 0.0
    %6876 = vmatpush.msra.mxu0 0.0
    %6877 = vmatpush.msra.mxu0 0.0
    %6878 = vmatpush.msra.mxu0 0.0
    %6879 = vmatpush.msra.mxu0 0.0
    %6880 = vmatpush.msra.mxu0 0.0
    %6881 = vmatpush.msra.mxu0 %v6849
    %6882 = vmatmul.f32.gmra.mxu0 %v6855
    %v6883 = vpop.f32.mrf.mxu0
    %v6884 = vadd.f32 0.0, %v6883
    %6885 = vmatmul.f32.gmra.mxu0 %v6858
    %v6886 = vpop.f32.mrf.mxu0
    %v6887 = vadd.f32 0.0, %v6886
    %6888 = vmatmul.f32.gmra.mxu0 %v6861
    %v6889 = vpop.f32.mrf.mxu0
    %v6890 = vadd.f32 0.0, %v6889
    %6891 = vmatmul.f32.gmra.mxu0 %v6864
    %v6892 = vpop.f32.mrf.mxu0
    %v6893 = vadd.f32 0.0, %v6892
    %6894 = vdwg.mxu0
    %6895 = vmatpush.msra.mxu0 0.0
    %6896 = vmatpush.msra.mxu0 0.0
    %6897 = vmatpush.msra.mxu0 0.0
    %6898 = vmatpush.msra.mxu0 0.0
    %6899 = vmatpush.msra.mxu0 0.0
    %6900 = vmatpush.msra.mxu0 0.0
    %6901 = vmatpush.msra.mxu0 0.0
    %6902 = vmatpush.msra.mxu0 0.0
    %6903 = vmatpush.msra.mxu0 0.0
    %6904 = vmatpush.msra.mxu0 0.0
    %6905 = vmatpush.msra.mxu0 0.0
    %6906 = vmatpush.msra.mxu0 0.0
    %6907 = vmatpush.msra.mxu0 0.0
    %6908 = vmatpush.msra.mxu0 0.0
    %6909 = vmatpush.msra.mxu0 0.0
    %6910 = vmatpush.msra.mxu0 %v6850
    %6911 = vmatmul.f32.gmra.mxu0 %v6855
    %v6912 = vpop.f32.mrf.mxu0
    %v6913 = vadd.f32 0.0, %v6912
    %6914 = vmatmul.f32.gmra.mxu0 %v6858
    %v6915 = vpop.f32.mrf.mxu0
    %v6916 = vadd.f32 0.0, %v6915
    %6917 = vmatmul.f32.gmra.mxu0 %v6861
    %v6918 = vpop.f32.mrf.mxu0
    %v6919 = vadd.f32 0.0, %v6918
    %6920 = vmatmul.f32.gmra.mxu0 %v6864
    %v6921 = vpop.f32.mrf.mxu0
    %v6922 = vadd.f32 0.0, %v6921
    %6923 = vdwg.mxu0
    %6924 = vmatpush.msra.mxu0 0.0
    %6925 = vmatpush.msra.mxu0 0.0
    %6926 = vmatpush.msra.mxu0 0.0
    %6927 = vmatpush.msra.mxu0 0.0
    %6928 = vmatpush.msra.mxu0 0.0
    %6929 = vmatpush.msra.mxu0 0.0
    %6930 = vmatpush.msra.mxu0 0.0
    %6931 = vmatpush.msra.mxu0 0.0
    %6932 = vmatpush.msra.mxu0 0.0
    %6933 = vmatpush.msra.mxu0 0.0
    %6934 = vmatpush.msra.mxu0 0.0
    %6935 = vmatpush.msra.mxu0 0.0
    %6936 = vmatpush.msra.mxu0 0.0
    %6937 = vmatpush.msra.mxu0 0.0
    %6938 = vmatpush.msra.mxu0 0.0
    %6939 = vmatpush.msra.mxu0 %v6851
    %6940 = vmatmul.f32.gmra.mxu0 %v6855
    %v6941 = vpop.f32.mrf.mxu0
    %v6942 = vadd.f32 0.0, %v6941
    %6943 = vmatmul.f32.gmra.mxu0 %v6858
    %v6944 = vpop.f32.mrf.mxu0
    %v6945 = vadd.f32 0.0, %v6944
    %6946 = vmatmul.f32.gmra.mxu0 %v6861
    %v6947 = vpop.f32.mrf.mxu0
    %v6948 = vadd.f32 0.0, %v6947
    %6949 = vmatmul.f32.gmra.mxu0 %v6864
    %v6950 = vpop.f32.mrf.mxu0
    %v6951 = vadd.f32 0.0, %v6950
    %6952 = vdwg.mxu0
    %6953 = vmatpush.msra.mxu0 0.0
    %6954 = vmatpush.msra.mxu0 0.0
    %6955 = vmatpush.msra.mxu0 0.0
    %6956 = vmatpush.msra.mxu0 0.0
    %6957 = vmatpush.msra.mxu0 0.0
    %6958 = vmatpush.msra.mxu0 0.0
    %6959 = vmatpush.msra.mxu0 0.0
    %6960 = vmatpush.msra.mxu0 0.0
    %6961 = vmatpush.msra.mxu0 0.0
    %6962 = vmatpush.msra.mxu0 0.0
    %6963 = vmatpush.msra.mxu0 0.0
    %6964 = vmatpush.msra.mxu0 0.0
    %6965 = vmatpush.msra.mxu0 0.0
    %6966 = vmatpush.msra.mxu0 0.0
    %6967 = vmatpush.msra.mxu0 0.0
    %6968 = vmatpush.msra.mxu0 %v6852
    %6969 = vmatmul.f32.gmra.mxu0 %v6855
    %v6970 = vpop.f32.mrf.mxu0
    %v6971 = vadd.f32 0.0, %v6970
    %6972 = vmatmul.f32.gmra.mxu0 %v6858
    %v6973 = vpop.f32.mrf.mxu0
    %v6974 = vadd.f32 0.0, %v6973
    %6975 = vmatmul.f32.gmra.mxu0 %v6861
    %v6976 = vpop.f32.mrf.mxu0
    %v6977 = vadd.f32 0.0, %v6976
    %6978 = vmatmul.f32.gmra.mxu0 %v6864
    %v6979 = vpop.f32.mrf.mxu0
    %v6980 = vadd.f32 0.0, %v6979
    %6981 = vdwg.mxu0
    %v6982 = vld [vmem:[%s7] sm:$0xff]
    %v6983 = vld [vmem:[%s7 + $0x8] sm:$0xff]
    %v6984 = vld [vmem:[%s7 + $0x10] sm:$0xff]
    %v6985 = vld [vmem:[%s7 + $0x18] sm:$0xff]
    %v6986 = vld [vmem:[%s7 + $0x20] sm:$0xff]
    %v6987 = vld [vmem:[%s7 + $0x28] sm:$0xff]
    %v6988 = vld [vmem:[%s7 + $0x30] sm:$0xff]
    %v6989 = vld [vmem:[%s7 + $0x38] sm:$0xff]
    %v6990 = vld [vmem:[%s7 + $0x40] sm:$0xff]
    %v6991 = vld [vmem:[%s7 + $0x48] sm:$0xff]
    %v6992 = vld [vmem:[%s7 + $0x50] sm:$0xff]
    %v6993 = vld [vmem:[%s7 + $0x58] sm:$0xff]
    %v6994 = vld [vmem:[%s7 + $0x60] sm:$0xff]
    %v6995 = vld [vmem:[%s7 + $0x68] sm:$0xff]
    %v6996 = vld [vmem:[%s7 + $0x70] sm:$0xff]
    %v6997 = vld [vmem:[%s7 + $0x78] sm:$0xff]
    %v6998 = vmul.f32 %v6884, %v6982
    %v6999 = vmul.f32 %v6913, %v6983
    %v7000 = vmul.f32 %v6942, %v6984
    %v7001 = vmul.f32 %v6971, %v6985
    %v7002 = vmul.f32 %v6887, %v6986
    %v7003 = vmul.f32 %v6916, %v6987
    %v7004 = vmul.f32 %v6945, %v6988
    %v7005 = vmul.f32 %v6974, %v6989
    %v7006 = vmul.f32 %v6890, %v6990
    %v7007 = vmul.f32 %v6919, %v6991
    %v7008 = vmul.f32 %v6948, %v6992
    %v7009 = vmul.f32 %v6977, %v6993
    %v7010 = vmul.f32 %v6893, %v6994
    %v7011 = vmul.f32 %v6922, %v6995
    %v7012 = vmul.f32 %v6951, %v6996
    %v7013 = vmul.f32 %v6980, %v6997
    %v7014 = vld [vmem:[%s8] sm:$0x3]
    %vm7015 = vcmask 261120
    %v7017 = vsel %vm7015, %v7014, 0
    %7019 = vmatpush.msra.mxu0 0.0
    %7020 = vmatpush.msra.mxu0 0.0
    %7021 = vmatpush.msra.mxu0 0.0
    %7022 = vmatpush.msra.mxu0 0.0
    %7023 = vmatpush.msra.mxu0 0.0
    %7024 = vmatpush.msra.mxu0 0.0
    %7025 = vmatpush.msra.mxu0 0.0
    %7026 = vmatpush.msra.mxu0 0.0
    %7027 = vmatpush.msra.mxu0 0.0
    %7028 = vmatpush.msra.mxu0 0.0
    %7029 = vmatpush.msra.mxu0 0.0
    %7030 = vmatpush.msra.mxu0 0.0
    %7031 = vmatpush.msra.mxu0 %v7010
    %7032 = vmatpush.msra.mxu0 %v7006
    %7033 = vmatpush.msra.mxu0 %v7002
    %7034 = vmatpush.msra.mxu0 %v6998
    %7035 = vmatmul.f32.gmra.mxu0 %v7017
    %v7036 = vpop.f32.mrf.mxu0
    %v7037 = vadd.f32 0.0, %v7036
    %7038 = vdwg.mxu0
    %7039 = vmatpush.msra.mxu0 0.0
    %7040 = vmatpush.msra.mxu0 0.0
    %7041 = vmatpush.msra.mxu0 0.0
    %7042 = vmatpush.msra.mxu0 0.0
    %7043 = vmatpush.msra.mxu0 0.0
    %7044 = vmatpush.msra.mxu0 0.0
    %7045 = vmatpush.msra.mxu0 0.0
    %7046 = vmatpush.msra.mxu0 0.0
    %7047 = vmatpush.msra.mxu0 0.0
    %7048 = vmatpush.msra.mxu0 0.0
    %7049 = vmatpush.msra.mxu0 0.0
    %7050 = vmatpush.msra.mxu0 0.0
    %7051 = vmatpush.msra.mxu0 %v7011
    %7052 = vmatpush.msra.mxu0 %v7007
    %7053 = vmatpush.msra.mxu0 %v7003
    %7054 = vmatpush.msra.mxu0 %v6999
    %7055 = vmatmul.f32.gmra.mxu0 %v7017
    %v7056 = vpop.f32.mrf.mxu0
    %v7057 = vadd.f32 0.0, %v7056
    %7058 = vdwg.mxu0
    %7059 = vmatpush.msra.mxu0 0.0
    %7060 = vmatpush.msra.mxu0 0.0
    %7061 = vmatpush.msra.mxu0 0.0
    %7062 = vmatpush.msra.mxu0 0.0
    %7063 = vmatpush.msra.mxu0 0.0
    %7064 = vmatpush.msra.mxu0 0.0
    %7065 = vmatpush.msra.mxu0 0.0
    %7066 = vmatpush.msra.mxu0 0.0
    %7067 = vmatpush.msra.mxu0 0.0
    %7068 = vmatpush.msra.mxu0 0.0
    %7069 = vmatpush.msra.mxu0 0.0
    %7070 = vmatpush.msra.mxu0 0.0
    %7071 = vmatpush.msra.mxu0 %v7012
    %7072 = vmatpush.msra.mxu0 %v7008
    %7073 = vmatpush.msra.mxu0 %v7004
    %7074 = vmatpush.msra.mxu0 %v7000
    %7075 = vmatmul.f32.gmra.mxu0 %v7017
    %v7076 = vpop.f32.mrf.mxu0
    %v7077 = vadd.f32 0.0, %v7076
    %7078 = vdwg.mxu0
    %7079 = vmatpush.msra.mxu0 0.0
    %7080 = vmatpush.msra.mxu0 0.0
    %7081 = vmatpush.msra.mxu0 0.0
    %7082 = vmatpush.msra.mxu0 0.0
    %7083 = vmatpush.msra.mxu0 0.0
    %7084 = vmatpush.msra.mxu0 0.0
    %7085 = vmatpush.msra.mxu0 0.0
    %7086 = vmatpush.msra.mxu0 0.0
    %7087 = vmatpush.msra.mxu0 0.0
    %7088 = vmatpush.msra.mxu0 0.0
    %7089 = vmatpush.msra.mxu0 0.0
    %7090 = vmatpush.msra.mxu0 0.0
    %7091 = vmatpush.msra.mxu0 %v7013
    %7092 = vmatpush.msra.mxu0 %v7009
    %7093 = vmatpush.msra.mxu0 %v7005
    %7094 = vmatpush.msra.mxu0 %v7001
    %7095 = vmatmul.f32.gmra.mxu0 %v7017
    %v7096 = vpop.f32.mrf.mxu0
    %v7097 = vadd.f32 0.0, %v7096
    %7098 = vdwg.mxu0
    %v7099 = vld [vmem:[%s9] sm:$0xff]
    %v7100 = vld [vmem:[%s9 + $0x8] sm:$0xff]
    %v7101 = vld [vmem:[%s9 + $0x10] sm:$0xff]
    %v7102 = vld [vmem:[%s9 + $0x18] sm:$0xff]
    %v7103 = vld [vmem:[%s9 + $0x20] sm:$0xff]
    %v7104 = vld [vmem:[%s9 + $0x28] sm:$0xff]
    %v7105 = vld [vmem:[%s9 + $0x30] sm:$0xff]
    %v7106 = vld [vmem:[%s9 + $0x38] sm:$0xff]
    %v7107 = vld [vmem:[%s9 + $0x40] sm:$0xff]
    %v7108 = vld [vmem:[%s9 + $0x48] sm:$0xff]
    %v7109 = vld [vmem:[%s9 + $0x50] sm:$0xff]
    %v7110 = vld [vmem:[%s9 + $0x58] sm:$0xff]
    %v7111 = vld [vmem:[%s9 + $0x60] sm:$0xff]
    %v7112 = vld [vmem:[%s9 + $0x68] sm:$0xff]
    %v7113 = vld [vmem:[%s9 + $0x70] sm:$0xff]
    %v7114 = vld [vmem:[%s9 + $0x78] sm:$0xff]
    %v7115 = vld [vmem:[%s9 + $0x80] sm:$0xff]
    %v7116 = vld [vmem:[%s9 + $0x88] sm:$0xff]
    %v7117 = vld [vmem:[%s9 + $0x90] sm:$0xff]
    %v7118 = vld [vmem:[%s9 + $0x98] sm:$0xff]
    %v7119 = vld [vmem:[%s9 + $0xa0] sm:$0xff]
    %v7120 = vld [vmem:[%s9 + $0xa8] sm:$0xff]
    %v7121 = vld [vmem:[%s9 + $0xb0] sm:$0xff]
    %v7122 = vld [vmem:[%s9 + $0xb8] sm:$0xff]
    %v7123 = vld [vmem:[%s9 + $0xc0] sm:$0xff]
    %v7124 = vld [vmem:[%s9 + $0xc8] sm:$0xff]
    %v7125 = vld [vmem:[%s9 + $0xd0] sm:$0xff]
    %v7126 = vld [vmem:[%s9 + $0xd8] sm:$0xff]
    %v7127 = vld [vmem:[%s9 + $0xe0] sm:$0xff]
    %v7128 = vld [vmem:[%s9 + $0xe8] sm:$0xff]
    %v7129 = vld [vmem:[%s9 + $0xf0] sm:$0xff]
    %v7130 = vld [vmem:[%s9 + $0xf8] sm:$0xff]
    %v7131 = vld [vmem:[%s9 + $0x100] sm:$0xff]
    %v7132 = vld [vmem:[%s9 + $0x108] sm:$0xff]
    %v7133 = vld [vmem:[%s9 + $0x110] sm:$0xff]
    %v7134 = vld [vmem:[%s9 + $0x118] sm:$0xff]
    %v7135 = vld [vmem:[%s9 + $0x120] sm:$0xff]
    %v7136 = vld [vmem:[%s9 + $0x128] sm:$0xff]
    %v7137 = vld [vmem:[%s9 + $0x130] sm:$0xff]
    %v7138 = vld [vmem:[%s9 + $0x138] sm:$0xff]
    %v7139 = vld [vmem:[%s9 + $0x140] sm:$0xff]
    %v7140 = vld [vmem:[%s9 + $0x148] sm:$0xff]
    %v7141 = vld [vmem:[%s9 + $0x150] sm:$0xff]
    %v7142 = vld [vmem:[%s9 + $0x158] sm:$0xff]
    %v7143 = vld [vmem:[%s9 + $0x160] sm:$0xff]
    %v7144 = vld [vmem:[%s9 + $0x168] sm:$0xff]
    %v7145 = vld [vmem:[%s9 + $0x170] sm:$0xff]
    %v7146 = vld [vmem:[%s9 + $0x178] sm:$0xff]
    %v7147 = vld [vmem:[%s9 + $0x180] sm:$0xff]
    %v7148 = vld [vmem:[%s9 + $0x188] sm:$0xff]
    %v7149 = vld [vmem:[%s9 + $0x190] sm:$0xff]
    %v7150 = vld [vmem:[%s9 + $0x198] sm:$0xff]
    %v7151 = vld [vmem:[%s9 + $0x1a0] sm:$0xff]
    %v7152 = vld [vmem:[%s9 + $0x1a8] sm:$0xff]
    %v7153 = vld [vmem:[%s9 + $0x1b0] sm:$0xff]
    %v7154 = vld [vmem:[%s9 + $0x1b8] sm:$0xff]
    %v7155 = vld [vmem:[%s9 + $0x1c0] sm:$0xff]
    %v7156 = vld [vmem:[%s9 + $0x1c8] sm:$0xff]
    %v7157 = vld [vmem:[%s9 + $0x1d0] sm:$0xff]
    %v7158 = vld [vmem:[%s9 + $0x1d8] sm:$0xff]
    %v7159 = vld [vmem:[%s9 + $0x1e0] sm:$0xff]
    %v7160 = vld [vmem:[%s9 + $0x1e8] sm:$0xff]
    %v7161 = vld [vmem:[%s9 + $0x1f0] sm:$0xff]
    %v7162 = vld [vmem:[%s9 + $0x1f8] sm:$0xff]
    %v7163 = vld [vmem:[%s10] sm:$0x1]
    %v7165 = vperm.slane %v7163, 0
    %7167 = vmatpush.msra.mxu0 %v7114
    %7168 = vmatpush.msra.mxu0 %v7113
    %7169 = vmatpush.msra.mxu0 %v7112
    %7170 = vmatpush.msra.mxu0 %v7111
    %7171 = vmatpush.msra.mxu0 %v7110
    %7172 = vmatpush.msra.mxu0 %v7109
    %7173 = vmatpush.msra.mxu0 %v7108
    %7174 = vmatpush.msra.mxu0 %v7107
    %7175 = vmatpush.msra.mxu0 %v7106
    %7176 = vmatpush.msra.mxu0 %v7105
    %7177 = vmatpush.msra.mxu0 %v7104
    %7178 = vmatpush.msra.mxu0 %v7103
    %7179 = vmatpush.msra.mxu0 %v7102
    %7180 = vmatpush.msra.mxu0 %v7101
    %7181 = vmatpush.msra.mxu0 %v7100
    %7182 = vmatpush.msra.mxu0 %v7099
    %7183 = vmatmul.f32.gmra.mxu0 %v7037
    %v7184 = vpop.f32.mrf.mxu0
    %v7185 = vadd.f32 %v7165, %v7184
    %7186 = vdwg.mxu0
    %7187 = vmatpush.msra.mxu0 %v7130
    %7188 = vmatpush.msra.mxu0 %v7129
    %7189 = vmatpush.msra.mxu0 %v7128
    %7190 = vmatpush.msra.mxu0 %v7127
    %7191 = vmatpush.msra.mxu0 %v7126
    %7192 = vmatpush.msra.mxu0 %v7125
    %7193 = vmatpush.msra.mxu0 %v7124
    %7194 = vmatpush.msra.mxu0 %v7123
    %7195 = vmatpush.msra.mxu0 %v7122
    %7196 = vmatpush.msra.mxu0 %v7121
    %7197 = vmatpush.msra.mxu0 %v7120
    %7198 = vmatpush.msra.mxu0 %v7119
    %7199 = vmatpush.msra.mxu0 %v7118
    %7200 = vmatpush.msra.mxu0 %v7117
    %7201 = vmatpush.msra.mxu0 %v7116
    %7202 = vmatpush.msra.mxu0 %v7115
    %7203 = vmatmul.f32.gmra.mxu0 %v7057
    %v7204 = vpop.f32.mrf.mxu0
    %v7205 = vadd.f32 %v7185, %v7204
    %7206 = vdwg.mxu0
    %7207 = vmatpush.msra.mxu0 %v7146
    %7208 = vmatpush.msra.mxu0 %v7145
    %7209 = vmatpush.msra.mxu0 %v7144
    %7210 = vmatpush.msra.mxu0 %v7143
    %7211 = vmatpush.msra.mxu0 %v7142
    %7212 = vmatpush.msra.mxu0 %v7141
    %7213 = vmatpush.msra.mxu0 %v7140
    %7214 = vmatpush.msra.mxu0 %v7139
    %7215 = vmatpush.msra.mxu0 %v7138
    %7216 = vmatpush.msra.mxu0 %v7137
    %7217 = vmatpush.msra.mxu0 %v7136
    %7218 = vmatpush.msra.mxu0 %v7135
    %7219 = vmatpush.msra.mxu0 %v7134
    %7220 = vmatpush.msra.mxu0 %v7133
    %7221 = vmatpush.msra.mxu0 %v7132
    %7222 = vmatpush.msra.mxu0 %v7131
    %7223 = vmatmul.f32.gmra.mxu0 %v7077
    %v7224 = vpop.f32.mrf.mxu0
    %v7225 = vadd.f32 %v7205, %v7224
    %7226 = vdwg.mxu0
    %7227 = vmatpush.msra.mxu0 %v7162
    %7228 = vmatpush.msra.mxu0 %v7161
    %7229 = vmatpush.msra.mxu0 %v7160
    %7230 = vmatpush.msra.mxu0 %v7159
    %7231 = vmatpush.msra.mxu0 %v7158
    %7232 = vmatpush.msra.mxu0 %v7157
    %7233 = vmatpush.msra.mxu0 %v7156
    %7234 = vmatpush.msra.mxu0 %v7155
    %7235 = vmatpush.msra.mxu0 %v7154
    %7236 = vmatpush.msra.mxu0 %v7153
    %7237 = vmatpush.msra.mxu0 %v7152
    %7238 = vmatpush.msra.mxu0 %v7151
    %7239 = vmatpush.msra.mxu0 %v7150
    %7240 = vmatpush.msra.mxu0 %v7149
    %7241 = vmatpush.msra.mxu0 %v7148
    %7242 = vmatpush.msra.mxu0 %v7147
    %7243 = vmatmul.f32.gmra.mxu0 %v7097
    %v7244 = vpop.f32.mrf.mxu0
    %v7245 = vadd.f32 %v7225, %v7244
    %7246 = vdwg.mxu0
    %v7247 = vld [vmem:[%s11] sm:$0xff]
    %v7248 = vld [vmem:[%s11 + $0x8] sm:$0xff]
    %v7249 = vld [vmem:[%s11 + $0x10] sm:$0xff]
    %v7250 = vld [vmem:[%s11 + $0x18] sm:$0xff]
    %v7251 = vld [vmem:[%s12] sm:$0x1]
    %v7253 = vperm.slane %v7251, 0
    %v7256 = vsel %vm7015, %v7245, 0
    %7258 = vmatpush.msra.mxu0 0.0
    %7259 = vmatpush.msra.mxu0 0.0
    %7260 = vmatpush.msra.mxu0 0.0
    %7261 = vmatpush.msra.mxu0 0.0
    %7262 = vmatpush.msra.mxu0 0.0
    %7263 = vmatpush.msra.mxu0 0.0
    %7264 = vmatpush.msra.mxu0 0.0
    %7265 = vmatpush.msra.mxu0 0.0
    %7266 = vmatpush.msra.mxu0 0.0
    %7267 = vmatpush.msra.mxu0 0.0
    %7268 = vmatpush.msra.mxu0 0.0
    %7269 = vmatpush.msra.mxu0 0.0
    %7270 = vmatpush.msra.mxu0 %v7250
    %7271 = vmatpush.msra.mxu0 %v7249
    %7272 = vmatpush.msra.mxu0 %v7248
    %7273 = vmatpush.msra.mxu0 %v7247
    %7274 = vmatmul.f32.gmra.mxu0 %v7256
    %v7275 = vpop.f32.mrf.mxu0
    %v7276 = vadd.f32 %v7253, %v7275
    %7277 = vdwg.mxu0
    %vm7278 = vcmask 74752
    %7279 = vst.msk [vmem:[#allocation2] sm:$0x3] %vm7278, %v7276
    // Predicated region
    $region54: #{lenet_forward.1} parent=1 // pred_check
      _
    $region55: #{lenet_forward.1} parent=1 // pred_check_branch
      %7281 = sbr.rel (0) target = $region57
    $region56: #{lenet_forward.1} parent=1 // pred_region
      %7283 = vsyncadd [#allocation3], 0
      %s7285 = sshll.u32 [#allocation2], 4
      %s7286 = int_to_ptr.vmem [resolvable:$true] %s7285
      %s7287 = sshll.u32 %s13, 4
      %s7288 = int_to_ptr.hbm [resolvable:$true] %s7287
      %7290 = dma.vmem_to_hbm [thread:$0]  %s7286, 32, %s7288, [#allocation3]
    $region57: #{lenet_forward.1} parent=1 // pred_fallthru
      _
    // Predicated region
    $region58: #{lenet_forward.1} parent=1 // pred_check
      _
    $region59: #{lenet_forward.1} parent=1 // pred_check_branch
      %7292 = sbr.rel (0) target = $region61
    $region60: #{lenet_forward.1} parent=1 // pred_region
      %7294 = dma.done [#allocation3], 32
    $region61: #{lenet_forward.1} parent=1 // pred_fallthru
      _
    %7295 = vsyncpa [#allocation3], 1

</llo_original>
